<compile_context>
chip_gen: v5e
topology: v5e:2x2
jax: 0.10.0
libtpu: 0.0.40
codegen_flags: <defaults>
</compile_context>

<pallas_src>
import math

import jax
import jax.numpy as jnp
from jax import lax
from jax.experimental import pallas as pl
from jax.experimental.pallas import tpu as pltpu

N_F = 32
Z_DIM = 12
H_DIM = 256

# Row tile for the matmul grid (multiple of the 8/16-row sublane tiling).
# It is only used when it divides M exactly, so no partial / out-of-bounds
# blocks are ever issued; otherwise the (small) operand is a single block.
_TM = 256


# ---------------------------------------------------------------------------
# Pallas kernels
# ---------------------------------------------------------------------------
def _make_matmul_kernel(has_pre_bias, pre_relu, has_bias, relu):
    """Builds: out = act[(pre_act(x (+ pre_b))) @ w (+ b)], stages optional.

    The MXU sees bf16 operands; accumulation / bias / activation are f32.
    pre_bias / pre_relu let the *previous* layer's bias+ReLU be fused into
    this matmul (used for the decoder's ConvTranspose col2im chain).
    """

    def kernel(*refs):
        i = 0
        x = refs[i][...]; i += 1                       # (tm, K)
        if has_pre_bias:
            x = x + refs[i][...]; i += 1               # + (1, K) broadcast
        if pre_relu:
            x = jnp.maximum(x, 0.0)
        w = refs[i][...]; i += 1                       # (K, N) bf16
        acc = jnp.dot(x.astype(jnp.bfloat16), w,
                      preferred_element_type=jnp.float32)
        if has_bias:
            acc = acc + refs[i][...]; i += 1           # + (1, N) broadcast
        if relu:
            acc = jnp.maximum(acc, 0.0)
        refs[i][...] = acc                             # (tm, N) f32

    return kernel


def matmul_fused(x, w, b=None, *, relu=False, pre_bias=None, pre_relu=False):
    """act[(pre_act(x + pre_bias)) @ w + b] on the MXU, f32 accumulate/output.

    x: (M, K); w: (K, N); b: (N,) or None; pre_bias: (K,) or None.
    Operands are passed unpadded (full-array or M-tiled blocks) and cast to
    bf16 outside the kernel so XLA fuses the cast into the producing fusion.
    """
    M, K = x.shape
    K2, N = w.shape
    assert K == K2
    w = w.astype(jnp.bfloat16)
    if pre_bias is None:
        x = x.astype(jnp.bfloat16)     # halve HBM traffic into the kernel
    else:
        x = x.astype(jnp.float32)      # pre-bias/ReLU applied in f32 in-kernel

    tm = _TM if (M > _TM and M % _TM == 0) else M
    grid = (M // tm,)

    args = [x]
    in_specs = [pl.BlockSpec((tm, K), lambda i: (i, 0))]
    if pre_bias is not None:
        args.append(pre_bias.astype(jnp.float32).reshape(1, K))
        in_specs.append(pl.BlockSpec((1, K), lambda i: (0, 0)))
    args.append(w)
    in_specs.append(pl.BlockSpec((K, N), lambda i: (0, 0)))
    if b is not None:
        args.append(b.astype(jnp.float32).reshape(1, N))
        in_specs.append(pl.BlockSpec((1, N), lambda i: (0, 0)))

    kernel = _make_matmul_kernel(pre_bias is not None, pre_relu,
                                 b is not None, relu)
    return pl.pallas_call(
        kernel,
        out_shape=jax.ShapeDtypeStruct((M, N), jnp.float32),
        grid=grid,
        in_specs=in_specs,
        out_specs=pl.BlockSpec((tm, N), lambda i: (i, 0)),
        compiler_params=pltpu.CompilerParams(
            dimension_semantics=("parallel",)),
    )(*args)


def _bottleneck_kernel(h_ref, w1_ref, b1_ref, w2_ref, b2_ref, eps_ref,
                       w3_ref, b3_ref, mu_ref, lv_ref, h2_ref):
    """fc1 / fc2 / reparameterize / fc3 fused into a single kernel."""
    h = h_ref[...]                                               # (B, H) bf16
    mu = jnp.dot(h, w1_ref[...],
                 preferred_element_type=jnp.float32) + b1_ref[...]
    lv = jnp.dot(h, w2_ref[...],
                 preferred_element_type=jnp.float32) + b2_ref[...]
    z = mu + jnp.exp(0.5 * lv) * eps_ref[...]                    # reparam
    h2 = jnp.dot(z.astype(jnp.bfloat16), w3_ref[...],
                 preferred_element_type=jnp.float32) + b3_ref[...]
    mu_ref[...] = mu
    lv_ref[...] = lv
    h2_ref[...] = h2


def bottleneck(h, eps, fc1, fc2, fc3):
    """One pallas_call for the whole bottleneck (was 4 calls)."""
    B = h.shape[0]
    (w1, b1), (w2, b2), (w3, b3) = fc1, fc2, fc3
    full = lambda shape: pl.BlockSpec(shape, lambda i: (0, 0))
    return pl.pallas_call(
        _bottleneck_kernel,
        out_shape=(jax.ShapeDtypeStruct((B, Z_DIM), jnp.float32),
                   jax.ShapeDtypeStruct((B, Z_DIM), jnp.float32),
                   jax.ShapeDtypeStruct((B, H_DIM), jnp.float32)),
        grid=(1,),
        in_specs=[full((B, H_DIM)),
                  full((H_DIM, Z_DIM)), full((1, Z_DIM)),
                  full((H_DIM, Z_DIM)), full((1, Z_DIM)),
                  full((B, Z_DIM)),
                  full((Z_DIM, H_DIM)), full((1, H_DIM))],
        out_specs=(full((B, Z_DIM)), full((B, Z_DIM)), full((B, H_DIM))),
    )(h.astype(jnp.bfloat16),
      w1.astype(jnp.bfloat16), b1.reshape(1, Z_DIM).astype(jnp.float32),
      w2.astype(jnp.bfloat16), b2.reshape(1, Z_DIM).astype(jnp.float32),
      eps.astype(jnp.float32),
      w3.astype(jnp.bfloat16), b3.reshape(1, H_DIM).astype(jnp.float32))


def _bias_relu_kernel(x_ref, b_ref, o_ref):
    o_ref[...] = jnp.maximum(x_ref[...] + b_ref[...], 0.0)


def bias_relu(x, b):
    """relu(x + b); x: (M, C) channels-last, b: (C,). Used for the last layer."""
    M, C = x.shape
    return pl.pallas_call(
        _bias_relu_kernel,
        out_shape=jax.ShapeDtypeStruct((M, C), jnp.float32),
        grid=(1,),
        in_specs=[pl.BlockSpec((M, C), lambda i: (0, 0)),
                  pl.BlockSpec((1, C), lambda i: (0, 0))],
        out_specs=pl.BlockSpec((M, C), lambda i: (0, 0)),
    )(x.astype(jnp.float32), b.reshape(1, C).astype(jnp.float32))


# ---------------------------------------------------------------------------
# Conv / ConvTranspose lowerings (NHWC).  Light layout glue stays in XLA; all
# MACs / bias / activations run in the Pallas kernels above.
# ---------------------------------------------------------------------------
def _im2col_nhwc(x, kh, kw, stride, pad):
    """x: (B,H,W,C) -> (B*OH*OW, KH*KW*C) with lane-contiguous (kh,kw,c) cols."""
    B, H, W, C = x.shape
    if pad:
        x = jnp.pad(x, ((0, 0), (pad, pad), (pad, pad), (0, 0)))
    oh = (H + 2 * pad - kh) // stride + 1
    ow = (W + 2 * pad - kw) // stride + 1
    taps = [x[:, i:i + stride * (oh - 1) + 1:stride,
               j:j + stride * (ow - 1) + 1:stride, :]
            for i in range(kh) for j in range(kw)]
    cols = jnp.concatenate(taps, axis=-1)            # (B, OH, OW, KH*KW*C)
    return cols.reshape(B * oh * ow, kh * kw * C), oh, ow


def conv2d(x, w, b, *, stride, pad, relu=True):
    """PyTorch Conv2d semantics, NHWC activations. w: (Cout, Cin, KH, KW)."""
    # TODO(synk): fold the im2col tap gather into the matmul kernel (VMEM-
    # resident input tile) to remove the KH*KW HBM amplification at large batch.
    Cout, Cin, KH, KW = w.shape
    B = x.shape[0]
    cols, oh, ow = _im2col_nhwc(x, KH, KW, stride, pad)
    w_mat = w.transpose(2, 3, 1, 0).reshape(KH * KW * Cin, Cout)
    out = matmul_fused(cols, w_mat, b, relu=relu)    # (B*OH*OW, Cout) f32
    return out.reshape(B, oh, ow, Cout)


def conv_transpose2d(x, w, *, stride, pad, pre_bias=None, pre_relu=False):
    """PyTorch ConvTranspose2d, NHWC.  Bias/ReLU of THIS layer are NOT applied
    here; the caller fuses them into the next layer's matmul (pre-activation)
    or a final bias_relu kernel.

    x: (B, IH, IW, Cin); w: (Cin, Cout, KH, KW).
    Lowered as a dense matmul over Cin followed by a col2im overlap-add --
    no zero-dilated input, no im2col slab, no wasted MACs.
    """
    B, IH, IW, Cin = x.shape
    _, Cout, KH, KW = w.shape
    w_mat = w.transpose(0, 2, 3, 1).reshape(Cin, KH * KW * Cout)
    y = matmul_fused(x.reshape(B * IH * IW, Cin), w_mat,
                     pre_bias=pre_bias, pre_relu=pre_relu)   # (B*IH*IW, KH*KW*Cout)
    y = y.reshape(B, IH, IW, KH, KW, Cout)

    FH, FW = (IH - 1) * stride + KH, (IW - 1) * stride + KW
    zero = jnp.array(0.0, dtype=y.dtype)
    full = None
    for kh in range(KH):
        for kw in range(KW):
            tap = lax.pad(y[:, :, :, kh, kw, :], zero,
                          ((0, 0, 0),
                           (kh, KH - kh - 1, stride - 1),
                           (kw, KW - kw - 1, stride - 1),
                           (0, 0, 0)))                       # (B, FH, FW, Cout)
            full = tap if full is None else full + tap
    return full[:, pad:FH - pad, pad:FW - pad, :]            # raw (needs +b, relu)


# ---------------------------------------------------------------------------
# Parameters (deterministic synthetic init)
# ---------------------------------------------------------------------------
def _wb(key, w_shape, b_shape, fan_in):
    kw, kb = jax.random.split(key)
    w = jax.random.normal(kw, w_shape, jnp.float32) / math.sqrt(fan_in)
    b = jax.random.normal(kb, b_shape, jnp.float32) / math.sqrt(fan_in)
    return w, b


def init_params(key):
    ks = jax.random.split(key, 11)
    p = {}
    # encoder convs: (Cout, Cin, KH, KW)
    p["ec1"] = _wb(ks[0], (N_F, 1, 4, 4), (N_F,), 1 * 16)
    p["ec2"] = _wb(ks[1], (N_F * 2, N_F, 4, 4), (N_F * 2,), N_F * 16)
    p["ec3"] = _wb(ks[2], (N_F * 4, N_F * 2, 3, 3), (N_F * 4,), N_F * 2 * 9)
    p["ec4"] = _wb(ks[3], (N_F * 8, N_F * 4, 4, 4), (N_F * 8,), N_F * 4 * 16)
    # linears stored as (in, out)
    p["fc1"] = _wb(ks[4], (H_DIM, Z_DIM), (Z_DIM,), H_DIM)
    p["fc2"] = _wb(ks[5], (H_DIM, Z_DIM), (Z_DIM,), H_DIM)
    p["fc3"] = _wb(ks[6], (Z_DIM, H_DIM), (H_DIM,), Z_DIM)
    # decoder transposed convs: (Cin, Cout, KH, KW)
    p["dc1"] = _wb(ks[7], (H_DIM, N_F * 4, 4, 4), (N_F * 4,), H_DIM * 16)
    p["dc2"] = _wb(ks[8], (N_F * 4, N_F * 2, 3, 3), (N_F * 2,), N_F * 4 * 9)
    p["dc3"] = _wb(ks[9], (N_F * 2, N_F, 4, 4), (N_F,), N_F * 2 * 16)
    p["dc4"] = _wb(ks[10], (N_F, 1, 4, 4), (1,), N_F * 16)
    return p


# ---------------------------------------------------------------------------
# VAE forward (mirrors the PyTorch module)
# ---------------------------------------------------------------------------
def vae_forward(p, x, eps):
    B = x.shape[0]
    x = x.astype(jnp.float32).transpose(0, 2, 3, 1)        # NCHW -> NHWC (once)

    # ---------------- encoder ----------------
    h = conv2d(x, *p["ec1"], stride=2, pad=1)              # (B, 16, 16,  32)
    h = conv2d(h, *p["ec2"], stride=2, pad=1)              # (B,  8,  8,  64)
    h = conv2d(h, *p["ec3"], stride=2, pad=1)              # (B,  4,  4, 128)
    h = conv2d(h, *p["ec4"], stride=1, pad=0)              # (B,  1,  1, 256)
    h = h.reshape(B, H_DIM)                                # Flatten -> (B, 256)

    # ------------- bottleneck: one fused pallas_call -------------
    mu, logvar, h2 = bottleneck(h, eps, p["fc1"], p["fc2"], p["fc3"])

    # ---------------- decoder ----------------
    # Bias+ReLU of layer L is fused as pre-activation of layer L+1's matmul;
    # the final layer's bias+ReLU runs in a small elementwise kernel.
    d = conv_transpose2d(h2.reshape(B, 1, 1, H_DIM), p["dc1"][0],
                         stride=1, pad=0)                              # (B, 4, 4,128)
    d = conv_transpose2d(d, p["dc2"][0], stride=2, pad=1,
                         pre_bias=p["dc1"][1], pre_relu=True)          # (B, 7, 7, 64)
    d = conv_transpose2d(d, p["dc3"][0], stride=2, pad=1,
                         pre_bias=p["dc2"][1], pre_relu=True)          # (B,14,14, 32)
    d = conv_transpose2d(d, p["dc4"][0], stride=2, pad=1,
                         pre_bias=p["dc3"][1], pre_relu=True)          # (B,28,28,  1)
    OH, OW, C = d.shape[1], d.shape[2], d.shape[3]
    recon = bias_relu(d.reshape(B * OH * OW, C), p["dc4"][1])
    recon = recon.reshape(B, OH, OW, C).transpose(0, 3, 1, 2)          # -> NCHW
    return recon, mu, logvar


if __name__ == "__main__":
    key = jax.random.PRNGKey(0)
    kx, kp, ke = jax.random.split(key, 3)
    x = jax.random.normal(kx, (2, 1, 32, 32), jnp.float32)
    params = init_params(kp)
    # eps replaces torch.randn inside reparameterize (deterministic here)
    eps = jax.random.normal(ke, (2, Z_DIM), jnp.float32)

    fwd = jax.jit(vae_forward)
    recon, mu, logvar = fwd(params, x, eps)
    jax.block_until_ready((recon, mu, logvar))

    assert recon.shape == (2, 1, 28, 28), recon.shape
    assert mu.shape == (2, Z_DIM) and logvar.shape == (2, Z_DIM)
    assert bool(jnp.all(jnp.isfinite(recon)))
    assert bool(jnp.all(recon >= 0.0))  # final ReLU (matches reference module)
    print("KERNEL_OK")
</pallas_src>

<mosaic_0001>
module attributes {stable_mosaic.version = 11 : i64} {
  func.func @kernel(%arg0: i32, %arg1: memref<256x16xbf16, #tpu.memory_space<vmem>>, %arg2: memref<16x32xbf16, #tpu.memory_space<vmem>>, %arg3: memref<1x32xf32, #tpu.memory_space<vmem>>, %arg4: memref<256x32xf32, #tpu.memory_space<vmem>>) attributes {dimension_semantics = [#tpu.dimension_semantics<parallel>], iteration_bounds = array<i64: 2>, scalar_prefetch = 0 : i64, scratch_operands = 0 : i64, tpu.core_type = #tpu.core_type<tc>, window_params = [{transform_indices = @transform_0, window_bounds = array<i64: 256, 16>}, {pipeline_mode = #tpu.pipeline_mode<synchronous>, transform_indices = @transform_1, window_bounds = array<i64: 16, 32>}, {pipeline_mode = #tpu.pipeline_mode<synchronous>, transform_indices = @transform_2, window_bounds = array<i64: 1, 32>}, {transform_indices = @transform_3, window_bounds = array<i64: 256, 32>}]} {
    %c0 = arith.constant 0 : index
    %c0_0 = arith.constant 0 : index
    %0 = vector.load %arg1[%c0, %c0_0] : memref<256x16xbf16, #tpu.memory_space<vmem>>, vector<256x16xbf16>
    %c0_1 = arith.constant 0 : index
    %c0_2 = arith.constant 0 : index
    %1 = vector.load %arg2[%c0_1, %c0_2] : memref<16x32xbf16, #tpu.memory_space<vmem>>, vector<16x32xbf16>
    %cst = arith.constant dense<0.000000e+00> : vector<256x32xf32>
    %2 = tpu.matmul %0, %1, %cst {dimension_numbers = #tpu.dot_dimension_numbers<[1], [0], [0], [1], [0, 0, 1, 1], [], []>} : vector<256x16xbf16>, vector<16x32xbf16>, vector<256x32xf32> -> vector<256x32xf32>
    %c0_3 = arith.constant 0 : index
    %c0_4 = arith.constant 0 : index
    %3 = vector.load %arg3[%c0_3, %c0_4] : memref<1x32xf32, #tpu.memory_space<vmem>>, vector<1x32xf32>
    %4 = vector.broadcast %3 : vector<1x32xf32> to vector<256x32xf32>
    %5 = arith.addf %2, %4 : vector<256x32xf32>
    %cst_5 = arith.constant 0.000000e+00 : f32
    %6 = vector.broadcast %cst_5 : f32 to vector<256x32xf32>
    %7 = arith.maximumf %5, %6 : vector<256x32xf32>
    %c0_6 = arith.constant 0 : index
    %c0_7 = arith.constant 0 : index
    %8 = vector.load %arg4[%c0_6, %c0_7] : memref<256x32xf32, #tpu.memory_space<vmem>>, vector<256x32xf32>
    tpu.vector_store %arg4[%c0_6, %c0_7], %7 {strides = array<i32>} : memref<256x32xf32, #tpu.memory_space<vmem>>, vector<256x32xf32>,
    return
  }
  func.func @transform_0(%arg0: i32) -> (i32, i32) {
    %c0_i32 = arith.constant 0 : i32
    %c0_i32_0 = arith.constant 0 : i32
    return %arg0, %c0_i32 : i32, i32
  }
  func.func @transform_1(%arg0: i32) -> (i32, i32) {
    %c0_i32 = arith.constant 0 : i32
    %c0_i32_0 = arith.constant 0 : i32
    %c0_i32_1 = arith.constant 0 : i32
    return %c0_i32, %c0_i32_0 : i32, i32
  }
  func.func @transform_2(%arg0: i32) -> (i32, i32) {
    %c0_i32 = arith.constant 0 : i32
    %c0_i32_0 = arith.constant 0 : i32
    %c0_i32_1 = arith.constant 0 : i32
    return %c0_i32, %c0_i32_0 : i32, i32
  }
  func.func @transform_3(%arg0: i32) -> (i32, i32) {
    %c0_i32 = arith.constant 0 : i32
    %c0_i32_0 = arith.constant 0 : i32
    return %arg0, %c0_i32 : i32, i32
  }
}

module attributes {stable_mosaic.version = 11 : i64} {
  func.func @kernel(%arg0: i32, %arg1: memref<128x512xbf16, #tpu.memory_space<vmem>>, %arg2: memref<512x64xbf16, #tpu.memory_space<vmem>>, %arg3: memref<1x64xf32, #tpu.memory_space<vmem>>, %arg4: memref<128x64xf32, #tpu.memory_space<vmem>>) attributes {dimension_semantics = [#tpu.dimension_semantics<parallel>], iteration_bounds = array<i64: 1>, scalar_prefetch = 0 : i64, scratch_operands = 0 : i64, tpu.core_type = #tpu.core_type<tc>, window_params = [{transform_indices = @transform_0, window_bounds = array<i64: 128, 512>}, {pipeline_mode = #tpu.pipeline_mode<synchronous>, transform_indices = @transform_1, window_bounds = array<i64: 512, 64>}, {pipeline_mode = #tpu.pipeline_mode<synchronous>, transform_indices = @transform_2, window_bounds = array<i64: 1, 64>}, {transform_indices = @transform_3, window_bounds = array<i64: 128, 64>}]} {
    %c0 = arith.constant 0 : index
    %c0_0 = arith.constant 0 : index
    %0 = vector.load %arg1[%c0, %c0_0] : memref<128x512xbf16, #tpu.memory_space<vmem>>, vector<128x512xbf16>
    %c0_1 = arith.constant 0 : index
    %c0_2 = arith.constant 0 : index
    %1 = vector.load %arg2[%c0_1, %c0_2] : memref<512x64xbf16, #tpu.memory_space<vmem>>, vector<512x64xbf16>
    %cst = arith.constant dense<0.000000e+00> : vector<128x64xf32>
    %2 = tpu.matmul %0, %1, %cst {dimension_numbers = #tpu.dot_dimension_numbers<[1], [0], [0], [1], [0, 0, 1, 1], [], []>} : vector<128x512xbf16>, vector<512x64xbf16>, vector<128x64xf32> -> vector<128x64xf32>
    %c0_3 = arith.constant 0 : index
    %c0_4 = arith.constant 0 : index
    %3 = vector.load %arg3[%c0_3, %c0_4] : memref<1x64xf32, #tpu.memory_space<vmem>>, vector<1x64xf32>
    %4 = vector.broadcast %3 : vector<1x64xf32> to vector<128x64xf32>
    %5 = arith.addf %2, %4 : vector<128x64xf32>
    %cst_5 = arith.constant 0.000000e+00 : f32
    %6 = vector.broadcast %cst_5 : f32 to vector<128x64xf32>
    %7 = arith.maximumf %5, %6 : vector<128x64xf32>
    %c0_6 = arith.constant 0 : index
    %c0_7 = arith.constant 0 : index
    %8 = vector.load %arg4[%c0_6, %c0_7] : memref<128x64xf32, #tpu.memory_space<vmem>>, vector<128x64xf32>
    tpu.vector_store %arg4[%c0_6, %c0_7], %7 {strides = array<i32>} : memref<128x64xf32, #tpu.memory_space<vmem>>, vector<128x64xf32>,
    return
  }
  func.func @transform_0(%arg0: i32) -> (i32, i32) {
    %c0_i32 = arith.constant 0 : i32
    %c0_i32_0 = arith.constant 0 : i32
    return %arg0, %c0_i32 : i32, i32
  }
  func.func @transform_1(%arg0: i32) -> (i32, i32) {
    %c0_i32 = arith.constant 0 : i32
    %c0_i32_0 = arith.constant 0 : i32
    %c0_i32_1 = arith.constant 0 : i32
    return %c0_i32, %c0_i32_0 : i32, i32
  }
  func.func @transform_2(%arg0: i32) -> (i32, i32) {
    %c0_i32 = arith.constant 0 : i32
    %c0_i32_0 = arith.constant 0 : i32
    %c0_i32_1 = arith.constant 0 : i32
    return %c0_i32, %c0_i32_0 : i32, i32
  }
  func.func @transform_3(%arg0: i32) -> (i32, i32) {
    %c0_i32 = arith.constant 0 : i32
    %c0_i32_0 = arith.constant 0 : i32
    return %arg0, %c0_i32 : i32, i32
  }
}

module attributes {stable_mosaic.version = 11 : i64} {
  func.func @kernel(%arg0: i32, %arg1: memref<32x576xbf16, #tpu.memory_space<vmem>>, %arg2: memref<576x128xbf16, #tpu.memory_space<vmem>>, %arg3: memref<1x128xf32, #tpu.memory_space<vmem>>, %arg4: memref<32x128xf32, #tpu.memory_space<vmem>>) attributes {dimension_semantics = [#tpu.dimension_semantics<parallel>], iteration_bounds = array<i64: 1>, scalar_prefetch = 0 : i64, scratch_operands = 0 : i64, tpu.core_type = #tpu.core_type<tc>, window_params = [{transform_indices = @transform_0, window_bounds = array<i64: 32, 576>}, {pipeline_mode = #tpu.pipeline_mode<synchronous>, transform_indices = @transform_1, window_bounds = array<i64: 576, 128>}, {pipeline_mode = #tpu.pipeline_mode<synchronous>, transform_indices = @transform_2, window_bounds = array<i64: 1, 128>}, {transform_indices = @transform_3, window_bounds = array<i64: 32, 128>}]} {
    %c0 = arith.constant 0 : index
    %c0_0 = arith.constant 0 : index
    %0 = vector.load %arg1[%c0, %c0_0] : memref<32x576xbf16, #tpu.memory_space<vmem>>, vector<32x576xbf16>
    %c0_1 = arith.constant 0 : index
    %c0_2 = arith.constant 0 : index
    %1 = vector.load %arg2[%c0_1, %c0_2] : memref<576x128xbf16, #tpu.memory_space<vmem>>, vector<576x128xbf16>
    %cst = arith.constant dense<0.000000e+00> : vector<32x128xf32>
    %2 = tpu.matmul %0, %1, %cst {dimension_numbers = #tpu.dot_dimension_numbers<[1], [0], [0], [1], [0, 0, 1, 1], [], []>} : vector<32x576xbf16>, vector<576x128xbf16>, vector<32x128xf32> -> vector<32x128xf32>
    %c0_3 = arith.constant 0 : index
    %c0_4 = arith.constant 0 : index
    %3 = vector.load %arg3[%c0_3, %c0_4] : memref<1x128xf32, #tpu.memory_space<vmem>>, vector<1x128xf32>
    %4 = vector.broadcast %3 : vector<1x128xf32> to vector<32x128xf32>
    %5 = arith.addf %2, %4 : vector<32x128xf32>
    %cst_5 = arith.constant 0.000000e+00 : f32
    %6 = vector.broadcast %cst_5 : f32 to vector<32x128xf32>
    %7 = arith.maximumf %5, %6 : vector<32x128xf32>
    %c0_6 = arith.constant 0 : index
    %c0_7 = arith.constant 0 : index
    %8 = vector.load %arg4[%c0_6, %c0_7] : memref<32x128xf32, #tpu.memory_space<vmem>>, vector<32x128xf32>
    tpu.vector_store %arg4[%c0_6, %c0_7], %7 {strides = array<i32>} : memref<32x128xf32, #tpu.memory_space<vmem>>, vector<32x128xf32>,
    return
  }
  func.func @transform_0(%arg0: i32) -> (i32, i32) {
    %c0_i32 = arith.constant 0 : i32
    %c0_i32_0 = arith.constant 0 : i32
    return %arg0, %c0_i32 : i32, i32
  }
  func.func @transform_1(%arg0: i32) -> (i32, i32) {
    %c0_i32 = arith.constant 0 : i32
    %c0_i32_0 = arith.constant 0 : i32
    %c0_i32_1 = arith.constant 0 : i32
    return %c0_i32, %c0_i32_0 : i32, i32
  }
  func.func @transform_2(%arg0: i32) -> (i32, i32) {
    %c0_i32 = arith.constant 0 : i32
    %c0_i32_0 = arith.constant 0 : i32
    %c0_i32_1 = arith.constant 0 : i32
    return %c0_i32, %c0_i32_0 : i32, i32
  }
  func.func @transform_3(%arg0: i32) -> (i32, i32) {
    %c0_i32 = arith.constant 0 : i32
    %c0_i32_0 = arith.constant 0 : i32
    return %arg0, %c0_i32 : i32, i32
  }
}

module attributes {stable_mosaic.version = 11 : i64} {
  func.func @kernel(%arg0: i32, %arg1: memref<2x2048xbf16, #tpu.memory_space<vmem>>, %arg2: memref<2048x256xbf16, #tpu.memory_space<vmem>>, %arg3: memref<1x256xf32, #tpu.memory_space<vmem>>, %arg4: memref<2x256xf32, #tpu.memory_space<vmem>>) attributes {dimension_semantics = [#tpu.dimension_semantics<parallel>], iteration_bounds = array<i64: 1>, scalar_prefetch = 0 : i64, scratch_operands = 0 : i64, tpu.core_type = #tpu.core_type<tc>, window_params = [{transform_indices = @transform_0, window_bounds = array<i64: 2, 2048>}, {pipeline_mode = #tpu.pipeline_mode<synchronous>, transform_indices = @transform_1, window_bounds = array<i64: 2048, 256>}, {pipeline_mode = #tpu.pipeline_mode<synchronous>, transform_indices = @transform_2, window_bounds = array<i64: 1, 256>}, {transform_indices = @transform_3, window_bounds = array<i64: 2, 256>}]} {
    %c0 = arith.constant 0 : index
    %c0_0 = arith.constant 0 : index
    %0 = vector.load %arg1[%c0, %c0_0] : memref<2x2048xbf16, #tpu.memory_space<vmem>>, vector<2x2048xbf16>
    %c0_1 = arith.constant 0 : index
    %c0_2 = arith.constant 0 : index
    %1 = vector.load %arg2[%c0_1, %c0_2] : memref<2048x256xbf16, #tpu.memory_space<vmem>>, vector<2048x256xbf16>
    %cst = arith.constant dense<0.000000e+00> : vector<2x256xf32>
    %2 = tpu.matmul %0, %1, %cst {dimension_numbers = #tpu.dot_dimension_numbers<[1], [0], [0], [1], [0, 0, 1, 1], [], []>} : vector<2x2048xbf16>, vector<2048x256xbf16>, vector<2x256xf32> -> vector<2x256xf32>
    %c0_3 = arith.constant 0 : index
    %c0_4 = arith.constant 0 : index
    %3 = vector.load %arg3[%c0_3, %c0_4] : memref<1x256xf32, #tpu.memory_space<vmem>>, vector<1x256xf32>
    %4 = vector.broadcast %3 : vector<1x256xf32> to vector<2x256xf32>
    %5 = arith.addf %2, %4 : vector<2x256xf32>
    %cst_5 = arith.constant 0.000000e+00 : f32
    %6 = vector.broadcast %cst_5 : f32 to vector<2x256xf32>
    %7 = arith.maximumf %5, %6 : vector<2x256xf32>
    %c0_6 = arith.constant 0 : index
    %c0_7 = arith.constant 0 : index
    %8 = vector.load %arg4[%c0_6, %c0_7] : memref<2x256xf32, #tpu.memory_space<vmem>>, vector<2x256xf32>
    tpu.vector_store %arg4[%c0_6, %c0_7], %7 {strides = array<i32>} : memref<2x256xf32, #tpu.memory_space<vmem>>, vector<2x256xf32>,
    return
  }
  func.func @transform_0(%arg0: i32) -> (i32, i32) {
    %c0_i32 = arith.constant 0 : i32
    %c0_i32_0 = arith.constant 0 : i32
    return %arg0, %c0_i32 : i32, i32
  }
  func.func @transform_1(%arg0: i32) -> (i32, i32) {
    %c0_i32 = arith.constant 0 : i32
    %c0_i32_0 = arith.constant 0 : i32
    %c0_i32_1 = arith.constant 0 : i32
    return %c0_i32, %c0_i32_0 : i32, i32
  }
  func.func @transform_2(%arg0: i32) -> (i32, i32) {
    %c0_i32 = arith.constant 0 : i32
    %c0_i32_0 = arith.constant 0 : i32
    %c0_i32_1 = arith.constant 0 : i32
    return %c0_i32, %c0_i32_0 : i32, i32
  }
  func.func @transform_3(%arg0: i32) -> (i32, i32) {
    %c0_i32 = arith.constant 0 : i32
    %c0_i32_0 = arith.constant 0 : i32
    return %arg0, %c0_i32 : i32, i32
  }
}

module attributes {stable_mosaic.version = 11 : i64} {
  func.func @_bottleneck_kernel(%arg0: i32, %arg1: memref<2x256xbf16, #tpu.memory_space<vmem>>, %arg2: memref<256x12xbf16, #tpu.memory_space<vmem>>, %arg3: memref<1x12xf32, #tpu.memory_space<vmem>>, %arg4: memref<256x12xbf16, #tpu.memory_space<vmem>>, %arg5: memref<1x12xf32, #tpu.memory_space<vmem>>, %arg6: memref<2x12xf32, #tpu.memory_space<vmem>>, %arg7: memref<12x256xbf16, #tpu.memory_space<vmem>>, %arg8: memref<1x256xf32, #tpu.memory_space<vmem>>, %arg9: memref<2x12xf32, #tpu.memory_space<vmem>>, %arg10: memref<2x12xf32, #tpu.memory_space<vmem>>, %arg11: memref<2x256xf32, #tpu.memory_space<vmem>>) attributes {dimension_semantics = [#tpu.dimension_semantics<arbitrary>], iteration_bounds = array<i64: 1>, scalar_prefetch = 0 : i64, scratch_operands = 0 : i64, tpu.core_type = #tpu.core_type<tc>, window_params = [{pipeline_mode = #tpu.pipeline_mode<synchronous>, transform_indices = @transform_0, window_bounds = array<i64: 2, 256>}, {pipeline_mode = #tpu.pipeline_mode<synchronous>, transform_indices = @transform_1, window_bounds = array<i64: 256, 12>}, {pipeline_mode = #tpu.pipeline_mode<synchronous>, transform_indices = @transform_2, window_bounds = array<i64: 1, 12>}, {pipeline_mode = #tpu.pipeline_mode<synchronous>, transform_indices = @transform_3, window_bounds = array<i64: 256, 12>}, {pipeline_mode = #tpu.pipeline_mode<synchronous>, transform_indices = @transform_4, window_bounds = array<i64: 1, 12>}, {pipeline_mode = #tpu.pipeline_mode<synchronous>, transform_indices = @transform_5, window_bounds = array<i64: 2, 12>}, {pipeline_mode = #tpu.pipeline_mode<synchronous>, transform_indices = @transform_6, window_bounds = array<i64: 12, 256>}, {pipeline_mode = #tpu.pipeline_mode<synchronous>, transform_indices = @transform_7, window_bounds = array<i64: 1, 256>}, {pipeline_mode = #tpu.pipeline_mode<synchronous>, transform_indices = @transform_8, window_bounds = array<i64: 2, 12>}, {pipeline_mode = #tpu.pipeline_mode<synchronous>, transform_indices = @transform_9, window_bounds = array<i64: 2, 12>}, {pipeline_mode = #tpu.pipeline_mode<synchronous>, transform_indices = @transform_10, window_bounds = array<i64: 2, 256>}]} {
    %c0 = arith.constant 0 : index
    %c0_0 = arith.constant 0 : index
    %0 = vector.load %arg1[%c0, %c0_0] : memref<2x256xbf16, #tpu.memory_space<vmem>>, vector<2x256xbf16>
    %c0_1 = arith.constant 0 : index
    %c0_2 = arith.constant 0 : index
    %1 = vector.load %arg2[%c0_1, %c0_2] : memref<256x12xbf16, #tpu.memory_space<vmem>>, vector<256x12xbf16>
    %cst = arith.constant dense<0.000000e+00> : vector<2x12xf32>
    %2 = tpu.matmul %0, %1, %cst {dimension_numbers = #tpu.dot_dimension_numbers<[1], [0], [0], [1], [0, 0, 1, 1], [], []>} : vector<2x256xbf16>, vector<256x12xbf16>, vector<2x12xf32> -> vector<2x12xf32>
    %c0_3 = arith.constant 0 : index
    %c0_4 = arith.constant 0 : index
    %3 = vector.load %arg3[%c0_3, %c0_4] : memref<1x12xf32, #tpu.memory_space<vmem>>, vector<1x12xf32>
    %4 = vector.broadcast %3 : vector<1x12xf32> to vector<2x12xf32>
    %5 = arith.addf %2, %4 : vector<2x12xf32>
    %c0_5 = arith.constant 0 : index
    %c0_6 = arith.constant 0 : index
    %6 = vector.load %arg4[%c0_5, %c0_6] : memref<256x12xbf16, #tpu.memory_space<vmem>>, vector<256x12xbf16>
    %cst_7 = arith.constant dense<0.000000e+00> : vector<2x12xf32>
    %7 = tpu.matmul %0, %6, %cst_7 {dimension_numbers = #tpu.dot_dimension_numbers<[1], [0], [0], [1], [0, 0, 1, 1], [], []>} : vector<2x256xbf16>, vector<256x12xbf16>, vector<2x12xf32> -> vector<2x12xf32>
    %c0_8 = arith.constant 0 : index
    %c0_9 = arith.constant 0 : index
    %8 = vector.load %arg5[%c0_8, %c0_9] : memref<1x12xf32, #tpu.memory_space<vmem>>, vector<1x12xf32>
    %9 = vector.broadcast %8 : vector<1x12xf32> to vector<2x12xf32>
    %10 = arith.addf %7, %9 : vector<2x12xf32>
    %cst_10 = arith.constant 5.000000e-01 : f32
    %11 = vector.broadcast %cst_10 : f32 to vector<2x12xf32>
    %12 = arith.mulf %11, %10 : vector<2x12xf32>
    %13 = math.exp %12 : vector<2x12xf32>
    %c0_11 = arith.constant 0 : index
    %c0_12 = arith.constant 0 : index
    %14 = vector.load %arg6[%c0_11, %c0_12] : memref<2x12xf32, #tpu.memory_space<vmem>>, vector<2x12xf32>
    %15 = arith.mulf %13, %14 : vector<2x12xf32>
    %16 = arith.addf %5, %15 : vector<2x12xf32>
    %17 = arith.truncf %16 : vector<2x12xf32> to vector<2x12xbf16>
    %c0_13 = arith.constant 0 : index
    %c0_14 = arith.constant 0 : index
    %18 = vector.load %arg7[%c0_13, %c0_14] : memref<12x256xbf16, #tpu.memory_space<vmem>>, vector<12x256xbf16>
    %cst_15 = arith.constant dense<0.000000e+00> : vector<2x256xf32>
    %19 = tpu.matmul %17, %18, %cst_15 {dimension_numbers = #tpu.dot_dimension_numbers<[1], [0], [0], [1], [0, 0, 1, 1], [], []>} : vector<2x12xbf16>, vector<12x256xbf16>, vector<2x256xf32> -> vector<2x256xf32>
    %c0_16 = arith.constant 0 : index
    %c0_17 = arith.constant 0 : index
    %20 = vector.load %arg8[%c0_16, %c0_17] : memref<1x256xf32, #tpu.memory_space<vmem>>, vector<1x256xf32>
    %21 = vector.broadcast %20 : vector<1x256xf32> to vector<2x256xf32>
    %22 = arith.addf %19, %21 : vector<2x256xf32>
    %c0_18 = arith.constant 0 : index
    %c0_19 = arith.constant 0 : index
    %23 = vector.load %arg9[%c0_18, %c0_19] : memref<2x12xf32, #tpu.memory_space<vmem>>, vector<2x12xf32>
    tpu.vector_store %arg9[%c0_18, %c0_19], %5 {strides = array<i32>} : memref<2x12xf32, #tpu.memory_space<vmem>>, vector<2x12xf32>,
    %c0_20 = arith.constant 0 : index
    %c0_21 = arith.constant 0 : index
    %24 = vector.load %arg10[%c0_20, %c0_21] : memref<2x12xf32, #tpu.memory_space<vmem>>, vector<2x12xf32>
    tpu.vector_store %arg10[%c0_20, %c0_21], %10 {strides = array<i32>} : memref<2x12xf32, #tpu.memory_space<vmem>>, vector<2x12xf32>,
    %c0_22 = arith.constant 0 : index
    %c0_23 = arith.constant 0 : index
    %25 = vector.load %arg11[%c0_22, %c0_23] : memref<2x256xf32, #tpu.memory_space<vmem>>, vector<2x256xf32>
    tpu.vector_store %arg11[%c0_22, %c0_23], %22 {strides = array<i32>} : memref<2x256xf32, #tpu.memory_space<vmem>>, vector<2x256xf32>,
    return
  }
  func.func @transform_0(%arg0: i32) -> (i32, i32) {
    %c0_i32 = arith.constant 0 : i32
    %c0_i32_0 = arith.constant 0 : i32
    %c0_i32_1 = arith.constant 0 : i32
    return %c0_i32, %c0_i32_0 : i32, i32
  }
  func.func @transform_1(%arg0: i32) -> (i32, i32) {
    %c0_i32 = arith.constant 0 : i32
    %c0_i32_0 = arith.constant 0 : i32
    %c0_i32_1 = arith.constant 0 : i32
    return %c0_i32, %c0_i32_0 : i32, i32
  }
  func.func @transform_2(%arg0: i32) -> (i32, i32) {
    %c0_i32 = arith.constant 0 : i32
    %c0_i32_0 = arith.constant 0 : i32
    %c0_i32_1 = arith.constant 0 : i32
    return %c0_i32, %c0_i32_0 : i32, i32
  }
  func.func @transform_3(%arg0: i32) -> (i32, i32) {
    %c0_i32 = arith.constant 0 : i32
    %c0_i32_0 = arith.constant 0 : i32
    %c0_i32_1 = arith.constant 0 : i32
    return %c0_i32, %c0_i32_0 : i32, i32
  }
  func.func @transform_4(%arg0: i32) -> (i32, i32) {
    %c0_i32 = arith.constant 0 : i32
    %c0_i32_0 = arith.constant 0 : i32
    %c0_i32_1 = arith.constant 0 : i32
    return %c0_i32, %c0_i32_0 : i32, i32
  }
  func.func @transform_5(%arg0: i32) -> (i32, i32) {
    %c0_i32 = arith.constant 0 : i32
    %c0_i32_0 = arith.constant 0 : i32
    %c0_i32_1 = arith.constant 0 : i32
    return %c0_i32, %c0_i32_0 : i32, i32
  }
  func.func @transform_6(%arg0: i32) -> (i32, i32) {
    %c0_i32 = arith.constant 0 : i32
    %c0_i32_0 = arith.constant 0 : i32
    %c0_i32_1 = arith.constant 0 : i32
    return %c0_i32, %c0_i32_0 : i32, i32
  }
  func.func @transform_7(%arg0: i32) -> (i32, i32) {
    %c0_i32 = arith.constant 0 : i32
    %c0_i32_0 = arith.constant 0 : i32
    %c0_i32_1 = arith.constant 0 : i32
    return %c0_i32, %c0_i32_0 : i32, i32
  }
  func.func @transform_8(%arg0: i32) -> (i32, i32) {
    %c0_i32 = arith.constant 0 : i32
    %c0_i32_0 = arith.constant 0 : i32
    %c0_i32_1 = arith.constant 0 : i32
    return %c0_i32, %c0_i32_0 : i32, i32
  }
  func.func @transform_9(%arg0: i32) -> (i32, i32) {
    %c0_i32 = arith.constant 0 : i32
    %c0_i32_0 = arith.constant 0 : i32
    %c0_i32_1 = arith.constant 0 : i32
    return %c0_i32, %c0_i32_0 : i32, i32
  }
  func.func @transform_10(%arg0: i32) -> (i32, i32) {
    %c0_i32 = arith.constant 0 : i32
    %c0_i32_0 = arith.constant 0 : i32
    %c0_i32_1 = arith.constant 0 : i32
    return %c0_i32, %c0_i32_0 : i32, i32
  }
}

module attributes {stable_mosaic.version = 11 : i64} {
  func.func @kernel(%arg0: i32, %arg1: memref<2x256xbf16, #tpu.memory_space<vmem>>, %arg2: memref<256x2048xbf16, #tpu.memory_space<vmem>>, %arg3: memref<2x2048xf32, #tpu.memory_space<vmem>>) attributes {dimension_semantics = [#tpu.dimension_semantics<parallel>], iteration_bounds = array<i64: 1>, scalar_prefetch = 0 : i64, scratch_operands = 0 : i64, tpu.core_type = #tpu.core_type<tc>, window_params = [{transform_indices = @transform_0, window_bounds = array<i64: 2, 256>}, {pipeline_mode = #tpu.pipeline_mode<synchronous>, transform_indices = @transform_1, window_bounds = array<i64: 256, 2048>}, {transform_indices = @transform_2, window_bounds = array<i64: 2, 2048>}]} {
    %c0 = arith.constant 0 : index
    %c0_0 = arith.constant 0 : index
    %0 = vector.load %arg1[%c0, %c0_0] : memref<2x256xbf16, #tpu.memory_space<vmem>>, vector<2x256xbf16>
    %c0_1 = arith.constant 0 : index
    %c0_2 = arith.constant 0 : index
    %1 = vector.load %arg2[%c0_1, %c0_2] : memref<256x2048xbf16, #tpu.memory_space<vmem>>, vector<256x2048xbf16>
    %cst = arith.constant dense<0.000000e+00> : vector<2x2048xf32>
    %2 = tpu.matmul %0, %1, %cst {dimension_numbers = #tpu.dot_dimension_numbers<[1], [0], [0], [1], [0, 0, 1, 1], [], []>} : vector<2x256xbf16>, vector<256x2048xbf16>, vector<2x2048xf32> -> vector<2x2048xf32>
    %c0_3 = arith.constant 0 : index
    %c0_4 = arith.constant 0 : index
    %3 = vector.load %arg3[%c0_3, %c0_4] : memref<2x2048xf32, #tpu.memory_space<vmem>>, vector<2x2048xf32>
    tpu.vector_store %arg3[%c0_3, %c0_4], %2 {strides = array<i32>} : memref<2x2048xf32, #tpu.memory_space<vmem>>, vector<2x2048xf32>,
    return
  }
  func.func @transform_0(%arg0: i32) -> (i32, i32) {
    %c0_i32 = arith.constant 0 : i32
    %c0_i32_0 = arith.constant 0 : i32
    return %arg0, %c0_i32 : i32, i32
  }
  func.func @transform_1(%arg0: i32) -> (i32, i32) {
    %c0_i32 = arith.constant 0 : i32
    %c0_i32_0 = arith.constant 0 : i32
    %c0_i32_1 = arith.constant 0 : i32
    return %c0_i32, %c0_i32_0 : i32, i32
  }
  func.func @transform_2(%arg0: i32) -> (i32, i32) {
    %c0_i32 = arith.constant 0 : i32
    %c0_i32_0 = arith.constant 0 : i32
    return %arg0, %c0_i32 : i32, i32
  }
}

module attributes {stable_mosaic.version = 11 : i64} {
  func.func @kernel(%arg0: i32, %arg1: memref<32x128xf32, #tpu.memory_space<vmem>>, %arg2: memref<1x128xf32, #tpu.memory_space<vmem>>, %arg3: memref<128x576xbf16, #tpu.memory_space<vmem>>, %arg4: memref<32x576xf32, #tpu.memory_space<vmem>>) attributes {dimension_semantics = [#tpu.dimension_semantics<parallel>], iteration_bounds = array<i64: 1>, scalar_prefetch = 0 : i64, scratch_operands = 0 : i64, tpu.core_type = #tpu.core_type<tc>, window_params = [{transform_indices = @transform_0, window_bounds = array<i64: 32, 128>}, {pipeline_mode = #tpu.pipeline_mode<synchronous>, transform_indices = @transform_1, window_bounds = array<i64: 1, 128>}, {pipeline_mode = #tpu.pipeline_mode<synchronous>, transform_indices = @transform_2, window_bounds = array<i64: 128, 576>}, {transform_indices = @transform_3, window_bounds = array<i64: 32, 576>}]} {
    %c0 = arith.constant 0 : index
    %c0_0 = arith.constant 0 : index
    %0 = vector.load %arg1[%c0, %c0_0] : memref<32x128xf32, #tpu.memory_space<vmem>>, vector<32x128xf32>
    %c0_1 = arith.constant 0 : index
    %c0_2 = arith.constant 0 : index
    %1 = vector.load %arg2[%c0_1, %c0_2] : memref<1x128xf32, #tpu.memory_space<vmem>>, vector<1x128xf32>
    %2 = vector.broadcast %1 : vector<1x128xf32> to vector<32x128xf32>
    %3 = arith.addf %0, %2 : vector<32x128xf32>
    %cst = arith.constant 0.000000e+00 : f32
    %4 = vector.broadcast %cst : f32 to vector<32x128xf32>
    %5 = arith.maximumf %3, %4 : vector<32x128xf32>
    %c0_3 = arith.constant 0 : index
    %c0_4 = arith.constant 0 : index
    %6 = vector.load %arg3[%c0_3, %c0_4] : memref<128x576xbf16, #tpu.memory_space<vmem>>, vector<128x576xbf16>
    %7 = arith.truncf %5 : vector<32x128xf32> to vector<32x128xbf16>
    %cst_5 = arith.constant dense<0.000000e+00> : vector<32x576xf32>
    %8 = tpu.matmul %7, %6, %cst_5 {dimension_numbers = #tpu.dot_dimension_numbers<[1], [0], [0], [1], [0, 0, 1, 1], [], []>} : vector<32x128xbf16>, vector<128x576xbf16>, vector<32x576xf32> -> vector<32x576xf32>
    %c0_6 = arith.constant 0 : index
    %c0_7 = arith.constant 0 : index
    %9 = vector.load %arg4[%c0_6, %c0_7] : memref<32x576xf32, #tpu.memory_space<vmem>>, vector<32x576xf32>
    tpu.vector_store %arg4[%c0_6, %c0_7], %8 {strides = array<i32>} : memref<32x576xf32, #tpu.memory_space<vmem>>, vector<32x576xf32>,
    return
  }
  func.func @transform_0(%arg0: i32) -> (i32, i32) {
    %c0_i32 = arith.constant 0 : i32
    %c0_i32_0 = arith.constant 0 : i32
    return %arg0, %c0_i32 : i32, i32
  }
  func.func @transform_1(%arg0: i32) -> (i32, i32) {
    %c0_i32 = arith.constant 0 : i32
    %c0_i32_0 = arith.constant 0 : i32
    %c0_i32_1 = arith.constant 0 : i32
    return %c0_i32, %c0_i32_0 : i32, i32
  }
  func.func @transform_2(%arg0: i32) -> (i32, i32) {
    %c0_i32 = arith.constant 0 : i32
    %c0_i32_0 = arith.constant 0 : i32
    %c0_i32_1 = arith.constant 0 : i32
    return %c0_i32, %c0_i32_0 : i32, i32
  }
  func.func @transform_3(%arg0: i32) -> (i32, i32) {
    %c0_i32 = arith.constant 0 : i32
    %c0_i32_0 = arith.constant 0 : i32
    return %arg0, %c0_i32 : i32, i32
  }
}

module attributes {stable_mosaic.version = 11 : i64} {
  func.func @kernel(%arg0: i32, %arg1: memref<98x64xf32, #tpu.memory_space<vmem>>, %arg2: memref<1x64xf32, #tpu.memory_space<vmem>>, %arg3: memref<64x512xbf16, #tpu.memory_space<vmem>>, %arg4: memref<98x512xf32, #tpu.memory_space<vmem>>) attributes {dimension_semantics = [#tpu.dimension_semantics<parallel>], iteration_bounds = array<i64: 1>, scalar_prefetch = 0 : i64, scratch_operands = 0 : i64, tpu.core_type = #tpu.core_type<tc>, window_params = [{transform_indices = @transform_0, window_bounds = array<i64: 98, 64>}, {pipeline_mode = #tpu.pipeline_mode<synchronous>, transform_indices = @transform_1, window_bounds = array<i64: 1, 64>}, {pipeline_mode = #tpu.pipeline_mode<synchronous>, transform_indices = @transform_2, window_bounds = array<i64: 64, 512>}, {transform_indices = @transform_3, window_bounds = array<i64: 98, 512>}]} {
    %c0 = arith.constant 0 : index
    %c0_0 = arith.constant 0 : index
    %0 = vector.load %arg1[%c0, %c0_0] : memref<98x64xf32, #tpu.memory_space<vmem>>, vector<98x64xf32>
    %c0_1 = arith.constant 0 : index
    %c0_2 = arith.constant 0 : index
    %1 = vector.load %arg2[%c0_1, %c0_2] : memref<1x64xf32, #tpu.memory_space<vmem>>, vector<1x64xf32>
    %2 = vector.broadcast %1 : vector<1x64xf32> to vector<98x64xf32>
    %3 = arith.addf %0, %2 : vector<98x64xf32>
    %cst = arith.constant 0.000000e+00 : f32
    %4 = vector.broadcast %cst : f32 to vector<98x64xf32>
    %5 = arith.maximumf %3, %4 : vector<98x64xf32>
    %c0_3 = arith.constant 0 : index
    %c0_4 = arith.constant 0 : index
    %6 = vector.load %arg3[%c0_3, %c0_4] : memref<64x512xbf16, #tpu.memory_space<vmem>>, vector<64x512xbf16>
    %7 = arith.truncf %5 : vector<98x64xf32> to vector<98x64xbf16>
    %cst_5 = arith.constant dense<0.000000e+00> : vector<98x512xf32>
    %8 = tpu.matmul %7, %6, %cst_5 {dimension_numbers = #tpu.dot_dimension_numbers<[1], [0], [0], [1], [0, 0, 1, 1], [], []>} : vector<98x64xbf16>, vector<64x512xbf16>, vector<98x512xf32> -> vector<98x512xf32>
    %c0_6 = arith.constant 0 : index
    %c0_7 = arith.constant 0 : index
    %9 = vector.load %arg4[%c0_6, %c0_7] : memref<98x512xf32, #tpu.memory_space<vmem>>, vector<98x512xf32>
    tpu.vector_store %arg4[%c0_6, %c0_7], %8 {strides = array<i32>} : memref<98x512xf32, #tpu.memory_space<vmem>>, vector<98x512xf32>,
    return
  }
  func.func @transform_0(%arg0: i32) -> (i32, i32) {
    %c0_i32 = arith.constant 0 : i32
    %c0_i32_0 = arith.constant 0 : i32
    return %arg0, %c0_i32 : i32, i32
  }
  func.func @transform_1(%arg0: i32) -> (i32, i32) {
    %c0_i32 = arith.constant 0 : i32
    %c0_i32_0 = arith.constant 0 : i32
    %c0_i32_1 = arith.constant 0 : i32
    return %c0_i32, %c0_i32_0 : i32, i32
  }
  func.func @transform_2(%arg0: i32) -> (i32, i32) {
    %c0_i32 = arith.constant 0 : i32
    %c0_i32_0 = arith.constant 0 : i32
    %c0_i32_1 = arith.constant 0 : i32
    return %c0_i32, %c0_i32_0 : i32, i32
  }
  func.func @transform_3(%arg0: i32) -> (i32, i32) {
    %c0_i32 = arith.constant 0 : i32
    %c0_i32_0 = arith.constant 0 : i32
    return %arg0, %c0_i32 : i32, i32
  }
}

module attributes {stable_mosaic.version = 11 : i64} {
  func.func @kernel(%arg0: i32, %arg1: memref<392x32xf32, #tpu.memory_space<vmem>>, %arg2: memref<1x32xf32, #tpu.memory_space<vmem>>, %arg3: memref<32x16xbf16, #tpu.memory_space<vmem>>, %arg4: memref<392x16xf32, #tpu.memory_space<vmem>>) attributes {dimension_semantics = [#tpu.dimension_semantics<parallel>], iteration_bounds = array<i64: 1>, scalar_prefetch = 0 : i64, scratch_operands = 0 : i64, tpu.core_type = #tpu.core_type<tc>, window_params = [{transform_indices = @transform_0, window_bounds = array<i64: 392, 32>}, {pipeline_mode = #tpu.pipeline_mode<synchronous>, transform_indices = @transform_1, window_bounds = array<i64: 1, 32>}, {pipeline_mode = #tpu.pipeline_mode<synchronous>, transform_indices = @transform_2, window_bounds = array<i64: 32, 16>}, {transform_indices = @transform_3, window_bounds = array<i64: 392, 16>}]} {
    %c0 = arith.constant 0 : index
    %c0_0 = arith.constant 0 : index
    %0 = vector.load %arg1[%c0, %c0_0] : memref<392x32xf32, #tpu.memory_space<vmem>>, vector<392x32xf32>
    %c0_1 = arith.constant 0 : index
    %c0_2 = arith.constant 0 : index
    %1 = vector.load %arg2[%c0_1, %c0_2] : memref<1x32xf32, #tpu.memory_space<vmem>>, vector<1x32xf32>
    %2 = vector.broadcast %1 : vector<1x32xf32> to vector<392x32xf32>
    %3 = arith.addf %0, %2 : vector<392x32xf32>
    %cst = arith.constant 0.000000e+00 : f32
    %4 = vector.broadcast %cst : f32 to vector<392x32xf32>
    %5 = arith.maximumf %3, %4 : vector<392x32xf32>
    %c0_3 = arith.constant 0 : index
    %c0_4 = arith.constant 0 : index
    %6 = vector.load %arg3[%c0_3, %c0_4] : memref<32x16xbf16, #tpu.memory_space<vmem>>, vector<32x16xbf16>
    %7 = arith.truncf %5 : vector<392x32xf32> to vector<392x32xbf16>
    %cst_5 = arith.constant dense<0.000000e+00> : vector<392x16xf32>
    %8 = tpu.matmul %7, %6, %cst_5 {dimension_numbers = #tpu.dot_dimension_numbers<[1], [0], [0], [1], [0, 0, 1, 1], [], []>} : vector<392x32xbf16>, vector<32x16xbf16>, vector<392x16xf32> -> vector<392x16xf32>
    %c0_6 = arith.constant 0 : index
    %c0_7 = arith.constant 0 : index
    %9 = vector.load %arg4[%c0_6, %c0_7] : memref<392x16xf32, #tpu.memory_space<vmem>>, vector<392x16xf32>
    tpu.vector_store %arg4[%c0_6, %c0_7], %8 {strides = array<i32>} : memref<392x16xf32, #tpu.memory_space<vmem>>, vector<392x16xf32>,
    return
  }
  func.func @transform_0(%arg0: i32) -> (i32, i32) {
    %c0_i32 = arith.constant 0 : i32
    %c0_i32_0 = arith.constant 0 : i32
    return %arg0, %c0_i32 : i32, i32
  }
  func.func @transform_1(%arg0: i32) -> (i32, i32) {
    %c0_i32 = arith.constant 0 : i32
    %c0_i32_0 = arith.constant 0 : i32
    %c0_i32_1 = arith.constant 0 : i32
    return %c0_i32, %c0_i32_0 : i32, i32
  }
  func.func @transform_2(%arg0: i32) -> (i32, i32) {
    %c0_i32 = arith.constant 0 : i32
    %c0_i32_0 = arith.constant 0 : i32
    %c0_i32_1 = arith.constant 0 : i32
    return %c0_i32, %c0_i32_0 : i32, i32
  }
  func.func @transform_3(%arg0: i32) -> (i32, i32) {
    %c0_i32 = arith.constant 0 : i32
    %c0_i32_0 = arith.constant 0 : i32
    return %arg0, %c0_i32 : i32, i32
  }
}

module attributes {stable_mosaic.version = 11 : i64} {
  func.func @_bias_relu_kernel(%arg0: i32, %arg1: memref<1568x1xf32, #tpu.memory_space<vmem>>, %arg2: memref<1x1xf32, #tpu.memory_space<vmem>>, %arg3: memref<1568x1xf32, #tpu.memory_space<vmem>>) attributes {dimension_semantics = [#tpu.dimension_semantics<arbitrary>], iteration_bounds = array<i64: 1>, scalar_prefetch = 0 : i64, scratch_operands = 0 : i64, tpu.core_type = #tpu.core_type<tc>, window_params = [{pipeline_mode = #tpu.pipeline_mode<synchronous>, transform_indices = @transform_0, window_bounds = array<i64: 1568, 1>}, {pipeline_mode = #tpu.pipeline_mode<synchronous>, transform_indices = @transform_1, window_bounds = array<i64: 1, 1>}, {pipeline_mode = #tpu.pipeline_mode<synchronous>, transform_indices = @transform_2, window_bounds = array<i64: 1568, 1>}]} {
    %c0 = arith.constant 0 : index
    %c0_0 = arith.constant 0 : index
    %0 = vector.load %arg1[%c0, %c0_0] : memref<1568x1xf32, #tpu.memory_space<vmem>>, vector<1568x1xf32>
    %c0_1 = arith.constant 0 : index
    %c0_2 = arith.constant 0 : index
    %1 = vector.load %arg2[%c0_1, %c0_2] : memref<1x1xf32, #tpu.memory_space<vmem>>, vector<1x1xf32>
    %2 = vector.broadcast %1 : vector<1x1xf32> to vector<1568x1xf32>
    %3 = arith.addf %0, %2 : vector<1568x1xf32>
    %cst = arith.constant 0.000000e+00 : f32
    %4 = vector.broadcast %cst : f32 to vector<1568x1xf32>
    %5 = arith.maximumf %3, %4 : vector<1568x1xf32>
    %c0_3 = arith.constant 0 : index
    %c0_4 = arith.constant 0 : index
    %6 = vector.load %arg3[%c0_3, %c0_4] : memref<1568x1xf32, #tpu.memory_space<vmem>>, vector<1568x1xf32>
    tpu.vector_store %arg3[%c0_3, %c0_4], %5 {strides = array<i32>} : memref<1568x1xf32, #tpu.memory_space<vmem>>, vector<1568x1xf32>,
    return
  }
  func.func @transform_0(%arg0: i32) -> (i32, i32) {
    %c0_i32 = arith.constant 0 : i32
    %c0_i32_0 = arith.constant 0 : i32
    %c0_i32_1 = arith.constant 0 : i32
    return %c0_i32, %c0_i32_0 : i32, i32
  }
  func.func @transform_1(%arg0: i32) -> (i32, i32) {
    %c0_i32 = arith.constant 0 : i32
    %c0_i32_0 = arith.constant 0 : i32
    %c0_i32_1 = arith.constant 0 : i32
    return %c0_i32, %c0_i32_0 : i32, i32
  }
  func.func @transform_2(%arg0: i32) -> (i32, i32) {
    %c0_i32 = arith.constant 0 : i32
    %c0_i32_0 = arith.constant 0 : i32
    %c0_i32_1 = arith.constant 0 : i32
    return %c0_i32, %c0_i32_0 : i32, i32
  }
}

</mosaic_0001>

<llo_original>
// kernel: vae_forward.10
$region0: #{vae_forward.10}
  #allocation0 [shape = 'u32[]', space=smem, size = 0x4, offset = 0x4, fixed_abs, tag = 'smem constant byte address 0x4 - core index']
  #allocation1 [shape = 'u32[72,128]{1,0:T(1,128)}', space=vmem, size = 0x9000, scoped, tag = 'internal scratch']
  %s0 = inlined_call_operand.vmem [shape: bf16[512,16], index: 0, kind: input, shape index: {}]
  %s1 = inlined_call_operand.vmem [shape: bf16[16,32], index: 1, kind: input, shape index: {}]
  %s2 = inlined_call_operand.hbm [shape: f32[1,32], index: 2, kind: input, shape index: {}]
  %s3 = inlined_call_operand.vmem [shape: f32[512,32], index: 3, kind: output, shape index: {}]
  %s4 = sld [smem:[#allocation0]]
  $region49: #{vae_forward.10} parent=0
    _
  %s6 = ssub.s32 1, %s4
  %s7 = scalar_select 0, %s6, %s4
  $region1: #{vae_forward.10} parent=0
    #allocation2 [shape = 'u8[512]{0}', space=vmem, size = 0x400, scoped, tag = 'input window, operand 2, single buffered']
    #allocation3 [shape = 's32[2]{0}', space=sflag, size = 0x8, scoped, tag = 'scoped memory for vae_forward.10']
    %8 = vsyncpa [#allocation3], 0
    loop: start=0, step=1, limit=4
    $region2: #{vae_forward.10} parent=1 // loop_pre_header
      _
    $region3: #{vae_forward.10} parent=1 // loop_header
      %s10 = sphi 0, %s14
      %p11 = scmp.ge.s32.totalorder %s10, 4
      %s20 = sphi 0, %s22
      %s23 = sphi 0, %s20
      %s24 = sphi 0, %s23
      %s40 = sphi 0, %s24
      %s44 = sphi 0, %s44
      %s46 = sphi 0, %s44
      %s47 = sphi 0, %s46
      %s61 = sphi 0, %s47
      %s65 = sphi 0, %s65
      %s67 = sphi 0, %s65
      %s68 = sphi 0, %s67
      %s82 = sphi 0, %s68
      %s88 = sphi 0, %s90
      %s91 = sphi 0, %s88
      %s92 = sphi 0, %s91
      %s108 = sphi 0, %s92
    $region4: #{vae_forward.10} parent=1 // loop_header_branch
      %13 = sbr.rel (%p11) target = $region8
    $region5: #{vae_forward.10} parent=1 // loop_body
      %s15 = ssub.s32 %s10, 1
      %s16 = ssub.s32 %s10, 2
      %s17 = sadd.s32 %s10, 1
      %s18 = ssub.s32 %s10, %s17
      %p19 = scmp.eq.s32.totalorder %s18, 0
      %s21 = sadd.s32 %s20, 1
      %s22 = scalar_select %p19, %s20, %s21
      %p25 = pneg %p19
      %p26 = scmp.eq.s32.totalorder %s10, 1
      %p27 = por %p25, %p26
      %p28 = scmp.ne.s32.totalorder %s20, %s23
      %p29 = scmp.eq.s32.totalorder %s10, 0
      %p30 = por %p28, %p29
      %p31 = scmp.ne.s32.totalorder %s20, %s23
      %p32 = scmp.eq.s32.totalorder %s15, 1
      %p33 = por %p31, %p32
      %p34 = scmp.ne.s32.totalorder %s23, %s24
      %p35 = scmp.eq.s32.totalorder %s15, 0
      %p36 = por %p34, %p35
      %p37 = scmp.ne.s32.totalorder %s23, %s24
      %p38 = scmp.eq.s32.totalorder %s16, 1
      %p39 = por %p37, %p38
      %p41 = scmp.ne.s32.totalorder %s24, %s40
      %p42 = scmp.eq.s32.totalorder %s16, 0
      %p43 = por %p41, %p42
      %s45 = sadd.s32 %s44, 1
      %p48 = scmp.eq.s32.totalorder %s10, 1
      %p49 = scmp.ne.s32.totalorder %s44, %s46
      %p50 = scmp.eq.s32.totalorder %s10, 0
      %p51 = por %p49, %p50
      %p52 = scmp.ne.s32.totalorder %s44, %s46
      %p53 = scmp.eq.s32.totalorder %s15, 1
      %p54 = por %p52, %p53
      %p55 = scmp.ne.s32.totalorder %s46, %s47
      %p56 = scmp.eq.s32.totalorder %s15, 0
      %p57 = por %p55, %p56
      %p58 = scmp.ne.s32.totalorder %s46, %s47
      %p59 = scmp.eq.s32.totalorder %s16, 1
      %p60 = por %p58, %p59
      %p62 = scmp.ne.s32.totalorder %s47, %s61
      %p63 = scmp.eq.s32.totalorder %s16, 0
      %p64 = por %p62, %p63
      %s66 = sadd.s32 %s65, 1
      %p69 = scmp.eq.s32.totalorder %s10, 1
      %p70 = scmp.ne.s32.totalorder %s65, %s67
      %p71 = scmp.eq.s32.totalorder %s10, 0
      %p72 = por %p70, %p71
      %p73 = scmp.ne.s32.totalorder %s65, %s67
      %p74 = scmp.eq.s32.totalorder %s15, 1
      %p75 = por %p73, %p74
      %p76 = scmp.ne.s32.totalorder %s67, %s68
      %p77 = scmp.eq.s32.totalorder %s15, 0
      %p78 = por %p76, %p77
      %p79 = scmp.ne.s32.totalorder %s67, %s68
      %p80 = scmp.eq.s32.totalorder %s16, 1
      %p81 = por %p79, %p80
      %p83 = scmp.ne.s32.totalorder %s68, %s82
      %p84 = scmp.eq.s32.totalorder %s16, 0
      %p85 = por %p83, %p84
      %s86 = ssub.s32 %s10, %s17
      %p87 = scmp.eq.s32.totalorder %s86, 0
      %s89 = sadd.s32 %s88, 1
      %s90 = scalar_select %p87, %s88, %s89
      %p93 = pneg %p87
      %p94 = scmp.eq.s32.totalorder %s10, 1
      %p95 = por %p93, %p94
      %p96 = scmp.ne.s32.totalorder %s88, %s91
      %p97 = scmp.eq.s32.totalorder %s10, 0
      %p98 = por %p96, %p97
      %p99 = scmp.ne.s32.totalorder %s88, %s91
      %p100 = scmp.eq.s32.totalorder %s15, 1
      %p101 = por %p99, %p100
      %p102 = scmp.ne.s32.totalorder %s91, %s92
      %p103 = scmp.eq.s32.totalorder %s15, 0
      %p104 = por %p102, %p103
      %p105 = scmp.ne.s32.totalorder %s91, %s92
      %p106 = scmp.eq.s32.totalorder %s16, 1
      %p107 = por %p105, %p106
      %p109 = scmp.ne.s32.totalorder %s92, %s108
      %p110 = scmp.eq.s32.totalorder %s16, 0
      %p111 = por %p109, %p110
      %p112 = scmp.le.s32.totalorder 1, %s10
      %p113 = scmp.lt.s32.totalorder %s10, 3
      %p114 = pnand %p112, %p113
      %p115 = pneg %p114
      // Predicated region
      $region9: #{vae_forward.10} parent=5 // pred_check
        _
      $region10: #{vae_forward.10} parent=5 // pred_check_branch
        %117 = sbr.rel (%p114) target = $region12
      $region11: #{vae_forward.10} parent=5 // pred_region
        %s118 = ssub.s32 %s10, 1
        // Predicated region
        $region13: #{vae_forward.10} parent=11 // pred_check
          %p119 = pneg %p57
        $region14: #{vae_forward.10} parent=11 // pred_check_branch
          %121 = sbr.rel (%p119) target = $region16
        $region15: #{vae_forward.10} parent=11 // pred_region
          _
        $region16: #{vae_forward.10} parent=11 // pred_fallthru
          _
        // Predicated region
        $region17: #{vae_forward.10} parent=11 // pred_check
          %p122 = pneg %p78
        $region18: #{vae_forward.10} parent=11 // pred_check_branch
          %124 = sbr.rel (%p122) target = $region20
        $region19: #{vae_forward.10} parent=11 // pred_region
          %126 = vsyncadd [#allocation3], 0
          %s128 = sshll.u32 %s2, 4
          %s129 = int_to_ptr.hbm [resolvable:$true] %s128
          %s130 = sshll.u32 [#allocation2], 4
          %s131 = int_to_ptr.vmem [resolvable:$true] %s130
          %133 = dma.hbm_to_vmem [thread:$0]  %s129, 16, %s131, [#allocation3]
        $region20: #{vae_forward.10} parent=11 // pred_fallthru
          _
      $region12: #{vae_forward.10} parent=5 // pred_fallthru
        _
      %p134 = scmp.lt.s32.totalorder %s10, 2
      // Predicated region
      $region21: #{vae_forward.10} parent=5 // pred_check
        %p135 = pneg %p134
      $region22: #{vae_forward.10} parent=5 // pred_check_branch
        %137 = sbr.rel (%p135) target = $region24
      $region23: #{vae_forward.10} parent=5 // pred_region
        // Predicated region
        $region25: #{vae_forward.10} parent=23 // pred_check
          %p138 = pneg %p30
        $region26: #{vae_forward.10} parent=23 // pred_check_branch
          %140 = sbr.rel (%p138) target = $region28
        $region27: #{vae_forward.10} parent=23 // pred_region
          %s141 = smul.u32 32, %s10
          %p142 = scmp.lt.s32.totalorder %s141, 63
          %s143 = scalar_select %p142, %s141, 63
          %s144 = smul.addr %s143, 4
          %s145 = scalar_lea.vmem %s0, %s144
          %s146 = smul.u32 32, %s10
        $region28: #{vae_forward.10} parent=23 // pred_fallthru
          _
      $region24: #{vae_forward.10} parent=5 // pred_fallthru
        _
      %p147 = scmp.le.s32.totalorder 1, %s10
      %p148 = scmp.lt.s32.totalorder %s10, 3
      %p149 = pnand %p147, %p148
      %p150 = pneg %p149
      // Predicated region
      $region29: #{vae_forward.10} parent=5 // pred_check
        _
      $region30: #{vae_forward.10} parent=5 // pred_check_branch
        %152 = sbr.rel (%p149) target = $region32
      $region31: #{vae_forward.10} parent=5 // pred_region
        %s153 = ssub.s32 %s10, 1
        // Predicated region
        $region33: #{vae_forward.10} parent=31 // pred_check
          %p154 = pneg %p78
        $region34: #{vae_forward.10} parent=31 // pred_check_branch
          %156 = sbr.rel (%p154) target = $region36
        $region35: #{vae_forward.10} parent=31 // pred_region
          %158 = dma.done [#allocation3], 16
        $region36: #{vae_forward.10} parent=31 // pred_fallthru
          _
        %s159 = smul.u32 32, %s15
        %p160 = scmp.lt.s32.totalorder %s159, 63
        %s161 = scalar_select %p160, %s159, 63
        %s162 = smul.addr %s161, 4
        %s163 = scalar_lea.vmem %s0, %s162
        %p164 = pneg %p36
        %p165 = pneg %p33
        %p166 = pneg %p57
        %p167 = pneg %p54
        %p168 = pneg %p78
        %p169 = pneg %p75
        %p170 = pneg %p104
        %p171 = pneg %p101
        %s172 = smul.u32 32, %s15
        %p173 = scmp.lt.s32.totalorder %s172, 63
        %s174 = scalar_select %p173, %s172, 63
        %s175 = smul.addr %s174, 8
        %s176 = scalar_lea.vmem %s3, %s175
        %s177 = smul.u32 32, %s15
        %p178 = scmp.lt.s32.totalorder %s177, 63
        %s179 = scalar_select %p178, %s177, 63
        %s180 = smul.addr %s179, 4
        %s181 = scalar_lea.vmem %s0, %s180
        %s182 = smul.u32 32, %s15
        %s183 = smul.u32 32, %s15
        %p184 = scmp.lt.s32.totalorder %s183, 63
        %s185 = scalar_select %p184, %s183, 63
        %s186 = smul.addr %s185, 8
        %s187 = scalar_lea.vmem %s3, %s186
        %s188 = smul.u32 32, %s15
        %v190 = vld [vmem:[%s181] sm:$0xf]
        %v191 = vld [vmem:[%s181 + $0x4] sm:$0xf]
        %v192 = vld [vmem:[%s181 + $0x8] sm:$0xf]
        %v193 = vld [vmem:[%s181 + $0xc] sm:$0xf]
        %v194 = vld [vmem:[%s181 + $0x10] sm:$0xf]
        %v195 = vld [vmem:[%s181 + $0x14] sm:$0xf]
        %v196 = vld [vmem:[%s181 + $0x18] sm:$0xf]
        %v197 = vld [vmem:[%s181 + $0x1c] sm:$0xf]
        %v198 = vld [vmem:[%s181 + $0x20] sm:$0xf]
        %v199 = vld [vmem:[%s181 + $0x24] sm:$0xf]
        %v200 = vld [vmem:[%s181 + $0x28] sm:$0xf]
        %v201 = vld [vmem:[%s181 + $0x2c] sm:$0xf]
        %v202 = vld [vmem:[%s181 + $0x30] sm:$0xf]
        %v203 = vld [vmem:[%s181 + $0x34] sm:$0xf]
        %v204 = vld [vmem:[%s181 + $0x38] sm:$0xf]
        %v205 = vld [vmem:[%s181 + $0x3c] sm:$0xf]
        %v206 = vld [vmem:[%s181 + $0x40] sm:$0xf]
        %v207 = vld [vmem:[%s181 + $0x44] sm:$0xf]
        %v208 = vld [vmem:[%s181 + $0x48] sm:$0xf]
        %v209 = vld [vmem:[%s181 + $0x4c] sm:$0xf]
        %v210 = vld [vmem:[%s181 + $0x50] sm:$0xf]
        %v211 = vld [vmem:[%s181 + $0x54] sm:$0xf]
        %v212 = vld [vmem:[%s181 + $0x58] sm:$0xf]
        %v213 = vld [vmem:[%s181 + $0x5c] sm:$0xf]
        %v214 = vld [vmem:[%s181 + $0x60] sm:$0xf]
        %v215 = vld [vmem:[%s181 + $0x64] sm:$0xf]
        %v216 = vld [vmem:[%s181 + $0x68] sm:$0xf]
        %v217 = vld [vmem:[%s181 + $0x6c] sm:$0xf]
        %v218 = vld [vmem:[%s181 + $0x70] sm:$0xf]
        %v219 = vld [vmem:[%s181 + $0x74] sm:$0xf]
        %v220 = vld [vmem:[%s181 + $0x78] sm:$0xf]
        %v221 = vld [vmem:[%s181 + $0x7c] sm:$0xf]
        %v222 = vld [vmem:[%s1] sm:$0xf]
        %v223 = vld [vmem:[%s1 + $0x4] sm:$0xf]
        %v224 = vld [vmem:[#allocation2] sm:$0x1]
        %v226 = vperm.slane %v224, 0
        %v260 = vunpack.c.l.b16 %v190
        %v261 = vunpack.c.l.b16 %v191
        %v262 = vunpack.c.l.b16 %v192
        %v263 = vunpack.c.l.b16 %v193
        %v264 = vunpack.c.l.b16 %v194
        %v265 = vunpack.c.l.b16 %v195
        %v266 = vunpack.c.l.b16 %v196
        %v267 = vunpack.c.l.b16 %v197
        %v268 = vunpack.c.l.b16 %v198
        %v269 = vunpack.c.l.b16 %v199
        %v270 = vunpack.c.l.b16 %v200
        %v271 = vunpack.c.l.b16 %v201
        %v272 = vunpack.c.l.b16 %v202
        %v273 = vunpack.c.l.b16 %v203
        %v274 = vunpack.c.l.b16 %v204
        %v275 = vunpack.c.l.b16 %v205
        %v276 = vunpack.c.l.b16 %v206
        %v277 = vunpack.c.l.b16 %v207
        %v278 = vunpack.c.l.b16 %v208
        %v279 = vunpack.c.l.b16 %v209
        %v280 = vunpack.c.l.b16 %v210
        %v281 = vunpack.c.l.b16 %v211
        %v282 = vunpack.c.l.b16 %v212
        %v283 = vunpack.c.l.b16 %v213
        %v284 = vunpack.c.l.b16 %v214
        %v285 = vunpack.c.l.b16 %v215
        %v286 = vunpack.c.l.b16 %v216
        %v287 = vunpack.c.l.b16 %v217
        %v288 = vunpack.c.l.b16 %v218
        %v289 = vunpack.c.l.b16 %v219
        %v290 = vunpack.c.l.b16 %v220
        %v291 = vunpack.c.l.b16 %v221
        %v292 = vpack.c.b16 %v261, %v260
        %v293 = vpack.c.b16 %v263, %v262
        %v294 = vpack.c.b16 %v265, %v264
        %v295 = vpack.c.b16 %v267, %v266
        %v296 = vpack.c.b16 %v269, %v268
        %v297 = vpack.c.b16 %v271, %v270
        %v298 = vpack.c.b16 %v273, %v272
        %v299 = vpack.c.b16 %v275, %v274
        %v300 = vpack.c.b16 %v277, %v276
        %v301 = vpack.c.b16 %v279, %v278
        %v302 = vpack.c.b16 %v281, %v280
        %v303 = vpack.c.b16 %v283, %v282
        %v304 = vpack.c.b16 %v285, %v284
        %v305 = vpack.c.b16 %v287, %v286
        %v306 = vpack.c.b16 %v289, %v288
        %v307 = vpack.c.b16 %v291, %v290
        %v310 = vunpack.c.l.b16 %v222
        %v311 = vunpack.c.l.b16 %v223
        %v312 = vpack.c.b16 %v311, %v310
        %vm314 = vcmask 130048
        %v316 = vsel %vm314, %v292, 0
        %v319 = vsel %vm314, %v293, 0
        %v322 = vsel %vm314, %v294, 0
        %v325 = vsel %vm314, %v295, 0
        %v328 = vsel %vm314, %v296, 0
        %v331 = vsel %vm314, %v297, 0
        %v334 = vsel %vm314, %v298, 0
        %v337 = vsel %vm314, %v299, 0
        %v340 = vsel %vm314, %v300, 0
        %v343 = vsel %vm314, %v301, 0
        %v346 = vsel %vm314, %v302, 0
        %v349 = vsel %vm314, %v303, 0
        %v352 = vsel %vm314, %v304, 0
        %v355 = vsel %vm314, %v305, 0
        %v358 = vsel %vm314, %v306, 0
        %v361 = vsel %vm314, %v307, 0
        %363 = vmatpush.bf16.msra.mxu0 0
        %364 = vmatpush.bf16.msra.mxu0 0
        %365 = vmatpush.bf16.msra.mxu0 0
        %366 = vmatpush.bf16.msra.mxu0 0
        %367 = vmatpush.bf16.msra.mxu0 0
        %368 = vmatpush.bf16.msra.mxu0 0
        %369 = vmatpush.bf16.msra.mxu0 0
        %370 = vmatpush.bf16.msra.mxu0 %v312
        %371 = vmatmul.bf16.gmra.mxu0 %v316
        %v372 = vpop.f32.mrf.mxu0
        %v373 = vadd.f32 %v226, %v372
        %v374 = vpop.f32.mrf.mxu0
        %v375 = vadd.f32 %v226, %v374
        %376 = vmatmul.bf16.gmra.mxu0 %v319
        %v377 = vpop.f32.mrf.mxu0
        %v378 = vadd.f32 %v226, %v377
        %v379 = vpop.f32.mrf.mxu0
        %v380 = vadd.f32 %v226, %v379
        %381 = vmatmul.bf16.gmra.mxu0 %v322
        %v382 = vpop.f32.mrf.mxu0
        %v383 = vadd.f32 %v226, %v382
        %v384 = vpop.f32.mrf.mxu0
        %v385 = vadd.f32 %v226, %v384
        %386 = vmatmul.bf16.gmra.mxu0 %v325
        %v387 = vpop.f32.mrf.mxu0
        %v388 = vadd.f32 %v226, %v387
        %v389 = vpop.f32.mrf.mxu0
        %v390 = vadd.f32 %v226, %v389
        %391 = vmatmul.bf16.gmra.mxu0 %v328
        %v392 = vpop.f32.mrf.mxu0
        %v393 = vadd.f32 %v226, %v392
        %v394 = vpop.f32.mrf.mxu0
        %v395 = vadd.f32 %v226, %v394
        %396 = vmatmul.bf16.gmra.mxu0 %v331
        %v397 = vpop.f32.mrf.mxu0
        %v398 = vadd.f32 %v226, %v397
        %v399 = vpop.f32.mrf.mxu0
        %v400 = vadd.f32 %v226, %v399
        %401 = vmatmul.bf16.gmra.mxu0 %v334
        %v402 = vpop.f32.mrf.mxu0
        %v403 = vadd.f32 %v226, %v402
        %v404 = vpop.f32.mrf.mxu0
        %v405 = vadd.f32 %v226, %v404
        %406 = vmatmul.bf16.gmra.mxu0 %v337
        %v407 = vpop.f32.mrf.mxu0
        %v408 = vadd.f32 %v226, %v407
        %v409 = vpop.f32.mrf.mxu0
        %v410 = vadd.f32 %v226, %v409
        %411 = vmatmul.bf16.gmra.mxu0 %v340
        %v412 = vpop.f32.mrf.mxu0
        %v413 = vadd.f32 %v226, %v412
        %v414 = vpop.f32.mrf.mxu0
        %v415 = vadd.f32 %v226, %v414
        %416 = vmatmul.bf16.gmra.mxu0 %v343
        %v417 = vpop.f32.mrf.mxu0
        %v418 = vadd.f32 %v226, %v417
        %v419 = vpop.f32.mrf.mxu0
        %v420 = vadd.f32 %v226, %v419
        %421 = vmatmul.bf16.gmra.mxu0 %v346
        %v422 = vpop.f32.mrf.mxu0
        %v423 = vadd.f32 %v226, %v422
        %v424 = vpop.f32.mrf.mxu0
        %v425 = vadd.f32 %v226, %v424
        %426 = vmatmul.bf16.gmra.mxu0 %v349
        %v427 = vpop.f32.mrf.mxu0
        %v428 = vadd.f32 %v226, %v427
        %v429 = vpop.f32.mrf.mxu0
        %v430 = vadd.f32 %v226, %v429
        %431 = vmatmul.bf16.gmra.mxu0 %v352
        %v432 = vpop.f32.mrf.mxu0
        %v433 = vadd.f32 %v226, %v432
        %v434 = vpop.f32.mrf.mxu0
        %v435 = vadd.f32 %v226, %v434
        %436 = vmatmul.bf16.gmra.mxu0 %v355
        %v437 = vpop.f32.mrf.mxu0
        %v438 = vadd.f32 %v226, %v437
        %v439 = vpop.f32.mrf.mxu0
        %v440 = vadd.f32 %v226, %v439
        %441 = vmatmul.bf16.gmra.mxu0 %v358
        %v442 = vpop.f32.mrf.mxu0
        %v443 = vadd.f32 %v226, %v442
        %v444 = vpop.f32.mrf.mxu0
        %v445 = vadd.f32 %v226, %v444
        %446 = vmatmul.bf16.gmra.mxu0 %v361
        %v447 = vpop.f32.mrf.mxu0
        %v448 = vadd.f32 %v226, %v447
        %v449 = vpop.f32.mrf.mxu0
        %v450 = vadd.f32 %v226, %v449
        %451 = vdwg.mxu0
        %v452 = vmax.f32 %v373, 0.0
        %v453 = vmax.f32 %v375, 0.0
        %v454 = vmax.f32 %v378, 0.0
        %v455 = vmax.f32 %v380, 0.0
        %v456 = vmax.f32 %v383, 0.0
        %v457 = vmax.f32 %v385, 0.0
        %v458 = vmax.f32 %v388, 0.0
        %v459 = vmax.f32 %v390, 0.0
        %v460 = vmax.f32 %v393, 0.0
        %v461 = vmax.f32 %v395, 0.0
        %v462 = vmax.f32 %v398, 0.0
        %v463 = vmax.f32 %v400, 0.0
        %v464 = vmax.f32 %v403, 0.0
        %v465 = vmax.f32 %v405, 0.0
        %v466 = vmax.f32 %v408, 0.0
        %v467 = vmax.f32 %v410, 0.0
        %v468 = vmax.f32 %v413, 0.0
        %v469 = vmax.f32 %v415, 0.0
        %v470 = vmax.f32 %v418, 0.0
        %v471 = vmax.f32 %v420, 0.0
        %v472 = vmax.f32 %v423, 0.0
        %v473 = vmax.f32 %v425, 0.0
        %v474 = vmax.f32 %v428, 0.0
        %v475 = vmax.f32 %v430, 0.0
        %v476 = vmax.f32 %v433, 0.0
        %v477 = vmax.f32 %v435, 0.0
        %v478 = vmax.f32 %v438, 0.0
        %v479 = vmax.f32 %v440, 0.0
        %v480 = vmax.f32 %v443, 0.0
        %v481 = vmax.f32 %v445, 0.0
        %v482 = vmax.f32 %v448, 0.0
        %v483 = vmax.f32 %v450, 0.0
        %vm484 = vcmask 261120
        %485 = vst.msk [vmem:[%s187] sm:$0xff] %vm484, %v452
        %486 = vst.msk [vmem:[%s187 + $0x8] sm:$0xff] %vm484, %v453
        %487 = vst.msk [vmem:[%s187 + $0x10] sm:$0xff] %vm484, %v454
        %488 = vst.msk [vmem:[%s187 + $0x18] sm:$0xff] %vm484, %v455
        %489 = vst.msk [vmem:[%s187 + $0x20] sm:$0xff] %vm484, %v456
        %490 = vst.msk [vmem:[%s187 + $0x28] sm:$0xff] %vm484, %v457
        %491 = vst.msk [vmem:[%s187 + $0x30] sm:$0xff] %vm484, %v458
        %492 = vst.msk [vmem:[%s187 + $0x38] sm:$0xff] %vm484, %v459
        %493 = vst.msk [vmem:[%s187 + $0x40] sm:$0xff] %vm484, %v460
        %494 = vst.msk [vmem:[%s187 + $0x48] sm:$0xff] %vm484, %v461
        %495 = vst.msk [vmem:[%s187 + $0x50] sm:$0xff] %vm484, %v462
        %496 = vst.msk [vmem:[%s187 + $0x58] sm:$0xff] %vm484, %v463
        %497 = vst.msk [vmem:[%s187 + $0x60] sm:$0xff] %vm484, %v464
        %498 = vst.msk [vmem:[%s187 + $0x68] sm:$0xff] %vm484, %v465
        %499 = vst.msk [vmem:[%s187 + $0x70] sm:$0xff] %vm484, %v466
        %500 = vst.msk [vmem:[%s187 + $0x78] sm:$0xff] %vm484, %v467
        %501 = vst.msk [vmem:[%s187 + $0x80] sm:$0xff] %vm484, %v468
        %502 = vst.msk [vmem:[%s187 + $0x88] sm:$0xff] %vm484, %v469
        %503 = vst.msk [vmem:[%s187 + $0x90] sm:$0xff] %vm484, %v470
        %504 = vst.msk [vmem:[%s187 + $0x98] sm:$0xff] %vm484, %v471
        %505 = vst.msk [vmem:[%s187 + $0xa0] sm:$0xff] %vm484, %v472
        %506 = vst.msk [vmem:[%s187 + $0xa8] sm:$0xff] %vm484, %v473
        %507 = vst.msk [vmem:[%s187 + $0xb0] sm:$0xff] %vm484, %v474
        %508 = vst.msk [vmem:[%s187 + $0xb8] sm:$0xff] %vm484, %v475
        %509 = vst.msk [vmem:[%s187 + $0xc0] sm:$0xff] %vm484, %v476
        %510 = vst.msk [vmem:[%s187 + $0xc8] sm:$0xff] %vm484, %v477
        %511 = vst.msk [vmem:[%s187 + $0xd0] sm:$0xff] %vm484, %v478
        %512 = vst.msk [vmem:[%s187 + $0xd8] sm:$0xff] %vm484, %v479
        %513 = vst.msk [vmem:[%s187 + $0xe0] sm:$0xff] %vm484, %v480
        %514 = vst.msk [vmem:[%s187 + $0xe8] sm:$0xff] %vm484, %v481
        %515 = vst.msk [vmem:[%s187 + $0xf0] sm:$0xff] %vm484, %v482
        %516 = vst.msk [vmem:[%s187 + $0xf8] sm:$0xff] %vm484, %v483
        %s517 = smul.u32 32, %s15
        %p518 = scmp.lt.s32.totalorder %s517, 63
        %s519 = scalar_select %p518, %s517, 63
        %s520 = smul.addr %s519, 8
        %s521 = scalar_lea.vmem %s3, %s520
        // Predicated region
        $region37: #{vae_forward.10} parent=31 // pred_check
          %p522 = pneg %p101
        $region38: #{vae_forward.10} parent=31 // pred_check_branch
          %524 = sbr.rel (%p522) target = $region40
        $region39: #{vae_forward.10} parent=31 // pred_region
          %s525 = smul.u32 32, %s15
        $region40: #{vae_forward.10} parent=31 // pred_fallthru
          _
      $region32: #{vae_forward.10} parent=5 // pred_fallthru
        _
      %p526 = scmp.le.s32.totalorder 2, %s10
      // Predicated region
      $region41: #{vae_forward.10} parent=5 // pred_check
        %p527 = pneg %p526
      $region42: #{vae_forward.10} parent=5 // pred_check_branch
        %529 = sbr.rel (%p527) target = $region44
      $region43: #{vae_forward.10} parent=5 // pred_region
        %s530 = ssub.s32 %s10, 2
        // Predicated region
        $region45: #{vae_forward.10} parent=43 // pred_check
          %p531 = pneg %p107
        $region46: #{vae_forward.10} parent=43 // pred_check_branch
          %533 = sbr.rel (%p531) target = $region48
        $region47: #{vae_forward.10} parent=43 // pred_region
          %s534 = smul.u32 32, %s16
          %p535 = scmp.lt.s32.totalorder %s534, 63
          %s536 = scalar_select %p535, %s534, 63
          %s537 = smul.addr %s536, 8
          %s538 = scalar_lea.vmem %s3, %s537
        $region48: #{vae_forward.10} parent=43 // pred_fallthru
          _
      $region44: #{vae_forward.10} parent=5 // pred_fallthru
        _
    $region6: #{vae_forward.10} parent=1 // loop_footer
      %s14 = sadd.s32 1, %s10
    $region7: #{vae_forward.10} parent=1 // loop_footer_branch
      %9 = sbr.rel target = $region3
    $region8: #{vae_forward.10} parent=1 // loop_exit
      _
    %539 = vsyncpa [#allocation3], 1
    %s540 = scalar_lea.sflag [#allocation3], 1
    %541 = vsyncpa %s540, 1

// kernel: vae_forward.11
$region0: #{vae_forward.11}
  #allocation0 [shape = 'u32[]', space=smem, size = 0x4, offset = 0x4, fixed_abs, tag = 'smem constant byte address 0x4 - core index']
  #allocation1 [shape = 'u32[72,128]{1,0:T(1,128)}', space=vmem, size = 0x9000, scoped, tag = 'internal scratch']
  %s0 = inlined_call_operand.vmem [shape: bf16[128,512], index: 0, kind: input, shape index: {}]
  %s1 = inlined_call_operand.vmem [shape: bf16[512,64], index: 1, kind: input, shape index: {}]
  %s2 = inlined_call_operand.vmem [shape: f32[1,64], index: 2, kind: input, shape index: {}]
  %s3 = inlined_call_operand.vmem [shape: f32[128,64], index: 3, kind: output, shape index: {}]
  %s4 = sld [smem:[#allocation0]]
  $region22: #{vae_forward.11} parent=0
    _
  %s6 = ssub.s32 1, %s4
  %s7 = scalar_select 0, %s6, %s4
  // Predicated region
  $region2: #{vae_forward.11} parent=0 // pred_check
    _
  $region3: #{vae_forward.11} parent=0 // pred_check_branch
    %9 = sbr.rel (0) target = $region5
  $region4: #{vae_forward.11} parent=0 // pred_region
    _
  $region5: #{vae_forward.11} parent=0 // pred_fallthru
    _
  // Predicated region
  $region6: #{vae_forward.11} parent=0 // pred_check
    _
  $region7: #{vae_forward.11} parent=0 // pred_check_branch
    %11 = sbr.rel (0) target = $region9
  $region8: #{vae_forward.11} parent=0 // pred_region
    _
  $region9: #{vae_forward.11} parent=0 // pred_fallthru
    _
  // Predicated region
  $region10: #{vae_forward.11} parent=0 // pred_check
    _
  $region11: #{vae_forward.11} parent=0 // pred_check_branch
    %13 = sbr.rel (0) target = $region13
  $region12: #{vae_forward.11} parent=0 // pred_region
    _
  $region13: #{vae_forward.11} parent=0 // pred_fallthru
    _
  %v14 = vld [vmem:[%s0] sm:$0xff]
  %v15 = vld [vmem:[%s0 + $0x8] sm:$0xff]
  %v16 = vld [vmem:[%s0 + $0x10] sm:$0xff]
  %v17 = vld [vmem:[%s0 + $0x18] sm:$0xff]
  %v18 = vld [vmem:[%s0 + $0x20] sm:$0xff]
  %v19 = vld [vmem:[%s0 + $0x28] sm:$0xff]
  %v20 = vld [vmem:[%s0 + $0x30] sm:$0xff]
  %v21 = vld [vmem:[%s0 + $0x38] sm:$0xff]
  %v22 = vld [vmem:[%s0 + $0x40] sm:$0xff]
  %v23 = vld [vmem:[%s0 + $0x48] sm:$0xff]
  %v24 = vld [vmem:[%s0 + $0x50] sm:$0xff]
  %v25 = vld [vmem:[%s0 + $0x58] sm:$0xff]
  %v26 = vld [vmem:[%s0 + $0x60] sm:$0xff]
  %v27 = vld [vmem:[%s0 + $0x68] sm:$0xff]
  %v28 = vld [vmem:[%s0 + $0x70] sm:$0xff]
  %v29 = vld [vmem:[%s0 + $0x78] sm:$0xff]
  %v30 = vld [vmem:[%s0 + $0x80] sm:$0xff]
  %v31 = vld [vmem:[%s0 + $0x88] sm:$0xff]
  %v32 = vld [vmem:[%s0 + $0x90] sm:$0xff]
  %v33 = vld [vmem:[%s0 + $0x98] sm:$0xff]
  %v34 = vld [vmem:[%s0 + $0xa0] sm:$0xff]
  %v35 = vld [vmem:[%s0 + $0xa8] sm:$0xff]
  %v36 = vld [vmem:[%s0 + $0xb0] sm:$0xff]
  %v37 = vld [vmem:[%s0 + $0xb8] sm:$0xff]
  %v38 = vld [vmem:[%s0 + $0xc0] sm:$0xff]
  %v39 = vld [vmem:[%s0 + $0xc8] sm:$0xff]
  %v40 = vld [vmem:[%s0 + $0xd0] sm:$0xff]
  %v41 = vld [vmem:[%s0 + $0xd8] sm:$0xff]
  %v42 = vld [vmem:[%s0 + $0xe0] sm:$0xff]
  %v43 = vld [vmem:[%s0 + $0xe8] sm:$0xff]
  %v44 = vld [vmem:[%s0 + $0xf0] sm:$0xff]
  %v45 = vld [vmem:[%s0 + $0xf8] sm:$0xff]
  %v46 = vld [vmem:[%s1] sm:$0xf]
  %v47 = vld [vmem:[%s1 + $0x4] sm:$0xf]
  %v48 = vld [vmem:[%s1 + $0x8] sm:$0xf]
  %v49 = vld [vmem:[%s1 + $0xc] sm:$0xf]
  %v50 = vld [vmem:[%s1 + $0x10] sm:$0xf]
  %v51 = vld [vmem:[%s1 + $0x14] sm:$0xf]
  %v52 = vld [vmem:[%s1 + $0x18] sm:$0xf]
  %v53 = vld [vmem:[%s1 + $0x1c] sm:$0xf]
  %v54 = vld [vmem:[%s1 + $0x20] sm:$0xf]
  %v55 = vld [vmem:[%s1 + $0x24] sm:$0xf]
  %v56 = vld [vmem:[%s1 + $0x28] sm:$0xf]
  %v57 = vld [vmem:[%s1 + $0x2c] sm:$0xf]
  %v58 = vld [vmem:[%s1 + $0x30] sm:$0xf]
  %v59 = vld [vmem:[%s1 + $0x34] sm:$0xf]
  %v60 = vld [vmem:[%s1 + $0x38] sm:$0xf]
  %v61 = vld [vmem:[%s1 + $0x3c] sm:$0xf]
  %v62 = vld [vmem:[%s1 + $0x40] sm:$0xf]
  %v63 = vld [vmem:[%s1 + $0x44] sm:$0xf]
  %v64 = vld [vmem:[%s1 + $0x48] sm:$0xf]
  %v65 = vld [vmem:[%s1 + $0x4c] sm:$0xf]
  %v66 = vld [vmem:[%s1 + $0x50] sm:$0xf]
  %v67 = vld [vmem:[%s1 + $0x54] sm:$0xf]
  %v68 = vld [vmem:[%s1 + $0x58] sm:$0xf]
  %v69 = vld [vmem:[%s1 + $0x5c] sm:$0xf]
  %v70 = vld [vmem:[%s1 + $0x60] sm:$0xf]
  %v71 = vld [vmem:[%s1 + $0x64] sm:$0xf]
  %v72 = vld [vmem:[%s1 + $0x68] sm:$0xf]
  %v73 = vld [vmem:[%s1 + $0x6c] sm:$0xf]
  %v74 = vld [vmem:[%s1 + $0x70] sm:$0xf]
  %v75 = vld [vmem:[%s1 + $0x74] sm:$0xf]
  %v76 = vld [vmem:[%s1 + $0x78] sm:$0xf]
  %v77 = vld [vmem:[%s1 + $0x7c] sm:$0xf]
  %v78 = vld [vmem:[%s1 + $0x80] sm:$0xf]
  %v79 = vld [vmem:[%s1 + $0x84] sm:$0xf]
  %v80 = vld [vmem:[%s1 + $0x88] sm:$0xf]
  %v81 = vld [vmem:[%s1 + $0x8c] sm:$0xf]
  %v82 = vld [vmem:[%s1 + $0x90] sm:$0xf]
  %v83 = vld [vmem:[%s1 + $0x94] sm:$0xf]
  %v84 = vld [vmem:[%s1 + $0x98] sm:$0xf]
  %v85 = vld [vmem:[%s1 + $0x9c] sm:$0xf]
  %v86 = vld [vmem:[%s1 + $0xa0] sm:$0xf]
  %v87 = vld [vmem:[%s1 + $0xa4] sm:$0xf]
  %v88 = vld [vmem:[%s1 + $0xa8] sm:$0xf]
  %v89 = vld [vmem:[%s1 + $0xac] sm:$0xf]
  %v90 = vld [vmem:[%s1 + $0xb0] sm:$0xf]
  %v91 = vld [vmem:[%s1 + $0xb4] sm:$0xf]
  %v92 = vld [vmem:[%s1 + $0xb8] sm:$0xf]
  %v93 = vld [vmem:[%s1 + $0xbc] sm:$0xf]
  %v94 = vld [vmem:[%s1 + $0xc0] sm:$0xf]
  %v95 = vld [vmem:[%s1 + $0xc4] sm:$0xf]
  %v96 = vld [vmem:[%s1 + $0xc8] sm:$0xf]
  %v97 = vld [vmem:[%s1 + $0xcc] sm:$0xf]
  %v98 = vld [vmem:[%s1 + $0xd0] sm:$0xf]
  %v99 = vld [vmem:[%s1 + $0xd4] sm:$0xf]
  %v100 = vld [vmem:[%s1 + $0xd8] sm:$0xf]
  %v101 = vld [vmem:[%s1 + $0xdc] sm:$0xf]
  %v102 = vld [vmem:[%s1 + $0xe0] sm:$0xf]
  %v103 = vld [vmem:[%s1 + $0xe4] sm:$0xf]
  %v104 = vld [vmem:[%s1 + $0xe8] sm:$0xf]
  %v105 = vld [vmem:[%s1 + $0xec] sm:$0xf]
  %v106 = vld [vmem:[%s1 + $0xf0] sm:$0xf]
  %v107 = vld [vmem:[%s1 + $0xf4] sm:$0xf]
  %v108 = vld [vmem:[%s1 + $0xf8] sm:$0xf]
  %v109 = vld [vmem:[%s1 + $0xfc] sm:$0xf]
  %v110 = vld [vmem:[%s2] sm:$0x1]
  %v112 = vperm.slane %v110, 0
  %v146 = vunpack.c.l.b16 %v14
  %v147 = vunpack.c.h.b16 %v14
  %v148 = vunpack.c.l.b16 %v15
  %v149 = vunpack.c.h.b16 %v15
  %v150 = vunpack.c.l.b16 %v16
  %v151 = vunpack.c.h.b16 %v16
  %v152 = vunpack.c.l.b16 %v17
  %v153 = vunpack.c.h.b16 %v17
  %v154 = vunpack.c.l.b16 %v18
  %v155 = vunpack.c.h.b16 %v18
  %v156 = vunpack.c.l.b16 %v19
  %v157 = vunpack.c.h.b16 %v19
  %v158 = vunpack.c.l.b16 %v20
  %v159 = vunpack.c.h.b16 %v20
  %v160 = vunpack.c.l.b16 %v21
  %v161 = vunpack.c.h.b16 %v21
  %v162 = vunpack.c.l.b16 %v22
  %v163 = vunpack.c.h.b16 %v22
  %v164 = vunpack.c.l.b16 %v23
  %v165 = vunpack.c.h.b16 %v23
  %v166 = vunpack.c.l.b16 %v24
  %v167 = vunpack.c.h.b16 %v24
  %v168 = vunpack.c.l.b16 %v25
  %v169 = vunpack.c.h.b16 %v25
  %v170 = vunpack.c.l.b16 %v26
  %v171 = vunpack.c.h.b16 %v26
  %v172 = vunpack.c.l.b16 %v27
  %v173 = vunpack.c.h.b16 %v27
  %v174 = vunpack.c.l.b16 %v28
  %v175 = vunpack.c.h.b16 %v28
  %v176 = vunpack.c.l.b16 %v29
  %v177 = vunpack.c.h.b16 %v29
  %v178 = vunpack.c.l.b16 %v30
  %v179 = vunpack.c.h.b16 %v30
  %v180 = vunpack.c.l.b16 %v31
  %v181 = vunpack.c.h.b16 %v31
  %v182 = vunpack.c.l.b16 %v32
  %v183 = vunpack.c.h.b16 %v32
  %v184 = vunpack.c.l.b16 %v33
  %v185 = vunpack.c.h.b16 %v33
  %v186 = vunpack.c.l.b16 %v34
  %v187 = vunpack.c.h.b16 %v34
  %v188 = vunpack.c.l.b16 %v35
  %v189 = vunpack.c.h.b16 %v35
  %v190 = vunpack.c.l.b16 %v36
  %v191 = vunpack.c.h.b16 %v36
  %v192 = vunpack.c.l.b16 %v37
  %v193 = vunpack.c.h.b16 %v37
  %v194 = vunpack.c.l.b16 %v38
  %v195 = vunpack.c.h.b16 %v38
  %v196 = vunpack.c.l.b16 %v39
  %v197 = vunpack.c.h.b16 %v39
  %v198 = vunpack.c.l.b16 %v40
  %v199 = vunpack.c.h.b16 %v40
  %v200 = vunpack.c.l.b16 %v41
  %v201 = vunpack.c.h.b16 %v41
  %v202 = vunpack.c.l.b16 %v42
  %v203 = vunpack.c.h.b16 %v42
  %v204 = vunpack.c.l.b16 %v43
  %v205 = vunpack.c.h.b16 %v43
  %v206 = vunpack.c.l.b16 %v44
  %v207 = vunpack.c.h.b16 %v44
  %v208 = vunpack.c.l.b16 %v45
  %v209 = vunpack.c.h.b16 %v45
  %v210 = vpack.c.b16 %v150, %v146
  %v211 = vpack.c.b16 %v151, %v147
  %v212 = vpack.c.b16 %v152, %v148
  %v213 = vpack.c.b16 %v153, %v149
  %v214 = vpack.c.b16 %v158, %v154
  %v215 = vpack.c.b16 %v159, %v155
  %v216 = vpack.c.b16 %v160, %v156
  %v217 = vpack.c.b16 %v161, %v157
  %v218 = vpack.c.b16 %v166, %v162
  %v219 = vpack.c.b16 %v167, %v163
  %v220 = vpack.c.b16 %v168, %v164
  %v221 = vpack.c.b16 %v169, %v165
  %v222 = vpack.c.b16 %v174, %v170
  %v223 = vpack.c.b16 %v175, %v171
  %v224 = vpack.c.b16 %v176, %v172
  %v225 = vpack.c.b16 %v177, %v173
  %v226 = vpack.c.b16 %v182, %v178
  %v227 = vpack.c.b16 %v183, %v179
  %v228 = vpack.c.b16 %v184, %v180
  %v229 = vpack.c.b16 %v185, %v181
  %v230 = vpack.c.b16 %v190, %v186
  %v231 = vpack.c.b16 %v191, %v187
  %v232 = vpack.c.b16 %v192, %v188
  %v233 = vpack.c.b16 %v193, %v189
  %v234 = vpack.c.b16 %v198, %v194
  %v235 = vpack.c.b16 %v199, %v195
  %v236 = vpack.c.b16 %v200, %v196
  %v237 = vpack.c.b16 %v201, %v197
  %v238 = vpack.c.b16 %v206, %v202
  %v239 = vpack.c.b16 %v207, %v203
  %v240 = vpack.c.b16 %v208, %v204
  %v241 = vpack.c.b16 %v209, %v205
  %v338 = vunpack.c.l.b16 %v46
  %v339 = vunpack.c.l.b16 %v47
  %v340 = vunpack.c.l.b16 %v48
  %v341 = vunpack.c.l.b16 %v49
  %v342 = vunpack.c.l.b16 %v50
  %v343 = vunpack.c.l.b16 %v51
  %v344 = vunpack.c.l.b16 %v52
  %v345 = vunpack.c.l.b16 %v53
  %v346 = vunpack.c.l.b16 %v54
  %v347 = vunpack.c.l.b16 %v55
  %v348 = vunpack.c.l.b16 %v56
  %v349 = vunpack.c.l.b16 %v57
  %v350 = vunpack.c.l.b16 %v58
  %v351 = vunpack.c.l.b16 %v59
  %v352 = vunpack.c.l.b16 %v60
  %v353 = vunpack.c.l.b16 %v61
  %v354 = vunpack.c.l.b16 %v62
  %v355 = vunpack.c.l.b16 %v63
  %v356 = vunpack.c.l.b16 %v64
  %v357 = vunpack.c.l.b16 %v65
  %v358 = vunpack.c.l.b16 %v66
  %v359 = vunpack.c.l.b16 %v67
  %v360 = vunpack.c.l.b16 %v68
  %v361 = vunpack.c.l.b16 %v69
  %v362 = vunpack.c.l.b16 %v70
  %v363 = vunpack.c.l.b16 %v71
  %v364 = vunpack.c.l.b16 %v72
  %v365 = vunpack.c.l.b16 %v73
  %v366 = vunpack.c.l.b16 %v74
  %v367 = vunpack.c.l.b16 %v75
  %v368 = vunpack.c.l.b16 %v76
  %v369 = vunpack.c.l.b16 %v77
  %v370 = vunpack.c.l.b16 %v78
  %v371 = vunpack.c.l.b16 %v79
  %v372 = vunpack.c.l.b16 %v80
  %v373 = vunpack.c.l.b16 %v81
  %v374 = vunpack.c.l.b16 %v82
  %v375 = vunpack.c.l.b16 %v83
  %v376 = vunpack.c.l.b16 %v84
  %v377 = vunpack.c.l.b16 %v85
  %v378 = vunpack.c.l.b16 %v86
  %v379 = vunpack.c.l.b16 %v87
  %v380 = vunpack.c.l.b16 %v88
  %v381 = vunpack.c.l.b16 %v89
  %v382 = vunpack.c.l.b16 %v90
  %v383 = vunpack.c.l.b16 %v91
  %v384 = vunpack.c.l.b16 %v92
  %v385 = vunpack.c.l.b16 %v93
  %v386 = vunpack.c.l.b16 %v94
  %v387 = vunpack.c.l.b16 %v95
  %v388 = vunpack.c.l.b16 %v96
  %v389 = vunpack.c.l.b16 %v97
  %v390 = vunpack.c.l.b16 %v98
  %v391 = vunpack.c.l.b16 %v99
  %v392 = vunpack.c.l.b16 %v100
  %v393 = vunpack.c.l.b16 %v101
  %v394 = vunpack.c.l.b16 %v102
  %v395 = vunpack.c.l.b16 %v103
  %v396 = vunpack.c.l.b16 %v104
  %v397 = vunpack.c.l.b16 %v105
  %v398 = vunpack.c.l.b16 %v106
  %v399 = vunpack.c.l.b16 %v107
  %v400 = vunpack.c.l.b16 %v108
  %v401 = vunpack.c.l.b16 %v109
  %v402 = vpack.c.b16 %v339, %v338
  %v403 = vpack.c.b16 %v341, %v340
  %v404 = vpack.c.b16 %v343, %v342
  %v405 = vpack.c.b16 %v345, %v344
  %v406 = vpack.c.b16 %v347, %v346
  %v407 = vpack.c.b16 %v349, %v348
  %v408 = vpack.c.b16 %v351, %v350
  %v409 = vpack.c.b16 %v353, %v352
  %v410 = vpack.c.b16 %v355, %v354
  %v411 = vpack.c.b16 %v357, %v356
  %v412 = vpack.c.b16 %v359, %v358
  %v413 = vpack.c.b16 %v361, %v360
  %v414 = vpack.c.b16 %v363, %v362
  %v415 = vpack.c.b16 %v365, %v364
  %v416 = vpack.c.b16 %v367, %v366
  %v417 = vpack.c.b16 %v369, %v368
  %v418 = vpack.c.b16 %v371, %v370
  %v419 = vpack.c.b16 %v373, %v372
  %v420 = vpack.c.b16 %v375, %v374
  %v421 = vpack.c.b16 %v377, %v376
  %v422 = vpack.c.b16 %v379, %v378
  %v423 = vpack.c.b16 %v381, %v380
  %v424 = vpack.c.b16 %v383, %v382
  %v425 = vpack.c.b16 %v385, %v384
  %v426 = vpack.c.b16 %v387, %v386
  %v427 = vpack.c.b16 %v389, %v388
  %v428 = vpack.c.b16 %v391, %v390
  %v429 = vpack.c.b16 %v393, %v392
  %v430 = vpack.c.b16 %v395, %v394
  %v431 = vpack.c.b16 %v397, %v396
  %v432 = vpack.c.b16 %v399, %v398
  %v433 = vpack.c.b16 %v401, %v400
  %466 = vmatpush.bf16.msra.mxu0 %v409
  %467 = vmatpush.bf16.msra.mxu0 %v408
  %468 = vmatpush.bf16.msra.mxu0 %v407
  %469 = vmatpush.bf16.msra.mxu0 %v406
  %470 = vmatpush.bf16.msra.mxu0 %v405
  %471 = vmatpush.bf16.msra.mxu0 %v404
  %472 = vmatpush.bf16.msra.mxu0 %v403
  %473 = vmatpush.bf16.msra.mxu0 %v402
  %474 = vmatmul.bf16.gmra.mxu0 %v210
  %v475 = vpop.f32.mrf.mxu0
  %v476 = vadd.f32 %v112, %v475
  %v477 = vpop.f32.mrf.mxu0
  %v478 = vadd.f32 %v112, %v477
  %479 = vmatmul.bf16.gmra.mxu0 %v214
  %v480 = vpop.f32.mrf.mxu0
  %v481 = vadd.f32 %v112, %v480
  %v482 = vpop.f32.mrf.mxu0
  %v483 = vadd.f32 %v112, %v482
  %484 = vmatmul.bf16.gmra.mxu0 %v218
  %v485 = vpop.f32.mrf.mxu0
  %v486 = vadd.f32 %v112, %v485
  %v487 = vpop.f32.mrf.mxu0
  %v488 = vadd.f32 %v112, %v487
  %489 = vmatmul.bf16.gmra.mxu0 %v222
  %v490 = vpop.f32.mrf.mxu0
  %v491 = vadd.f32 %v112, %v490
  %v492 = vpop.f32.mrf.mxu0
  %v493 = vadd.f32 %v112, %v492
  %494 = vmatmul.bf16.gmra.mxu0 %v226
  %v495 = vpop.f32.mrf.mxu0
  %v496 = vadd.f32 %v112, %v495
  %v497 = vpop.f32.mrf.mxu0
  %v498 = vadd.f32 %v112, %v497
  %499 = vmatmul.bf16.gmra.mxu0 %v230
  %v500 = vpop.f32.mrf.mxu0
  %v501 = vadd.f32 %v112, %v500
  %v502 = vpop.f32.mrf.mxu0
  %v503 = vadd.f32 %v112, %v502
  %504 = vmatmul.bf16.gmra.mxu0 %v234
  %v505 = vpop.f32.mrf.mxu0
  %v506 = vadd.f32 %v112, %v505
  %v507 = vpop.f32.mrf.mxu0
  %v508 = vadd.f32 %v112, %v507
  %509 = vmatmul.bf16.gmra.mxu0 %v238
  %v510 = vpop.f32.mrf.mxu0
  %v511 = vadd.f32 %v112, %v510
  %v512 = vpop.f32.mrf.mxu0
  %v513 = vadd.f32 %v112, %v512
  %514 = vdwg.mxu0
  %515 = vmatpush.bf16.msra.mxu0 %v417
  %516 = vmatpush.bf16.msra.mxu0 %v416
  %517 = vmatpush.bf16.msra.mxu0 %v415
  %518 = vmatpush.bf16.msra.mxu0 %v414
  %519 = vmatpush.bf16.msra.mxu0 %v413
  %520 = vmatpush.bf16.msra.mxu0 %v412
  %521 = vmatpush.bf16.msra.mxu0 %v411
  %522 = vmatpush.bf16.msra.mxu0 %v410
  %523 = vmatmul.bf16.gmra.mxu0 %v211
  %v524 = vpop.f32.mrf.mxu0
  %v525 = vadd.f32 %v476, %v524
  %v526 = vpop.f32.mrf.mxu0
  %v527 = vadd.f32 %v478, %v526
  %528 = vmatmul.bf16.gmra.mxu0 %v215
  %v529 = vpop.f32.mrf.mxu0
  %v530 = vadd.f32 %v481, %v529
  %v531 = vpop.f32.mrf.mxu0
  %v532 = vadd.f32 %v483, %v531
  %533 = vmatmul.bf16.gmra.mxu0 %v219
  %v534 = vpop.f32.mrf.mxu0
  %v535 = vadd.f32 %v486, %v534
  %v536 = vpop.f32.mrf.mxu0
  %v537 = vadd.f32 %v488, %v536
  %538 = vmatmul.bf16.gmra.mxu0 %v223
  %v539 = vpop.f32.mrf.mxu0
  %v540 = vadd.f32 %v491, %v539
  %v541 = vpop.f32.mrf.mxu0
  %v542 = vadd.f32 %v493, %v541
  %543 = vmatmul.bf16.gmra.mxu0 %v227
  %v544 = vpop.f32.mrf.mxu0
  %v545 = vadd.f32 %v496, %v544
  %v546 = vpop.f32.mrf.mxu0
  %v547 = vadd.f32 %v498, %v546
  %548 = vmatmul.bf16.gmra.mxu0 %v231
  %v549 = vpop.f32.mrf.mxu0
  %v550 = vadd.f32 %v501, %v549
  %v551 = vpop.f32.mrf.mxu0
  %v552 = vadd.f32 %v503, %v551
  %553 = vmatmul.bf16.gmra.mxu0 %v235
  %v554 = vpop.f32.mrf.mxu0
  %v555 = vadd.f32 %v506, %v554
  %v556 = vpop.f32.mrf.mxu0
  %v557 = vadd.f32 %v508, %v556
  %558 = vmatmul.bf16.gmra.mxu0 %v239
  %v559 = vpop.f32.mrf.mxu0
  %v560 = vadd.f32 %v511, %v559
  %v561 = vpop.f32.mrf.mxu0
  %v562 = vadd.f32 %v513, %v561
  %563 = vdwg.mxu0
  %564 = vmatpush.bf16.msra.mxu0 %v425
  %565 = vmatpush.bf16.msra.mxu0 %v424
  %566 = vmatpush.bf16.msra.mxu0 %v423
  %567 = vmatpush.bf16.msra.mxu0 %v422
  %568 = vmatpush.bf16.msra.mxu0 %v421
  %569 = vmatpush.bf16.msra.mxu0 %v420
  %570 = vmatpush.bf16.msra.mxu0 %v419
  %571 = vmatpush.bf16.msra.mxu0 %v418
  %572 = vmatmul.bf16.gmra.mxu0 %v212
  %v573 = vpop.f32.mrf.mxu0
  %v574 = vadd.f32 %v525, %v573
  %v575 = vpop.f32.mrf.mxu0
  %v576 = vadd.f32 %v527, %v575
  %577 = vmatmul.bf16.gmra.mxu0 %v216
  %v578 = vpop.f32.mrf.mxu0
  %v579 = vadd.f32 %v530, %v578
  %v580 = vpop.f32.mrf.mxu0
  %v581 = vadd.f32 %v532, %v580
  %582 = vmatmul.bf16.gmra.mxu0 %v220
  %v583 = vpop.f32.mrf.mxu0
  %v584 = vadd.f32 %v535, %v583
  %v585 = vpop.f32.mrf.mxu0
  %v586 = vadd.f32 %v537, %v585
  %587 = vmatmul.bf16.gmra.mxu0 %v224
  %v588 = vpop.f32.mrf.mxu0
  %v589 = vadd.f32 %v540, %v588
  %v590 = vpop.f32.mrf.mxu0
  %v591 = vadd.f32 %v542, %v590
  %592 = vmatmul.bf16.gmra.mxu0 %v228
  %v593 = vpop.f32.mrf.mxu0
  %v594 = vadd.f32 %v545, %v593
  %v595 = vpop.f32.mrf.mxu0
  %v596 = vadd.f32 %v547, %v595
  %597 = vmatmul.bf16.gmra.mxu0 %v232
  %v598 = vpop.f32.mrf.mxu0
  %v599 = vadd.f32 %v550, %v598
  %v600 = vpop.f32.mrf.mxu0
  %v601 = vadd.f32 %v552, %v600
  %602 = vmatmul.bf16.gmra.mxu0 %v236
  %v603 = vpop.f32.mrf.mxu0
  %v604 = vadd.f32 %v555, %v603
  %v605 = vpop.f32.mrf.mxu0
  %v606 = vadd.f32 %v557, %v605
  %607 = vmatmul.bf16.gmra.mxu0 %v240
  %v608 = vpop.f32.mrf.mxu0
  %v609 = vadd.f32 %v560, %v608
  %v610 = vpop.f32.mrf.mxu0
  %v611 = vadd.f32 %v562, %v610
  %612 = vdwg.mxu0
  %613 = vmatpush.bf16.msra.mxu0 %v433
  %614 = vmatpush.bf16.msra.mxu0 %v432
  %615 = vmatpush.bf16.msra.mxu0 %v431
  %616 = vmatpush.bf16.msra.mxu0 %v430
  %617 = vmatpush.bf16.msra.mxu0 %v429
  %618 = vmatpush.bf16.msra.mxu0 %v428
  %619 = vmatpush.bf16.msra.mxu0 %v427
  %620 = vmatpush.bf16.msra.mxu0 %v426
  %621 = vmatmul.bf16.gmra.mxu0 %v213
  %v622 = vpop.f32.mrf.mxu0
  %v623 = vadd.f32 %v574, %v622
  %v624 = vpop.f32.mrf.mxu0
  %v625 = vadd.f32 %v576, %v624
  %626 = vmatmul.bf16.gmra.mxu0 %v217
  %v627 = vpop.f32.mrf.mxu0
  %v628 = vadd.f32 %v579, %v627
  %v629 = vpop.f32.mrf.mxu0
  %v630 = vadd.f32 %v581, %v629
  %631 = vmatmul.bf16.gmra.mxu0 %v221
  %v632 = vpop.f32.mrf.mxu0
  %v633 = vadd.f32 %v584, %v632
  %v634 = vpop.f32.mrf.mxu0
  %v635 = vadd.f32 %v586, %v634
  %636 = vmatmul.bf16.gmra.mxu0 %v225
  %v637 = vpop.f32.mrf.mxu0
  %v638 = vadd.f32 %v589, %v637
  %v639 = vpop.f32.mrf.mxu0
  %v640 = vadd.f32 %v591, %v639
  %641 = vmatmul.bf16.gmra.mxu0 %v229
  %v642 = vpop.f32.mrf.mxu0
  %v643 = vadd.f32 %v594, %v642
  %v644 = vpop.f32.mrf.mxu0
  %v645 = vadd.f32 %v596, %v644
  %646 = vmatmul.bf16.gmra.mxu0 %v233
  %v647 = vpop.f32.mrf.mxu0
  %v648 = vadd.f32 %v599, %v647
  %v649 = vpop.f32.mrf.mxu0
  %v650 = vadd.f32 %v601, %v649
  %651 = vmatmul.bf16.gmra.mxu0 %v237
  %v652 = vpop.f32.mrf.mxu0
  %v653 = vadd.f32 %v604, %v652
  %v654 = vpop.f32.mrf.mxu0
  %v655 = vadd.f32 %v606, %v654
  %656 = vmatmul.bf16.gmra.mxu0 %v241
  %v657 = vpop.f32.mrf.mxu0
  %v658 = vadd.f32 %v609, %v657
  %v659 = vpop.f32.mrf.mxu0
  %v660 = vadd.f32 %v611, %v659
  %661 = vdwg.mxu0
  %v662 = vmax.f32 %v623, 0.0
  %v663 = vmax.f32 %v625, 0.0
  %v664 = vmax.f32 %v628, 0.0
  %v665 = vmax.f32 %v630, 0.0
  %v666 = vmax.f32 %v633, 0.0
  %v667 = vmax.f32 %v635, 0.0
  %v668 = vmax.f32 %v638, 0.0
  %v669 = vmax.f32 %v640, 0.0
  %v670 = vmax.f32 %v643, 0.0
  %v671 = vmax.f32 %v645, 0.0
  %v672 = vmax.f32 %v648, 0.0
  %v673 = vmax.f32 %v650, 0.0
  %v674 = vmax.f32 %v653, 0.0
  %v675 = vmax.f32 %v655, 0.0
  %v676 = vmax.f32 %v658, 0.0
  %v677 = vmax.f32 %v660, 0.0
  %vm678 = vcmask 523264
  %679 = vst.msk [vmem:[%s3] sm:$0xff] %vm678, %v662
  %680 = vst.msk [vmem:[%s3 + $0x8] sm:$0xff] %vm678, %v663
  %681 = vst.msk [vmem:[%s3 + $0x10] sm:$0xff] %vm678, %v664
  %682 = vst.msk [vmem:[%s3 + $0x18] sm:$0xff] %vm678, %v665
  %683 = vst.msk [vmem:[%s3 + $0x20] sm:$0xff] %vm678, %v666
  %684 = vst.msk [vmem:[%s3 + $0x28] sm:$0xff] %vm678, %v667
  %685 = vst.msk [vmem:[%s3 + $0x30] sm:$0xff] %vm678, %v668
  %686 = vst.msk [vmem:[%s3 + $0x38] sm:$0xff] %vm678, %v669
  %687 = vst.msk [vmem:[%s3 + $0x40] sm:$0xff] %vm678, %v670
  %688 = vst.msk [vmem:[%s3 + $0x48] sm:$0xff] %vm678, %v671
  %689 = vst.msk [vmem:[%s3 + $0x50] sm:$0xff] %vm678, %v672
  %690 = vst.msk [vmem:[%s3 + $0x58] sm:$0xff] %vm678, %v673
  %691 = vst.msk [vmem:[%s3 + $0x60] sm:$0xff] %vm678, %v674
  %692 = vst.msk [vmem:[%s3 + $0x68] sm:$0xff] %vm678, %v675
  %693 = vst.msk [vmem:[%s3 + $0x70] sm:$0xff] %vm678, %v676
  %694 = vst.msk [vmem:[%s3 + $0x78] sm:$0xff] %vm678, %v677
  // Predicated region
  $region14: #{vae_forward.11} parent=0 // pred_check
    _
  $region15: #{vae_forward.11} parent=0 // pred_check_branch
    %696 = sbr.rel (0) target = $region17
  $region16: #{vae_forward.11} parent=0 // pred_region
    _
  $region17: #{vae_forward.11} parent=0 // pred_fallthru
    _
  // Predicated region
  $region18: #{vae_forward.11} parent=0 // pred_check
    _
  $region19: #{vae_forward.11} parent=0 // pred_check_branch
    %698 = sbr.rel (0) target = $region21
  $region20: #{vae_forward.11} parent=0 // pred_region
    _
  $region21: #{vae_forward.11} parent=0 // pred_fallthru
    _

// kernel: vae_forward.12
$region0: #{vae_forward.12}
  #allocation0 [shape = 'u32[]', space=smem, size = 0x4, offset = 0x4, fixed_abs, tag = 'smem constant byte address 0x4 - core index']
  #allocation1 [shape = 'u32[72,128]{1,0:T(1,128)}', space=vmem, size = 0x9000, scoped, tag = 'internal scratch']
  %s0 = inlined_call_operand.vmem [shape: bf16[32,576], index: 0, kind: input, shape index: {}]
  %s1 = inlined_call_operand.vmem [shape: bf16[576,128], index: 1, kind: input, shape index: {}]
  %s2 = inlined_call_operand.vmem [shape: f32[1,128], index: 2, kind: input, shape index: {}]
  %s3 = inlined_call_operand.vmem [shape: f32[32,128], index: 3, kind: output, shape index: {}]
  %s4 = sld [smem:[#allocation0]]
  $region22: #{vae_forward.12} parent=0
    _
  %s6 = ssub.s32 1, %s4
  %s7 = scalar_select 0, %s6, %s4
  // Predicated region
  $region2: #{vae_forward.12} parent=0 // pred_check
    _
  $region3: #{vae_forward.12} parent=0 // pred_check_branch
    %9 = sbr.rel (0) target = $region5
  $region4: #{vae_forward.12} parent=0 // pred_region
    _
  $region5: #{vae_forward.12} parent=0 // pred_fallthru
    _
  // Predicated region
  $region6: #{vae_forward.12} parent=0 // pred_check
    _
  $region7: #{vae_forward.12} parent=0 // pred_check_branch
    %11 = sbr.rel (0) target = $region9
  $region8: #{vae_forward.12} parent=0 // pred_region
    _
  $region9: #{vae_forward.12} parent=0 // pred_fallthru
    _
  // Predicated region
  $region10: #{vae_forward.12} parent=0 // pred_check
    _
  $region11: #{vae_forward.12} parent=0 // pred_check_branch
    %13 = sbr.rel (0) target = $region13
  $region12: #{vae_forward.12} parent=0 // pred_region
    _
  $region13: #{vae_forward.12} parent=0 // pred_fallthru
    _
  %v15 = vld [vmem:[%s0] sm:$0xff]
  %v16 = vld [vmem:[%s0 + $0x8] sm:$0xff]
  %v17 = vld [vmem:[%s0 + $0x10] sm:$0xf]
  %v18 = vld [vmem:[%s0 + $0x14] sm:$0xff]
  %v19 = vld [vmem:[%s0 + $0x1c] sm:$0xff]
  %v20 = vld [vmem:[%s0 + $0x24] sm:$0xf]
  %v21 = vld [vmem:[%s0 + $0x28] sm:$0xff]
  %v22 = vld [vmem:[%s0 + $0x30] sm:$0xff]
  %v23 = vld [vmem:[%s0 + $0x38] sm:$0xf]
  %v24 = vld [vmem:[%s0 + $0x3c] sm:$0xff]
  %v25 = vld [vmem:[%s0 + $0x44] sm:$0xff]
  %v26 = vld [vmem:[%s0 + $0x4c] sm:$0xf]
  %v27 = vld [vmem:[%s1] sm:$0xf]
  %v28 = vld [vmem:[%s1 + $0x4] sm:$0xf]
  %v29 = vld [vmem:[%s1 + $0x8] sm:$0xf]
  %v30 = vld [vmem:[%s1 + $0xc] sm:$0xf]
  %v31 = vld [vmem:[%s1 + $0x10] sm:$0xf]
  %v32 = vld [vmem:[%s1 + $0x14] sm:$0xf]
  %v33 = vld [vmem:[%s1 + $0x18] sm:$0xf]
  %v34 = vld [vmem:[%s1 + $0x1c] sm:$0xf]
  %v35 = vld [vmem:[%s1 + $0x20] sm:$0xf]
  %v36 = vld [vmem:[%s1 + $0x24] sm:$0xf]
  %v37 = vld [vmem:[%s1 + $0x28] sm:$0xf]
  %v38 = vld [vmem:[%s1 + $0x2c] sm:$0xf]
  %v39 = vld [vmem:[%s1 + $0x30] sm:$0xf]
  %v40 = vld [vmem:[%s1 + $0x34] sm:$0xf]
  %v41 = vld [vmem:[%s1 + $0x38] sm:$0xf]
  %v42 = vld [vmem:[%s1 + $0x3c] sm:$0xf]
  %v43 = vld [vmem:[%s1 + $0x40] sm:$0xf]
  %v44 = vld [vmem:[%s1 + $0x44] sm:$0xf]
  %v45 = vld [vmem:[%s1 + $0x48] sm:$0xf]
  %v46 = vld [vmem:[%s1 + $0x4c] sm:$0xf]
  %v47 = vld [vmem:[%s1 + $0x50] sm:$0xf]
  %v48 = vld [vmem:[%s1 + $0x54] sm:$0xf]
  %v49 = vld [vmem:[%s1 + $0x58] sm:$0xf]
  %v50 = vld [vmem:[%s1 + $0x5c] sm:$0xf]
  %v51 = vld [vmem:[%s1 + $0x60] sm:$0xf]
  %v52 = vld [vmem:[%s1 + $0x64] sm:$0xf]
  %v53 = vld [vmem:[%s1 + $0x68] sm:$0xf]
  %v54 = vld [vmem:[%s1 + $0x6c] sm:$0xf]
  %v55 = vld [vmem:[%s1 + $0x70] sm:$0xf]
  %v56 = vld [vmem:[%s1 + $0x74] sm:$0xf]
  %v57 = vld [vmem:[%s1 + $0x78] sm:$0xf]
  %v58 = vld [vmem:[%s1 + $0x7c] sm:$0xf]
  %v59 = vld [vmem:[%s1 + $0x80] sm:$0xf]
  %v60 = vld [vmem:[%s1 + $0x84] sm:$0xf]
  %v61 = vld [vmem:[%s1 + $0x88] sm:$0xf]
  %v62 = vld [vmem:[%s1 + $0x8c] sm:$0xf]
  %v63 = vld [vmem:[%s1 + $0x90] sm:$0xf]
  %v64 = vld [vmem:[%s1 + $0x94] sm:$0xf]
  %v65 = vld [vmem:[%s1 + $0x98] sm:$0xf]
  %v66 = vld [vmem:[%s1 + $0x9c] sm:$0xf]
  %v67 = vld [vmem:[%s1 + $0xa0] sm:$0xf]
  %v68 = vld [vmem:[%s1 + $0xa4] sm:$0xf]
  %v69 = vld [vmem:[%s1 + $0xa8] sm:$0xf]
  %v70 = vld [vmem:[%s1 + $0xac] sm:$0xf]
  %v71 = vld [vmem:[%s1 + $0xb0] sm:$0xf]
  %v72 = vld [vmem:[%s1 + $0xb4] sm:$0xf]
  %v73 = vld [vmem:[%s1 + $0xb8] sm:$0xf]
  %v74 = vld [vmem:[%s1 + $0xbc] sm:$0xf]
  %v75 = vld [vmem:[%s1 + $0xc0] sm:$0xf]
  %v76 = vld [vmem:[%s1 + $0xc4] sm:$0xf]
  %v77 = vld [vmem:[%s1 + $0xc8] sm:$0xf]
  %v78 = vld [vmem:[%s1 + $0xcc] sm:$0xf]
  %v79 = vld [vmem:[%s1 + $0xd0] sm:$0xf]
  %v80 = vld [vmem:[%s1 + $0xd4] sm:$0xf]
  %v81 = vld [vmem:[%s1 + $0xd8] sm:$0xf]
  %v82 = vld [vmem:[%s1 + $0xdc] sm:$0xf]
  %v83 = vld [vmem:[%s1 + $0xe0] sm:$0xf]
  %v84 = vld [vmem:[%s1 + $0xe4] sm:$0xf]
  %v85 = vld [vmem:[%s1 + $0xe8] sm:$0xf]
  %v86 = vld [vmem:[%s1 + $0xec] sm:$0xf]
  %v87 = vld [vmem:[%s1 + $0xf0] sm:$0xf]
  %v88 = vld [vmem:[%s1 + $0xf4] sm:$0xf]
  %v89 = vld [vmem:[%s1 + $0xf8] sm:$0xf]
  %v90 = vld [vmem:[%s1 + $0xfc] sm:$0xf]
  %v91 = vld [vmem:[%s1 + $0x100] sm:$0xf]
  %v92 = vld [vmem:[%s1 + $0x104] sm:$0xf]
  %v93 = vld [vmem:[%s1 + $0x108] sm:$0xf]
  %v94 = vld [vmem:[%s1 + $0x10c] sm:$0xf]
  %v95 = vld [vmem:[%s1 + $0x110] sm:$0xf]
  %v96 = vld [vmem:[%s1 + $0x114] sm:$0xf]
  %v97 = vld [vmem:[%s1 + $0x118] sm:$0xf]
  %v98 = vld [vmem:[%s1 + $0x11c] sm:$0xf]
  %v99 = vld [vmem:[%s2] sm:$0x1]
  %v101 = vperm.slane %v99, 0
  %v115 = vunpack.c.l.b16 %v15
  %v116 = vunpack.c.h.b16 %v15
  %v117 = vunpack.c.l.b16 %v16
  %v118 = vunpack.c.h.b16 %v16
  %v119 = vunpack.c.l.b16 %v17
  %v120 = vunpack.c.l.b16 %v18
  %v121 = vunpack.c.h.b16 %v18
  %v122 = vunpack.c.l.b16 %v19
  %v123 = vunpack.c.h.b16 %v19
  %v124 = vunpack.c.l.b16 %v20
  %v125 = vunpack.c.l.b16 %v21
  %v126 = vunpack.c.h.b16 %v21
  %v127 = vunpack.c.l.b16 %v22
  %v128 = vunpack.c.h.b16 %v22
  %v129 = vunpack.c.l.b16 %v23
  %v130 = vunpack.c.l.b16 %v24
  %v131 = vunpack.c.h.b16 %v24
  %v132 = vunpack.c.l.b16 %v25
  %v133 = vunpack.c.h.b16 %v25
  %v134 = vunpack.c.l.b16 %v26
  %v135 = vpack.c.b16 %v120, %v115
  %v136 = vpack.c.b16 %v121, %v116
  %v137 = vpack.c.b16 %v122, %v117
  %v138 = vpack.c.b16 %v123, %v118
  %v139 = vpack.c.b16 %v124, %v119
  %v140 = vpack.c.b16 %v130, %v125
  %v141 = vpack.c.b16 %v131, %v126
  %v142 = vpack.c.b16 %v132, %v127
  %v143 = vpack.c.b16 %v133, %v128
  %v144 = vpack.c.b16 %v134, %v129
  %v225 = vunpack.c.l.b16 %v27
  %v226 = vunpack.c.l.b16 %v28
  %v227 = vunpack.c.l.b16 %v29
  %v228 = vunpack.c.l.b16 %v30
  %v229 = vunpack.c.l.b16 %v31
  %v230 = vunpack.c.l.b16 %v32
  %v231 = vunpack.c.l.b16 %v33
  %v232 = vunpack.c.l.b16 %v34
  %v233 = vunpack.c.l.b16 %v35
  %v234 = vunpack.c.l.b16 %v36
  %v235 = vunpack.c.l.b16 %v37
  %v236 = vunpack.c.l.b16 %v38
  %v237 = vunpack.c.l.b16 %v39
  %v238 = vunpack.c.l.b16 %v40
  %v239 = vunpack.c.l.b16 %v41
  %v240 = vunpack.c.l.b16 %v42
  %v241 = vunpack.c.l.b16 %v43
  %v242 = vunpack.c.l.b16 %v44
  %v243 = vunpack.c.l.b16 %v45
  %v244 = vunpack.c.l.b16 %v46
  %v245 = vunpack.c.l.b16 %v47
  %v246 = vunpack.c.l.b16 %v48
  %v247 = vunpack.c.l.b16 %v49
  %v248 = vunpack.c.l.b16 %v50
  %v249 = vunpack.c.l.b16 %v51
  %v250 = vunpack.c.l.b16 %v52
  %v251 = vunpack.c.l.b16 %v53
  %v252 = vunpack.c.l.b16 %v54
  %v253 = vunpack.c.l.b16 %v55
  %v254 = vunpack.c.l.b16 %v56
  %v255 = vunpack.c.l.b16 %v57
  %v256 = vunpack.c.l.b16 %v58
  %v257 = vunpack.c.l.b16 %v59
  %v258 = vunpack.c.l.b16 %v60
  %v259 = vunpack.c.l.b16 %v61
  %v260 = vunpack.c.l.b16 %v62
  %v261 = vunpack.c.l.b16 %v63
  %v262 = vunpack.c.l.b16 %v64
  %v263 = vunpack.c.l.b16 %v65
  %v264 = vunpack.c.l.b16 %v66
  %v265 = vunpack.c.l.b16 %v67
  %v266 = vunpack.c.l.b16 %v68
  %v267 = vunpack.c.l.b16 %v69
  %v268 = vunpack.c.l.b16 %v70
  %v269 = vunpack.c.l.b16 %v71
  %v270 = vunpack.c.l.b16 %v72
  %v271 = vunpack.c.l.b16 %v73
  %v272 = vunpack.c.l.b16 %v74
  %v273 = vunpack.c.l.b16 %v75
  %v274 = vunpack.c.l.b16 %v76
  %v275 = vunpack.c.l.b16 %v77
  %v276 = vunpack.c.l.b16 %v78
  %v277 = vunpack.c.l.b16 %v79
  %v278 = vunpack.c.l.b16 %v80
  %v279 = vunpack.c.l.b16 %v81
  %v280 = vunpack.c.l.b16 %v82
  %v281 = vunpack.c.l.b16 %v83
  %v282 = vunpack.c.l.b16 %v84
  %v283 = vunpack.c.l.b16 %v85
  %v284 = vunpack.c.l.b16 %v86
  %v285 = vunpack.c.l.b16 %v87
  %v286 = vunpack.c.l.b16 %v88
  %v287 = vunpack.c.l.b16 %v89
  %v288 = vunpack.c.l.b16 %v90
  %v289 = vunpack.c.l.b16 %v91
  %v290 = vunpack.c.l.b16 %v92
  %v291 = vunpack.c.l.b16 %v93
  %v292 = vunpack.c.l.b16 %v94
  %v293 = vunpack.c.l.b16 %v95
  %v294 = vunpack.c.l.b16 %v96
  %v295 = vunpack.c.l.b16 %v97
  %v296 = vunpack.c.l.b16 %v98
  %v297 = vpack.c.b16 %v226, %v225
  %v298 = vpack.c.b16 %v228, %v227
  %v299 = vpack.c.b16 %v230, %v229
  %v300 = vpack.c.b16 %v232, %v231
  %v301 = vpack.c.b16 %v234, %v233
  %v302 = vpack.c.b16 %v236, %v235
  %v303 = vpack.c.b16 %v238, %v237
  %v304 = vpack.c.b16 %v240, %v239
  %v305 = vpack.c.b16 %v242, %v241
  %v306 = vpack.c.b16 %v244, %v243
  %v307 = vpack.c.b16 %v246, %v245
  %v308 = vpack.c.b16 %v248, %v247
  %v309 = vpack.c.b16 %v250, %v249
  %v310 = vpack.c.b16 %v252, %v251
  %v311 = vpack.c.b16 %v254, %v253
  %v312 = vpack.c.b16 %v256, %v255
  %v313 = vpack.c.b16 %v258, %v257
  %v314 = vpack.c.b16 %v260, %v259
  %v315 = vpack.c.b16 %v262, %v261
  %v316 = vpack.c.b16 %v264, %v263
  %v317 = vpack.c.b16 %v266, %v265
  %v318 = vpack.c.b16 %v268, %v267
  %v319 = vpack.c.b16 %v270, %v269
  %v320 = vpack.c.b16 %v272, %v271
  %v321 = vpack.c.b16 %v274, %v273
  %v322 = vpack.c.b16 %v276, %v275
  %v323 = vpack.c.b16 %v278, %v277
  %v324 = vpack.c.b16 %v280, %v279
  %v325 = vpack.c.b16 %v282, %v281
  %v326 = vpack.c.b16 %v284, %v283
  %v327 = vpack.c.b16 %v286, %v285
  %v328 = vpack.c.b16 %v288, %v287
  %v329 = vpack.c.b16 %v290, %v289
  %v330 = vpack.c.b16 %v292, %v291
  %v331 = vpack.c.b16 %v294, %v293
  %v332 = vpack.c.b16 %v296, %v295
  %vm369 = vcmask 523264
  %v371 = vsel %vm369, %v139, 0
  %v374 = vsel %vm369, %v144, 0
  %376 = vmatpush.bf16.msra.mxu0 %v304
  %377 = vmatpush.bf16.msra.mxu0 %v303
  %378 = vmatpush.bf16.msra.mxu0 %v302
  %379 = vmatpush.bf16.msra.mxu0 %v301
  %380 = vmatpush.bf16.msra.mxu0 %v300
  %381 = vmatpush.bf16.msra.mxu0 %v299
  %382 = vmatpush.bf16.msra.mxu0 %v298
  %383 = vmatpush.bf16.msra.mxu0 %v297
  %384 = vmatmul.bf16.gmra.mxu0 %v135
  %v385 = vpop.f32.mrf.mxu0
  %v386 = vadd.f32 %v101, %v385
  %v387 = vpop.f32.mrf.mxu0
  %v388 = vadd.f32 %v101, %v387
  %389 = vmatmul.bf16.gmra.mxu0 %v140
  %v390 = vpop.f32.mrf.mxu0
  %v391 = vadd.f32 %v101, %v390
  %v392 = vpop.f32.mrf.mxu0
  %v393 = vadd.f32 %v101, %v392
  %394 = vdwg.mxu0
  %395 = vmatpush.bf16.msra.mxu0 %v312
  %396 = vmatpush.bf16.msra.mxu0 %v311
  %397 = vmatpush.bf16.msra.mxu0 %v310
  %398 = vmatpush.bf16.msra.mxu0 %v309
  %399 = vmatpush.bf16.msra.mxu0 %v308
  %400 = vmatpush.bf16.msra.mxu0 %v307
  %401 = vmatpush.bf16.msra.mxu0 %v306
  %402 = vmatpush.bf16.msra.mxu0 %v305
  %403 = vmatmul.bf16.gmra.mxu0 %v136
  %v404 = vpop.f32.mrf.mxu0
  %v405 = vadd.f32 %v386, %v404
  %v406 = vpop.f32.mrf.mxu0
  %v407 = vadd.f32 %v388, %v406
  %408 = vmatmul.bf16.gmra.mxu0 %v141
  %v409 = vpop.f32.mrf.mxu0
  %v410 = vadd.f32 %v391, %v409
  %v411 = vpop.f32.mrf.mxu0
  %v412 = vadd.f32 %v393, %v411
  %413 = vdwg.mxu0
  %414 = vmatpush.bf16.msra.mxu0 %v320
  %415 = vmatpush.bf16.msra.mxu0 %v319
  %416 = vmatpush.bf16.msra.mxu0 %v318
  %417 = vmatpush.bf16.msra.mxu0 %v317
  %418 = vmatpush.bf16.msra.mxu0 %v316
  %419 = vmatpush.bf16.msra.mxu0 %v315
  %420 = vmatpush.bf16.msra.mxu0 %v314
  %421 = vmatpush.bf16.msra.mxu0 %v313
  %422 = vmatmul.bf16.gmra.mxu0 %v137
  %v423 = vpop.f32.mrf.mxu0
  %v424 = vadd.f32 %v405, %v423
  %v425 = vpop.f32.mrf.mxu0
  %v426 = vadd.f32 %v407, %v425
  %427 = vmatmul.bf16.gmra.mxu0 %v142
  %v428 = vpop.f32.mrf.mxu0
  %v429 = vadd.f32 %v410, %v428
  %v430 = vpop.f32.mrf.mxu0
  %v431 = vadd.f32 %v412, %v430
  %432 = vdwg.mxu0
  %433 = vmatpush.bf16.msra.mxu0 %v328
  %434 = vmatpush.bf16.msra.mxu0 %v327
  %435 = vmatpush.bf16.msra.mxu0 %v326
  %436 = vmatpush.bf16.msra.mxu0 %v325
  %437 = vmatpush.bf16.msra.mxu0 %v324
  %438 = vmatpush.bf16.msra.mxu0 %v323
  %439 = vmatpush.bf16.msra.mxu0 %v322
  %440 = vmatpush.bf16.msra.mxu0 %v321
  %441 = vmatmul.bf16.gmra.mxu0 %v138
  %v442 = vpop.f32.mrf.mxu0
  %v443 = vadd.f32 %v424, %v442
  %v444 = vpop.f32.mrf.mxu0
  %v445 = vadd.f32 %v426, %v444
  %446 = vmatmul.bf16.gmra.mxu0 %v143
  %v447 = vpop.f32.mrf.mxu0
  %v448 = vadd.f32 %v429, %v447
  %v449 = vpop.f32.mrf.mxu0
  %v450 = vadd.f32 %v431, %v449
  %451 = vdwg.mxu0
  %452 = vmatpush.bf16.msra.mxu0 0
  %453 = vmatpush.bf16.msra.mxu0 0
  %454 = vmatpush.bf16.msra.mxu0 0
  %455 = vmatpush.bf16.msra.mxu0 0
  %456 = vmatpush.bf16.msra.mxu0 %v332
  %457 = vmatpush.bf16.msra.mxu0 %v331
  %458 = vmatpush.bf16.msra.mxu0 %v330
  %459 = vmatpush.bf16.msra.mxu0 %v329
  %460 = vmatmul.bf16.gmra.mxu0 %v371
  %v461 = vpop.f32.mrf.mxu0
  %v462 = vadd.f32 %v443, %v461
  %v463 = vpop.f32.mrf.mxu0
  %v464 = vadd.f32 %v445, %v463
  %465 = vmatmul.bf16.gmra.mxu0 %v374
  %v466 = vpop.f32.mrf.mxu0
  %v467 = vadd.f32 %v448, %v466
  %v468 = vpop.f32.mrf.mxu0
  %v469 = vadd.f32 %v450, %v468
  %470 = vdwg.mxu0
  %v471 = vmax.f32 %v462, 0.0
  %v472 = vmax.f32 %v464, 0.0
  %v473 = vmax.f32 %v467, 0.0
  %v474 = vmax.f32 %v469, 0.0
  %475 = vst [vmem:[%s3] sm:$0xff] %v471
  %476 = vst [vmem:[%s3 + $0x8] sm:$0xff] %v472
  %477 = vst [vmem:[%s3 + $0x10] sm:$0xff] %v473
  %478 = vst [vmem:[%s3 + $0x18] sm:$0xff] %v474
  // Predicated region
  $region14: #{vae_forward.12} parent=0 // pred_check
    _
  $region15: #{vae_forward.12} parent=0 // pred_check_branch
    %480 = sbr.rel (0) target = $region17
  $region16: #{vae_forward.12} parent=0 // pred_region
    _
  $region17: #{vae_forward.12} parent=0 // pred_fallthru
    _
  // Predicated region
  $region18: #{vae_forward.12} parent=0 // pred_check
    _
  $region19: #{vae_forward.12} parent=0 // pred_check_branch
    %482 = sbr.rel (0) target = $region21
  $region20: #{vae_forward.12} parent=0 // pred_region
    _
  $region21: #{vae_forward.12} parent=0 // pred_fallthru
    _

// kernel: vae_forward.14
$region0: #{vae_forward.14}
  #allocation0 [shape = 'u32[]', space=smem, size = 0x4, offset = 0x4, fixed_abs, tag = 'smem constant byte address 0x4 - core index']
  #allocation1 [shape = 'u32[72,128]{1,0:T(1,128)}', space=vmem, size = 0x9000, scoped, tag = 'internal scratch']
  %s0 = inlined_call_operand.vmem [shape: bf16[2,256], index: 0, kind: input, shape index: {}]
  %s1 = inlined_call_operand.vmem [shape: bf16[256,12], index: 1, kind: input, shape index: {}]
  %s2 = inlined_call_operand.vmem [shape: f32[1,12], index: 2, kind: input, shape index: {}]
  %s3 = inlined_call_operand.vmem [shape: bf16[256,12], index: 3, kind: input, shape index: {}]
  %s4 = inlined_call_operand.vmem [shape: f32[1,12], index: 4, kind: input, shape index: {}]
  %s5 = inlined_call_operand.vmem [shape: f32[2,12], index: 5, kind: input, shape index: {}]
  %s6 = inlined_call_operand.vmem [shape: bf16[12,256], index: 6, kind: input, shape index: {}]
  %s7 = inlined_call_operand.vmem [shape: f32[1,256], index: 7, kind: input, shape index: {}]
  %s8 = inlined_call_operand.hbm [shape: f32[2,12], index: 8, kind: output, shape index: {0}]
  %s9 = inlined_call_operand.hbm [shape: f32[2,12], index: 9, kind: output, shape index: {1}]
  %s10 = inlined_call_operand.vmem [shape: f32[2,256], index: 10, kind: output, shape index: {2}]
  %11 = xla_tuple %s8, %s9, %s10
  %s12 = sld [smem:[#allocation0]]
  $region58: #{vae_forward.14} parent=0
    _
  %s14 = ssub.s32 1, %s12
  %s15 = scalar_select 0, %s14, %s12
  $region1: #{vae_forward.14} parent=0
    #allocation2 [shape = 'u8[1024]{0}', space=vmem, size = 0x400, scoped, tag = 'output window, operand 0, single buffered']
    #allocation3 [shape = 's32[1]{0}', space=sflag, size = 0x4, scoped, tag = 'scoped memory for vae_forward.14']
    #allocation4 [shape = 'u8[1024]{0}', space=vmem, size = 0x400, scoped, tag = 'output window, operand 1, single buffered']
    #allocation5 [shape = 's32[1]{0}', space=sflag, size = 0x4, scoped, tag = 'scoped memory for vae_forward.14']
    %16 = vsyncpa [#allocation3], 0
    %17 = vsyncpa [#allocation5], 0
    // Predicated region
    $region2: #{vae_forward.14} parent=1 // pred_check
      _
    $region3: #{vae_forward.14} parent=1 // pred_check_branch
      %19 = sbr.rel (0) target = $region5
    $region4: #{vae_forward.14} parent=1 // pred_region
      _
    $region5: #{vae_forward.14} parent=1 // pred_fallthru
      _
    // Predicated region
    $region6: #{vae_forward.14} parent=1 // pred_check
      _
    $region7: #{vae_forward.14} parent=1 // pred_check_branch
      %21 = sbr.rel (0) target = $region9
    $region8: #{vae_forward.14} parent=1 // pred_region
      _
    $region9: #{vae_forward.14} parent=1 // pred_fallthru
      _
    // Predicated region
    $region10: #{vae_forward.14} parent=1 // pred_check
      _
    $region11: #{vae_forward.14} parent=1 // pred_check_branch
      %23 = sbr.rel (0) target = $region13
    $region12: #{vae_forward.14} parent=1 // pred_region
      _
    $region13: #{vae_forward.14} parent=1 // pred_fallthru
      _
    // Predicated region
    $region14: #{vae_forward.14} parent=1 // pred_check
      _
    $region15: #{vae_forward.14} parent=1 // pred_check_branch
      %25 = sbr.rel (0) target = $region17
    $region16: #{vae_forward.14} parent=1 // pred_region
      _
    $region17: #{vae_forward.14} parent=1 // pred_fallthru
      _
    // Predicated region
    $region18: #{vae_forward.14} parent=1 // pred_check
      _
    $region19: #{vae_forward.14} parent=1 // pred_check_branch
      %27 = sbr.rel (0) target = $region21
    $region20: #{vae_forward.14} parent=1 // pred_region
      _
    $region21: #{vae_forward.14} parent=1 // pred_fallthru
      _
    // Predicated region
    $region22: #{vae_forward.14} parent=1 // pred_check
      _
    $region23: #{vae_forward.14} parent=1 // pred_check_branch
      %29 = sbr.rel (0) target = $region25
    $region24: #{vae_forward.14} parent=1 // pred_region
      _
    $region25: #{vae_forward.14} parent=1 // pred_fallthru
      _
    // Predicated region
    $region26: #{vae_forward.14} parent=1 // pred_check
      _
    $region27: #{vae_forward.14} parent=1 // pred_check_branch
      %31 = sbr.rel (0) target = $region29
    $region28: #{vae_forward.14} parent=1 // pred_region
      _
    $region29: #{vae_forward.14} parent=1 // pred_fallthru
      _
    // Predicated region
    $region30: #{vae_forward.14} parent=1 // pred_check
      _
    $region31: #{vae_forward.14} parent=1 // pred_check_branch
      %33 = sbr.rel (0) target = $region33
    $region32: #{vae_forward.14} parent=1 // pred_region
      _
    $region33: #{vae_forward.14} parent=1 // pred_fallthru
      _
    %v35 = vld [vmem:[%s0] sm:$0x3]
    %v36 = vld [vmem:[%s1] sm:$0xf]
    %v37 = vld [vmem:[%s1 + $0x4] sm:$0xf]
    %v38 = vld [vmem:[%s1 + $0x8] sm:$0xf]
    %v39 = vld [vmem:[%s1 + $0xc] sm:$0xf]
    %v40 = vld [vmem:[%s1 + $0x10] sm:$0xf]
    %v41 = vld [vmem:[%s1 + $0x14] sm:$0xf]
    %v42 = vld [vmem:[%s1 + $0x18] sm:$0xf]
    %v43 = vld [vmem:[%s1 + $0x1c] sm:$0xf]
    %v44 = vld [vmem:[%s1 + $0x20] sm:$0xf]
    %v45 = vld [vmem:[%s1 + $0x24] sm:$0xf]
    %v46 = vld [vmem:[%s1 + $0x28] sm:$0xf]
    %v47 = vld [vmem:[%s1 + $0x2c] sm:$0xf]
    %v48 = vld [vmem:[%s1 + $0x30] sm:$0xf]
    %v49 = vld [vmem:[%s1 + $0x34] sm:$0xf]
    %v50 = vld [vmem:[%s1 + $0x38] sm:$0xf]
    %v51 = vld [vmem:[%s1 + $0x3c] sm:$0xf]
    %v52 = vld [vmem:[%s1 + $0x40] sm:$0xf]
    %v53 = vld [vmem:[%s1 + $0x44] sm:$0xf]
    %v54 = vld [vmem:[%s1 + $0x48] sm:$0xf]
    %v55 = vld [vmem:[%s1 + $0x4c] sm:$0xf]
    %v56 = vld [vmem:[%s1 + $0x50] sm:$0xf]
    %v57 = vld [vmem:[%s1 + $0x54] sm:$0xf]
    %v58 = vld [vmem:[%s1 + $0x58] sm:$0xf]
    %v59 = vld [vmem:[%s1 + $0x5c] sm:$0xf]
    %v60 = vld [vmem:[%s1 + $0x60] sm:$0xf]
    %v61 = vld [vmem:[%s1 + $0x64] sm:$0xf]
    %v62 = vld [vmem:[%s1 + $0x68] sm:$0xf]
    %v63 = vld [vmem:[%s1 + $0x6c] sm:$0xf]
    %v64 = vld [vmem:[%s1 + $0x70] sm:$0xf]
    %v65 = vld [vmem:[%s1 + $0x74] sm:$0xf]
    %v66 = vld [vmem:[%s1 + $0x78] sm:$0xf]
    %v67 = vld [vmem:[%s1 + $0x7c] sm:$0xf]
    %v68 = vld [vmem:[%s2] sm:$0x1]
    %v70 = vperm.slane %v68, 0
    %73 = vst [vmem:[#allocation1] ss:$9 sm:$0xff] %v35
    %v74 = vld [vmem:[#allocation1] sm:$0xff]
    %v75 = vld [vmem:[#allocation1 + $0x9] sm:$0xff]
    %v110 = vunpack.c.l.b16 %v36
    %v111 = vunpack.c.l.b16 %v37
    %v112 = vunpack.c.l.b16 %v38
    %v113 = vunpack.c.l.b16 %v39
    %v114 = vunpack.c.l.b16 %v40
    %v115 = vunpack.c.l.b16 %v41
    %v116 = vunpack.c.l.b16 %v42
    %v117 = vunpack.c.l.b16 %v43
    %v118 = vunpack.c.l.b16 %v44
    %v119 = vunpack.c.l.b16 %v45
    %v120 = vunpack.c.l.b16 %v46
    %v121 = vunpack.c.l.b16 %v47
    %v122 = vunpack.c.l.b16 %v48
    %v123 = vunpack.c.l.b16 %v49
    %v124 = vunpack.c.l.b16 %v50
    %v125 = vunpack.c.l.b16 %v51
    %v126 = vunpack.c.l.b16 %v52
    %v127 = vunpack.c.l.b16 %v53
    %v128 = vunpack.c.l.b16 %v54
    %v129 = vunpack.c.l.b16 %v55
    %v130 = vunpack.c.l.b16 %v56
    %v131 = vunpack.c.l.b16 %v57
    %v132 = vunpack.c.l.b16 %v58
    %v133 = vunpack.c.l.b16 %v59
    %v134 = vunpack.c.l.b16 %v60
    %v135 = vunpack.c.l.b16 %v61
    %v136 = vunpack.c.l.b16 %v62
    %v137 = vunpack.c.l.b16 %v63
    %v138 = vunpack.c.l.b16 %v64
    %v139 = vunpack.c.l.b16 %v65
    %v140 = vunpack.c.l.b16 %v66
    %v141 = vunpack.c.l.b16 %v67
    %v142 = vpack.c.b16 %v111, %v110
    %v143 = vpack.c.b16 %v113, %v112
    %v144 = vpack.c.b16 %v115, %v114
    %v145 = vpack.c.b16 %v117, %v116
    %v146 = vpack.c.b16 %v119, %v118
    %v147 = vpack.c.b16 %v121, %v120
    %v148 = vpack.c.b16 %v123, %v122
    %v149 = vpack.c.b16 %v125, %v124
    %v150 = vpack.c.b16 %v127, %v126
    %v151 = vpack.c.b16 %v129, %v128
    %v152 = vpack.c.b16 %v131, %v130
    %v153 = vpack.c.b16 %v133, %v132
    %v154 = vpack.c.b16 %v135, %v134
    %v155 = vpack.c.b16 %v137, %v136
    %v156 = vpack.c.b16 %v139, %v138
    %v157 = vpack.c.b16 %v141, %v140
    %174 = vmatpush.bf16.msra.mxu0 %v149
    %175 = vmatpush.bf16.msra.mxu0 %v148
    %176 = vmatpush.bf16.msra.mxu0 %v147
    %177 = vmatpush.bf16.msra.mxu0 %v146
    %178 = vmatpush.bf16.msra.mxu0 %v145
    %179 = vmatpush.bf16.msra.mxu0 %v144
    %180 = vmatpush.bf16.msra.mxu0 %v143
    %181 = vmatpush.bf16.msra.mxu0 %v142
    %182 = vmatmul.bf16.gmra.mxu0 %v74
    %v183 = vpop.f32.mrf.mxu0
    %v184 = vadd.f32 %v70, %v183
    %v185 = vpop.f32.mrf.mxu0
    %186 = vdwg.mxu0
    %187 = vmatpush.bf16.msra.mxu0 %v157
    %188 = vmatpush.bf16.msra.mxu0 %v156
    %189 = vmatpush.bf16.msra.mxu0 %v155
    %190 = vmatpush.bf16.msra.mxu0 %v154
    %191 = vmatpush.bf16.msra.mxu0 %v153
    %192 = vmatpush.bf16.msra.mxu0 %v152
    %193 = vmatpush.bf16.msra.mxu0 %v151
    %194 = vmatpush.bf16.msra.mxu0 %v150
    %195 = vmatmul.bf16.gmra.mxu0 %v75
    %v196 = vpop.f32.mrf.mxu0
    %v197 = vadd.f32 %v184, %v196
    %v198 = vpop.f32.mrf.mxu0
    %199 = vdwg.mxu0
    %v200 = vld [vmem:[%s3] sm:$0xf]
    %v201 = vld [vmem:[%s3 + $0x4] sm:$0xf]
    %v202 = vld [vmem:[%s3 + $0x8] sm:$0xf]
    %v203 = vld [vmem:[%s3 + $0xc] sm:$0xf]
    %v204 = vld [vmem:[%s3 + $0x10] sm:$0xf]
    %v205 = vld [vmem:[%s3 + $0x14] sm:$0xf]
    %v206 = vld [vmem:[%s3 + $0x18] sm:$0xf]
    %v207 = vld [vmem:[%s3 + $0x1c] sm:$0xf]
    %v208 = vld [vmem:[%s3 + $0x20] sm:$0xf]
    %v209 = vld [vmem:[%s3 + $0x24] sm:$0xf]
    %v210 = vld [vmem:[%s3 + $0x28] sm:$0xf]
    %v211 = vld [vmem:[%s3 + $0x2c] sm:$0xf]
    %v212 = vld [vmem:[%s3 + $0x30] sm:$0xf]
    %v213 = vld [vmem:[%s3 + $0x34] sm:$0xf]
    %v214 = vld [vmem:[%s3 + $0x38] sm:$0xf]
    %v215 = vld [vmem:[%s3 + $0x3c] sm:$0xf]
    %v216 = vld [vmem:[%s3 + $0x40] sm:$0xf]
    %v217 = vld [vmem:[%s3 + $0x44] sm:$0xf]
    %v218 = vld [vmem:[%s3 + $0x48] sm:$0xf]
    %v219 = vld [vmem:[%s3 + $0x4c] sm:$0xf]
    %v220 = vld [vmem:[%s3 + $0x50] sm:$0xf]
    %v221 = vld [vmem:[%s3 + $0x54] sm:$0xf]
    %v222 = vld [vmem:[%s3 + $0x58] sm:$0xf]
    %v223 = vld [vmem:[%s3 + $0x5c] sm:$0xf]
    %v224 = vld [vmem:[%s3 + $0x60] sm:$0xf]
    %v225 = vld [vmem:[%s3 + $0x64] sm:$0xf]
    %v226 = vld [vmem:[%s3 + $0x68] sm:$0xf]
    %v227 = vld [vmem:[%s3 + $0x6c] sm:$0xf]
    %v228 = vld [vmem:[%s3 + $0x70] sm:$0xf]
    %v229 = vld [vmem:[%s3 + $0x74] sm:$0xf]
    %v230 = vld [vmem:[%s3 + $0x78] sm:$0xf]
    %v231 = vld [vmem:[%s3 + $0x7c] sm:$0xf]
    %v232 = vld [vmem:[%s4] sm:$0x1]
    %v234 = vperm.slane %v232, 0
    %236 = vst [vmem:[#allocation1] ss:$9 sm:$0xff] %v35
    %v237 = vld [vmem:[#allocation1] sm:$0xff]
    %v238 = vld [vmem:[#allocation1 + $0x9] sm:$0xff]
    %v273 = vunpack.c.l.b16 %v200
    %v274 = vunpack.c.l.b16 %v201
    %v275 = vunpack.c.l.b16 %v202
    %v276 = vunpack.c.l.b16 %v203
    %v277 = vunpack.c.l.b16 %v204
    %v278 = vunpack.c.l.b16 %v205
    %v279 = vunpack.c.l.b16 %v206
    %v280 = vunpack.c.l.b16 %v207
    %v281 = vunpack.c.l.b16 %v208
    %v282 = vunpack.c.l.b16 %v209
    %v283 = vunpack.c.l.b16 %v210
    %v284 = vunpack.c.l.b16 %v211
    %v285 = vunpack.c.l.b16 %v212
    %v286 = vunpack.c.l.b16 %v213
    %v287 = vunpack.c.l.b16 %v214
    %v288 = vunpack.c.l.b16 %v215
    %v289 = vunpack.c.l.b16 %v216
    %v290 = vunpack.c.l.b16 %v217
    %v291 = vunpack.c.l.b16 %v218
    %v292 = vunpack.c.l.b16 %v219
    %v293 = vunpack.c.l.b16 %v220
    %v294 = vunpack.c.l.b16 %v221
    %v295 = vunpack.c.l.b16 %v222
    %v296 = vunpack.c.l.b16 %v223
    %v297 = vunpack.c.l.b16 %v224
    %v298 = vunpack.c.l.b16 %v225
    %v299 = vunpack.c.l.b16 %v226
    %v300 = vunpack.c.l.b16 %v227
    %v301 = vunpack.c.l.b16 %v228
    %v302 = vunpack.c.l.b16 %v229
    %v303 = vunpack.c.l.b16 %v230
    %v304 = vunpack.c.l.b16 %v231
    %v305 = vpack.c.b16 %v274, %v273
    %v306 = vpack.c.b16 %v276, %v275
    %v307 = vpack.c.b16 %v278, %v277
    %v308 = vpack.c.b16 %v280, %v279
    %v309 = vpack.c.b16 %v282, %v281
    %v310 = vpack.c.b16 %v284, %v283
    %v311 = vpack.c.b16 %v286, %v285
    %v312 = vpack.c.b16 %v288, %v287
    %v313 = vpack.c.b16 %v290, %v289
    %v314 = vpack.c.b16 %v292, %v291
    %v315 = vpack.c.b16 %v294, %v293
    %v316 = vpack.c.b16 %v296, %v295
    %v317 = vpack.c.b16 %v298, %v297
    %v318 = vpack.c.b16 %v300, %v299
    %v319 = vpack.c.b16 %v302, %v301
    %v320 = vpack.c.b16 %v304, %v303
    %337 = vmatpush.bf16.msra.mxu0 %v312
    %338 = vmatpush.bf16.msra.mxu0 %v311
    %339 = vmatpush.bf16.msra.mxu0 %v310
    %340 = vmatpush.bf16.msra.mxu0 %v309
    %341 = vmatpush.bf16.msra.mxu0 %v308
    %342 = vmatpush.bf16.msra.mxu0 %v307
    %343 = vmatpush.bf16.msra.mxu0 %v306
    %344 = vmatpush.bf16.msra.mxu0 %v305
    %345 = vmatmul.bf16.gmra.mxu0 %v237
    %v346 = vpop.f32.mrf.mxu0
    %v347 = vadd.f32 %v234, %v346
    %v348 = vpop.f32.mrf.mxu0
    %349 = vdwg.mxu0
    %350 = vmatpush.bf16.msra.mxu0 %v320
    %351 = vmatpush.bf16.msra.mxu0 %v319
    %352 = vmatpush.bf16.msra.mxu0 %v318
    %353 = vmatpush.bf16.msra.mxu0 %v317
    %354 = vmatpush.bf16.msra.mxu0 %v316
    %355 = vmatpush.bf16.msra.mxu0 %v315
    %356 = vmatpush.bf16.msra.mxu0 %v314
    %357 = vmatpush.bf16.msra.mxu0 %v313
    %358 = vmatmul.bf16.gmra.mxu0 %v238
    %v359 = vpop.f32.mrf.mxu0
    %v360 = vadd.f32 %v347, %v359
    %v361 = vpop.f32.mrf.mxu0
    %362 = vdwg.mxu0
    %v363 = vmul.f32 %v360, 0.5
    %v364 = vmul.f32 %v363, 1.442695
    %v365 = vpow.pop %v364
    %v366 = vld [vmem:[%s5] sm:$0x3]
    %v367 = vmul.f32 %v365, %v366
    %v368 = vadd.f32 %v197, %v367
    %v369 = vpack.c.bf16 %v368, %v368
    %v370 = vld [vmem:[%s6] sm:$0xff]
    %v371 = vld [vmem:[%s6 + $0x8] sm:$0x33]
    %v372 = vld [vmem:[%s7] sm:$0x3]
    %v374 = vperm.slane %v372, 0
    %v375 = vperm.slane %v372, 1
    %v380 = vunpack.c.l.b16 %v370
    %v381 = vunpack.c.h.b16 %v370
    %v382 = vunpack.c.l.b16 %v371
    %v383 = vunpack.c.h.b16 %v371
    %v384 = vpack.c.b16 %v382, %v380
    %v385 = vpack.c.b16 %v383, %v381
    %vm386 = vcmask 97280
    %v388 = vsel %vm386, %v369, 0
    %vm390 = vcmask 1045504
    %v392 = vsel %vm390, %v384, 0
    %v395 = vsel %vm390, %v385, 0
    %397 = vmatpush.bf16.msra.mxu0 0
    %398 = vmatpush.bf16.msra.mxu0 0
    %399 = vmatpush.bf16.msra.mxu0 0
    %400 = vmatpush.bf16.msra.mxu0 0
    %401 = vmatpush.bf16.msra.mxu0 0
    %402 = vmatpush.bf16.msra.mxu0 0
    %403 = vmatpush.bf16.msra.mxu0 0
    %404 = vmatpush.bf16.msra.mxu0 %v392
    %405 = vmatmul.bf16.gmra.mxu0 %v388
    %v406 = vpop.f32.mrf.mxu0
    %v407 = vadd.f32 %v374, %v406
    %v408 = vpop.f32.mrf.mxu0
    %409 = vdwg.mxu0
    %410 = vmatpush.bf16.msra.mxu0 0
    %411 = vmatpush.bf16.msra.mxu0 0
    %412 = vmatpush.bf16.msra.mxu0 0
    %413 = vmatpush.bf16.msra.mxu0 0
    %414 = vmatpush.bf16.msra.mxu0 0
    %415 = vmatpush.bf16.msra.mxu0 0
    %416 = vmatpush.bf16.msra.mxu0 0
    %417 = vmatpush.bf16.msra.mxu0 %v395
    %418 = vmatmul.bf16.gmra.mxu0 %v388
    %v419 = vpop.f32.mrf.mxu0
    %v420 = vadd.f32 %v375, %v419
    %v421 = vpop.f32.mrf.mxu0
    %422 = vdwg.mxu0
    %vm423 = vcmask 91136
    %424 = vst.msk [vmem:[#allocation2] sm:$0x3] %vm423, %v197
    %425 = vst.msk [vmem:[#allocation4] sm:$0x3] %vm423, %v360
    %v428 = vrot.slane %v420, 6
    %vm429 = vcmask 1041408
    %v430 = vsel %vm429, %v407, %v428
    %432 = vst [vmem:[%s10] sm:$0xf] %v430
    // Predicated region
    $region34: #{vae_forward.14} parent=1 // pred_check
      _
    $region35: #{vae_forward.14} parent=1 // pred_check_branch
      %434 = sbr.rel (0) target = $region37
    $region36: #{vae_forward.14} parent=1 // pred_region
      %436 = vsyncadd [#allocation3], 0
      %s438 = sshll.u32 [#allocation2], 4
      %s439 = int_to_ptr.vmem [resolvable:$true] %s438
      %s440 = sshll.u32 %s8, 4
      %s441 = int_to_ptr.hbm [resolvable:$true] %s440
      %443 = dma.vmem_to_hbm [thread:$0]  %s439, 32, %s441, [#allocation3]
    $region37: #{vae_forward.14} parent=1 // pred_fallthru
      _
    // Predicated region
    $region38: #{vae_forward.14} parent=1 // pred_check
      _
    $region39: #{vae_forward.14} parent=1 // pred_check_branch
      %445 = sbr.rel (0) target = $region41
    $region40: #{vae_forward.14} parent=1 // pred_region
      %447 = vsyncadd [#allocation5], 0
      %s449 = sshll.u32 [#allocation4], 4
      %s450 = int_to_ptr.vmem [resolvable:$true] %s449
      %s451 = sshll.u32 %s9, 4
      %s452 = int_to_ptr.hbm [resolvable:$true] %s451
      %454 = dma.vmem_to_hbm [thread:$0]  %s450, 32, %s452, [#allocation5]
    $region41: #{vae_forward.14} parent=1 // pred_fallthru
      _
    // Predicated region
    $region42: #{vae_forward.14} parent=1 // pred_check
      _
    $region43: #{vae_forward.14} parent=1 // pred_check_branch
      %456 = sbr.rel (0) target = $region45
    $region44: #{vae_forward.14} parent=1 // pred_region
      _
    $region45: #{vae_forward.14} parent=1 // pred_fallthru
      _
    // Predicated region
    $region46: #{vae_forward.14} parent=1 // pred_check
      _
    $region47: #{vae_forward.14} parent=1 // pred_check_branch
      %458 = sbr.rel (0) target = $region49
    $region48: #{vae_forward.14} parent=1 // pred_region
      %460 = dma.done [#allocation3], 32
    $region49: #{vae_forward.14} parent=1 // pred_fallthru
      _
    // Predicated region
    $region50: #{vae_forward.14} parent=1 // pred_check
      _
    $region51: #{vae_forward.14} parent=1 // pred_check_branch
      %462 = sbr.rel (0) target = $region53
    $region52: #{vae_forward.14} parent=1 // pred_region
      %464 = dma.done [#allocation5], 32
    $region53: #{vae_forward.14} parent=1 // pred_fallthru
      _
    // Predicated region
    $region54: #{vae_forward.14} parent=1 // pred_check
      _
    $region55: #{vae_forward.14} parent=1 // pred_check_branch
      %466 = sbr.rel (0) target = $region57
    $region56: #{vae_forward.14} parent=1 // pred_region
      _
    $region57: #{vae_forward.14} parent=1 // pred_fallthru
      _
    %467 = vsyncpa [#allocation3], 1
    %468 = vsyncpa [#allocation5], 1

// kernel: vae_forward.13
$region0: #{vae_forward.13}
  #allocation0 [shape = 'u32[]', space=smem, size = 0x4, offset = 0x4, fixed_abs, tag = 'smem constant byte address 0x4 - core index']
  #allocation1 [shape = 'u32[72,128]{1,0:T(1,128)}', space=vmem, size = 0x9000, scoped, tag = 'internal scratch']
  %s0 = inlined_call_operand.vmem [shape: bf16[2,2048], index: 0, kind: input, shape index: {}]
  %s1 = inlined_call_operand.vmem [shape: bf16[2048,256], index: 1, kind: input, shape index: {}]
  %s2 = inlined_call_operand.vmem [shape: f32[1,256], index: 2, kind: input, shape index: {}]
  %s3 = inlined_call_operand.vmem [shape: f32[2,256], index: 3, kind: output, shape index: {}]
  %s4 = sld [smem:[#allocation0]]
  $region22: #{vae_forward.13} parent=0
    _
  %s6 = ssub.s32 1, %s4
  %s7 = scalar_select 0, %s6, %s4
  // Predicated region
  $region2: #{vae_forward.13} parent=0 // pred_check
    _
  $region3: #{vae_forward.13} parent=0 // pred_check_branch
    %9 = sbr.rel (0) target = $region5
  $region4: #{vae_forward.13} parent=0 // pred_region
    _
  $region5: #{vae_forward.13} parent=0 // pred_fallthru
    _
  // Predicated region
  $region6: #{vae_forward.13} parent=0 // pred_check
    _
  $region7: #{vae_forward.13} parent=0 // pred_check_branch
    %11 = sbr.rel (0) target = $region9
  $region8: #{vae_forward.13} parent=0 // pred_region
    _
  $region9: #{vae_forward.13} parent=0 // pred_fallthru
    _
  // Predicated region
  $region10: #{vae_forward.13} parent=0 // pred_check
    _
  $region11: #{vae_forward.13} parent=0 // pred_check_branch
    %13 = sbr.rel (0) target = $region13
  $region12: #{vae_forward.13} parent=0 // pred_region
    _
  $region13: #{vae_forward.13} parent=0 // pred_fallthru
    _
  %v14 = vld [vmem:[%s0] sm:$0xff]
  %v15 = vld [vmem:[%s0 + $0x8] sm:$0xff]
  %v16 = vld [vmem:[%s1] sm:$0xff]
  %v17 = vld [vmem:[%s1 + $0x8] sm:$0xff]
  %v18 = vld [vmem:[%s1 + $0x10] sm:$0xff]
  %v19 = vld [vmem:[%s1 + $0x18] sm:$0xff]
  %v20 = vld [vmem:[%s1 + $0x20] sm:$0xff]
  %v21 = vld [vmem:[%s1 + $0x28] sm:$0xff]
  %v22 = vld [vmem:[%s1 + $0x30] sm:$0xff]
  %v23 = vld [vmem:[%s1 + $0x38] sm:$0xff]
  %v24 = vld [vmem:[%s1 + $0x40] sm:$0xff]
  %v25 = vld [vmem:[%s1 + $0x48] sm:$0xff]
  %v26 = vld [vmem:[%s1 + $0x50] sm:$0xff]
  %v27 = vld [vmem:[%s1 + $0x58] sm:$0xff]
  %v28 = vld [vmem:[%s1 + $0x60] sm:$0xff]
  %v29 = vld [vmem:[%s1 + $0x68] sm:$0xff]
  %v30 = vld [vmem:[%s1 + $0x70] sm:$0xff]
  %v31 = vld [vmem:[%s1 + $0x78] sm:$0xff]
  %v32 = vld [vmem:[%s1 + $0x80] sm:$0xff]
  %v33 = vld [vmem:[%s1 + $0x88] sm:$0xff]
  %v34 = vld [vmem:[%s1 + $0x90] sm:$0xff]
  %v35 = vld [vmem:[%s1 + $0x98] sm:$0xff]
  %v36 = vld [vmem:[%s1 + $0xa0] sm:$0xff]
  %v37 = vld [vmem:[%s1 + $0xa8] sm:$0xff]
  %v38 = vld [vmem:[%s1 + $0xb0] sm:$0xff]
  %v39 = vld [vmem:[%s1 + $0xb8] sm:$0xff]
  %v40 = vld [vmem:[%s1 + $0xc0] sm:$0xff]
  %v41 = vld [vmem:[%s1 + $0xc8] sm:$0xff]
  %v42 = vld [vmem:[%s1 + $0xd0] sm:$0xff]
  %v43 = vld [vmem:[%s1 + $0xd8] sm:$0xff]
  %v44 = vld [vmem:[%s1 + $0xe0] sm:$0xff]
  %v45 = vld [vmem:[%s1 + $0xe8] sm:$0xff]
  %v46 = vld [vmem:[%s1 + $0xf0] sm:$0xff]
  %v47 = vld [vmem:[%s1 + $0xf8] sm:$0xff]
  %v48 = vld [vmem:[%s1 + $0x100] sm:$0xff]
  %v49 = vld [vmem:[%s1 + $0x108] sm:$0xff]
  %v50 = vld [vmem:[%s1 + $0x110] sm:$0xff]
  %v51 = vld [vmem:[%s1 + $0x118] sm:$0xff]
  %v52 = vld [vmem:[%s1 + $0x120] sm:$0xff]
  %v53 = vld [vmem:[%s1 + $0x128] sm:$0xff]
  %v54 = vld [vmem:[%s1 + $0x130] sm:$0xff]
  %v55 = vld [vmem:[%s1 + $0x138] sm:$0xff]
  %v56 = vld [vmem:[%s1 + $0x140] sm:$0xff]
  %v57 = vld [vmem:[%s1 + $0x148] sm:$0xff]
  %v58 = vld [vmem:[%s1 + $0x150] sm:$0xff]
  %v59 = vld [vmem:[%s1 + $0x158] sm:$0xff]
  %v60 = vld [vmem:[%s1 + $0x160] sm:$0xff]
  %v61 = vld [vmem:[%s1 + $0x168] sm:$0xff]
  %v62 = vld [vmem:[%s1 + $0x170] sm:$0xff]
  %v63 = vld [vmem:[%s1 + $0x178] sm:$0xff]
  %v64 = vld [vmem:[%s1 + $0x180] sm:$0xff]
  %v65 = vld [vmem:[%s1 + $0x188] sm:$0xff]
  %v66 = vld [vmem:[%s1 + $0x190] sm:$0xff]
  %v67 = vld [vmem:[%s1 + $0x198] sm:$0xff]
  %v68 = vld [vmem:[%s1 + $0x1a0] sm:$0xff]
  %v69 = vld [vmem:[%s1 + $0x1a8] sm:$0xff]
  %v70 = vld [vmem:[%s1 + $0x1b0] sm:$0xff]
  %v71 = vld [vmem:[%s1 + $0x1b8] sm:$0xff]
  %v72 = vld [vmem:[%s1 + $0x1c0] sm:$0xff]
  %v73 = vld [vmem:[%s1 + $0x1c8] sm:$0xff]
  %v74 = vld [vmem:[%s1 + $0x1d0] sm:$0xff]
  %v75 = vld [vmem:[%s1 + $0x1d8] sm:$0xff]
  %v76 = vld [vmem:[%s1 + $0x1e0] sm:$0xff]
  %v77 = vld [vmem:[%s1 + $0x1e8] sm:$0xff]
  %v78 = vld [vmem:[%s1 + $0x1f0] sm:$0xff]
  %v79 = vld [vmem:[%s1 + $0x1f8] sm:$0xff]
  %v80 = vld [vmem:[%s1 + $0x200] sm:$0xff]
  %v81 = vld [vmem:[%s1 + $0x208] sm:$0xff]
  %v82 = vld [vmem:[%s1 + $0x210] sm:$0xff]
  %v83 = vld [vmem:[%s1 + $0x218] sm:$0xff]
  %v84 = vld [vmem:[%s1 + $0x220] sm:$0xff]
  %v85 = vld [vmem:[%s1 + $0x228] sm:$0xff]
  %v86 = vld [vmem:[%s1 + $0x230] sm:$0xff]
  %v87 = vld [vmem:[%s1 + $0x238] sm:$0xff]
  %v88 = vld [vmem:[%s1 + $0x240] sm:$0xff]
  %v89 = vld [vmem:[%s1 + $0x248] sm:$0xff]
  %v90 = vld [vmem:[%s1 + $0x250] sm:$0xff]
  %v91 = vld [vmem:[%s1 + $0x258] sm:$0xff]
  %v92 = vld [vmem:[%s1 + $0x260] sm:$0xff]
  %v93 = vld [vmem:[%s1 + $0x268] sm:$0xff]
  %v94 = vld [vmem:[%s1 + $0x270] sm:$0xff]
  %v95 = vld [vmem:[%s1 + $0x278] sm:$0xff]
  %v96 = vld [vmem:[%s1 + $0x280] sm:$0xff]
  %v97 = vld [vmem:[%s1 + $0x288] sm:$0xff]
  %v98 = vld [vmem:[%s1 + $0x290] sm:$0xff]
  %v99 = vld [vmem:[%s1 + $0x298] sm:$0xff]
  %v100 = vld [vmem:[%s1 + $0x2a0] sm:$0xff]
  %v101 = vld [vmem:[%s1 + $0x2a8] sm:$0xff]
  %v102 = vld [vmem:[%s1 + $0x2b0] sm:$0xff]
  %v103 = vld [vmem:[%s1 + $0x2b8] sm:$0xff]
  %v104 = vld [vmem:[%s1 + $0x2c0] sm:$0xff]
  %v105 = vld [vmem:[%s1 + $0x2c8] sm:$0xff]
  %v106 = vld [vmem:[%s1 + $0x2d0] sm:$0xff]
  %v107 = vld [vmem:[%s1 + $0x2d8] sm:$0xff]
  %v108 = vld [vmem:[%s1 + $0x2e0] sm:$0xff]
  %v109 = vld [vmem:[%s1 + $0x2e8] sm:$0xff]
  %v110 = vld [vmem:[%s1 + $0x2f0] sm:$0xff]
  %v111 = vld [vmem:[%s1 + $0x2f8] sm:$0xff]
  %v112 = vld [vmem:[%s1 + $0x300] sm:$0xff]
  %v113 = vld [vmem:[%s1 + $0x308] sm:$0xff]
  %v114 = vld [vmem:[%s1 + $0x310] sm:$0xff]
  %v115 = vld [vmem:[%s1 + $0x318] sm:$0xff]
  %v116 = vld [vmem:[%s1 + $0x320] sm:$0xff]
  %v117 = vld [vmem:[%s1 + $0x328] sm:$0xff]
  %v118 = vld [vmem:[%s1 + $0x330] sm:$0xff]
  %v119 = vld [vmem:[%s1 + $0x338] sm:$0xff]
  %v120 = vld [vmem:[%s1 + $0x340] sm:$0xff]
  %v121 = vld [vmem:[%s1 + $0x348] sm:$0xff]
  %v122 = vld [vmem:[%s1 + $0x350] sm:$0xff]
  %v123 = vld [vmem:[%s1 + $0x358] sm:$0xff]
  %v124 = vld [vmem:[%s1 + $0x360] sm:$0xff]
  %v125 = vld [vmem:[%s1 + $0x368] sm:$0xff]
  %v126 = vld [vmem:[%s1 + $0x370] sm:$0xff]
  %v127 = vld [vmem:[%s1 + $0x378] sm:$0xff]
  %v128 = vld [vmem:[%s1 + $0x380] sm:$0xff]
  %v129 = vld [vmem:[%s1 + $0x388] sm:$0xff]
  %v130 = vld [vmem:[%s1 + $0x390] sm:$0xff]
  %v131 = vld [vmem:[%s1 + $0x398] sm:$0xff]
  %v132 = vld [vmem:[%s1 + $0x3a0] sm:$0xff]
  %v133 = vld [vmem:[%s1 + $0x3a8] sm:$0xff]
  %v134 = vld [vmem:[%s1 + $0x3b0] sm:$0xff]
  %v135 = vld [vmem:[%s1 + $0x3b8] sm:$0xff]
  %v136 = vld [vmem:[%s1 + $0x3c0] sm:$0xff]
  %v137 = vld [vmem:[%s1 + $0x3c8] sm:$0xff]
  %v138 = vld [vmem:[%s1 + $0x3d0] sm:$0xff]
  %v139 = vld [vmem:[%s1 + $0x3d8] sm:$0xff]
  %v140 = vld [vmem:[%s1 + $0x3e0] sm:$0xff]
  %v141 = vld [vmem:[%s1 + $0x3e8] sm:$0xff]
  %v142 = vld [vmem:[%s1 + $0x3f0] sm:$0xff]
  %v143 = vld [vmem:[%s1 + $0x3f8] sm:$0xff]
  %v144 = vld [vmem:[%s1 + $0x400] sm:$0xff]
  %v145 = vld [vmem:[%s1 + $0x408] sm:$0xff]
  %v146 = vld [vmem:[%s1 + $0x410] sm:$0xff]
  %v147 = vld [vmem:[%s1 + $0x418] sm:$0xff]
  %v148 = vld [vmem:[%s1 + $0x420] sm:$0xff]
  %v149 = vld [vmem:[%s1 + $0x428] sm:$0xff]
  %v150 = vld [vmem:[%s1 + $0x430] sm:$0xff]
  %v151 = vld [vmem:[%s1 + $0x438] sm:$0xff]
  %v152 = vld [vmem:[%s1 + $0x440] sm:$0xff]
  %v153 = vld [vmem:[%s1 + $0x448] sm:$0xff]
  %v154 = vld [vmem:[%s1 + $0x450] sm:$0xff]
  %v155 = vld [vmem:[%s1 + $0x458] sm:$0xff]
  %v156 = vld [vmem:[%s1 + $0x460] sm:$0xff]
  %v157 = vld [vmem:[%s1 + $0x468] sm:$0xff]
  %v158 = vld [vmem:[%s1 + $0x470] sm:$0xff]
  %v159 = vld [vmem:[%s1 + $0x478] sm:$0xff]
  %v160 = vld [vmem:[%s1 + $0x480] sm:$0xff]
  %v161 = vld [vmem:[%s1 + $0x488] sm:$0xff]
  %v162 = vld [vmem:[%s1 + $0x490] sm:$0xff]
  %v163 = vld [vmem:[%s1 + $0x498] sm:$0xff]
  %v164 = vld [vmem:[%s1 + $0x4a0] sm:$0xff]
  %v165 = vld [vmem:[%s1 + $0x4a8] sm:$0xff]
  %v166 = vld [vmem:[%s1 + $0x4b0] sm:$0xff]
  %v167 = vld [vmem:[%s1 + $0x4b8] sm:$0xff]
  %v168 = vld [vmem:[%s1 + $0x4c0] sm:$0xff]
  %v169 = vld [vmem:[%s1 + $0x4c8] sm:$0xff]
  %v170 = vld [vmem:[%s1 + $0x4d0] sm:$0xff]
  %v171 = vld [vmem:[%s1 + $0x4d8] sm:$0xff]
  %v172 = vld [vmem:[%s1 + $0x4e0] sm:$0xff]
  %v173 = vld [vmem:[%s1 + $0x4e8] sm:$0xff]
  %v174 = vld [vmem:[%s1 + $0x4f0] sm:$0xff]
  %v175 = vld [vmem:[%s1 + $0x4f8] sm:$0xff]
  %v176 = vld [vmem:[%s1 + $0x500] sm:$0xff]
  %v177 = vld [vmem:[%s1 + $0x508] sm:$0xff]
  %v178 = vld [vmem:[%s1 + $0x510] sm:$0xff]
  %v179 = vld [vmem:[%s1 + $0x518] sm:$0xff]
  %v180 = vld [vmem:[%s1 + $0x520] sm:$0xff]
  %v181 = vld [vmem:[%s1 + $0x528] sm:$0xff]
  %v182 = vld [vmem:[%s1 + $0x530] sm:$0xff]
  %v183 = vld [vmem:[%s1 + $0x538] sm:$0xff]
  %v184 = vld [vmem:[%s1 + $0x540] sm:$0xff]
  %v185 = vld [vmem:[%s1 + $0x548] sm:$0xff]
  %v186 = vld [vmem:[%s1 + $0x550] sm:$0xff]
  %v187 = vld [vmem:[%s1 + $0x558] sm:$0xff]
  %v188 = vld [vmem:[%s1 + $0x560] sm:$0xff]
  %v189 = vld [vmem:[%s1 + $0x568] sm:$0xff]
  %v190 = vld [vmem:[%s1 + $0x570] sm:$0xff]
  %v191 = vld [vmem:[%s1 + $0x578] sm:$0xff]
  %v192 = vld [vmem:[%s1 + $0x580] sm:$0xff]
  %v193 = vld [vmem:[%s1 + $0x588] sm:$0xff]
  %v194 = vld [vmem:[%s1 + $0x590] sm:$0xff]
  %v195 = vld [vmem:[%s1 + $0x598] sm:$0xff]
  %v196 = vld [vmem:[%s1 + $0x5a0] sm:$0xff]
  %v197 = vld [vmem:[%s1 + $0x5a8] sm:$0xff]
  %v198 = vld [vmem:[%s1 + $0x5b0] sm:$0xff]
  %v199 = vld [vmem:[%s1 + $0x5b8] sm:$0xff]
  %v200 = vld [vmem:[%s1 + $0x5c0] sm:$0xff]
  %v201 = vld [vmem:[%s1 + $0x5c8] sm:$0xff]
  %v202 = vld [vmem:[%s1 + $0x5d0] sm:$0xff]
  %v203 = vld [vmem:[%s1 + $0x5d8] sm:$0xff]
  %v204 = vld [vmem:[%s1 + $0x5e0] sm:$0xff]
  %v205 = vld [vmem:[%s1 + $0x5e8] sm:$0xff]
  %v206 = vld [vmem:[%s1 + $0x5f0] sm:$0xff]
  %v207 = vld [vmem:[%s1 + $0x5f8] sm:$0xff]
  %v208 = vld [vmem:[%s1 + $0x600] sm:$0xff]
  %v209 = vld [vmem:[%s1 + $0x608] sm:$0xff]
  %v210 = vld [vmem:[%s1 + $0x610] sm:$0xff]
  %v211 = vld [vmem:[%s1 + $0x618] sm:$0xff]
  %v212 = vld [vmem:[%s1 + $0x620] sm:$0xff]
  %v213 = vld [vmem:[%s1 + $0x628] sm:$0xff]
  %v214 = vld [vmem:[%s1 + $0x630] sm:$0xff]
  %v215 = vld [vmem:[%s1 + $0x638] sm:$0xff]
  %v216 = vld [vmem:[%s1 + $0x640] sm:$0xff]
  %v217 = vld [vmem:[%s1 + $0x648] sm:$0xff]
  %v218 = vld [vmem:[%s1 + $0x650] sm:$0xff]
  %v219 = vld [vmem:[%s1 + $0x658] sm:$0xff]
  %v220 = vld [vmem:[%s1 + $0x660] sm:$0xff]
  %v221 = vld [vmem:[%s1 + $0x668] sm:$0xff]
  %v222 = vld [vmem:[%s1 + $0x670] sm:$0xff]
  %v223 = vld [vmem:[%s1 + $0x678] sm:$0xff]
  %v224 = vld [vmem:[%s1 + $0x680] sm:$0xff]
  %v225 = vld [vmem:[%s1 + $0x688] sm:$0xff]
  %v226 = vld [vmem:[%s1 + $0x690] sm:$0xff]
  %v227 = vld [vmem:[%s1 + $0x698] sm:$0xff]
  %v228 = vld [vmem:[%s1 + $0x6a0] sm:$0xff]
  %v229 = vld [vmem:[%s1 + $0x6a8] sm:$0xff]
  %v230 = vld [vmem:[%s1 + $0x6b0] sm:$0xff]
  %v231 = vld [vmem:[%s1 + $0x6b8] sm:$0xff]
  %v232 = vld [vmem:[%s1 + $0x6c0] sm:$0xff]
  %v233 = vld [vmem:[%s1 + $0x6c8] sm:$0xff]
  %v234 = vld [vmem:[%s1 + $0x6d0] sm:$0xff]
  %v235 = vld [vmem:[%s1 + $0x6d8] sm:$0xff]
  %v236 = vld [vmem:[%s1 + $0x6e0] sm:$0xff]
  %v237 = vld [vmem:[%s1 + $0x6e8] sm:$0xff]
  %v238 = vld [vmem:[%s1 + $0x6f0] sm:$0xff]
  %v239 = vld [vmem:[%s1 + $0x6f8] sm:$0xff]
  %v240 = vld [vmem:[%s1 + $0x700] sm:$0xff]
  %v241 = vld [vmem:[%s1 + $0x708] sm:$0xff]
  %v242 = vld [vmem:[%s1 + $0x710] sm:$0xff]
  %v243 = vld [vmem:[%s1 + $0x718] sm:$0xff]
  %v244 = vld [vmem:[%s1 + $0x720] sm:$0xff]
  %v245 = vld [vmem:[%s1 + $0x728] sm:$0xff]
  %v246 = vld [vmem:[%s1 + $0x730] sm:$0xff]
  %v247 = vld [vmem:[%s1 + $0x738] sm:$0xff]
  %v248 = vld [vmem:[%s1 + $0x740] sm:$0xff]
  %v249 = vld [vmem:[%s1 + $0x748] sm:$0xff]
  %v250 = vld [vmem:[%s1 + $0x750] sm:$0xff]
  %v251 = vld [vmem:[%s1 + $0x758] sm:$0xff]
  %v252 = vld [vmem:[%s1 + $0x760] sm:$0xff]
  %v253 = vld [vmem:[%s1 + $0x768] sm:$0xff]
  %v254 = vld [vmem:[%s1 + $0x770] sm:$0xff]
  %v255 = vld [vmem:[%s1 + $0x778] sm:$0xff]
  %v256 = vld [vmem:[%s1 + $0x780] sm:$0xff]
  %v257 = vld [vmem:[%s1 + $0x788] sm:$0xff]
  %v258 = vld [vmem:[%s1 + $0x790] sm:$0xff]
  %v259 = vld [vmem:[%s1 + $0x798] sm:$0xff]
  %v260 = vld [vmem:[%s1 + $0x7a0] sm:$0xff]
  %v261 = vld [vmem:[%s1 + $0x7a8] sm:$0xff]
  %v262 = vld [vmem:[%s1 + $0x7b0] sm:$0xff]
  %v263 = vld [vmem:[%s1 + $0x7b8] sm:$0xff]
  %v264 = vld [vmem:[%s1 + $0x7c0] sm:$0xff]
  %v265 = vld [vmem:[%s1 + $0x7c8] sm:$0xff]
  %v266 = vld [vmem:[%s1 + $0x7d0] sm:$0xff]
  %v267 = vld [vmem:[%s1 + $0x7d8] sm:$0xff]
  %v268 = vld [vmem:[%s1 + $0x7e0] sm:$0xff]
  %v269 = vld [vmem:[%s1 + $0x7e8] sm:$0xff]
  %v270 = vld [vmem:[%s1 + $0x7f0] sm:$0xff]
  %v271 = vld [vmem:[%s1 + $0x7f8] sm:$0xff]
  %v272 = vld [vmem:[%s2] sm:$0x3]
  %v274 = vperm.slane %v272, 0
  %v275 = vperm.slane %v272, 1
  %279 = vst [vmem:[#allocation1] ss:$9 sm:$0xff] %v14
  %v280 = vld [vmem:[#allocation1] sm:$0xff]
  %v281 = vld [vmem:[#allocation1 + $0x9] sm:$0xff]
  %v282 = vld [vmem:[#allocation1 + $0x12] sm:$0xff]
  %v283 = vld [vmem:[#allocation1 + $0x1b] sm:$0xff]
  %v284 = vld [vmem:[#allocation1 + $0x24] sm:$0xff]
  %v285 = vld [vmem:[#allocation1 + $0x2d] sm:$0xff]
  %v286 = vld [vmem:[#allocation1 + $0x36] sm:$0xff]
  %v287 = vld [vmem:[#allocation1 + $0x3f] sm:$0xff]
  %289 = vst [vmem:[#allocation1] ss:$9 sm:$0xff] %v15
  %v290 = vld [vmem:[#allocation1] sm:$0xff]
  %v291 = vld [vmem:[#allocation1 + $0x9] sm:$0xff]
  %v292 = vld [vmem:[#allocation1 + $0x12] sm:$0xff]
  %v293 = vld [vmem:[#allocation1 + $0x1b] sm:$0xff]
  %v294 = vld [vmem:[#allocation1 + $0x24] sm:$0xff]
  %v295 = vld [vmem:[#allocation1 + $0x2d] sm:$0xff]
  %v296 = vld [vmem:[#allocation1 + $0x36] sm:$0xff]
  %v297 = vld [vmem:[#allocation1 + $0x3f] sm:$0xff]
  %v570 = vunpack.c.l.b16 %v16
  %v571 = vunpack.c.h.b16 %v16
  %v572 = vunpack.c.l.b16 %v17
  %v573 = vunpack.c.h.b16 %v17
  %v574 = vunpack.c.l.b16 %v18
  %v575 = vunpack.c.h.b16 %v18
  %v576 = vunpack.c.l.b16 %v19
  %v577 = vunpack.c.h.b16 %v19
  %v578 = vunpack.c.l.b16 %v20
  %v579 = vunpack.c.h.b16 %v20
  %v580 = vunpack.c.l.b16 %v21
  %v581 = vunpack.c.h.b16 %v21
  %v582 = vunpack.c.l.b16 %v22
  %v583 = vunpack.c.h.b16 %v22
  %v584 = vunpack.c.l.b16 %v23
  %v585 = vunpack.c.h.b16 %v23
  %v586 = vunpack.c.l.b16 %v24
  %v587 = vunpack.c.h.b16 %v24
  %v588 = vunpack.c.l.b16 %v25
  %v589 = vunpack.c.h.b16 %v25
  %v590 = vunpack.c.l.b16 %v26
  %v591 = vunpack.c.h.b16 %v26
  %v592 = vunpack.c.l.b16 %v27
  %v593 = vunpack.c.h.b16 %v27
  %v594 = vunpack.c.l.b16 %v28
  %v595 = vunpack.c.h.b16 %v28
  %v596 = vunpack.c.l.b16 %v29
  %v597 = vunpack.c.h.b16 %v29
  %v598 = vunpack.c.l.b16 %v30
  %v599 = vunpack.c.h.b16 %v30
  %v600 = vunpack.c.l.b16 %v31
  %v601 = vunpack.c.h.b16 %v31
  %v602 = vunpack.c.l.b16 %v32
  %v603 = vunpack.c.h.b16 %v32
  %v604 = vunpack.c.l.b16 %v33
  %v605 = vunpack.c.h.b16 %v33
  %v606 = vunpack.c.l.b16 %v34
  %v607 = vunpack.c.h.b16 %v34
  %v608 = vunpack.c.l.b16 %v35
  %v609 = vunpack.c.h.b16 %v35
  %v610 = vunpack.c.l.b16 %v36
  %v611 = vunpack.c.h.b16 %v36
  %v612 = vunpack.c.l.b16 %v37
  %v613 = vunpack.c.h.b16 %v37
  %v614 = vunpack.c.l.b16 %v38
  %v615 = vunpack.c.h.b16 %v38
  %v616 = vunpack.c.l.b16 %v39
  %v617 = vunpack.c.h.b16 %v39
  %v618 = vunpack.c.l.b16 %v40
  %v619 = vunpack.c.h.b16 %v40
  %v620 = vunpack.c.l.b16 %v41
  %v621 = vunpack.c.h.b16 %v41
  %v622 = vunpack.c.l.b16 %v42
  %v623 = vunpack.c.h.b16 %v42
  %v624 = vunpack.c.l.b16 %v43
  %v625 = vunpack.c.h.b16 %v43
  %v626 = vunpack.c.l.b16 %v44
  %v627 = vunpack.c.h.b16 %v44
  %v628 = vunpack.c.l.b16 %v45
  %v629 = vunpack.c.h.b16 %v45
  %v630 = vunpack.c.l.b16 %v46
  %v631 = vunpack.c.h.b16 %v46
  %v632 = vunpack.c.l.b16 %v47
  %v633 = vunpack.c.h.b16 %v47
  %v634 = vunpack.c.l.b16 %v48
  %v635 = vunpack.c.h.b16 %v48
  %v636 = vunpack.c.l.b16 %v49
  %v637 = vunpack.c.h.b16 %v49
  %v638 = vunpack.c.l.b16 %v50
  %v639 = vunpack.c.h.b16 %v50
  %v640 = vunpack.c.l.b16 %v51
  %v641 = vunpack.c.h.b16 %v51
  %v642 = vunpack.c.l.b16 %v52
  %v643 = vunpack.c.h.b16 %v52
  %v644 = vunpack.c.l.b16 %v53
  %v645 = vunpack.c.h.b16 %v53
  %v646 = vunpack.c.l.b16 %v54
  %v647 = vunpack.c.h.b16 %v54
  %v648 = vunpack.c.l.b16 %v55
  %v649 = vunpack.c.h.b16 %v55
  %v650 = vunpack.c.l.b16 %v56
  %v651 = vunpack.c.h.b16 %v56
  %v652 = vunpack.c.l.b16 %v57
  %v653 = vunpack.c.h.b16 %v57
  %v654 = vunpack.c.l.b16 %v58
  %v655 = vunpack.c.h.b16 %v58
  %v656 = vunpack.c.l.b16 %v59
  %v657 = vunpack.c.h.b16 %v59
  %v658 = vunpack.c.l.b16 %v60
  %v659 = vunpack.c.h.b16 %v60
  %v660 = vunpack.c.l.b16 %v61
  %v661 = vunpack.c.h.b16 %v61
  %v662 = vunpack.c.l.b16 %v62
  %v663 = vunpack.c.h.b16 %v62
  %v664 = vunpack.c.l.b16 %v63
  %v665 = vunpack.c.h.b16 %v63
  %v666 = vunpack.c.l.b16 %v64
  %v667 = vunpack.c.h.b16 %v64
  %v668 = vunpack.c.l.b16 %v65
  %v669 = vunpack.c.h.b16 %v65
  %v670 = vunpack.c.l.b16 %v66
  %v671 = vunpack.c.h.b16 %v66
  %v672 = vunpack.c.l.b16 %v67
  %v673 = vunpack.c.h.b16 %v67
  %v674 = vunpack.c.l.b16 %v68
  %v675 = vunpack.c.h.b16 %v68
  %v676 = vunpack.c.l.b16 %v69
  %v677 = vunpack.c.h.b16 %v69
  %v678 = vunpack.c.l.b16 %v70
  %v679 = vunpack.c.h.b16 %v70
  %v680 = vunpack.c.l.b16 %v71
  %v681 = vunpack.c.h.b16 %v71
  %v682 = vunpack.c.l.b16 %v72
  %v683 = vunpack.c.h.b16 %v72
  %v684 = vunpack.c.l.b16 %v73
  %v685 = vunpack.c.h.b16 %v73
  %v686 = vunpack.c.l.b16 %v74
  %v687 = vunpack.c.h.b16 %v74
  %v688 = vunpack.c.l.b16 %v75
  %v689 = vunpack.c.h.b16 %v75
  %v690 = vunpack.c.l.b16 %v76
  %v691 = vunpack.c.h.b16 %v76
  %v692 = vunpack.c.l.b16 %v77
  %v693 = vunpack.c.h.b16 %v77
  %v694 = vunpack.c.l.b16 %v78
  %v695 = vunpack.c.h.b16 %v78
  %v696 = vunpack.c.l.b16 %v79
  %v697 = vunpack.c.h.b16 %v79
  %v698 = vunpack.c.l.b16 %v80
  %v699 = vunpack.c.h.b16 %v80
  %v700 = vunpack.c.l.b16 %v81
  %v701 = vunpack.c.h.b16 %v81
  %v702 = vunpack.c.l.b16 %v82
  %v703 = vunpack.c.h.b16 %v82
  %v704 = vunpack.c.l.b16 %v83
  %v705 = vunpack.c.h.b16 %v83
  %v706 = vunpack.c.l.b16 %v84
  %v707 = vunpack.c.h.b16 %v84
  %v708 = vunpack.c.l.b16 %v85
  %v709 = vunpack.c.h.b16 %v85
  %v710 = vunpack.c.l.b16 %v86
  %v711 = vunpack.c.h.b16 %v86
  %v712 = vunpack.c.l.b16 %v87
  %v713 = vunpack.c.h.b16 %v87
  %v714 = vunpack.c.l.b16 %v88
  %v715 = vunpack.c.h.b16 %v88
  %v716 = vunpack.c.l.b16 %v89
  %v717 = vunpack.c.h.b16 %v89
  %v718 = vunpack.c.l.b16 %v90
  %v719 = vunpack.c.h.b16 %v90
  %v720 = vunpack.c.l.b16 %v91
  %v721 = vunpack.c.h.b16 %v91
  %v722 = vunpack.c.l.b16 %v92
  %v723 = vunpack.c.h.b16 %v92
  %v724 = vunpack.c.l.b16 %v93
  %v725 = vunpack.c.h.b16 %v93
  %v726 = vunpack.c.l.b16 %v94
  %v727 = vunpack.c.h.b16 %v94
  %v728 = vunpack.c.l.b16 %v95
  %v729 = vunpack.c.h.b16 %v95
  %v730 = vunpack.c.l.b16 %v96
  %v731 = vunpack.c.h.b16 %v96
  %v732 = vunpack.c.l.b16 %v97
  %v733 = vunpack.c.h.b16 %v97
  %v734 = vunpack.c.l.b16 %v98
  %v735 = vunpack.c.h.b16 %v98
  %v736 = vunpack.c.l.b16 %v99
  %v737 = vunpack.c.h.b16 %v99
  %v738 = vunpack.c.l.b16 %v100
  %v739 = vunpack.c.h.b16 %v100
  %v740 = vunpack.c.l.b16 %v101
  %v741 = vunpack.c.h.b16 %v101
  %v742 = vunpack.c.l.b16 %v102
  %v743 = vunpack.c.h.b16 %v102
  %v744 = vunpack.c.l.b16 %v103
  %v745 = vunpack.c.h.b16 %v103
  %v746 = vunpack.c.l.b16 %v104
  %v747 = vunpack.c.h.b16 %v104
  %v748 = vunpack.c.l.b16 %v105
  %v749 = vunpack.c.h.b16 %v105
  %v750 = vunpack.c.l.b16 %v106
  %v751 = vunpack.c.h.b16 %v106
  %v752 = vunpack.c.l.b16 %v107
  %v753 = vunpack.c.h.b16 %v107
  %v754 = vunpack.c.l.b16 %v108
  %v755 = vunpack.c.h.b16 %v108
  %v756 = vunpack.c.l.b16 %v109
  %v757 = vunpack.c.h.b16 %v109
  %v758 = vunpack.c.l.b16 %v110
  %v759 = vunpack.c.h.b16 %v110
  %v760 = vunpack.c.l.b16 %v111
  %v761 = vunpack.c.h.b16 %v111
  %v762 = vunpack.c.l.b16 %v112
  %v763 = vunpack.c.h.b16 %v112
  %v764 = vunpack.c.l.b16 %v113
  %v765 = vunpack.c.h.b16 %v113
  %v766 = vunpack.c.l.b16 %v114
  %v767 = vunpack.c.h.b16 %v114
  %v768 = vunpack.c.l.b16 %v115
  %v769 = vunpack.c.h.b16 %v115
  %v770 = vunpack.c.l.b16 %v116
  %v771 = vunpack.c.h.b16 %v116
  %v772 = vunpack.c.l.b16 %v117
  %v773 = vunpack.c.h.b16 %v117
  %v774 = vunpack.c.l.b16 %v118
  %v775 = vunpack.c.h.b16 %v118
  %v776 = vunpack.c.l.b16 %v119
  %v777 = vunpack.c.h.b16 %v119
  %v778 = vunpack.c.l.b16 %v120
  %v779 = vunpack.c.h.b16 %v120
  %v780 = vunpack.c.l.b16 %v121
  %v781 = vunpack.c.h.b16 %v121
  %v782 = vunpack.c.l.b16 %v122
  %v783 = vunpack.c.h.b16 %v122
  %v784 = vunpack.c.l.b16 %v123
  %v785 = vunpack.c.h.b16 %v123
  %v786 = vunpack.c.l.b16 %v124
  %v787 = vunpack.c.h.b16 %v124
  %v788 = vunpack.c.l.b16 %v125
  %v789 = vunpack.c.h.b16 %v125
  %v790 = vunpack.c.l.b16 %v126
  %v791 = vunpack.c.h.b16 %v126
  %v792 = vunpack.c.l.b16 %v127
  %v793 = vunpack.c.h.b16 %v127
  %v794 = vunpack.c.l.b16 %v128
  %v795 = vunpack.c.h.b16 %v128
  %v796 = vunpack.c.l.b16 %v129
  %v797 = vunpack.c.h.b16 %v129
  %v798 = vunpack.c.l.b16 %v130
  %v799 = vunpack.c.h.b16 %v130
  %v800 = vunpack.c.l.b16 %v131
  %v801 = vunpack.c.h.b16 %v131
  %v802 = vunpack.c.l.b16 %v132
  %v803 = vunpack.c.h.b16 %v132
  %v804 = vunpack.c.l.b16 %v133
  %v805 = vunpack.c.h.b16 %v133
  %v806 = vunpack.c.l.b16 %v134
  %v807 = vunpack.c.h.b16 %v134
  %v808 = vunpack.c.l.b16 %v135
  %v809 = vunpack.c.h.b16 %v135
  %v810 = vunpack.c.l.b16 %v136
  %v811 = vunpack.c.h.b16 %v136
  %v812 = vunpack.c.l.b16 %v137
  %v813 = vunpack.c.h.b16 %v137
  %v814 = vunpack.c.l.b16 %v138
  %v815 = vunpack.c.h.b16 %v138
  %v816 = vunpack.c.l.b16 %v139
  %v817 = vunpack.c.h.b16 %v139
  %v818 = vunpack.c.l.b16 %v140
  %v819 = vunpack.c.h.b16 %v140
  %v820 = vunpack.c.l.b16 %v141
  %v821 = vunpack.c.h.b16 %v141
  %v822 = vunpack.c.l.b16 %v142
  %v823 = vunpack.c.h.b16 %v142
  %v824 = vunpack.c.l.b16 %v143
  %v825 = vunpack.c.h.b16 %v143
  %v826 = vunpack.c.l.b16 %v144
  %v827 = vunpack.c.h.b16 %v144
  %v828 = vunpack.c.l.b16 %v145
  %v829 = vunpack.c.h.b16 %v145
  %v830 = vunpack.c.l.b16 %v146
  %v831 = vunpack.c.h.b16 %v146
  %v832 = vunpack.c.l.b16 %v147
  %v833 = vunpack.c.h.b16 %v147
  %v834 = vunpack.c.l.b16 %v148
  %v835 = vunpack.c.h.b16 %v148
  %v836 = vunpack.c.l.b16 %v149
  %v837 = vunpack.c.h.b16 %v149
  %v838 = vunpack.c.l.b16 %v150
  %v839 = vunpack.c.h.b16 %v150
  %v840 = vunpack.c.l.b16 %v151
  %v841 = vunpack.c.h.b16 %v151
  %v842 = vunpack.c.l.b16 %v152
  %v843 = vunpack.c.h.b16 %v152
  %v844 = vunpack.c.l.b16 %v153
  %v845 = vunpack.c.h.b16 %v153
  %v846 = vunpack.c.l.b16 %v154
  %v847 = vunpack.c.h.b16 %v154
  %v848 = vunpack.c.l.b16 %v155
  %v849 = vunpack.c.h.b16 %v155
  %v850 = vunpack.c.l.b16 %v156
  %v851 = vunpack.c.h.b16 %v156
  %v852 = vunpack.c.l.b16 %v157
  %v853 = vunpack.c.h.b16 %v157
  %v854 = vunpack.c.l.b16 %v158
  %v855 = vunpack.c.h.b16 %v158
  %v856 = vunpack.c.l.b16 %v159
  %v857 = vunpack.c.h.b16 %v159
  %v858 = vunpack.c.l.b16 %v160
  %v859 = vunpack.c.h.b16 %v160
  %v860 = vunpack.c.l.b16 %v161
  %v861 = vunpack.c.h.b16 %v161
  %v862 = vunpack.c.l.b16 %v162
  %v863 = vunpack.c.h.b16 %v162
  %v864 = vunpack.c.l.b16 %v163
  %v865 = vunpack.c.h.b16 %v163
  %v866 = vunpack.c.l.b16 %v164
  %v867 = vunpack.c.h.b16 %v164
  %v868 = vunpack.c.l.b16 %v165
  %v869 = vunpack.c.h.b16 %v165
  %v870 = vunpack.c.l.b16 %v166
  %v871 = vunpack.c.h.b16 %v166
  %v872 = vunpack.c.l.b16 %v167
  %v873 = vunpack.c.h.b16 %v167
  %v874 = vunpack.c.l.b16 %v168
  %v875 = vunpack.c.h.b16 %v168
  %v876 = vunpack.c.l.b16 %v169
  %v877 = vunpack.c.h.b16 %v169
  %v878 = vunpack.c.l.b16 %v170
  %v879 = vunpack.c.h.b16 %v170
  %v880 = vunpack.c.l.b16 %v171
  %v881 = vunpack.c.h.b16 %v171
  %v882 = vunpack.c.l.b16 %v172
  %v883 = vunpack.c.h.b16 %v172
  %v884 = vunpack.c.l.b16 %v173
  %v885 = vunpack.c.h.b16 %v173
  %v886 = vunpack.c.l.b16 %v174
  %v887 = vunpack.c.h.b16 %v174
  %v888 = vunpack.c.l.b16 %v175
  %v889 = vunpack.c.h.b16 %v175
  %v890 = vunpack.c.l.b16 %v176
  %v891 = vunpack.c.h.b16 %v176
  %v892 = vunpack.c.l.b16 %v177
  %v893 = vunpack.c.h.b16 %v177
  %v894 = vunpack.c.l.b16 %v178
  %v895 = vunpack.c.h.b16 %v178
  %v896 = vunpack.c.l.b16 %v179
  %v897 = vunpack.c.h.b16 %v179
  %v898 = vunpack.c.l.b16 %v180
  %v899 = vunpack.c.h.b16 %v180
  %v900 = vunpack.c.l.b16 %v181
  %v901 = vunpack.c.h.b16 %v181
  %v902 = vunpack.c.l.b16 %v182
  %v903 = vunpack.c.h.b16 %v182
  %v904 = vunpack.c.l.b16 %v183
  %v905 = vunpack.c.h.b16 %v183
  %v906 = vunpack.c.l.b16 %v184
  %v907 = vunpack.c.h.b16 %v184
  %v908 = vunpack.c.l.b16 %v185
  %v909 = vunpack.c.h.b16 %v185
  %v910 = vunpack.c.l.b16 %v186
  %v911 = vunpack.c.h.b16 %v186
  %v912 = vunpack.c.l.b16 %v187
  %v913 = vunpack.c.h.b16 %v187
  %v914 = vunpack.c.l.b16 %v188
  %v915 = vunpack.c.h.b16 %v188
  %v916 = vunpack.c.l.b16 %v189
  %v917 = vunpack.c.h.b16 %v189
  %v918 = vunpack.c.l.b16 %v190
  %v919 = vunpack.c.h.b16 %v190
  %v920 = vunpack.c.l.b16 %v191
  %v921 = vunpack.c.h.b16 %v191
  %v922 = vunpack.c.l.b16 %v192
  %v923 = vunpack.c.h.b16 %v192
  %v924 = vunpack.c.l.b16 %v193
  %v925 = vunpack.c.h.b16 %v193
  %v926 = vunpack.c.l.b16 %v194
  %v927 = vunpack.c.h.b16 %v194
  %v928 = vunpack.c.l.b16 %v195
  %v929 = vunpack.c.h.b16 %v195
  %v930 = vunpack.c.l.b16 %v196
  %v931 = vunpack.c.h.b16 %v196
  %v932 = vunpack.c.l.b16 %v197
  %v933 = vunpack.c.h.b16 %v197
  %v934 = vunpack.c.l.b16 %v198
  %v935 = vunpack.c.h.b16 %v198
  %v936 = vunpack.c.l.b16 %v199
  %v937 = vunpack.c.h.b16 %v199
  %v938 = vunpack.c.l.b16 %v200
  %v939 = vunpack.c.h.b16 %v200
  %v940 = vunpack.c.l.b16 %v201
  %v941 = vunpack.c.h.b16 %v201
  %v942 = vunpack.c.l.b16 %v202
  %v943 = vunpack.c.h.b16 %v202
  %v944 = vunpack.c.l.b16 %v203
  %v945 = vunpack.c.h.b16 %v203
  %v946 = vunpack.c.l.b16 %v204
  %v947 = vunpack.c.h.b16 %v204
  %v948 = vunpack.c.l.b16 %v205
  %v949 = vunpack.c.h.b16 %v205
  %v950 = vunpack.c.l.b16 %v206
  %v951 = vunpack.c.h.b16 %v206
  %v952 = vunpack.c.l.b16 %v207
  %v953 = vunpack.c.h.b16 %v207
  %v954 = vunpack.c.l.b16 %v208
  %v955 = vunpack.c.h.b16 %v208
  %v956 = vunpack.c.l.b16 %v209
  %v957 = vunpack.c.h.b16 %v209
  %v958 = vunpack.c.l.b16 %v210
  %v959 = vunpack.c.h.b16 %v210
  %v960 = vunpack.c.l.b16 %v211
  %v961 = vunpack.c.h.b16 %v211
  %v962 = vunpack.c.l.b16 %v212
  %v963 = vunpack.c.h.b16 %v212
  %v964 = vunpack.c.l.b16 %v213
  %v965 = vunpack.c.h.b16 %v213
  %v966 = vunpack.c.l.b16 %v214
  %v967 = vunpack.c.h.b16 %v214
  %v968 = vunpack.c.l.b16 %v215
  %v969 = vunpack.c.h.b16 %v215
  %v970 = vunpack.c.l.b16 %v216
  %v971 = vunpack.c.h.b16 %v216
  %v972 = vunpack.c.l.b16 %v217
  %v973 = vunpack.c.h.b16 %v217
  %v974 = vunpack.c.l.b16 %v218
  %v975 = vunpack.c.h.b16 %v218
  %v976 = vunpack.c.l.b16 %v219
  %v977 = vunpack.c.h.b16 %v219
  %v978 = vunpack.c.l.b16 %v220
  %v979 = vunpack.c.h.b16 %v220
  %v980 = vunpack.c.l.b16 %v221
  %v981 = vunpack.c.h.b16 %v221
  %v982 = vunpack.c.l.b16 %v222
  %v983 = vunpack.c.h.b16 %v222
  %v984 = vunpack.c.l.b16 %v223
  %v985 = vunpack.c.h.b16 %v223
  %v986 = vunpack.c.l.b16 %v224
  %v987 = vunpack.c.h.b16 %v224
  %v988 = vunpack.c.l.b16 %v225
  %v989 = vunpack.c.h.b16 %v225
  %v990 = vunpack.c.l.b16 %v226
  %v991 = vunpack.c.h.b16 %v226
  %v992 = vunpack.c.l.b16 %v227
  %v993 = vunpack.c.h.b16 %v227
  %v994 = vunpack.c.l.b16 %v228
  %v995 = vunpack.c.h.b16 %v228
  %v996 = vunpack.c.l.b16 %v229
  %v997 = vunpack.c.h.b16 %v229
  %v998 = vunpack.c.l.b16 %v230
  %v999 = vunpack.c.h.b16 %v230
  %v1000 = vunpack.c.l.b16 %v231
  %v1001 = vunpack.c.h.b16 %v231
  %v1002 = vunpack.c.l.b16 %v232
  %v1003 = vunpack.c.h.b16 %v232
  %v1004 = vunpack.c.l.b16 %v233
  %v1005 = vunpack.c.h.b16 %v233
  %v1006 = vunpack.c.l.b16 %v234
  %v1007 = vunpack.c.h.b16 %v234
  %v1008 = vunpack.c.l.b16 %v235
  %v1009 = vunpack.c.h.b16 %v235
  %v1010 = vunpack.c.l.b16 %v236
  %v1011 = vunpack.c.h.b16 %v236
  %v1012 = vunpack.c.l.b16 %v237
  %v1013 = vunpack.c.h.b16 %v237
  %v1014 = vunpack.c.l.b16 %v238
  %v1015 = vunpack.c.h.b16 %v238
  %v1016 = vunpack.c.l.b16 %v239
  %v1017 = vunpack.c.h.b16 %v239
  %v1018 = vunpack.c.l.b16 %v240
  %v1019 = vunpack.c.h.b16 %v240
  %v1020 = vunpack.c.l.b16 %v241
  %v1021 = vunpack.c.h.b16 %v241
  %v1022 = vunpack.c.l.b16 %v242
  %v1023 = vunpack.c.h.b16 %v242
  %v1024 = vunpack.c.l.b16 %v243
  %v1025 = vunpack.c.h.b16 %v243
  %v1026 = vunpack.c.l.b16 %v244
  %v1027 = vunpack.c.h.b16 %v244
  %v1028 = vunpack.c.l.b16 %v245
  %v1029 = vunpack.c.h.b16 %v245
  %v1030 = vunpack.c.l.b16 %v246
  %v1031 = vunpack.c.h.b16 %v246
  %v1032 = vunpack.c.l.b16 %v247
  %v1033 = vunpack.c.h.b16 %v247
  %v1034 = vunpack.c.l.b16 %v248
  %v1035 = vunpack.c.h.b16 %v248
  %v1036 = vunpack.c.l.b16 %v249
  %v1037 = vunpack.c.h.b16 %v249
  %v1038 = vunpack.c.l.b16 %v250
  %v1039 = vunpack.c.h.b16 %v250
  %v1040 = vunpack.c.l.b16 %v251
  %v1041 = vunpack.c.h.b16 %v251
  %v1042 = vunpack.c.l.b16 %v252
  %v1043 = vunpack.c.h.b16 %v252
  %v1044 = vunpack.c.l.b16 %v253
  %v1045 = vunpack.c.h.b16 %v253
  %v1046 = vunpack.c.l.b16 %v254
  %v1047 = vunpack.c.h.b16 %v254
  %v1048 = vunpack.c.l.b16 %v255
  %v1049 = vunpack.c.h.b16 %v255
  %v1050 = vunpack.c.l.b16 %v256
  %v1051 = vunpack.c.h.b16 %v256
  %v1052 = vunpack.c.l.b16 %v257
  %v1053 = vunpack.c.h.b16 %v257
  %v1054 = vunpack.c.l.b16 %v258
  %v1055 = vunpack.c.h.b16 %v258
  %v1056 = vunpack.c.l.b16 %v259
  %v1057 = vunpack.c.h.b16 %v259
  %v1058 = vunpack.c.l.b16 %v260
  %v1059 = vunpack.c.h.b16 %v260
  %v1060 = vunpack.c.l.b16 %v261
  %v1061 = vunpack.c.h.b16 %v261
  %v1062 = vunpack.c.l.b16 %v262
  %v1063 = vunpack.c.h.b16 %v262
  %v1064 = vunpack.c.l.b16 %v263
  %v1065 = vunpack.c.h.b16 %v263
  %v1066 = vunpack.c.l.b16 %v264
  %v1067 = vunpack.c.h.b16 %v264
  %v1068 = vunpack.c.l.b16 %v265
  %v1069 = vunpack.c.h.b16 %v265
  %v1070 = vunpack.c.l.b16 %v266
  %v1071 = vunpack.c.h.b16 %v266
  %v1072 = vunpack.c.l.b16 %v267
  %v1073 = vunpack.c.h.b16 %v267
  %v1074 = vunpack.c.l.b16 %v268
  %v1075 = vunpack.c.h.b16 %v268
  %v1076 = vunpack.c.l.b16 %v269
  %v1077 = vunpack.c.h.b16 %v269
  %v1078 = vunpack.c.l.b16 %v270
  %v1079 = vunpack.c.h.b16 %v270
  %v1080 = vunpack.c.l.b16 %v271
  %v1081 = vunpack.c.h.b16 %v271
  %v1082 = vpack.c.b16 %v572, %v570
  %v1083 = vpack.c.b16 %v573, %v571
  %v1084 = vpack.c.b16 %v576, %v574
  %v1085 = vpack.c.b16 %v577, %v575
  %v1086 = vpack.c.b16 %v580, %v578
  %v1087 = vpack.c.b16 %v581, %v579
  %v1088 = vpack.c.b16 %v584, %v582
  %v1089 = vpack.c.b16 %v585, %v583
  %v1090 = vpack.c.b16 %v588, %v586
  %v1091 = vpack.c.b16 %v589, %v587
  %v1092 = vpack.c.b16 %v592, %v590
  %v1093 = vpack.c.b16 %v593, %v591
  %v1094 = vpack.c.b16 %v596, %v594
  %v1095 = vpack.c.b16 %v597, %v595
  %v1096 = vpack.c.b16 %v600, %v598
  %v1097 = vpack.c.b16 %v601, %v599
  %v1098 = vpack.c.b16 %v604, %v602
  %v1099 = vpack.c.b16 %v605, %v603
  %v1100 = vpack.c.b16 %v608, %v606
  %v1101 = vpack.c.b16 %v609, %v607
  %v1102 = vpack.c.b16 %v612, %v610
  %v1103 = vpack.c.b16 %v613, %v611
  %v1104 = vpack.c.b16 %v616, %v614
  %v1105 = vpack.c.b16 %v617, %v615
  %v1106 = vpack.c.b16 %v620, %v618
  %v1107 = vpack.c.b16 %v621, %v619
  %v1108 = vpack.c.b16 %v624, %v622
  %v1109 = vpack.c.b16 %v625, %v623
  %v1110 = vpack.c.b16 %v628, %v626
  %v1111 = vpack.c.b16 %v629, %v627
  %v1112 = vpack.c.b16 %v632, %v630
  %v1113 = vpack.c.b16 %v633, %v631
  %v1114 = vpack.c.b16 %v636, %v634
  %v1115 = vpack.c.b16 %v637, %v635
  %v1116 = vpack.c.b16 %v640, %v638
  %v1117 = vpack.c.b16 %v641, %v639
  %v1118 = vpack.c.b16 %v644, %v642
  %v1119 = vpack.c.b16 %v645, %v643
  %v1120 = vpack.c.b16 %v648, %v646
  %v1121 = vpack.c.b16 %v649, %v647
  %v1122 = vpack.c.b16 %v652, %v650
  %v1123 = vpack.c.b16 %v653, %v651
  %v1124 = vpack.c.b16 %v656, %v654
  %v1125 = vpack.c.b16 %v657, %v655
  %v1126 = vpack.c.b16 %v660, %v658
  %v1127 = vpack.c.b16 %v661, %v659
  %v1128 = vpack.c.b16 %v664, %v662
  %v1129 = vpack.c.b16 %v665, %v663
  %v1130 = vpack.c.b16 %v668, %v666
  %v1131 = vpack.c.b16 %v669, %v667
  %v1132 = vpack.c.b16 %v672, %v670
  %v1133 = vpack.c.b16 %v673, %v671
  %v1134 = vpack.c.b16 %v676, %v674
  %v1135 = vpack.c.b16 %v677, %v675
  %v1136 = vpack.c.b16 %v680, %v678
  %v1137 = vpack.c.b16 %v681, %v679
  %v1138 = vpack.c.b16 %v684, %v682
  %v1139 = vpack.c.b16 %v685, %v683
  %v1140 = vpack.c.b16 %v688, %v686
  %v1141 = vpack.c.b16 %v689, %v687
  %v1142 = vpack.c.b16 %v692, %v690
  %v1143 = vpack.c.b16 %v693, %v691
  %v1144 = vpack.c.b16 %v696, %v694
  %v1145 = vpack.c.b16 %v697, %v695
  %v1146 = vpack.c.b16 %v700, %v698
  %v1147 = vpack.c.b16 %v701, %v699
  %v1148 = vpack.c.b16 %v704, %v702
  %v1149 = vpack.c.b16 %v705, %v703
  %v1150 = vpack.c.b16 %v708, %v706
  %v1151 = vpack.c.b16 %v709, %v707
  %v1152 = vpack.c.b16 %v712, %v710
  %v1153 = vpack.c.b16 %v713, %v711
  %v1154 = vpack.c.b16 %v716, %v714
  %v1155 = vpack.c.b16 %v717, %v715
  %v1156 = vpack.c.b16 %v720, %v718
  %v1157 = vpack.c.b16 %v721, %v719
  %v1158 = vpack.c.b16 %v724, %v722
  %v1159 = vpack.c.b16 %v725, %v723
  %v1160 = vpack.c.b16 %v728, %v726
  %v1161 = vpack.c.b16 %v729, %v727
  %v1162 = vpack.c.b16 %v732, %v730
  %v1163 = vpack.c.b16 %v733, %v731
  %v1164 = vpack.c.b16 %v736, %v734
  %v1165 = vpack.c.b16 %v737, %v735
  %v1166 = vpack.c.b16 %v740, %v738
  %v1167 = vpack.c.b16 %v741, %v739
  %v1168 = vpack.c.b16 %v744, %v742
  %v1169 = vpack.c.b16 %v745, %v743
  %v1170 = vpack.c.b16 %v748, %v746
  %v1171 = vpack.c.b16 %v749, %v747
  %v1172 = vpack.c.b16 %v752, %v750
  %v1173 = vpack.c.b16 %v753, %v751
  %v1174 = vpack.c.b16 %v756, %v754
  %v1175 = vpack.c.b16 %v757, %v755
  %v1176 = vpack.c.b16 %v760, %v758
  %v1177 = vpack.c.b16 %v761, %v759
  %v1178 = vpack.c.b16 %v764, %v762
  %v1179 = vpack.c.b16 %v765, %v763
  %v1180 = vpack.c.b16 %v768, %v766
  %v1181 = vpack.c.b16 %v769, %v767
  %v1182 = vpack.c.b16 %v772, %v770
  %v1183 = vpack.c.b16 %v773, %v771
  %v1184 = vpack.c.b16 %v776, %v774
  %v1185 = vpack.c.b16 %v777, %v775
  %v1186 = vpack.c.b16 %v780, %v778
  %v1187 = vpack.c.b16 %v781, %v779
  %v1188 = vpack.c.b16 %v784, %v782
  %v1189 = vpack.c.b16 %v785, %v783
  %v1190 = vpack.c.b16 %v788, %v786
  %v1191 = vpack.c.b16 %v789, %v787
  %v1192 = vpack.c.b16 %v792, %v790
  %v1193 = vpack.c.b16 %v793, %v791
  %v1194 = vpack.c.b16 %v796, %v794
  %v1195 = vpack.c.b16 %v797, %v795
  %v1196 = vpack.c.b16 %v800, %v798
  %v1197 = vpack.c.b16 %v801, %v799
  %v1198 = vpack.c.b16 %v804, %v802
  %v1199 = vpack.c.b16 %v805, %v803
  %v1200 = vpack.c.b16 %v808, %v806
  %v1201 = vpack.c.b16 %v809, %v807
  %v1202 = vpack.c.b16 %v812, %v810
  %v1203 = vpack.c.b16 %v813, %v811
  %v1204 = vpack.c.b16 %v816, %v814
  %v1205 = vpack.c.b16 %v817, %v815
  %v1206 = vpack.c.b16 %v820, %v818
  %v1207 = vpack.c.b16 %v821, %v819
  %v1208 = vpack.c.b16 %v824, %v822
  %v1209 = vpack.c.b16 %v825, %v823
  %v1210 = vpack.c.b16 %v828, %v826
  %v1211 = vpack.c.b16 %v829, %v827
  %v1212 = vpack.c.b16 %v832, %v830
  %v1213 = vpack.c.b16 %v833, %v831
  %v1214 = vpack.c.b16 %v836, %v834
  %v1215 = vpack.c.b16 %v837, %v835
  %v1216 = vpack.c.b16 %v840, %v838
  %v1217 = vpack.c.b16 %v841, %v839
  %v1218 = vpack.c.b16 %v844, %v842
  %v1219 = vpack.c.b16 %v845, %v843
  %v1220 = vpack.c.b16 %v848, %v846
  %v1221 = vpack.c.b16 %v849, %v847
  %v1222 = vpack.c.b16 %v852, %v850
  %v1223 = vpack.c.b16 %v853, %v851
  %v1224 = vpack.c.b16 %v856, %v854
  %v1225 = vpack.c.b16 %v857, %v855
  %v1226 = vpack.c.b16 %v860, %v858
  %v1227 = vpack.c.b16 %v861, %v859
  %v1228 = vpack.c.b16 %v864, %v862
  %v1229 = vpack.c.b16 %v865, %v863
  %v1230 = vpack.c.b16 %v868, %v866
  %v1231 = vpack.c.b16 %v869, %v867
  %v1232 = vpack.c.b16 %v872, %v870
  %v1233 = vpack.c.b16 %v873, %v871
  %v1234 = vpack.c.b16 %v876, %v874
  %v1235 = vpack.c.b16 %v877, %v875
  %v1236 = vpack.c.b16 %v880, %v878
  %v1237 = vpack.c.b16 %v881, %v879
  %v1238 = vpack.c.b16 %v884, %v882
  %v1239 = vpack.c.b16 %v885, %v883
  %v1240 = vpack.c.b16 %v888, %v886
  %v1241 = vpack.c.b16 %v889, %v887
  %v1242 = vpack.c.b16 %v892, %v890
  %v1243 = vpack.c.b16 %v893, %v891
  %v1244 = vpack.c.b16 %v896, %v894
  %v1245 = vpack.c.b16 %v897, %v895
  %v1246 = vpack.c.b16 %v900, %v898
  %v1247 = vpack.c.b16 %v901, %v899
  %v1248 = vpack.c.b16 %v904, %v902
  %v1249 = vpack.c.b16 %v905, %v903
  %v1250 = vpack.c.b16 %v908, %v906
  %v1251 = vpack.c.b16 %v909, %v907
  %v1252 = vpack.c.b16 %v912, %v910
  %v1253 = vpack.c.b16 %v913, %v911
  %v1254 = vpack.c.b16 %v916, %v914
  %v1255 = vpack.c.b16 %v917, %v915
  %v1256 = vpack.c.b16 %v920, %v918
  %v1257 = vpack.c.b16 %v921, %v919
  %v1258 = vpack.c.b16 %v924, %v922
  %v1259 = vpack.c.b16 %v925, %v923
  %v1260 = vpack.c.b16 %v928, %v926
  %v1261 = vpack.c.b16 %v929, %v927
  %v1262 = vpack.c.b16 %v932, %v930
  %v1263 = vpack.c.b16 %v933, %v931
  %v1264 = vpack.c.b16 %v936, %v934
  %v1265 = vpack.c.b16 %v937, %v935
  %v1266 = vpack.c.b16 %v940, %v938
  %v1267 = vpack.c.b16 %v941, %v939
  %v1268 = vpack.c.b16 %v944, %v942
  %v1269 = vpack.c.b16 %v945, %v943
  %v1270 = vpack.c.b16 %v948, %v946
  %v1271 = vpack.c.b16 %v949, %v947
  %v1272 = vpack.c.b16 %v952, %v950
  %v1273 = vpack.c.b16 %v953, %v951
  %v1274 = vpack.c.b16 %v956, %v954
  %v1275 = vpack.c.b16 %v957, %v955
  %v1276 = vpack.c.b16 %v960, %v958
  %v1277 = vpack.c.b16 %v961, %v959
  %v1278 = vpack.c.b16 %v964, %v962
  %v1279 = vpack.c.b16 %v965, %v963
  %v1280 = vpack.c.b16 %v968, %v966
  %v1281 = vpack.c.b16 %v969, %v967
  %v1282 = vpack.c.b16 %v972, %v970
  %v1283 = vpack.c.b16 %v973, %v971
  %v1284 = vpack.c.b16 %v976, %v974
  %v1285 = vpack.c.b16 %v977, %v975
  %v1286 = vpack.c.b16 %v980, %v978
  %v1287 = vpack.c.b16 %v981, %v979
  %v1288 = vpack.c.b16 %v984, %v982
  %v1289 = vpack.c.b16 %v985, %v983
  %v1290 = vpack.c.b16 %v988, %v986
  %v1291 = vpack.c.b16 %v989, %v987
  %v1292 = vpack.c.b16 %v992, %v990
  %v1293 = vpack.c.b16 %v993, %v991
  %v1294 = vpack.c.b16 %v996, %v994
  %v1295 = vpack.c.b16 %v997, %v995
  %v1296 = vpack.c.b16 %v1000, %v998
  %v1297 = vpack.c.b16 %v1001, %v999
  %v1298 = vpack.c.b16 %v1004, %v1002
  %v1299 = vpack.c.b16 %v1005, %v1003
  %v1300 = vpack.c.b16 %v1008, %v1006
  %v1301 = vpack.c.b16 %v1009, %v1007
  %v1302 = vpack.c.b16 %v1012, %v1010
  %v1303 = vpack.c.b16 %v1013, %v1011
  %v1304 = vpack.c.b16 %v1016, %v1014
  %v1305 = vpack.c.b16 %v1017, %v1015
  %v1306 = vpack.c.b16 %v1020, %v1018
  %v1307 = vpack.c.b16 %v1021, %v1019
  %v1308 = vpack.c.b16 %v1024, %v1022
  %v1309 = vpack.c.b16 %v1025, %v1023
  %v1310 = vpack.c.b16 %v1028, %v1026
  %v1311 = vpack.c.b16 %v1029, %v1027
  %v1312 = vpack.c.b16 %v1032, %v1030
  %v1313 = vpack.c.b16 %v1033, %v1031
  %v1314 = vpack.c.b16 %v1036, %v1034
  %v1315 = vpack.c.b16 %v1037, %v1035
  %v1316 = vpack.c.b16 %v1040, %v1038
  %v1317 = vpack.c.b16 %v1041, %v1039
  %v1318 = vpack.c.b16 %v1044, %v1042
  %v1319 = vpack.c.b16 %v1045, %v1043
  %v1320 = vpack.c.b16 %v1048, %v1046
  %v1321 = vpack.c.b16 %v1049, %v1047
  %v1322 = vpack.c.b16 %v1052, %v1050
  %v1323 = vpack.c.b16 %v1053, %v1051
  %v1324 = vpack.c.b16 %v1056, %v1054
  %v1325 = vpack.c.b16 %v1057, %v1055
  %v1326 = vpack.c.b16 %v1060, %v1058
  %v1327 = vpack.c.b16 %v1061, %v1059
  %v1328 = vpack.c.b16 %v1064, %v1062
  %v1329 = vpack.c.b16 %v1065, %v1063
  %v1330 = vpack.c.b16 %v1068, %v1066
  %v1331 = vpack.c.b16 %v1069, %v1067
  %v1332 = vpack.c.b16 %v1072, %v1070
  %v1333 = vpack.c.b16 %v1073, %v1071
  %v1334 = vpack.c.b16 %v1076, %v1074
  %v1335 = vpack.c.b16 %v1077, %v1075
  %v1336 = vpack.c.b16 %v1080, %v1078
  %v1337 = vpack.c.b16 %v1081, %v1079
  %1594 = vmatpush.bf16.msra.mxu0 %v1096
  %1595 = vmatpush.bf16.msra.mxu0 %v1094
  %1596 = vmatpush.bf16.msra.mxu0 %v1092
  %1597 = vmatpush.bf16.msra.mxu0 %v1090
  %1598 = vmatpush.bf16.msra.mxu0 %v1088
  %1599 = vmatpush.bf16.msra.mxu0 %v1086
  %1600 = vmatpush.bf16.msra.mxu0 %v1084
  %1601 = vmatpush.bf16.msra.mxu0 %v1082
  %1602 = vmatmul.bf16.gmra.mxu0 %v280
  %v1603 = vpop.f32.mrf.mxu0
  %v1604 = vadd.f32 %v274, %v1603
  %v1605 = vpop.f32.mrf.mxu0
  %1606 = vdwg.mxu0
  %1607 = vmatpush.bf16.msra.mxu0 %v1112
  %1608 = vmatpush.bf16.msra.mxu0 %v1110
  %1609 = vmatpush.bf16.msra.mxu0 %v1108
  %1610 = vmatpush.bf16.msra.mxu0 %v1106
  %1611 = vmatpush.bf16.msra.mxu0 %v1104
  %1612 = vmatpush.bf16.msra.mxu0 %v1102
  %1613 = vmatpush.bf16.msra.mxu0 %v1100
  %1614 = vmatpush.bf16.msra.mxu0 %v1098
  %1615 = vmatmul.bf16.gmra.mxu0 %v281
  %v1616 = vpop.f32.mrf.mxu0
  %v1617 = vadd.f32 %v1604, %v1616
  %v1618 = vpop.f32.mrf.mxu0
  %1619 = vdwg.mxu0
  %1620 = vmatpush.bf16.msra.mxu0 %v1128
  %1621 = vmatpush.bf16.msra.mxu0 %v1126
  %1622 = vmatpush.bf16.msra.mxu0 %v1124
  %1623 = vmatpush.bf16.msra.mxu0 %v1122
  %1624 = vmatpush.bf16.msra.mxu0 %v1120
  %1625 = vmatpush.bf16.msra.mxu0 %v1118
  %1626 = vmatpush.bf16.msra.mxu0 %v1116
  %1627 = vmatpush.bf16.msra.mxu0 %v1114
  %1628 = vmatmul.bf16.gmra.mxu0 %v282
  %v1629 = vpop.f32.mrf.mxu0
  %v1630 = vadd.f32 %v1617, %v1629
  %v1631 = vpop.f32.mrf.mxu0
  %1632 = vdwg.mxu0
  %1633 = vmatpush.bf16.msra.mxu0 %v1144
  %1634 = vmatpush.bf16.msra.mxu0 %v1142
  %1635 = vmatpush.bf16.msra.mxu0 %v1140
  %1636 = vmatpush.bf16.msra.mxu0 %v1138
  %1637 = vmatpush.bf16.msra.mxu0 %v1136
  %1638 = vmatpush.bf16.msra.mxu0 %v1134
  %1639 = vmatpush.bf16.msra.mxu0 %v1132
  %1640 = vmatpush.bf16.msra.mxu0 %v1130
  %1641 = vmatmul.bf16.gmra.mxu0 %v283
  %v1642 = vpop.f32.mrf.mxu0
  %v1643 = vadd.f32 %v1630, %v1642
  %v1644 = vpop.f32.mrf.mxu0
  %1645 = vdwg.mxu0
  %1646 = vmatpush.bf16.msra.mxu0 %v1160
  %1647 = vmatpush.bf16.msra.mxu0 %v1158
  %1648 = vmatpush.bf16.msra.mxu0 %v1156
  %1649 = vmatpush.bf16.msra.mxu0 %v1154
  %1650 = vmatpush.bf16.msra.mxu0 %v1152
  %1651 = vmatpush.bf16.msra.mxu0 %v1150
  %1652 = vmatpush.bf16.msra.mxu0 %v1148
  %1653 = vmatpush.bf16.msra.mxu0 %v1146
  %1654 = vmatmul.bf16.gmra.mxu0 %v284
  %v1655 = vpop.f32.mrf.mxu0
  %v1656 = vadd.f32 %v1643, %v1655
  %v1657 = vpop.f32.mrf.mxu0
  %1658 = vdwg.mxu0
  %1659 = vmatpush.bf16.msra.mxu0 %v1176
  %1660 = vmatpush.bf16.msra.mxu0 %v1174
  %1661 = vmatpush.bf16.msra.mxu0 %v1172
  %1662 = vmatpush.bf16.msra.mxu0 %v1170
  %1663 = vmatpush.bf16.msra.mxu0 %v1168
  %1664 = vmatpush.bf16.msra.mxu0 %v1166
  %1665 = vmatpush.bf16.msra.mxu0 %v1164
  %1666 = vmatpush.bf16.msra.mxu0 %v1162
  %1667 = vmatmul.bf16.gmra.mxu0 %v285
  %v1668 = vpop.f32.mrf.mxu0
  %v1669 = vadd.f32 %v1656, %v1668
  %v1670 = vpop.f32.mrf.mxu0
  %1671 = vdwg.mxu0
  %1672 = vmatpush.bf16.msra.mxu0 %v1192
  %1673 = vmatpush.bf16.msra.mxu0 %v1190
  %1674 = vmatpush.bf16.msra.mxu0 %v1188
  %1675 = vmatpush.bf16.msra.mxu0 %v1186
  %1676 = vmatpush.bf16.msra.mxu0 %v1184
  %1677 = vmatpush.bf16.msra.mxu0 %v1182
  %1678 = vmatpush.bf16.msra.mxu0 %v1180
  %1679 = vmatpush.bf16.msra.mxu0 %v1178
  %1680 = vmatmul.bf16.gmra.mxu0 %v286
  %v1681 = vpop.f32.mrf.mxu0
  %v1682 = vadd.f32 %v1669, %v1681
  %v1683 = vpop.f32.mrf.mxu0
  %1684 = vdwg.mxu0
  %1685 = vmatpush.bf16.msra.mxu0 %v1208
  %1686 = vmatpush.bf16.msra.mxu0 %v1206
  %1687 = vmatpush.bf16.msra.mxu0 %v1204
  %1688 = vmatpush.bf16.msra.mxu0 %v1202
  %1689 = vmatpush.bf16.msra.mxu0 %v1200
  %1690 = vmatpush.bf16.msra.mxu0 %v1198
  %1691 = vmatpush.bf16.msra.mxu0 %v1196
  %1692 = vmatpush.bf16.msra.mxu0 %v1194
  %1693 = vmatmul.bf16.gmra.mxu0 %v287
  %v1694 = vpop.f32.mrf.mxu0
  %v1695 = vadd.f32 %v1682, %v1694
  %v1696 = vpop.f32.mrf.mxu0
  %1697 = vdwg.mxu0
  %1698 = vmatpush.bf16.msra.mxu0 %v1224
  %1699 = vmatpush.bf16.msra.mxu0 %v1222
  %1700 = vmatpush.bf16.msra.mxu0 %v1220
  %1701 = vmatpush.bf16.msra.mxu0 %v1218
  %1702 = vmatpush.bf16.msra.mxu0 %v1216
  %1703 = vmatpush.bf16.msra.mxu0 %v1214
  %1704 = vmatpush.bf16.msra.mxu0 %v1212
  %1705 = vmatpush.bf16.msra.mxu0 %v1210
  %1706 = vmatmul.bf16.gmra.mxu0 %v290
  %v1707 = vpop.f32.mrf.mxu0
  %v1708 = vadd.f32 %v1695, %v1707
  %v1709 = vpop.f32.mrf.mxu0
  %1710 = vdwg.mxu0
  %1711 = vmatpush.bf16.msra.mxu0 %v1240
  %1712 = vmatpush.bf16.msra.mxu0 %v1238
  %1713 = vmatpush.bf16.msra.mxu0 %v1236
  %1714 = vmatpush.bf16.msra.mxu0 %v1234
  %1715 = vmatpush.bf16.msra.mxu0 %v1232
  %1716 = vmatpush.bf16.msra.mxu0 %v1230
  %1717 = vmatpush.bf16.msra.mxu0 %v1228
  %1718 = vmatpush.bf16.msra.mxu0 %v1226
  %1719 = vmatmul.bf16.gmra.mxu0 %v291
  %v1720 = vpop.f32.mrf.mxu0
  %v1721 = vadd.f32 %v1708, %v1720
  %v1722 = vpop.f32.mrf.mxu0
  %1723 = vdwg.mxu0
  %1724 = vmatpush.bf16.msra.mxu0 %v1256
  %1725 = vmatpush.bf16.msra.mxu0 %v1254
  %1726 = vmatpush.bf16.msra.mxu0 %v1252
  %1727 = vmatpush.bf16.msra.mxu0 %v1250
  %1728 = vmatpush.bf16.msra.mxu0 %v1248
  %1729 = vmatpush.bf16.msra.mxu0 %v1246
  %1730 = vmatpush.bf16.msra.mxu0 %v1244
  %1731 = vmatpush.bf16.msra.mxu0 %v1242
  %1732 = vmatmul.bf16.gmra.mxu0 %v292
  %v1733 = vpop.f32.mrf.mxu0
  %v1734 = vadd.f32 %v1721, %v1733
  %v1735 = vpop.f32.mrf.mxu0
  %1736 = vdwg.mxu0
  %1737 = vmatpush.bf16.msra.mxu0 %v1272
  %1738 = vmatpush.bf16.msra.mxu0 %v1270
  %1739 = vmatpush.bf16.msra.mxu0 %v1268
  %1740 = vmatpush.bf16.msra.mxu0 %v1266
  %1741 = vmatpush.bf16.msra.mxu0 %v1264
  %1742 = vmatpush.bf16.msra.mxu0 %v1262
  %1743 = vmatpush.bf16.msra.mxu0 %v1260
  %1744 = vmatpush.bf16.msra.mxu0 %v1258
  %1745 = vmatmul.bf16.gmra.mxu0 %v293
  %v1746 = vpop.f32.mrf.mxu0
  %v1747 = vadd.f32 %v1734, %v1746
  %v1748 = vpop.f32.mrf.mxu0
  %1749 = vdwg.mxu0
  %1750 = vmatpush.bf16.msra.mxu0 %v1288
  %1751 = vmatpush.bf16.msra.mxu0 %v1286
  %1752 = vmatpush.bf16.msra.mxu0 %v1284
  %1753 = vmatpush.bf16.msra.mxu0 %v1282
  %1754 = vmatpush.bf16.msra.mxu0 %v1280
  %1755 = vmatpush.bf16.msra.mxu0 %v1278
  %1756 = vmatpush.bf16.msra.mxu0 %v1276
  %1757 = vmatpush.bf16.msra.mxu0 %v1274
  %1758 = vmatmul.bf16.gmra.mxu0 %v294
  %v1759 = vpop.f32.mrf.mxu0
  %v1760 = vadd.f32 %v1747, %v1759
  %v1761 = vpop.f32.mrf.mxu0
  %1762 = vdwg.mxu0
  %1763 = vmatpush.bf16.msra.mxu0 %v1304
  %1764 = vmatpush.bf16.msra.mxu0 %v1302
  %1765 = vmatpush.bf16.msra.mxu0 %v1300
  %1766 = vmatpush.bf16.msra.mxu0 %v1298
  %1767 = vmatpush.bf16.msra.mxu0 %v1296
  %1768 = vmatpush.bf16.msra.mxu0 %v1294
  %1769 = vmatpush.bf16.msra.mxu0 %v1292
  %1770 = vmatpush.bf16.msra.mxu0 %v1290
  %1771 = vmatmul.bf16.gmra.mxu0 %v295
  %v1772 = vpop.f32.mrf.mxu0
  %v1773 = vadd.f32 %v1760, %v1772
  %v1774 = vpop.f32.mrf.mxu0
  %1775 = vdwg.mxu0
  %1776 = vmatpush.bf16.msra.mxu0 %v1320
  %1777 = vmatpush.bf16.msra.mxu0 %v1318
  %1778 = vmatpush.bf16.msra.mxu0 %v1316
  %1779 = vmatpush.bf16.msra.mxu0 %v1314
  %1780 = vmatpush.bf16.msra.mxu0 %v1312
  %1781 = vmatpush.bf16.msra.mxu0 %v1310
  %1782 = vmatpush.bf16.msra.mxu0 %v1308
  %1783 = vmatpush.bf16.msra.mxu0 %v1306
  %1784 = vmatmul.bf16.gmra.mxu0 %v296
  %v1785 = vpop.f32.mrf.mxu0
  %v1786 = vadd.f32 %v1773, %v1785
  %v1787 = vpop.f32.mrf.mxu0
  %1788 = vdwg.mxu0
  %1789 = vmatpush.bf16.msra.mxu0 %v1336
  %1790 = vmatpush.bf16.msra.mxu0 %v1334
  %1791 = vmatpush.bf16.msra.mxu0 %v1332
  %1792 = vmatpush.bf16.msra.mxu0 %v1330
  %1793 = vmatpush.bf16.msra.mxu0 %v1328
  %1794 = vmatpush.bf16.msra.mxu0 %v1326
  %1795 = vmatpush.bf16.msra.mxu0 %v1324
  %1796 = vmatpush.bf16.msra.mxu0 %v1322
  %1797 = vmatmul.bf16.gmra.mxu0 %v297
  %v1798 = vpop.f32.mrf.mxu0
  %v1799 = vadd.f32 %v1786, %v1798
  %v1800 = vpop.f32.mrf.mxu0
  %1801 = vdwg.mxu0
  %1802 = vmatpush.bf16.msra.mxu0 %v1097
  %1803 = vmatpush.bf16.msra.mxu0 %v1095
  %1804 = vmatpush.bf16.msra.mxu0 %v1093
  %1805 = vmatpush.bf16.msra.mxu0 %v1091
  %1806 = vmatpush.bf16.msra.mxu0 %v1089
  %1807 = vmatpush.bf16.msra.mxu0 %v1087
  %1808 = vmatpush.bf16.msra.mxu0 %v1085
  %1809 = vmatpush.bf16.msra.mxu0 %v1083
  %1810 = vmatmul.bf16.gmra.mxu0 %v280
  %v1811 = vpop.f32.mrf.mxu0
  %v1812 = vadd.f32 %v275, %v1811
  %v1813 = vpop.f32.mrf.mxu0
  %1814 = vdwg.mxu0
  %1815 = vmatpush.bf16.msra.mxu0 %v1113
  %1816 = vmatpush.bf16.msra.mxu0 %v1111
  %1817 = vmatpush.bf16.msra.mxu0 %v1109
  %1818 = vmatpush.bf16.msra.mxu0 %v1107
  %1819 = vmatpush.bf16.msra.mxu0 %v1105
  %1820 = vmatpush.bf16.msra.mxu0 %v1103
  %1821 = vmatpush.bf16.msra.mxu0 %v1101
  %1822 = vmatpush.bf16.msra.mxu0 %v1099
  %1823 = vmatmul.bf16.gmra.mxu0 %v281
  %v1824 = vpop.f32.mrf.mxu0
  %v1825 = vadd.f32 %v1812, %v1824
  %v1826 = vpop.f32.mrf.mxu0
  %1827 = vdwg.mxu0
  %1828 = vmatpush.bf16.msra.mxu0 %v1129
  %1829 = vmatpush.bf16.msra.mxu0 %v1127
  %1830 = vmatpush.bf16.msra.mxu0 %v1125
  %1831 = vmatpush.bf16.msra.mxu0 %v1123
  %1832 = vmatpush.bf16.msra.mxu0 %v1121
  %1833 = vmatpush.bf16.msra.mxu0 %v1119
  %1834 = vmatpush.bf16.msra.mxu0 %v1117
  %1835 = vmatpush.bf16.msra.mxu0 %v1115
  %1836 = vmatmul.bf16.gmra.mxu0 %v282
  %v1837 = vpop.f32.mrf.mxu0
  %v1838 = vadd.f32 %v1825, %v1837
  %v1839 = vpop.f32.mrf.mxu0
  %1840 = vdwg.mxu0
  %1841 = vmatpush.bf16.msra.mxu0 %v1145
  %1842 = vmatpush.bf16.msra.mxu0 %v1143
  %1843 = vmatpush.bf16.msra.mxu0 %v1141
  %1844 = vmatpush.bf16.msra.mxu0 %v1139
  %1845 = vmatpush.bf16.msra.mxu0 %v1137
  %1846 = vmatpush.bf16.msra.mxu0 %v1135
  %1847 = vmatpush.bf16.msra.mxu0 %v1133
  %1848 = vmatpush.bf16.msra.mxu0 %v1131
  %1849 = vmatmul.bf16.gmra.mxu0 %v283
  %v1850 = vpop.f32.mrf.mxu0
  %v1851 = vadd.f32 %v1838, %v1850
  %v1852 = vpop.f32.mrf.mxu0
  %1853 = vdwg.mxu0
  %1854 = vmatpush.bf16.msra.mxu0 %v1161
  %1855 = vmatpush.bf16.msra.mxu0 %v1159
  %1856 = vmatpush.bf16.msra.mxu0 %v1157
  %1857 = vmatpush.bf16.msra.mxu0 %v1155
  %1858 = vmatpush.bf16.msra.mxu0 %v1153
  %1859 = vmatpush.bf16.msra.mxu0 %v1151
  %1860 = vmatpush.bf16.msra.mxu0 %v1149
  %1861 = vmatpush.bf16.msra.mxu0 %v1147
  %1862 = vmatmul.bf16.gmra.mxu0 %v284
  %v1863 = vpop.f32.mrf.mxu0
  %v1864 = vadd.f32 %v1851, %v1863
  %v1865 = vpop.f32.mrf.mxu0
  %1866 = vdwg.mxu0
  %1867 = vmatpush.bf16.msra.mxu0 %v1177
  %1868 = vmatpush.bf16.msra.mxu0 %v1175
  %1869 = vmatpush.bf16.msra.mxu0 %v1173
  %1870 = vmatpush.bf16.msra.mxu0 %v1171
  %1871 = vmatpush.bf16.msra.mxu0 %v1169
  %1872 = vmatpush.bf16.msra.mxu0 %v1167
  %1873 = vmatpush.bf16.msra.mxu0 %v1165
  %1874 = vmatpush.bf16.msra.mxu0 %v1163
  %1875 = vmatmul.bf16.gmra.mxu0 %v285
  %v1876 = vpop.f32.mrf.mxu0
  %v1877 = vadd.f32 %v1864, %v1876
  %v1878 = vpop.f32.mrf.mxu0
  %1879 = vdwg.mxu0
  %1880 = vmatpush.bf16.msra.mxu0 %v1193
  %1881 = vmatpush.bf16.msra.mxu0 %v1191
  %1882 = vmatpush.bf16.msra.mxu0 %v1189
  %1883 = vmatpush.bf16.msra.mxu0 %v1187
  %1884 = vmatpush.bf16.msra.mxu0 %v1185
  %1885 = vmatpush.bf16.msra.mxu0 %v1183
  %1886 = vmatpush.bf16.msra.mxu0 %v1181
  %1887 = vmatpush.bf16.msra.mxu0 %v1179
  %1888 = vmatmul.bf16.gmra.mxu0 %v286
  %v1889 = vpop.f32.mrf.mxu0
  %v1890 = vadd.f32 %v1877, %v1889
  %v1891 = vpop.f32.mrf.mxu0
  %1892 = vdwg.mxu0
  %1893 = vmatpush.bf16.msra.mxu0 %v1209
  %1894 = vmatpush.bf16.msra.mxu0 %v1207
  %1895 = vmatpush.bf16.msra.mxu0 %v1205
  %1896 = vmatpush.bf16.msra.mxu0 %v1203
  %1897 = vmatpush.bf16.msra.mxu0 %v1201
  %1898 = vmatpush.bf16.msra.mxu0 %v1199
  %1899 = vmatpush.bf16.msra.mxu0 %v1197
  %1900 = vmatpush.bf16.msra.mxu0 %v1195
  %1901 = vmatmul.bf16.gmra.mxu0 %v287
  %v1902 = vpop.f32.mrf.mxu0
  %v1903 = vadd.f32 %v1890, %v1902
  %v1904 = vpop.f32.mrf.mxu0
  %1905 = vdwg.mxu0
  %1906 = vmatpush.bf16.msra.mxu0 %v1225
  %1907 = vmatpush.bf16.msra.mxu0 %v1223
  %1908 = vmatpush.bf16.msra.mxu0 %v1221
  %1909 = vmatpush.bf16.msra.mxu0 %v1219
  %1910 = vmatpush.bf16.msra.mxu0 %v1217
  %1911 = vmatpush.bf16.msra.mxu0 %v1215
  %1912 = vmatpush.bf16.msra.mxu0 %v1213
  %1913 = vmatpush.bf16.msra.mxu0 %v1211
  %1914 = vmatmul.bf16.gmra.mxu0 %v290
  %v1915 = vpop.f32.mrf.mxu0
  %v1916 = vadd.f32 %v1903, %v1915
  %v1917 = vpop.f32.mrf.mxu0
  %1918 = vdwg.mxu0
  %1919 = vmatpush.bf16.msra.mxu0 %v1241
  %1920 = vmatpush.bf16.msra.mxu0 %v1239
  %1921 = vmatpush.bf16.msra.mxu0 %v1237
  %1922 = vmatpush.bf16.msra.mxu0 %v1235
  %1923 = vmatpush.bf16.msra.mxu0 %v1233
  %1924 = vmatpush.bf16.msra.mxu0 %v1231
  %1925 = vmatpush.bf16.msra.mxu0 %v1229
  %1926 = vmatpush.bf16.msra.mxu0 %v1227
  %1927 = vmatmul.bf16.gmra.mxu0 %v291
  %v1928 = vpop.f32.mrf.mxu0
  %v1929 = vadd.f32 %v1916, %v1928
  %v1930 = vpop.f32.mrf.mxu0
  %1931 = vdwg.mxu0
  %1932 = vmatpush.bf16.msra.mxu0 %v1257
  %1933 = vmatpush.bf16.msra.mxu0 %v1255
  %1934 = vmatpush.bf16.msra.mxu0 %v1253
  %1935 = vmatpush.bf16.msra.mxu0 %v1251
  %1936 = vmatpush.bf16.msra.mxu0 %v1249
  %1937 = vmatpush.bf16.msra.mxu0 %v1247
  %1938 = vmatpush.bf16.msra.mxu0 %v1245
  %1939 = vmatpush.bf16.msra.mxu0 %v1243
  %1940 = vmatmul.bf16.gmra.mxu0 %v292
  %v1941 = vpop.f32.mrf.mxu0
  %v1942 = vadd.f32 %v1929, %v1941
  %v1943 = vpop.f32.mrf.mxu0
  %1944 = vdwg.mxu0
  %1945 = vmatpush.bf16.msra.mxu0 %v1273
  %1946 = vmatpush.bf16.msra.mxu0 %v1271
  %1947 = vmatpush.bf16.msra.mxu0 %v1269
  %1948 = vmatpush.bf16.msra.mxu0 %v1267
  %1949 = vmatpush.bf16.msra.mxu0 %v1265
  %1950 = vmatpush.bf16.msra.mxu0 %v1263
  %1951 = vmatpush.bf16.msra.mxu0 %v1261
  %1952 = vmatpush.bf16.msra.mxu0 %v1259
  %1953 = vmatmul.bf16.gmra.mxu0 %v293
  %v1954 = vpop.f32.mrf.mxu0
  %v1955 = vadd.f32 %v1942, %v1954
  %v1956 = vpop.f32.mrf.mxu0
  %1957 = vdwg.mxu0
  %1958 = vmatpush.bf16.msra.mxu0 %v1289
  %1959 = vmatpush.bf16.msra.mxu0 %v1287
  %1960 = vmatpush.bf16.msra.mxu0 %v1285
  %1961 = vmatpush.bf16.msra.mxu0 %v1283
  %1962 = vmatpush.bf16.msra.mxu0 %v1281
  %1963 = vmatpush.bf16.msra.mxu0 %v1279
  %1964 = vmatpush.bf16.msra.mxu0 %v1277
  %1965 = vmatpush.bf16.msra.mxu0 %v1275
  %1966 = vmatmul.bf16.gmra.mxu0 %v294
  %v1967 = vpop.f32.mrf.mxu0
  %v1968 = vadd.f32 %v1955, %v1967
  %v1969 = vpop.f32.mrf.mxu0
  %1970 = vdwg.mxu0
  %1971 = vmatpush.bf16.msra.mxu0 %v1305
  %1972 = vmatpush.bf16.msra.mxu0 %v1303
  %1973 = vmatpush.bf16.msra.mxu0 %v1301
  %1974 = vmatpush.bf16.msra.mxu0 %v1299
  %1975 = vmatpush.bf16.msra.mxu0 %v1297
  %1976 = vmatpush.bf16.msra.mxu0 %v1295
  %1977 = vmatpush.bf16.msra.mxu0 %v1293
  %1978 = vmatpush.bf16.msra.mxu0 %v1291
  %1979 = vmatmul.bf16.gmra.mxu0 %v295
  %v1980 = vpop.f32.mrf.mxu0
  %v1981 = vadd.f32 %v1968, %v1980
  %v1982 = vpop.f32.mrf.mxu0
  %1983 = vdwg.mxu0
  %1984 = vmatpush.bf16.msra.mxu0 %v1321
  %1985 = vmatpush.bf16.msra.mxu0 %v1319
  %1986 = vmatpush.bf16.msra.mxu0 %v1317
  %1987 = vmatpush.bf16.msra.mxu0 %v1315
  %1988 = vmatpush.bf16.msra.mxu0 %v1313
  %1989 = vmatpush.bf16.msra.mxu0 %v1311
  %1990 = vmatpush.bf16.msra.mxu0 %v1309
  %1991 = vmatpush.bf16.msra.mxu0 %v1307
  %1992 = vmatmul.bf16.gmra.mxu0 %v296
  %v1993 = vpop.f32.mrf.mxu0
  %v1994 = vadd.f32 %v1981, %v1993
  %v1995 = vpop.f32.mrf.mxu0
  %1996 = vdwg.mxu0
  %1997 = vmatpush.bf16.msra.mxu0 %v1337
  %1998 = vmatpush.bf16.msra.mxu0 %v1335
  %1999 = vmatpush.bf16.msra.mxu0 %v1333
  %2000 = vmatpush.bf16.msra.mxu0 %v1331
  %2001 = vmatpush.bf16.msra.mxu0 %v1329
  %2002 = vmatpush.bf16.msra.mxu0 %v1327
  %2003 = vmatpush.bf16.msra.mxu0 %v1325
  %2004 = vmatpush.bf16.msra.mxu0 %v1323
  %2005 = vmatmul.bf16.gmra.mxu0 %v297
  %v2006 = vpop.f32.mrf.mxu0
  %v2007 = vadd.f32 %v1994, %v2006
  %v2008 = vpop.f32.mrf.mxu0
  %2009 = vdwg.mxu0
  %v2010 = vmax.f32 %v1799, 0.0
  %v2011 = vmax.f32 %v2007, 0.0
  %v2014 = vrot.slane %v2011, 6
  %vm2015 = vcmask 1041408
  %v2016 = vsel %vm2015, %v2010, %v2014
  %2018 = vst [vmem:[%s3] sm:$0xf] %v2016
  // Predicated region
  $region14: #{vae_forward.13} parent=0 // pred_check
    _
  $region15: #{vae_forward.13} parent=0 // pred_check_branch
    %2020 = sbr.rel (0) target = $region17
  $region16: #{vae_forward.13} parent=0 // pred_region
    _
  $region17: #{vae_forward.13} parent=0 // pred_fallthru
    _
  // Predicated region
  $region18: #{vae_forward.13} parent=0 // pred_check
    _
  $region19: #{vae_forward.13} parent=0 // pred_check_branch
    %2022 = sbr.rel (0) target = $region21
  $region20: #{vae_forward.13} parent=0 // pred_region
    _
  $region21: #{vae_forward.13} parent=0 // pred_fallthru
    _

// kernel: vae_forward.15
$region0: #{vae_forward.15}
  #allocation0 [shape = 'u32[]', space=smem, size = 0x4, offset = 0x4, fixed_abs, tag = 'smem constant byte address 0x4 - core index']
  #allocation1 [shape = 'u32[72,128]{1,0:T(1,128)}', space=vmem, size = 0x9000, scoped, tag = 'internal scratch']
  %s0 = inlined_call_operand.vmem [shape: bf16[2,256], index: 0, kind: input, shape index: {}]
  %s1 = inlined_call_operand.vmem [shape: bf16[256,2048], index: 1, kind: input, shape index: {}]
  %s2 = inlined_call_operand.vmem [shape: f32[2,2048], index: 2, kind: output, shape index: {}]
  %s3 = sld [smem:[#allocation0]]
  $region18: #{vae_forward.15} parent=0
    _
  %s5 = ssub.s32 1, %s3
  %s6 = scalar_select 0, %s5, %s3
  // Predicated region
  $region2: #{vae_forward.15} parent=0 // pred_check
    _
  $region3: #{vae_forward.15} parent=0 // pred_check_branch
    %8 = sbr.rel (0) target = $region5
  $region4: #{vae_forward.15} parent=0 // pred_region
    _
  $region5: #{vae_forward.15} parent=0 // pred_fallthru
    _
  // Predicated region
  $region6: #{vae_forward.15} parent=0 // pred_check
    _
  $region7: #{vae_forward.15} parent=0 // pred_check_branch
    %10 = sbr.rel (0) target = $region9
  $region8: #{vae_forward.15} parent=0 // pred_region
    _
  $region9: #{vae_forward.15} parent=0 // pred_fallthru
    _
  %v11 = vld [vmem:[%s0] sm:$0x3]
  %v12 = vld [vmem:[%s1] sm:$0xff]
  %v13 = vld [vmem:[%s1 + $0x8] sm:$0xff]
  %v14 = vld [vmem:[%s1 + $0x10] sm:$0xff]
  %v15 = vld [vmem:[%s1 + $0x18] sm:$0xff]
  %v16 = vld [vmem:[%s1 + $0x20] sm:$0xff]
  %v17 = vld [vmem:[%s1 + $0x28] sm:$0xff]
  %v18 = vld [vmem:[%s1 + $0x30] sm:$0xff]
  %v19 = vld [vmem:[%s1 + $0x38] sm:$0xff]
  %v20 = vld [vmem:[%s1 + $0x40] sm:$0xff]
  %v21 = vld [vmem:[%s1 + $0x48] sm:$0xff]
  %v22 = vld [vmem:[%s1 + $0x50] sm:$0xff]
  %v23 = vld [vmem:[%s1 + $0x58] sm:$0xff]
  %v24 = vld [vmem:[%s1 + $0x60] sm:$0xff]
  %v25 = vld [vmem:[%s1 + $0x68] sm:$0xff]
  %v26 = vld [vmem:[%s1 + $0x70] sm:$0xff]
  %v27 = vld [vmem:[%s1 + $0x78] sm:$0xff]
  %v28 = vld [vmem:[%s1 + $0x80] sm:$0xff]
  %v29 = vld [vmem:[%s1 + $0x88] sm:$0xff]
  %v30 = vld [vmem:[%s1 + $0x90] sm:$0xff]
  %v31 = vld [vmem:[%s1 + $0x98] sm:$0xff]
  %v32 = vld [vmem:[%s1 + $0xa0] sm:$0xff]
  %v33 = vld [vmem:[%s1 + $0xa8] sm:$0xff]
  %v34 = vld [vmem:[%s1 + $0xb0] sm:$0xff]
  %v35 = vld [vmem:[%s1 + $0xb8] sm:$0xff]
  %v36 = vld [vmem:[%s1 + $0xc0] sm:$0xff]
  %v37 = vld [vmem:[%s1 + $0xc8] sm:$0xff]
  %v38 = vld [vmem:[%s1 + $0xd0] sm:$0xff]
  %v39 = vld [vmem:[%s1 + $0xd8] sm:$0xff]
  %v40 = vld [vmem:[%s1 + $0xe0] sm:$0xff]
  %v41 = vld [vmem:[%s1 + $0xe8] sm:$0xff]
  %v42 = vld [vmem:[%s1 + $0xf0] sm:$0xff]
  %v43 = vld [vmem:[%s1 + $0xf8] sm:$0xff]
  %v44 = vld [vmem:[%s1 + $0x100] sm:$0xff]
  %v45 = vld [vmem:[%s1 + $0x108] sm:$0xff]
  %v46 = vld [vmem:[%s1 + $0x110] sm:$0xff]
  %v47 = vld [vmem:[%s1 + $0x118] sm:$0xff]
  %v48 = vld [vmem:[%s1 + $0x120] sm:$0xff]
  %v49 = vld [vmem:[%s1 + $0x128] sm:$0xff]
  %v50 = vld [vmem:[%s1 + $0x130] sm:$0xff]
  %v51 = vld [vmem:[%s1 + $0x138] sm:$0xff]
  %v52 = vld [vmem:[%s1 + $0x140] sm:$0xff]
  %v53 = vld [vmem:[%s1 + $0x148] sm:$0xff]
  %v54 = vld [vmem:[%s1 + $0x150] sm:$0xff]
  %v55 = vld [vmem:[%s1 + $0x158] sm:$0xff]
  %v56 = vld [vmem:[%s1 + $0x160] sm:$0xff]
  %v57 = vld [vmem:[%s1 + $0x168] sm:$0xff]
  %v58 = vld [vmem:[%s1 + $0x170] sm:$0xff]
  %v59 = vld [vmem:[%s1 + $0x178] sm:$0xff]
  %v60 = vld [vmem:[%s1 + $0x180] sm:$0xff]
  %v61 = vld [vmem:[%s1 + $0x188] sm:$0xff]
  %v62 = vld [vmem:[%s1 + $0x190] sm:$0xff]
  %v63 = vld [vmem:[%s1 + $0x198] sm:$0xff]
  %v64 = vld [vmem:[%s1 + $0x1a0] sm:$0xff]
  %v65 = vld [vmem:[%s1 + $0x1a8] sm:$0xff]
  %v66 = vld [vmem:[%s1 + $0x1b0] sm:$0xff]
  %v67 = vld [vmem:[%s1 + $0x1b8] sm:$0xff]
  %v68 = vld [vmem:[%s1 + $0x1c0] sm:$0xff]
  %v69 = vld [vmem:[%s1 + $0x1c8] sm:$0xff]
  %v70 = vld [vmem:[%s1 + $0x1d0] sm:$0xff]
  %v71 = vld [vmem:[%s1 + $0x1d8] sm:$0xff]
  %v72 = vld [vmem:[%s1 + $0x1e0] sm:$0xff]
  %v73 = vld [vmem:[%s1 + $0x1e8] sm:$0xff]
  %v74 = vld [vmem:[%s1 + $0x1f0] sm:$0xff]
  %v75 = vld [vmem:[%s1 + $0x1f8] sm:$0xff]
  %v76 = vld [vmem:[%s1 + $0x200] sm:$0xff]
  %v77 = vld [vmem:[%s1 + $0x208] sm:$0xff]
  %v78 = vld [vmem:[%s1 + $0x210] sm:$0xff]
  %v79 = vld [vmem:[%s1 + $0x218] sm:$0xff]
  %v80 = vld [vmem:[%s1 + $0x220] sm:$0xff]
  %v81 = vld [vmem:[%s1 + $0x228] sm:$0xff]
  %v82 = vld [vmem:[%s1 + $0x230] sm:$0xff]
  %v83 = vld [vmem:[%s1 + $0x238] sm:$0xff]
  %v84 = vld [vmem:[%s1 + $0x240] sm:$0xff]
  %v85 = vld [vmem:[%s1 + $0x248] sm:$0xff]
  %v86 = vld [vmem:[%s1 + $0x250] sm:$0xff]
  %v87 = vld [vmem:[%s1 + $0x258] sm:$0xff]
  %v88 = vld [vmem:[%s1 + $0x260] sm:$0xff]
  %v89 = vld [vmem:[%s1 + $0x268] sm:$0xff]
  %v90 = vld [vmem:[%s1 + $0x270] sm:$0xff]
  %v91 = vld [vmem:[%s1 + $0x278] sm:$0xff]
  %v92 = vld [vmem:[%s1 + $0x280] sm:$0xff]
  %v93 = vld [vmem:[%s1 + $0x288] sm:$0xff]
  %v94 = vld [vmem:[%s1 + $0x290] sm:$0xff]
  %v95 = vld [vmem:[%s1 + $0x298] sm:$0xff]
  %v96 = vld [vmem:[%s1 + $0x2a0] sm:$0xff]
  %v97 = vld [vmem:[%s1 + $0x2a8] sm:$0xff]
  %v98 = vld [vmem:[%s1 + $0x2b0] sm:$0xff]
  %v99 = vld [vmem:[%s1 + $0x2b8] sm:$0xff]
  %v100 = vld [vmem:[%s1 + $0x2c0] sm:$0xff]
  %v101 = vld [vmem:[%s1 + $0x2c8] sm:$0xff]
  %v102 = vld [vmem:[%s1 + $0x2d0] sm:$0xff]
  %v103 = vld [vmem:[%s1 + $0x2d8] sm:$0xff]
  %v104 = vld [vmem:[%s1 + $0x2e0] sm:$0xff]
  %v105 = vld [vmem:[%s1 + $0x2e8] sm:$0xff]
  %v106 = vld [vmem:[%s1 + $0x2f0] sm:$0xff]
  %v107 = vld [vmem:[%s1 + $0x2f8] sm:$0xff]
  %v108 = vld [vmem:[%s1 + $0x300] sm:$0xff]
  %v109 = vld [vmem:[%s1 + $0x308] sm:$0xff]
  %v110 = vld [vmem:[%s1 + $0x310] sm:$0xff]
  %v111 = vld [vmem:[%s1 + $0x318] sm:$0xff]
  %v112 = vld [vmem:[%s1 + $0x320] sm:$0xff]
  %v113 = vld [vmem:[%s1 + $0x328] sm:$0xff]
  %v114 = vld [vmem:[%s1 + $0x330] sm:$0xff]
  %v115 = vld [vmem:[%s1 + $0x338] sm:$0xff]
  %v116 = vld [vmem:[%s1 + $0x340] sm:$0xff]
  %v117 = vld [vmem:[%s1 + $0x348] sm:$0xff]
  %v118 = vld [vmem:[%s1 + $0x350] sm:$0xff]
  %v119 = vld [vmem:[%s1 + $0x358] sm:$0xff]
  %v120 = vld [vmem:[%s1 + $0x360] sm:$0xff]
  %v121 = vld [vmem:[%s1 + $0x368] sm:$0xff]
  %v122 = vld [vmem:[%s1 + $0x370] sm:$0xff]
  %v123 = vld [vmem:[%s1 + $0x378] sm:$0xff]
  %v124 = vld [vmem:[%s1 + $0x380] sm:$0xff]
  %v125 = vld [vmem:[%s1 + $0x388] sm:$0xff]
  %v126 = vld [vmem:[%s1 + $0x390] sm:$0xff]
  %v127 = vld [vmem:[%s1 + $0x398] sm:$0xff]
  %v128 = vld [vmem:[%s1 + $0x3a0] sm:$0xff]
  %v129 = vld [vmem:[%s1 + $0x3a8] sm:$0xff]
  %v130 = vld [vmem:[%s1 + $0x3b0] sm:$0xff]
  %v131 = vld [vmem:[%s1 + $0x3b8] sm:$0xff]
  %v132 = vld [vmem:[%s1 + $0x3c0] sm:$0xff]
  %v133 = vld [vmem:[%s1 + $0x3c8] sm:$0xff]
  %v134 = vld [vmem:[%s1 + $0x3d0] sm:$0xff]
  %v135 = vld [vmem:[%s1 + $0x3d8] sm:$0xff]
  %v136 = vld [vmem:[%s1 + $0x3e0] sm:$0xff]
  %v137 = vld [vmem:[%s1 + $0x3e8] sm:$0xff]
  %v138 = vld [vmem:[%s1 + $0x3f0] sm:$0xff]
  %v139 = vld [vmem:[%s1 + $0x3f8] sm:$0xff]
  %v140 = vld [vmem:[%s1 + $0x400] sm:$0xff]
  %v141 = vld [vmem:[%s1 + $0x408] sm:$0xff]
  %v142 = vld [vmem:[%s1 + $0x410] sm:$0xff]
  %v143 = vld [vmem:[%s1 + $0x418] sm:$0xff]
  %v144 = vld [vmem:[%s1 + $0x420] sm:$0xff]
  %v145 = vld [vmem:[%s1 + $0x428] sm:$0xff]
  %v146 = vld [vmem:[%s1 + $0x430] sm:$0xff]
  %v147 = vld [vmem:[%s1 + $0x438] sm:$0xff]
  %v148 = vld [vmem:[%s1 + $0x440] sm:$0xff]
  %v149 = vld [vmem:[%s1 + $0x448] sm:$0xff]
  %v150 = vld [vmem:[%s1 + $0x450] sm:$0xff]
  %v151 = vld [vmem:[%s1 + $0x458] sm:$0xff]
  %v152 = vld [vmem:[%s1 + $0x460] sm:$0xff]
  %v153 = vld [vmem:[%s1 + $0x468] sm:$0xff]
  %v154 = vld [vmem:[%s1 + $0x470] sm:$0xff]
  %v155 = vld [vmem:[%s1 + $0x478] sm:$0xff]
  %v156 = vld [vmem:[%s1 + $0x480] sm:$0xff]
  %v157 = vld [vmem:[%s1 + $0x488] sm:$0xff]
  %v158 = vld [vmem:[%s1 + $0x490] sm:$0xff]
  %v159 = vld [vmem:[%s1 + $0x498] sm:$0xff]
  %v160 = vld [vmem:[%s1 + $0x4a0] sm:$0xff]
  %v161 = vld [vmem:[%s1 + $0x4a8] sm:$0xff]
  %v162 = vld [vmem:[%s1 + $0x4b0] sm:$0xff]
  %v163 = vld [vmem:[%s1 + $0x4b8] sm:$0xff]
  %v164 = vld [vmem:[%s1 + $0x4c0] sm:$0xff]
  %v165 = vld [vmem:[%s1 + $0x4c8] sm:$0xff]
  %v166 = vld [vmem:[%s1 + $0x4d0] sm:$0xff]
  %v167 = vld [vmem:[%s1 + $0x4d8] sm:$0xff]
  %v168 = vld [vmem:[%s1 + $0x4e0] sm:$0xff]
  %v169 = vld [vmem:[%s1 + $0x4e8] sm:$0xff]
  %v170 = vld [vmem:[%s1 + $0x4f0] sm:$0xff]
  %v171 = vld [vmem:[%s1 + $0x4f8] sm:$0xff]
  %v172 = vld [vmem:[%s1 + $0x500] sm:$0xff]
  %v173 = vld [vmem:[%s1 + $0x508] sm:$0xff]
  %v174 = vld [vmem:[%s1 + $0x510] sm:$0xff]
  %v175 = vld [vmem:[%s1 + $0x518] sm:$0xff]
  %v176 = vld [vmem:[%s1 + $0x520] sm:$0xff]
  %v177 = vld [vmem:[%s1 + $0x528] sm:$0xff]
  %v178 = vld [vmem:[%s1 + $0x530] sm:$0xff]
  %v179 = vld [vmem:[%s1 + $0x538] sm:$0xff]
  %v180 = vld [vmem:[%s1 + $0x540] sm:$0xff]
  %v181 = vld [vmem:[%s1 + $0x548] sm:$0xff]
  %v182 = vld [vmem:[%s1 + $0x550] sm:$0xff]
  %v183 = vld [vmem:[%s1 + $0x558] sm:$0xff]
  %v184 = vld [vmem:[%s1 + $0x560] sm:$0xff]
  %v185 = vld [vmem:[%s1 + $0x568] sm:$0xff]
  %v186 = vld [vmem:[%s1 + $0x570] sm:$0xff]
  %v187 = vld [vmem:[%s1 + $0x578] sm:$0xff]
  %v188 = vld [vmem:[%s1 + $0x580] sm:$0xff]
  %v189 = vld [vmem:[%s1 + $0x588] sm:$0xff]
  %v190 = vld [vmem:[%s1 + $0x590] sm:$0xff]
  %v191 = vld [vmem:[%s1 + $0x598] sm:$0xff]
  %v192 = vld [vmem:[%s1 + $0x5a0] sm:$0xff]
  %v193 = vld [vmem:[%s1 + $0x5a8] sm:$0xff]
  %v194 = vld [vmem:[%s1 + $0x5b0] sm:$0xff]
  %v195 = vld [vmem:[%s1 + $0x5b8] sm:$0xff]
  %v196 = vld [vmem:[%s1 + $0x5c0] sm:$0xff]
  %v197 = vld [vmem:[%s1 + $0x5c8] sm:$0xff]
  %v198 = vld [vmem:[%s1 + $0x5d0] sm:$0xff]
  %v199 = vld [vmem:[%s1 + $0x5d8] sm:$0xff]
  %v200 = vld [vmem:[%s1 + $0x5e0] sm:$0xff]
  %v201 = vld [vmem:[%s1 + $0x5e8] sm:$0xff]
  %v202 = vld [vmem:[%s1 + $0x5f0] sm:$0xff]
  %v203 = vld [vmem:[%s1 + $0x5f8] sm:$0xff]
  %v204 = vld [vmem:[%s1 + $0x600] sm:$0xff]
  %v205 = vld [vmem:[%s1 + $0x608] sm:$0xff]
  %v206 = vld [vmem:[%s1 + $0x610] sm:$0xff]
  %v207 = vld [vmem:[%s1 + $0x618] sm:$0xff]
  %v208 = vld [vmem:[%s1 + $0x620] sm:$0xff]
  %v209 = vld [vmem:[%s1 + $0x628] sm:$0xff]
  %v210 = vld [vmem:[%s1 + $0x630] sm:$0xff]
  %v211 = vld [vmem:[%s1 + $0x638] sm:$0xff]
  %v212 = vld [vmem:[%s1 + $0x640] sm:$0xff]
  %v213 = vld [vmem:[%s1 + $0x648] sm:$0xff]
  %v214 = vld [vmem:[%s1 + $0x650] sm:$0xff]
  %v215 = vld [vmem:[%s1 + $0x658] sm:$0xff]
  %v216 = vld [vmem:[%s1 + $0x660] sm:$0xff]
  %v217 = vld [vmem:[%s1 + $0x668] sm:$0xff]
  %v218 = vld [vmem:[%s1 + $0x670] sm:$0xff]
  %v219 = vld [vmem:[%s1 + $0x678] sm:$0xff]
  %v220 = vld [vmem:[%s1 + $0x680] sm:$0xff]
  %v221 = vld [vmem:[%s1 + $0x688] sm:$0xff]
  %v222 = vld [vmem:[%s1 + $0x690] sm:$0xff]
  %v223 = vld [vmem:[%s1 + $0x698] sm:$0xff]
  %v224 = vld [vmem:[%s1 + $0x6a0] sm:$0xff]
  %v225 = vld [vmem:[%s1 + $0x6a8] sm:$0xff]
  %v226 = vld [vmem:[%s1 + $0x6b0] sm:$0xff]
  %v227 = vld [vmem:[%s1 + $0x6b8] sm:$0xff]
  %v228 = vld [vmem:[%s1 + $0x6c0] sm:$0xff]
  %v229 = vld [vmem:[%s1 + $0x6c8] sm:$0xff]
  %v230 = vld [vmem:[%s1 + $0x6d0] sm:$0xff]
  %v231 = vld [vmem:[%s1 + $0x6d8] sm:$0xff]
  %v232 = vld [vmem:[%s1 + $0x6e0] sm:$0xff]
  %v233 = vld [vmem:[%s1 + $0x6e8] sm:$0xff]
  %v234 = vld [vmem:[%s1 + $0x6f0] sm:$0xff]
  %v235 = vld [vmem:[%s1 + $0x6f8] sm:$0xff]
  %v236 = vld [vmem:[%s1 + $0x700] sm:$0xff]
  %v237 = vld [vmem:[%s1 + $0x708] sm:$0xff]
  %v238 = vld [vmem:[%s1 + $0x710] sm:$0xff]
  %v239 = vld [vmem:[%s1 + $0x718] sm:$0xff]
  %v240 = vld [vmem:[%s1 + $0x720] sm:$0xff]
  %v241 = vld [vmem:[%s1 + $0x728] sm:$0xff]
  %v242 = vld [vmem:[%s1 + $0x730] sm:$0xff]
  %v243 = vld [vmem:[%s1 + $0x738] sm:$0xff]
  %v244 = vld [vmem:[%s1 + $0x740] sm:$0xff]
  %v245 = vld [vmem:[%s1 + $0x748] sm:$0xff]
  %v246 = vld [vmem:[%s1 + $0x750] sm:$0xff]
  %v247 = vld [vmem:[%s1 + $0x758] sm:$0xff]
  %v248 = vld [vmem:[%s1 + $0x760] sm:$0xff]
  %v249 = vld [vmem:[%s1 + $0x768] sm:$0xff]
  %v250 = vld [vmem:[%s1 + $0x770] sm:$0xff]
  %v251 = vld [vmem:[%s1 + $0x778] sm:$0xff]
  %v252 = vld [vmem:[%s1 + $0x780] sm:$0xff]
  %v253 = vld [vmem:[%s1 + $0x788] sm:$0xff]
  %v254 = vld [vmem:[%s1 + $0x790] sm:$0xff]
  %v255 = vld [vmem:[%s1 + $0x798] sm:$0xff]
  %v256 = vld [vmem:[%s1 + $0x7a0] sm:$0xff]
  %v257 = vld [vmem:[%s1 + $0x7a8] sm:$0xff]
  %v258 = vld [vmem:[%s1 + $0x7b0] sm:$0xff]
  %v259 = vld [vmem:[%s1 + $0x7b8] sm:$0xff]
  %v260 = vld [vmem:[%s1 + $0x7c0] sm:$0xff]
  %v261 = vld [vmem:[%s1 + $0x7c8] sm:$0xff]
  %v262 = vld [vmem:[%s1 + $0x7d0] sm:$0xff]
  %v263 = vld [vmem:[%s1 + $0x7d8] sm:$0xff]
  %v264 = vld [vmem:[%s1 + $0x7e0] sm:$0xff]
  %v265 = vld [vmem:[%s1 + $0x7e8] sm:$0xff]
  %v266 = vld [vmem:[%s1 + $0x7f0] sm:$0xff]
  %v267 = vld [vmem:[%s1 + $0x7f8] sm:$0xff]
  %269 = vst [vmem:[#allocation1] ss:$9 sm:$0xff] %v11
  %v270 = vld [vmem:[#allocation1] sm:$0xff]
  %v271 = vld [vmem:[#allocation1 + $0x9] sm:$0xff]
  %v530 = vunpack.c.l.b16 %v12
  %v531 = vunpack.c.h.b16 %v12
  %v532 = vunpack.c.l.b16 %v13
  %v533 = vunpack.c.h.b16 %v13
  %v534 = vunpack.c.l.b16 %v14
  %v535 = vunpack.c.h.b16 %v14
  %v536 = vunpack.c.l.b16 %v15
  %v537 = vunpack.c.h.b16 %v15
  %v538 = vunpack.c.l.b16 %v16
  %v539 = vunpack.c.h.b16 %v16
  %v540 = vunpack.c.l.b16 %v17
  %v541 = vunpack.c.h.b16 %v17
  %v542 = vunpack.c.l.b16 %v18
  %v543 = vunpack.c.h.b16 %v18
  %v544 = vunpack.c.l.b16 %v19
  %v545 = vunpack.c.h.b16 %v19
  %v546 = vunpack.c.l.b16 %v20
  %v547 = vunpack.c.h.b16 %v20
  %v548 = vunpack.c.l.b16 %v21
  %v549 = vunpack.c.h.b16 %v21
  %v550 = vunpack.c.l.b16 %v22
  %v551 = vunpack.c.h.b16 %v22
  %v552 = vunpack.c.l.b16 %v23
  %v553 = vunpack.c.h.b16 %v23
  %v554 = vunpack.c.l.b16 %v24
  %v555 = vunpack.c.h.b16 %v24
  %v556 = vunpack.c.l.b16 %v25
  %v557 = vunpack.c.h.b16 %v25
  %v558 = vunpack.c.l.b16 %v26
  %v559 = vunpack.c.h.b16 %v26
  %v560 = vunpack.c.l.b16 %v27
  %v561 = vunpack.c.h.b16 %v27
  %v562 = vunpack.c.l.b16 %v28
  %v563 = vunpack.c.h.b16 %v28
  %v564 = vunpack.c.l.b16 %v29
  %v565 = vunpack.c.h.b16 %v29
  %v566 = vunpack.c.l.b16 %v30
  %v567 = vunpack.c.h.b16 %v30
  %v568 = vunpack.c.l.b16 %v31
  %v569 = vunpack.c.h.b16 %v31
  %v570 = vunpack.c.l.b16 %v32
  %v571 = vunpack.c.h.b16 %v32
  %v572 = vunpack.c.l.b16 %v33
  %v573 = vunpack.c.h.b16 %v33
  %v574 = vunpack.c.l.b16 %v34
  %v575 = vunpack.c.h.b16 %v34
  %v576 = vunpack.c.l.b16 %v35
  %v577 = vunpack.c.h.b16 %v35
  %v578 = vunpack.c.l.b16 %v36
  %v579 = vunpack.c.h.b16 %v36
  %v580 = vunpack.c.l.b16 %v37
  %v581 = vunpack.c.h.b16 %v37
  %v582 = vunpack.c.l.b16 %v38
  %v583 = vunpack.c.h.b16 %v38
  %v584 = vunpack.c.l.b16 %v39
  %v585 = vunpack.c.h.b16 %v39
  %v586 = vunpack.c.l.b16 %v40
  %v587 = vunpack.c.h.b16 %v40
  %v588 = vunpack.c.l.b16 %v41
  %v589 = vunpack.c.h.b16 %v41
  %v590 = vunpack.c.l.b16 %v42
  %v591 = vunpack.c.h.b16 %v42
  %v592 = vunpack.c.l.b16 %v43
  %v593 = vunpack.c.h.b16 %v43
  %v594 = vunpack.c.l.b16 %v44
  %v595 = vunpack.c.h.b16 %v44
  %v596 = vunpack.c.l.b16 %v45
  %v597 = vunpack.c.h.b16 %v45
  %v598 = vunpack.c.l.b16 %v46
  %v599 = vunpack.c.h.b16 %v46
  %v600 = vunpack.c.l.b16 %v47
  %v601 = vunpack.c.h.b16 %v47
  %v602 = vunpack.c.l.b16 %v48
  %v603 = vunpack.c.h.b16 %v48
  %v604 = vunpack.c.l.b16 %v49
  %v605 = vunpack.c.h.b16 %v49
  %v606 = vunpack.c.l.b16 %v50
  %v607 = vunpack.c.h.b16 %v50
  %v608 = vunpack.c.l.b16 %v51
  %v609 = vunpack.c.h.b16 %v51
  %v610 = vunpack.c.l.b16 %v52
  %v611 = vunpack.c.h.b16 %v52
  %v612 = vunpack.c.l.b16 %v53
  %v613 = vunpack.c.h.b16 %v53
  %v614 = vunpack.c.l.b16 %v54
  %v615 = vunpack.c.h.b16 %v54
  %v616 = vunpack.c.l.b16 %v55
  %v617 = vunpack.c.h.b16 %v55
  %v618 = vunpack.c.l.b16 %v56
  %v619 = vunpack.c.h.b16 %v56
  %v620 = vunpack.c.l.b16 %v57
  %v621 = vunpack.c.h.b16 %v57
  %v622 = vunpack.c.l.b16 %v58
  %v623 = vunpack.c.h.b16 %v58
  %v624 = vunpack.c.l.b16 %v59
  %v625 = vunpack.c.h.b16 %v59
  %v626 = vunpack.c.l.b16 %v60
  %v627 = vunpack.c.h.b16 %v60
  %v628 = vunpack.c.l.b16 %v61
  %v629 = vunpack.c.h.b16 %v61
  %v630 = vunpack.c.l.b16 %v62
  %v631 = vunpack.c.h.b16 %v62
  %v632 = vunpack.c.l.b16 %v63
  %v633 = vunpack.c.h.b16 %v63
  %v634 = vunpack.c.l.b16 %v64
  %v635 = vunpack.c.h.b16 %v64
  %v636 = vunpack.c.l.b16 %v65
  %v637 = vunpack.c.h.b16 %v65
  %v638 = vunpack.c.l.b16 %v66
  %v639 = vunpack.c.h.b16 %v66
  %v640 = vunpack.c.l.b16 %v67
  %v641 = vunpack.c.h.b16 %v67
  %v642 = vunpack.c.l.b16 %v68
  %v643 = vunpack.c.h.b16 %v68
  %v644 = vunpack.c.l.b16 %v69
  %v645 = vunpack.c.h.b16 %v69
  %v646 = vunpack.c.l.b16 %v70
  %v647 = vunpack.c.h.b16 %v70
  %v648 = vunpack.c.l.b16 %v71
  %v649 = vunpack.c.h.b16 %v71
  %v650 = vunpack.c.l.b16 %v72
  %v651 = vunpack.c.h.b16 %v72
  %v652 = vunpack.c.l.b16 %v73
  %v653 = vunpack.c.h.b16 %v73
  %v654 = vunpack.c.l.b16 %v74
  %v655 = vunpack.c.h.b16 %v74
  %v656 = vunpack.c.l.b16 %v75
  %v657 = vunpack.c.h.b16 %v75
  %v658 = vunpack.c.l.b16 %v76
  %v659 = vunpack.c.h.b16 %v76
  %v660 = vunpack.c.l.b16 %v77
  %v661 = vunpack.c.h.b16 %v77
  %v662 = vunpack.c.l.b16 %v78
  %v663 = vunpack.c.h.b16 %v78
  %v664 = vunpack.c.l.b16 %v79
  %v665 = vunpack.c.h.b16 %v79
  %v666 = vunpack.c.l.b16 %v80
  %v667 = vunpack.c.h.b16 %v80
  %v668 = vunpack.c.l.b16 %v81
  %v669 = vunpack.c.h.b16 %v81
  %v670 = vunpack.c.l.b16 %v82
  %v671 = vunpack.c.h.b16 %v82
  %v672 = vunpack.c.l.b16 %v83
  %v673 = vunpack.c.h.b16 %v83
  %v674 = vunpack.c.l.b16 %v84
  %v675 = vunpack.c.h.b16 %v84
  %v676 = vunpack.c.l.b16 %v85
  %v677 = vunpack.c.h.b16 %v85
  %v678 = vunpack.c.l.b16 %v86
  %v679 = vunpack.c.h.b16 %v86
  %v680 = vunpack.c.l.b16 %v87
  %v681 = vunpack.c.h.b16 %v87
  %v682 = vunpack.c.l.b16 %v88
  %v683 = vunpack.c.h.b16 %v88
  %v684 = vunpack.c.l.b16 %v89
  %v685 = vunpack.c.h.b16 %v89
  %v686 = vunpack.c.l.b16 %v90
  %v687 = vunpack.c.h.b16 %v90
  %v688 = vunpack.c.l.b16 %v91
  %v689 = vunpack.c.h.b16 %v91
  %v690 = vunpack.c.l.b16 %v92
  %v691 = vunpack.c.h.b16 %v92
  %v692 = vunpack.c.l.b16 %v93
  %v693 = vunpack.c.h.b16 %v93
  %v694 = vunpack.c.l.b16 %v94
  %v695 = vunpack.c.h.b16 %v94
  %v696 = vunpack.c.l.b16 %v95
  %v697 = vunpack.c.h.b16 %v95
  %v698 = vunpack.c.l.b16 %v96
  %v699 = vunpack.c.h.b16 %v96
  %v700 = vunpack.c.l.b16 %v97
  %v701 = vunpack.c.h.b16 %v97
  %v702 = vunpack.c.l.b16 %v98
  %v703 = vunpack.c.h.b16 %v98
  %v704 = vunpack.c.l.b16 %v99
  %v705 = vunpack.c.h.b16 %v99
  %v706 = vunpack.c.l.b16 %v100
  %v707 = vunpack.c.h.b16 %v100
  %v708 = vunpack.c.l.b16 %v101
  %v709 = vunpack.c.h.b16 %v101
  %v710 = vunpack.c.l.b16 %v102
  %v711 = vunpack.c.h.b16 %v102
  %v712 = vunpack.c.l.b16 %v103
  %v713 = vunpack.c.h.b16 %v103
  %v714 = vunpack.c.l.b16 %v104
  %v715 = vunpack.c.h.b16 %v104
  %v716 = vunpack.c.l.b16 %v105
  %v717 = vunpack.c.h.b16 %v105
  %v718 = vunpack.c.l.b16 %v106
  %v719 = vunpack.c.h.b16 %v106
  %v720 = vunpack.c.l.b16 %v107
  %v721 = vunpack.c.h.b16 %v107
  %v722 = vunpack.c.l.b16 %v108
  %v723 = vunpack.c.h.b16 %v108
  %v724 = vunpack.c.l.b16 %v109
  %v725 = vunpack.c.h.b16 %v109
  %v726 = vunpack.c.l.b16 %v110
  %v727 = vunpack.c.h.b16 %v110
  %v728 = vunpack.c.l.b16 %v111
  %v729 = vunpack.c.h.b16 %v111
  %v730 = vunpack.c.l.b16 %v112
  %v731 = vunpack.c.h.b16 %v112
  %v732 = vunpack.c.l.b16 %v113
  %v733 = vunpack.c.h.b16 %v113
  %v734 = vunpack.c.l.b16 %v114
  %v735 = vunpack.c.h.b16 %v114
  %v736 = vunpack.c.l.b16 %v115
  %v737 = vunpack.c.h.b16 %v115
  %v738 = vunpack.c.l.b16 %v116
  %v739 = vunpack.c.h.b16 %v116
  %v740 = vunpack.c.l.b16 %v117
  %v741 = vunpack.c.h.b16 %v117
  %v742 = vunpack.c.l.b16 %v118
  %v743 = vunpack.c.h.b16 %v118
  %v744 = vunpack.c.l.b16 %v119
  %v745 = vunpack.c.h.b16 %v119
  %v746 = vunpack.c.l.b16 %v120
  %v747 = vunpack.c.h.b16 %v120
  %v748 = vunpack.c.l.b16 %v121
  %v749 = vunpack.c.h.b16 %v121
  %v750 = vunpack.c.l.b16 %v122
  %v751 = vunpack.c.h.b16 %v122
  %v752 = vunpack.c.l.b16 %v123
  %v753 = vunpack.c.h.b16 %v123
  %v754 = vunpack.c.l.b16 %v124
  %v755 = vunpack.c.h.b16 %v124
  %v756 = vunpack.c.l.b16 %v125
  %v757 = vunpack.c.h.b16 %v125
  %v758 = vunpack.c.l.b16 %v126
  %v759 = vunpack.c.h.b16 %v126
  %v760 = vunpack.c.l.b16 %v127
  %v761 = vunpack.c.h.b16 %v127
  %v762 = vunpack.c.l.b16 %v128
  %v763 = vunpack.c.h.b16 %v128
  %v764 = vunpack.c.l.b16 %v129
  %v765 = vunpack.c.h.b16 %v129
  %v766 = vunpack.c.l.b16 %v130
  %v767 = vunpack.c.h.b16 %v130
  %v768 = vunpack.c.l.b16 %v131
  %v769 = vunpack.c.h.b16 %v131
  %v770 = vunpack.c.l.b16 %v132
  %v771 = vunpack.c.h.b16 %v132
  %v772 = vunpack.c.l.b16 %v133
  %v773 = vunpack.c.h.b16 %v133
  %v774 = vunpack.c.l.b16 %v134
  %v775 = vunpack.c.h.b16 %v134
  %v776 = vunpack.c.l.b16 %v135
  %v777 = vunpack.c.h.b16 %v135
  %v778 = vunpack.c.l.b16 %v136
  %v779 = vunpack.c.h.b16 %v136
  %v780 = vunpack.c.l.b16 %v137
  %v781 = vunpack.c.h.b16 %v137
  %v782 = vunpack.c.l.b16 %v138
  %v783 = vunpack.c.h.b16 %v138
  %v784 = vunpack.c.l.b16 %v139
  %v785 = vunpack.c.h.b16 %v139
  %v786 = vunpack.c.l.b16 %v140
  %v787 = vunpack.c.h.b16 %v140
  %v788 = vunpack.c.l.b16 %v141
  %v789 = vunpack.c.h.b16 %v141
  %v790 = vunpack.c.l.b16 %v142
  %v791 = vunpack.c.h.b16 %v142
  %v792 = vunpack.c.l.b16 %v143
  %v793 = vunpack.c.h.b16 %v143
  %v794 = vunpack.c.l.b16 %v144
  %v795 = vunpack.c.h.b16 %v144
  %v796 = vunpack.c.l.b16 %v145
  %v797 = vunpack.c.h.b16 %v145
  %v798 = vunpack.c.l.b16 %v146
  %v799 = vunpack.c.h.b16 %v146
  %v800 = vunpack.c.l.b16 %v147
  %v801 = vunpack.c.h.b16 %v147
  %v802 = vunpack.c.l.b16 %v148
  %v803 = vunpack.c.h.b16 %v148
  %v804 = vunpack.c.l.b16 %v149
  %v805 = vunpack.c.h.b16 %v149
  %v806 = vunpack.c.l.b16 %v150
  %v807 = vunpack.c.h.b16 %v150
  %v808 = vunpack.c.l.b16 %v151
  %v809 = vunpack.c.h.b16 %v151
  %v810 = vunpack.c.l.b16 %v152
  %v811 = vunpack.c.h.b16 %v152
  %v812 = vunpack.c.l.b16 %v153
  %v813 = vunpack.c.h.b16 %v153
  %v814 = vunpack.c.l.b16 %v154
  %v815 = vunpack.c.h.b16 %v154
  %v816 = vunpack.c.l.b16 %v155
  %v817 = vunpack.c.h.b16 %v155
  %v818 = vunpack.c.l.b16 %v156
  %v819 = vunpack.c.h.b16 %v156
  %v820 = vunpack.c.l.b16 %v157
  %v821 = vunpack.c.h.b16 %v157
  %v822 = vunpack.c.l.b16 %v158
  %v823 = vunpack.c.h.b16 %v158
  %v824 = vunpack.c.l.b16 %v159
  %v825 = vunpack.c.h.b16 %v159
  %v826 = vunpack.c.l.b16 %v160
  %v827 = vunpack.c.h.b16 %v160
  %v828 = vunpack.c.l.b16 %v161
  %v829 = vunpack.c.h.b16 %v161
  %v830 = vunpack.c.l.b16 %v162
  %v831 = vunpack.c.h.b16 %v162
  %v832 = vunpack.c.l.b16 %v163
  %v833 = vunpack.c.h.b16 %v163
  %v834 = vunpack.c.l.b16 %v164
  %v835 = vunpack.c.h.b16 %v164
  %v836 = vunpack.c.l.b16 %v165
  %v837 = vunpack.c.h.b16 %v165
  %v838 = vunpack.c.l.b16 %v166
  %v839 = vunpack.c.h.b16 %v166
  %v840 = vunpack.c.l.b16 %v167
  %v841 = vunpack.c.h.b16 %v167
  %v842 = vunpack.c.l.b16 %v168
  %v843 = vunpack.c.h.b16 %v168
  %v844 = vunpack.c.l.b16 %v169
  %v845 = vunpack.c.h.b16 %v169
  %v846 = vunpack.c.l.b16 %v170
  %v847 = vunpack.c.h.b16 %v170
  %v848 = vunpack.c.l.b16 %v171
  %v849 = vunpack.c.h.b16 %v171
  %v850 = vunpack.c.l.b16 %v172
  %v851 = vunpack.c.h.b16 %v172
  %v852 = vunpack.c.l.b16 %v173
  %v853 = vunpack.c.h.b16 %v173
  %v854 = vunpack.c.l.b16 %v174
  %v855 = vunpack.c.h.b16 %v174
  %v856 = vunpack.c.l.b16 %v175
  %v857 = vunpack.c.h.b16 %v175
  %v858 = vunpack.c.l.b16 %v176
  %v859 = vunpack.c.h.b16 %v176
  %v860 = vunpack.c.l.b16 %v177
  %v861 = vunpack.c.h.b16 %v177
  %v862 = vunpack.c.l.b16 %v178
  %v863 = vunpack.c.h.b16 %v178
  %v864 = vunpack.c.l.b16 %v179
  %v865 = vunpack.c.h.b16 %v179
  %v866 = vunpack.c.l.b16 %v180
  %v867 = vunpack.c.h.b16 %v180
  %v868 = vunpack.c.l.b16 %v181
  %v869 = vunpack.c.h.b16 %v181
  %v870 = vunpack.c.l.b16 %v182
  %v871 = vunpack.c.h.b16 %v182
  %v872 = vunpack.c.l.b16 %v183
  %v873 = vunpack.c.h.b16 %v183
  %v874 = vunpack.c.l.b16 %v184
  %v875 = vunpack.c.h.b16 %v184
  %v876 = vunpack.c.l.b16 %v185
  %v877 = vunpack.c.h.b16 %v185
  %v878 = vunpack.c.l.b16 %v186
  %v879 = vunpack.c.h.b16 %v186
  %v880 = vunpack.c.l.b16 %v187
  %v881 = vunpack.c.h.b16 %v187
  %v882 = vunpack.c.l.b16 %v188
  %v883 = vunpack.c.h.b16 %v188
  %v884 = vunpack.c.l.b16 %v189
  %v885 = vunpack.c.h.b16 %v189
  %v886 = vunpack.c.l.b16 %v190
  %v887 = vunpack.c.h.b16 %v190
  %v888 = vunpack.c.l.b16 %v191
  %v889 = vunpack.c.h.b16 %v191
  %v890 = vunpack.c.l.b16 %v192
  %v891 = vunpack.c.h.b16 %v192
  %v892 = vunpack.c.l.b16 %v193
  %v893 = vunpack.c.h.b16 %v193
  %v894 = vunpack.c.l.b16 %v194
  %v895 = vunpack.c.h.b16 %v194
  %v896 = vunpack.c.l.b16 %v195
  %v897 = vunpack.c.h.b16 %v195
  %v898 = vunpack.c.l.b16 %v196
  %v899 = vunpack.c.h.b16 %v196
  %v900 = vunpack.c.l.b16 %v197
  %v901 = vunpack.c.h.b16 %v197
  %v902 = vunpack.c.l.b16 %v198
  %v903 = vunpack.c.h.b16 %v198
  %v904 = vunpack.c.l.b16 %v199
  %v905 = vunpack.c.h.b16 %v199
  %v906 = vunpack.c.l.b16 %v200
  %v907 = vunpack.c.h.b16 %v200
  %v908 = vunpack.c.l.b16 %v201
  %v909 = vunpack.c.h.b16 %v201
  %v910 = vunpack.c.l.b16 %v202
  %v911 = vunpack.c.h.b16 %v202
  %v912 = vunpack.c.l.b16 %v203
  %v913 = vunpack.c.h.b16 %v203
  %v914 = vunpack.c.l.b16 %v204
  %v915 = vunpack.c.h.b16 %v204
  %v916 = vunpack.c.l.b16 %v205
  %v917 = vunpack.c.h.b16 %v205
  %v918 = vunpack.c.l.b16 %v206
  %v919 = vunpack.c.h.b16 %v206
  %v920 = vunpack.c.l.b16 %v207
  %v921 = vunpack.c.h.b16 %v207
  %v922 = vunpack.c.l.b16 %v208
  %v923 = vunpack.c.h.b16 %v208
  %v924 = vunpack.c.l.b16 %v209
  %v925 = vunpack.c.h.b16 %v209
  %v926 = vunpack.c.l.b16 %v210
  %v927 = vunpack.c.h.b16 %v210
  %v928 = vunpack.c.l.b16 %v211
  %v929 = vunpack.c.h.b16 %v211
  %v930 = vunpack.c.l.b16 %v212
  %v931 = vunpack.c.h.b16 %v212
  %v932 = vunpack.c.l.b16 %v213
  %v933 = vunpack.c.h.b16 %v213
  %v934 = vunpack.c.l.b16 %v214
  %v935 = vunpack.c.h.b16 %v214
  %v936 = vunpack.c.l.b16 %v215
  %v937 = vunpack.c.h.b16 %v215
  %v938 = vunpack.c.l.b16 %v216
  %v939 = vunpack.c.h.b16 %v216
  %v940 = vunpack.c.l.b16 %v217
  %v941 = vunpack.c.h.b16 %v217
  %v942 = vunpack.c.l.b16 %v218
  %v943 = vunpack.c.h.b16 %v218
  %v944 = vunpack.c.l.b16 %v219
  %v945 = vunpack.c.h.b16 %v219
  %v946 = vunpack.c.l.b16 %v220
  %v947 = vunpack.c.h.b16 %v220
  %v948 = vunpack.c.l.b16 %v221
  %v949 = vunpack.c.h.b16 %v221
  %v950 = vunpack.c.l.b16 %v222
  %v951 = vunpack.c.h.b16 %v222
  %v952 = vunpack.c.l.b16 %v223
  %v953 = vunpack.c.h.b16 %v223
  %v954 = vunpack.c.l.b16 %v224
  %v955 = vunpack.c.h.b16 %v224
  %v956 = vunpack.c.l.b16 %v225
  %v957 = vunpack.c.h.b16 %v225
  %v958 = vunpack.c.l.b16 %v226
  %v959 = vunpack.c.h.b16 %v226
  %v960 = vunpack.c.l.b16 %v227
  %v961 = vunpack.c.h.b16 %v227
  %v962 = vunpack.c.l.b16 %v228
  %v963 = vunpack.c.h.b16 %v228
  %v964 = vunpack.c.l.b16 %v229
  %v965 = vunpack.c.h.b16 %v229
  %v966 = vunpack.c.l.b16 %v230
  %v967 = vunpack.c.h.b16 %v230
  %v968 = vunpack.c.l.b16 %v231
  %v969 = vunpack.c.h.b16 %v231
  %v970 = vunpack.c.l.b16 %v232
  %v971 = vunpack.c.h.b16 %v232
  %v972 = vunpack.c.l.b16 %v233
  %v973 = vunpack.c.h.b16 %v233
  %v974 = vunpack.c.l.b16 %v234
  %v975 = vunpack.c.h.b16 %v234
  %v976 = vunpack.c.l.b16 %v235
  %v977 = vunpack.c.h.b16 %v235
  %v978 = vunpack.c.l.b16 %v236
  %v979 = vunpack.c.h.b16 %v236
  %v980 = vunpack.c.l.b16 %v237
  %v981 = vunpack.c.h.b16 %v237
  %v982 = vunpack.c.l.b16 %v238
  %v983 = vunpack.c.h.b16 %v238
  %v984 = vunpack.c.l.b16 %v239
  %v985 = vunpack.c.h.b16 %v239
  %v986 = vunpack.c.l.b16 %v240
  %v987 = vunpack.c.h.b16 %v240
  %v988 = vunpack.c.l.b16 %v241
  %v989 = vunpack.c.h.b16 %v241
  %v990 = vunpack.c.l.b16 %v242
  %v991 = vunpack.c.h.b16 %v242
  %v992 = vunpack.c.l.b16 %v243
  %v993 = vunpack.c.h.b16 %v243
  %v994 = vunpack.c.l.b16 %v244
  %v995 = vunpack.c.h.b16 %v244
  %v996 = vunpack.c.l.b16 %v245
  %v997 = vunpack.c.h.b16 %v245
  %v998 = vunpack.c.l.b16 %v246
  %v999 = vunpack.c.h.b16 %v246
  %v1000 = vunpack.c.l.b16 %v247
  %v1001 = vunpack.c.h.b16 %v247
  %v1002 = vunpack.c.l.b16 %v248
  %v1003 = vunpack.c.h.b16 %v248
  %v1004 = vunpack.c.l.b16 %v249
  %v1005 = vunpack.c.h.b16 %v249
  %v1006 = vunpack.c.l.b16 %v250
  %v1007 = vunpack.c.h.b16 %v250
  %v1008 = vunpack.c.l.b16 %v251
  %v1009 = vunpack.c.h.b16 %v251
  %v1010 = vunpack.c.l.b16 %v252
  %v1011 = vunpack.c.h.b16 %v252
  %v1012 = vunpack.c.l.b16 %v253
  %v1013 = vunpack.c.h.b16 %v253
  %v1014 = vunpack.c.l.b16 %v254
  %v1015 = vunpack.c.h.b16 %v254
  %v1016 = vunpack.c.l.b16 %v255
  %v1017 = vunpack.c.h.b16 %v255
  %v1018 = vunpack.c.l.b16 %v256
  %v1019 = vunpack.c.h.b16 %v256
  %v1020 = vunpack.c.l.b16 %v257
  %v1021 = vunpack.c.h.b16 %v257
  %v1022 = vunpack.c.l.b16 %v258
  %v1023 = vunpack.c.h.b16 %v258
  %v1024 = vunpack.c.l.b16 %v259
  %v1025 = vunpack.c.h.b16 %v259
  %v1026 = vunpack.c.l.b16 %v260
  %v1027 = vunpack.c.h.b16 %v260
  %v1028 = vunpack.c.l.b16 %v261
  %v1029 = vunpack.c.h.b16 %v261
  %v1030 = vunpack.c.l.b16 %v262
  %v1031 = vunpack.c.h.b16 %v262
  %v1032 = vunpack.c.l.b16 %v263
  %v1033 = vunpack.c.h.b16 %v263
  %v1034 = vunpack.c.l.b16 %v264
  %v1035 = vunpack.c.h.b16 %v264
  %v1036 = vunpack.c.l.b16 %v265
  %v1037 = vunpack.c.h.b16 %v265
  %v1038 = vunpack.c.l.b16 %v266
  %v1039 = vunpack.c.h.b16 %v266
  %v1040 = vunpack.c.l.b16 %v267
  %v1041 = vunpack.c.h.b16 %v267
  %v1042 = vpack.c.b16 %v546, %v530
  %v1043 = vpack.c.b16 %v547, %v531
  %v1044 = vpack.c.b16 %v548, %v532
  %v1045 = vpack.c.b16 %v549, %v533
  %v1046 = vpack.c.b16 %v550, %v534
  %v1047 = vpack.c.b16 %v551, %v535
  %v1048 = vpack.c.b16 %v552, %v536
  %v1049 = vpack.c.b16 %v553, %v537
  %v1050 = vpack.c.b16 %v554, %v538
  %v1051 = vpack.c.b16 %v555, %v539
  %v1052 = vpack.c.b16 %v556, %v540
  %v1053 = vpack.c.b16 %v557, %v541
  %v1054 = vpack.c.b16 %v558, %v542
  %v1055 = vpack.c.b16 %v559, %v543
  %v1056 = vpack.c.b16 %v560, %v544
  %v1057 = vpack.c.b16 %v561, %v545
  %v1058 = vpack.c.b16 %v578, %v562
  %v1059 = vpack.c.b16 %v579, %v563
  %v1060 = vpack.c.b16 %v580, %v564
  %v1061 = vpack.c.b16 %v581, %v565
  %v1062 = vpack.c.b16 %v582, %v566
  %v1063 = vpack.c.b16 %v583, %v567
  %v1064 = vpack.c.b16 %v584, %v568
  %v1065 = vpack.c.b16 %v585, %v569
  %v1066 = vpack.c.b16 %v586, %v570
  %v1067 = vpack.c.b16 %v587, %v571
  %v1068 = vpack.c.b16 %v588, %v572
  %v1069 = vpack.c.b16 %v589, %v573
  %v1070 = vpack.c.b16 %v590, %v574
  %v1071 = vpack.c.b16 %v591, %v575
  %v1072 = vpack.c.b16 %v592, %v576
  %v1073 = vpack.c.b16 %v593, %v577
  %v1074 = vpack.c.b16 %v610, %v594
  %v1075 = vpack.c.b16 %v611, %v595
  %v1076 = vpack.c.b16 %v612, %v596
  %v1077 = vpack.c.b16 %v613, %v597
  %v1078 = vpack.c.b16 %v614, %v598
  %v1079 = vpack.c.b16 %v615, %v599
  %v1080 = vpack.c.b16 %v616, %v600
  %v1081 = vpack.c.b16 %v617, %v601
  %v1082 = vpack.c.b16 %v618, %v602
  %v1083 = vpack.c.b16 %v619, %v603
  %v1084 = vpack.c.b16 %v620, %v604
  %v1085 = vpack.c.b16 %v621, %v605
  %v1086 = vpack.c.b16 %v622, %v606
  %v1087 = vpack.c.b16 %v623, %v607
  %v1088 = vpack.c.b16 %v624, %v608
  %v1089 = vpack.c.b16 %v625, %v609
  %v1090 = vpack.c.b16 %v642, %v626
  %v1091 = vpack.c.b16 %v643, %v627
  %v1092 = vpack.c.b16 %v644, %v628
  %v1093 = vpack.c.b16 %v645, %v629
  %v1094 = vpack.c.b16 %v646, %v630
  %v1095 = vpack.c.b16 %v647, %v631
  %v1096 = vpack.c.b16 %v648, %v632
  %v1097 = vpack.c.b16 %v649, %v633
  %v1098 = vpack.c.b16 %v650, %v634
  %v1099 = vpack.c.b16 %v651, %v635
  %v1100 = vpack.c.b16 %v652, %v636
  %v1101 = vpack.c.b16 %v653, %v637
  %v1102 = vpack.c.b16 %v654, %v638
  %v1103 = vpack.c.b16 %v655, %v639
  %v1104 = vpack.c.b16 %v656, %v640
  %v1105 = vpack.c.b16 %v657, %v641
  %v1106 = vpack.c.b16 %v674, %v658
  %v1107 = vpack.c.b16 %v675, %v659
  %v1108 = vpack.c.b16 %v676, %v660
  %v1109 = vpack.c.b16 %v677, %v661
  %v1110 = vpack.c.b16 %v678, %v662
  %v1111 = vpack.c.b16 %v679, %v663
  %v1112 = vpack.c.b16 %v680, %v664
  %v1113 = vpack.c.b16 %v681, %v665
  %v1114 = vpack.c.b16 %v682, %v666
  %v1115 = vpack.c.b16 %v683, %v667
  %v1116 = vpack.c.b16 %v684, %v668
  %v1117 = vpack.c.b16 %v685, %v669
  %v1118 = vpack.c.b16 %v686, %v670
  %v1119 = vpack.c.b16 %v687, %v671
  %v1120 = vpack.c.b16 %v688, %v672
  %v1121 = vpack.c.b16 %v689, %v673
  %v1122 = vpack.c.b16 %v706, %v690
  %v1123 = vpack.c.b16 %v707, %v691
  %v1124 = vpack.c.b16 %v708, %v692
  %v1125 = vpack.c.b16 %v709, %v693
  %v1126 = vpack.c.b16 %v710, %v694
  %v1127 = vpack.c.b16 %v711, %v695
  %v1128 = vpack.c.b16 %v712, %v696
  %v1129 = vpack.c.b16 %v713, %v697
  %v1130 = vpack.c.b16 %v714, %v698
  %v1131 = vpack.c.b16 %v715, %v699
  %v1132 = vpack.c.b16 %v716, %v700
  %v1133 = vpack.c.b16 %v717, %v701
  %v1134 = vpack.c.b16 %v718, %v702
  %v1135 = vpack.c.b16 %v719, %v703
  %v1136 = vpack.c.b16 %v720, %v704
  %v1137 = vpack.c.b16 %v721, %v705
  %v1138 = vpack.c.b16 %v738, %v722
  %v1139 = vpack.c.b16 %v739, %v723
  %v1140 = vpack.c.b16 %v740, %v724
  %v1141 = vpack.c.b16 %v741, %v725
  %v1142 = vpack.c.b16 %v742, %v726
  %v1143 = vpack.c.b16 %v743, %v727
  %v1144 = vpack.c.b16 %v744, %v728
  %v1145 = vpack.c.b16 %v745, %v729
  %v1146 = vpack.c.b16 %v746, %v730
  %v1147 = vpack.c.b16 %v747, %v731
  %v1148 = vpack.c.b16 %v748, %v732
  %v1149 = vpack.c.b16 %v749, %v733
  %v1150 = vpack.c.b16 %v750, %v734
  %v1151 = vpack.c.b16 %v751, %v735
  %v1152 = vpack.c.b16 %v752, %v736
  %v1153 = vpack.c.b16 %v753, %v737
  %v1154 = vpack.c.b16 %v770, %v754
  %v1155 = vpack.c.b16 %v771, %v755
  %v1156 = vpack.c.b16 %v772, %v756
  %v1157 = vpack.c.b16 %v773, %v757
  %v1158 = vpack.c.b16 %v774, %v758
  %v1159 = vpack.c.b16 %v775, %v759
  %v1160 = vpack.c.b16 %v776, %v760
  %v1161 = vpack.c.b16 %v777, %v761
  %v1162 = vpack.c.b16 %v778, %v762
  %v1163 = vpack.c.b16 %v779, %v763
  %v1164 = vpack.c.b16 %v780, %v764
  %v1165 = vpack.c.b16 %v781, %v765
  %v1166 = vpack.c.b16 %v782, %v766
  %v1167 = vpack.c.b16 %v783, %v767
  %v1168 = vpack.c.b16 %v784, %v768
  %v1169 = vpack.c.b16 %v785, %v769
  %v1170 = vpack.c.b16 %v802, %v786
  %v1171 = vpack.c.b16 %v803, %v787
  %v1172 = vpack.c.b16 %v804, %v788
  %v1173 = vpack.c.b16 %v805, %v789
  %v1174 = vpack.c.b16 %v806, %v790
  %v1175 = vpack.c.b16 %v807, %v791
  %v1176 = vpack.c.b16 %v808, %v792
  %v1177 = vpack.c.b16 %v809, %v793
  %v1178 = vpack.c.b16 %v810, %v794
  %v1179 = vpack.c.b16 %v811, %v795
  %v1180 = vpack.c.b16 %v812, %v796
  %v1181 = vpack.c.b16 %v813, %v797
  %v1182 = vpack.c.b16 %v814, %v798
  %v1183 = vpack.c.b16 %v815, %v799
  %v1184 = vpack.c.b16 %v816, %v800
  %v1185 = vpack.c.b16 %v817, %v801
  %v1186 = vpack.c.b16 %v834, %v818
  %v1187 = vpack.c.b16 %v835, %v819
  %v1188 = vpack.c.b16 %v836, %v820
  %v1189 = vpack.c.b16 %v837, %v821
  %v1190 = vpack.c.b16 %v838, %v822
  %v1191 = vpack.c.b16 %v839, %v823
  %v1192 = vpack.c.b16 %v840, %v824
  %v1193 = vpack.c.b16 %v841, %v825
  %v1194 = vpack.c.b16 %v842, %v826
  %v1195 = vpack.c.b16 %v843, %v827
  %v1196 = vpack.c.b16 %v844, %v828
  %v1197 = vpack.c.b16 %v845, %v829
  %v1198 = vpack.c.b16 %v846, %v830
  %v1199 = vpack.c.b16 %v847, %v831
  %v1200 = vpack.c.b16 %v848, %v832
  %v1201 = vpack.c.b16 %v849, %v833
  %v1202 = vpack.c.b16 %v866, %v850
  %v1203 = vpack.c.b16 %v867, %v851
  %v1204 = vpack.c.b16 %v868, %v852
  %v1205 = vpack.c.b16 %v869, %v853
  %v1206 = vpack.c.b16 %v870, %v854
  %v1207 = vpack.c.b16 %v871, %v855
  %v1208 = vpack.c.b16 %v872, %v856
  %v1209 = vpack.c.b16 %v873, %v857
  %v1210 = vpack.c.b16 %v874, %v858
  %v1211 = vpack.c.b16 %v875, %v859
  %v1212 = vpack.c.b16 %v876, %v860
  %v1213 = vpack.c.b16 %v877, %v861
  %v1214 = vpack.c.b16 %v878, %v862
  %v1215 = vpack.c.b16 %v879, %v863
  %v1216 = vpack.c.b16 %v880, %v864
  %v1217 = vpack.c.b16 %v881, %v865
  %v1218 = vpack.c.b16 %v898, %v882
  %v1219 = vpack.c.b16 %v899, %v883
  %v1220 = vpack.c.b16 %v900, %v884
  %v1221 = vpack.c.b16 %v901, %v885
  %v1222 = vpack.c.b16 %v902, %v886
  %v1223 = vpack.c.b16 %v903, %v887
  %v1224 = vpack.c.b16 %v904, %v888
  %v1225 = vpack.c.b16 %v905, %v889
  %v1226 = vpack.c.b16 %v906, %v890
  %v1227 = vpack.c.b16 %v907, %v891
  %v1228 = vpack.c.b16 %v908, %v892
  %v1229 = vpack.c.b16 %v909, %v893
  %v1230 = vpack.c.b16 %v910, %v894
  %v1231 = vpack.c.b16 %v911, %v895
  %v1232 = vpack.c.b16 %v912, %v896
  %v1233 = vpack.c.b16 %v913, %v897
  %v1234 = vpack.c.b16 %v930, %v914
  %v1235 = vpack.c.b16 %v931, %v915
  %v1236 = vpack.c.b16 %v932, %v916
  %v1237 = vpack.c.b16 %v933, %v917
  %v1238 = vpack.c.b16 %v934, %v918
  %v1239 = vpack.c.b16 %v935, %v919
  %v1240 = vpack.c.b16 %v936, %v920
  %v1241 = vpack.c.b16 %v937, %v921
  %v1242 = vpack.c.b16 %v938, %v922
  %v1243 = vpack.c.b16 %v939, %v923
  %v1244 = vpack.c.b16 %v940, %v924
  %v1245 = vpack.c.b16 %v941, %v925
  %v1246 = vpack.c.b16 %v942, %v926
  %v1247 = vpack.c.b16 %v943, %v927
  %v1248 = vpack.c.b16 %v944, %v928
  %v1249 = vpack.c.b16 %v945, %v929
  %v1250 = vpack.c.b16 %v962, %v946
  %v1251 = vpack.c.b16 %v963, %v947
  %v1252 = vpack.c.b16 %v964, %v948
  %v1253 = vpack.c.b16 %v965, %v949
  %v1254 = vpack.c.b16 %v966, %v950
  %v1255 = vpack.c.b16 %v967, %v951
  %v1256 = vpack.c.b16 %v968, %v952
  %v1257 = vpack.c.b16 %v969, %v953
  %v1258 = vpack.c.b16 %v970, %v954
  %v1259 = vpack.c.b16 %v971, %v955
  %v1260 = vpack.c.b16 %v972, %v956
  %v1261 = vpack.c.b16 %v973, %v957
  %v1262 = vpack.c.b16 %v974, %v958
  %v1263 = vpack.c.b16 %v975, %v959
  %v1264 = vpack.c.b16 %v976, %v960
  %v1265 = vpack.c.b16 %v977, %v961
  %v1266 = vpack.c.b16 %v994, %v978
  %v1267 = vpack.c.b16 %v995, %v979
  %v1268 = vpack.c.b16 %v996, %v980
  %v1269 = vpack.c.b16 %v997, %v981
  %v1270 = vpack.c.b16 %v998, %v982
  %v1271 = vpack.c.b16 %v999, %v983
  %v1272 = vpack.c.b16 %v1000, %v984
  %v1273 = vpack.c.b16 %v1001, %v985
  %v1274 = vpack.c.b16 %v1002, %v986
  %v1275 = vpack.c.b16 %v1003, %v987
  %v1276 = vpack.c.b16 %v1004, %v988
  %v1277 = vpack.c.b16 %v1005, %v989
  %v1278 = vpack.c.b16 %v1006, %v990
  %v1279 = vpack.c.b16 %v1007, %v991
  %v1280 = vpack.c.b16 %v1008, %v992
  %v1281 = vpack.c.b16 %v1009, %v993
  %v1282 = vpack.c.b16 %v1026, %v1010
  %v1283 = vpack.c.b16 %v1027, %v1011
  %v1284 = vpack.c.b16 %v1028, %v1012
  %v1285 = vpack.c.b16 %v1029, %v1013
  %v1286 = vpack.c.b16 %v1030, %v1014
  %v1287 = vpack.c.b16 %v1031, %v1015
  %v1288 = vpack.c.b16 %v1032, %v1016
  %v1289 = vpack.c.b16 %v1033, %v1017
  %v1290 = vpack.c.b16 %v1034, %v1018
  %v1291 = vpack.c.b16 %v1035, %v1019
  %v1292 = vpack.c.b16 %v1036, %v1020
  %v1293 = vpack.c.b16 %v1037, %v1021
  %v1294 = vpack.c.b16 %v1038, %v1022
  %v1295 = vpack.c.b16 %v1039, %v1023
  %v1296 = vpack.c.b16 %v1040, %v1024
  %v1297 = vpack.c.b16 %v1041, %v1025
  %1554 = vmatpush.bf16.msra.mxu0 %v1154
  %1555 = vmatpush.bf16.msra.mxu0 %v1138
  %1556 = vmatpush.bf16.msra.mxu0 %v1122
  %1557 = vmatpush.bf16.msra.mxu0 %v1106
  %1558 = vmatpush.bf16.msra.mxu0 %v1090
  %1559 = vmatpush.bf16.msra.mxu0 %v1074
  %1560 = vmatpush.bf16.msra.mxu0 %v1058
  %1561 = vmatpush.bf16.msra.mxu0 %v1042
  %1562 = vmatmul.bf16.gmra.mxu0 %v270
  %v1563 = vpop.f32.mrf.mxu0
  %v1564 = vadd.f32 0.0, %v1563
  %v1565 = vpop.f32.mrf.mxu0
  %1566 = vdwg.mxu0
  %1567 = vmatpush.bf16.msra.mxu0 %v1282
  %1568 = vmatpush.bf16.msra.mxu0 %v1266
  %1569 = vmatpush.bf16.msra.mxu0 %v1250
  %1570 = vmatpush.bf16.msra.mxu0 %v1234
  %1571 = vmatpush.bf16.msra.mxu0 %v1218
  %1572 = vmatpush.bf16.msra.mxu0 %v1202
  %1573 = vmatpush.bf16.msra.mxu0 %v1186
  %1574 = vmatpush.bf16.msra.mxu0 %v1170
  %1575 = vmatmul.bf16.gmra.mxu0 %v271
  %v1576 = vpop.f32.mrf.mxu0
  %v1577 = vadd.f32 %v1564, %v1576
  %v1578 = vpop.f32.mrf.mxu0
  %1579 = vdwg.mxu0
  %1580 = vmatpush.bf16.msra.mxu0 %v1155
  %1581 = vmatpush.bf16.msra.mxu0 %v1139
  %1582 = vmatpush.bf16.msra.mxu0 %v1123
  %1583 = vmatpush.bf16.msra.mxu0 %v1107
  %1584 = vmatpush.bf16.msra.mxu0 %v1091
  %1585 = vmatpush.bf16.msra.mxu0 %v1075
  %1586 = vmatpush.bf16.msra.mxu0 %v1059
  %1587 = vmatpush.bf16.msra.mxu0 %v1043
  %1588 = vmatmul.bf16.gmra.mxu0 %v270
  %v1589 = vpop.f32.mrf.mxu0
  %v1590 = vadd.f32 0.0, %v1589
  %v1591 = vpop.f32.mrf.mxu0
  %1592 = vdwg.mxu0
  %1593 = vmatpush.bf16.msra.mxu0 %v1283
  %1594 = vmatpush.bf16.msra.mxu0 %v1267
  %1595 = vmatpush.bf16.msra.mxu0 %v1251
  %1596 = vmatpush.bf16.msra.mxu0 %v1235
  %1597 = vmatpush.bf16.msra.mxu0 %v1219
  %1598 = vmatpush.bf16.msra.mxu0 %v1203
  %1599 = vmatpush.bf16.msra.mxu0 %v1187
  %1600 = vmatpush.bf16.msra.mxu0 %v1171
  %1601 = vmatmul.bf16.gmra.mxu0 %v271
  %v1602 = vpop.f32.mrf.mxu0
  %v1603 = vadd.f32 %v1590, %v1602
  %v1604 = vpop.f32.mrf.mxu0
  %1605 = vdwg.mxu0
  %1606 = vmatpush.bf16.msra.mxu0 %v1156
  %1607 = vmatpush.bf16.msra.mxu0 %v1140
  %1608 = vmatpush.bf16.msra.mxu0 %v1124
  %1609 = vmatpush.bf16.msra.mxu0 %v1108
  %1610 = vmatpush.bf16.msra.mxu0 %v1092
  %1611 = vmatpush.bf16.msra.mxu0 %v1076
  %1612 = vmatpush.bf16.msra.mxu0 %v1060
  %1613 = vmatpush.bf16.msra.mxu0 %v1044
  %1614 = vmatmul.bf16.gmra.mxu0 %v270
  %v1615 = vpop.f32.mrf.mxu0
  %v1616 = vadd.f32 0.0, %v1615
  %v1617 = vpop.f32.mrf.mxu0
  %1618 = vdwg.mxu0
  %1619 = vmatpush.bf16.msra.mxu0 %v1284
  %1620 = vmatpush.bf16.msra.mxu0 %v1268
  %1621 = vmatpush.bf16.msra.mxu0 %v1252
  %1622 = vmatpush.bf16.msra.mxu0 %v1236
  %1623 = vmatpush.bf16.msra.mxu0 %v1220
  %1624 = vmatpush.bf16.msra.mxu0 %v1204
  %1625 = vmatpush.bf16.msra.mxu0 %v1188
  %1626 = vmatpush.bf16.msra.mxu0 %v1172
  %1627 = vmatmul.bf16.gmra.mxu0 %v271
  %v1628 = vpop.f32.mrf.mxu0
  %v1629 = vadd.f32 %v1616, %v1628
  %v1630 = vpop.f32.mrf.mxu0
  %1631 = vdwg.mxu0
  %1632 = vmatpush.bf16.msra.mxu0 %v1157
  %1633 = vmatpush.bf16.msra.mxu0 %v1141
  %1634 = vmatpush.bf16.msra.mxu0 %v1125
  %1635 = vmatpush.bf16.msra.mxu0 %v1109
  %1636 = vmatpush.bf16.msra.mxu0 %v1093
  %1637 = vmatpush.bf16.msra.mxu0 %v1077
  %1638 = vmatpush.bf16.msra.mxu0 %v1061
  %1639 = vmatpush.bf16.msra.mxu0 %v1045
  %1640 = vmatmul.bf16.gmra.mxu0 %v270
  %v1641 = vpop.f32.mrf.mxu0
  %v1642 = vadd.f32 0.0, %v1641
  %v1643 = vpop.f32.mrf.mxu0
  %1644 = vdwg.mxu0
  %1645 = vmatpush.bf16.msra.mxu0 %v1285
  %1646 = vmatpush.bf16.msra.mxu0 %v1269
  %1647 = vmatpush.bf16.msra.mxu0 %v1253
  %1648 = vmatpush.bf16.msra.mxu0 %v1237
  %1649 = vmatpush.bf16.msra.mxu0 %v1221
  %1650 = vmatpush.bf16.msra.mxu0 %v1205
  %1651 = vmatpush.bf16.msra.mxu0 %v1189
  %1652 = vmatpush.bf16.msra.mxu0 %v1173
  %1653 = vmatmul.bf16.gmra.mxu0 %v271
  %v1654 = vpop.f32.mrf.mxu0
  %v1655 = vadd.f32 %v1642, %v1654
  %v1656 = vpop.f32.mrf.mxu0
  %1657 = vdwg.mxu0
  %1658 = vmatpush.bf16.msra.mxu0 %v1158
  %1659 = vmatpush.bf16.msra.mxu0 %v1142
  %1660 = vmatpush.bf16.msra.mxu0 %v1126
  %1661 = vmatpush.bf16.msra.mxu0 %v1110
  %1662 = vmatpush.bf16.msra.mxu0 %v1094
  %1663 = vmatpush.bf16.msra.mxu0 %v1078
  %1664 = vmatpush.bf16.msra.mxu0 %v1062
  %1665 = vmatpush.bf16.msra.mxu0 %v1046
  %1666 = vmatmul.bf16.gmra.mxu0 %v270
  %v1667 = vpop.f32.mrf.mxu0
  %v1668 = vadd.f32 0.0, %v1667
  %v1669 = vpop.f32.mrf.mxu0
  %1670 = vdwg.mxu0
  %1671 = vmatpush.bf16.msra.mxu0 %v1286
  %1672 = vmatpush.bf16.msra.mxu0 %v1270
  %1673 = vmatpush.bf16.msra.mxu0 %v1254
  %1674 = vmatpush.bf16.msra.mxu0 %v1238
  %1675 = vmatpush.bf16.msra.mxu0 %v1222
  %1676 = vmatpush.bf16.msra.mxu0 %v1206
  %1677 = vmatpush.bf16.msra.mxu0 %v1190
  %1678 = vmatpush.bf16.msra.mxu0 %v1174
  %1679 = vmatmul.bf16.gmra.mxu0 %v271
  %v1680 = vpop.f32.mrf.mxu0
  %v1681 = vadd.f32 %v1668, %v1680
  %v1682 = vpop.f32.mrf.mxu0
  %1683 = vdwg.mxu0
  %1684 = vmatpush.bf16.msra.mxu0 %v1159
  %1685 = vmatpush.bf16.msra.mxu0 %v1143
  %1686 = vmatpush.bf16.msra.mxu0 %v1127
  %1687 = vmatpush.bf16.msra.mxu0 %v1111
  %1688 = vmatpush.bf16.msra.mxu0 %v1095
  %1689 = vmatpush.bf16.msra.mxu0 %v1079
  %1690 = vmatpush.bf16.msra.mxu0 %v1063
  %1691 = vmatpush.bf16.msra.mxu0 %v1047
  %1692 = vmatmul.bf16.gmra.mxu0 %v270
  %v1693 = vpop.f32.mrf.mxu0
  %v1694 = vadd.f32 0.0, %v1693
  %v1695 = vpop.f32.mrf.mxu0
  %1696 = vdwg.mxu0
  %1697 = vmatpush.bf16.msra.mxu0 %v1287
  %1698 = vmatpush.bf16.msra.mxu0 %v1271
  %1699 = vmatpush.bf16.msra.mxu0 %v1255
  %1700 = vmatpush.bf16.msra.mxu0 %v1239
  %1701 = vmatpush.bf16.msra.mxu0 %v1223
  %1702 = vmatpush.bf16.msra.mxu0 %v1207
  %1703 = vmatpush.bf16.msra.mxu0 %v1191
  %1704 = vmatpush.bf16.msra.mxu0 %v1175
  %1705 = vmatmul.bf16.gmra.mxu0 %v271
  %v1706 = vpop.f32.mrf.mxu0
  %v1707 = vadd.f32 %v1694, %v1706
  %v1708 = vpop.f32.mrf.mxu0
  %1709 = vdwg.mxu0
  %1710 = vmatpush.bf16.msra.mxu0 %v1160
  %1711 = vmatpush.bf16.msra.mxu0 %v1144
  %1712 = vmatpush.bf16.msra.mxu0 %v1128
  %1713 = vmatpush.bf16.msra.mxu0 %v1112
  %1714 = vmatpush.bf16.msra.mxu0 %v1096
  %1715 = vmatpush.bf16.msra.mxu0 %v1080
  %1716 = vmatpush.bf16.msra.mxu0 %v1064
  %1717 = vmatpush.bf16.msra.mxu0 %v1048
  %1718 = vmatmul.bf16.gmra.mxu0 %v270
  %v1719 = vpop.f32.mrf.mxu0
  %v1720 = vadd.f32 0.0, %v1719
  %v1721 = vpop.f32.mrf.mxu0
  %1722 = vdwg.mxu0
  %1723 = vmatpush.bf16.msra.mxu0 %v1288
  %1724 = vmatpush.bf16.msra.mxu0 %v1272
  %1725 = vmatpush.bf16.msra.mxu0 %v1256
  %1726 = vmatpush.bf16.msra.mxu0 %v1240
  %1727 = vmatpush.bf16.msra.mxu0 %v1224
  %1728 = vmatpush.bf16.msra.mxu0 %v1208
  %1729 = vmatpush.bf16.msra.mxu0 %v1192
  %1730 = vmatpush.bf16.msra.mxu0 %v1176
  %1731 = vmatmul.bf16.gmra.mxu0 %v271
  %v1732 = vpop.f32.mrf.mxu0
  %v1733 = vadd.f32 %v1720, %v1732
  %v1734 = vpop.f32.mrf.mxu0
  %1735 = vdwg.mxu0
  %1736 = vmatpush.bf16.msra.mxu0 %v1161
  %1737 = vmatpush.bf16.msra.mxu0 %v1145
  %1738 = vmatpush.bf16.msra.mxu0 %v1129
  %1739 = vmatpush.bf16.msra.mxu0 %v1113
  %1740 = vmatpush.bf16.msra.mxu0 %v1097
  %1741 = vmatpush.bf16.msra.mxu0 %v1081
  %1742 = vmatpush.bf16.msra.mxu0 %v1065
  %1743 = vmatpush.bf16.msra.mxu0 %v1049
  %1744 = vmatmul.bf16.gmra.mxu0 %v270
  %v1745 = vpop.f32.mrf.mxu0
  %v1746 = vadd.f32 0.0, %v1745
  %v1747 = vpop.f32.mrf.mxu0
  %1748 = vdwg.mxu0
  %1749 = vmatpush.bf16.msra.mxu0 %v1289
  %1750 = vmatpush.bf16.msra.mxu0 %v1273
  %1751 = vmatpush.bf16.msra.mxu0 %v1257
  %1752 = vmatpush.bf16.msra.mxu0 %v1241
  %1753 = vmatpush.bf16.msra.mxu0 %v1225
  %1754 = vmatpush.bf16.msra.mxu0 %v1209
  %1755 = vmatpush.bf16.msra.mxu0 %v1193
  %1756 = vmatpush.bf16.msra.mxu0 %v1177
  %1757 = vmatmul.bf16.gmra.mxu0 %v271
  %v1758 = vpop.f32.mrf.mxu0
  %v1759 = vadd.f32 %v1746, %v1758
  %v1760 = vpop.f32.mrf.mxu0
  %1761 = vdwg.mxu0
  %1762 = vmatpush.bf16.msra.mxu0 %v1162
  %1763 = vmatpush.bf16.msra.mxu0 %v1146
  %1764 = vmatpush.bf16.msra.mxu0 %v1130
  %1765 = vmatpush.bf16.msra.mxu0 %v1114
  %1766 = vmatpush.bf16.msra.mxu0 %v1098
  %1767 = vmatpush.bf16.msra.mxu0 %v1082
  %1768 = vmatpush.bf16.msra.mxu0 %v1066
  %1769 = vmatpush.bf16.msra.mxu0 %v1050
  %1770 = vmatmul.bf16.gmra.mxu0 %v270
  %v1771 = vpop.f32.mrf.mxu0
  %v1772 = vadd.f32 0.0, %v1771
  %v1773 = vpop.f32.mrf.mxu0
  %1774 = vdwg.mxu0
  %1775 = vmatpush.bf16.msra.mxu0 %v1290
  %1776 = vmatpush.bf16.msra.mxu0 %v1274
  %1777 = vmatpush.bf16.msra.mxu0 %v1258
  %1778 = vmatpush.bf16.msra.mxu0 %v1242
  %1779 = vmatpush.bf16.msra.mxu0 %v1226
  %1780 = vmatpush.bf16.msra.mxu0 %v1210
  %1781 = vmatpush.bf16.msra.mxu0 %v1194
  %1782 = vmatpush.bf16.msra.mxu0 %v1178
  %1783 = vmatmul.bf16.gmra.mxu0 %v271
  %v1784 = vpop.f32.mrf.mxu0
  %v1785 = vadd.f32 %v1772, %v1784
  %v1786 = vpop.f32.mrf.mxu0
  %1787 = vdwg.mxu0
  %1788 = vmatpush.bf16.msra.mxu0 %v1163
  %1789 = vmatpush.bf16.msra.mxu0 %v1147
  %1790 = vmatpush.bf16.msra.mxu0 %v1131
  %1791 = vmatpush.bf16.msra.mxu0 %v1115
  %1792 = vmatpush.bf16.msra.mxu0 %v1099
  %1793 = vmatpush.bf16.msra.mxu0 %v1083
  %1794 = vmatpush.bf16.msra.mxu0 %v1067
  %1795 = vmatpush.bf16.msra.mxu0 %v1051
  %1796 = vmatmul.bf16.gmra.mxu0 %v270
  %v1797 = vpop.f32.mrf.mxu0
  %v1798 = vadd.f32 0.0, %v1797
  %v1799 = vpop.f32.mrf.mxu0
  %1800 = vdwg.mxu0
  %1801 = vmatpush.bf16.msra.mxu0 %v1291
  %1802 = vmatpush.bf16.msra.mxu0 %v1275
  %1803 = vmatpush.bf16.msra.mxu0 %v1259
  %1804 = vmatpush.bf16.msra.mxu0 %v1243
  %1805 = vmatpush.bf16.msra.mxu0 %v1227
  %1806 = vmatpush.bf16.msra.mxu0 %v1211
  %1807 = vmatpush.bf16.msra.mxu0 %v1195
  %1808 = vmatpush.bf16.msra.mxu0 %v1179
  %1809 = vmatmul.bf16.gmra.mxu0 %v271
  %v1810 = vpop.f32.mrf.mxu0
  %v1811 = vadd.f32 %v1798, %v1810
  %v1812 = vpop.f32.mrf.mxu0
  %1813 = vdwg.mxu0
  %1814 = vmatpush.bf16.msra.mxu0 %v1164
  %1815 = vmatpush.bf16.msra.mxu0 %v1148
  %1816 = vmatpush.bf16.msra.mxu0 %v1132
  %1817 = vmatpush.bf16.msra.mxu0 %v1116
  %1818 = vmatpush.bf16.msra.mxu0 %v1100
  %1819 = vmatpush.bf16.msra.mxu0 %v1084
  %1820 = vmatpush.bf16.msra.mxu0 %v1068
  %1821 = vmatpush.bf16.msra.mxu0 %v1052
  %1822 = vmatmul.bf16.gmra.mxu0 %v270
  %v1823 = vpop.f32.mrf.mxu0
  %v1824 = vadd.f32 0.0, %v1823
  %v1825 = vpop.f32.mrf.mxu0
  %1826 = vdwg.mxu0
  %1827 = vmatpush.bf16.msra.mxu0 %v1292
  %1828 = vmatpush.bf16.msra.mxu0 %v1276
  %1829 = vmatpush.bf16.msra.mxu0 %v1260
  %1830 = vmatpush.bf16.msra.mxu0 %v1244
  %1831 = vmatpush.bf16.msra.mxu0 %v1228
  %1832 = vmatpush.bf16.msra.mxu0 %v1212
  %1833 = vmatpush.bf16.msra.mxu0 %v1196
  %1834 = vmatpush.bf16.msra.mxu0 %v1180
  %1835 = vmatmul.bf16.gmra.mxu0 %v271
  %v1836 = vpop.f32.mrf.mxu0
  %v1837 = vadd.f32 %v1824, %v1836
  %v1838 = vpop.f32.mrf.mxu0
  %1839 = vdwg.mxu0
  %1840 = vmatpush.bf16.msra.mxu0 %v1165
  %1841 = vmatpush.bf16.msra.mxu0 %v1149
  %1842 = vmatpush.bf16.msra.mxu0 %v1133
  %1843 = vmatpush.bf16.msra.mxu0 %v1117
  %1844 = vmatpush.bf16.msra.mxu0 %v1101
  %1845 = vmatpush.bf16.msra.mxu0 %v1085
  %1846 = vmatpush.bf16.msra.mxu0 %v1069
  %1847 = vmatpush.bf16.msra.mxu0 %v1053
  %1848 = vmatmul.bf16.gmra.mxu0 %v270
  %v1849 = vpop.f32.mrf.mxu0
  %v1850 = vadd.f32 0.0, %v1849
  %v1851 = vpop.f32.mrf.mxu0
  %1852 = vdwg.mxu0
  %1853 = vmatpush.bf16.msra.mxu0 %v1293
  %1854 = vmatpush.bf16.msra.mxu0 %v1277
  %1855 = vmatpush.bf16.msra.mxu0 %v1261
  %1856 = vmatpush.bf16.msra.mxu0 %v1245
  %1857 = vmatpush.bf16.msra.mxu0 %v1229
  %1858 = vmatpush.bf16.msra.mxu0 %v1213
  %1859 = vmatpush.bf16.msra.mxu0 %v1197
  %1860 = vmatpush.bf16.msra.mxu0 %v1181
  %1861 = vmatmul.bf16.gmra.mxu0 %v271
  %v1862 = vpop.f32.mrf.mxu0
  %v1863 = vadd.f32 %v1850, %v1862
  %v1864 = vpop.f32.mrf.mxu0
  %1865 = vdwg.mxu0
  %1866 = vmatpush.bf16.msra.mxu0 %v1166
  %1867 = vmatpush.bf16.msra.mxu0 %v1150
  %1868 = vmatpush.bf16.msra.mxu0 %v1134
  %1869 = vmatpush.bf16.msra.mxu0 %v1118
  %1870 = vmatpush.bf16.msra.mxu0 %v1102
  %1871 = vmatpush.bf16.msra.mxu0 %v1086
  %1872 = vmatpush.bf16.msra.mxu0 %v1070
  %1873 = vmatpush.bf16.msra.mxu0 %v1054
  %1874 = vmatmul.bf16.gmra.mxu0 %v270
  %v1875 = vpop.f32.mrf.mxu0
  %v1876 = vadd.f32 0.0, %v1875
  %v1877 = vpop.f32.mrf.mxu0
  %1878 = vdwg.mxu0
  %1879 = vmatpush.bf16.msra.mxu0 %v1294
  %1880 = vmatpush.bf16.msra.mxu0 %v1278
  %1881 = vmatpush.bf16.msra.mxu0 %v1262
  %1882 = vmatpush.bf16.msra.mxu0 %v1246
  %1883 = vmatpush.bf16.msra.mxu0 %v1230
  %1884 = vmatpush.bf16.msra.mxu0 %v1214
  %1885 = vmatpush.bf16.msra.mxu0 %v1198
  %1886 = vmatpush.bf16.msra.mxu0 %v1182
  %1887 = vmatmul.bf16.gmra.mxu0 %v271
  %v1888 = vpop.f32.mrf.mxu0
  %v1889 = vadd.f32 %v1876, %v1888
  %v1890 = vpop.f32.mrf.mxu0
  %1891 = vdwg.mxu0
  %1892 = vmatpush.bf16.msra.mxu0 %v1167
  %1893 = vmatpush.bf16.msra.mxu0 %v1151
  %1894 = vmatpush.bf16.msra.mxu0 %v1135
  %1895 = vmatpush.bf16.msra.mxu0 %v1119
  %1896 = vmatpush.bf16.msra.mxu0 %v1103
  %1897 = vmatpush.bf16.msra.mxu0 %v1087
  %1898 = vmatpush.bf16.msra.mxu0 %v1071
  %1899 = vmatpush.bf16.msra.mxu0 %v1055
  %1900 = vmatmul.bf16.gmra.mxu0 %v270
  %v1901 = vpop.f32.mrf.mxu0
  %v1902 = vadd.f32 0.0, %v1901
  %v1903 = vpop.f32.mrf.mxu0
  %1904 = vdwg.mxu0
  %1905 = vmatpush.bf16.msra.mxu0 %v1295
  %1906 = vmatpush.bf16.msra.mxu0 %v1279
  %1907 = vmatpush.bf16.msra.mxu0 %v1263
  %1908 = vmatpush.bf16.msra.mxu0 %v1247
  %1909 = vmatpush.bf16.msra.mxu0 %v1231
  %1910 = vmatpush.bf16.msra.mxu0 %v1215
  %1911 = vmatpush.bf16.msra.mxu0 %v1199
  %1912 = vmatpush.bf16.msra.mxu0 %v1183
  %1913 = vmatmul.bf16.gmra.mxu0 %v271
  %v1914 = vpop.f32.mrf.mxu0
  %v1915 = vadd.f32 %v1902, %v1914
  %v1916 = vpop.f32.mrf.mxu0
  %1917 = vdwg.mxu0
  %1918 = vmatpush.bf16.msra.mxu0 %v1168
  %1919 = vmatpush.bf16.msra.mxu0 %v1152
  %1920 = vmatpush.bf16.msra.mxu0 %v1136
  %1921 = vmatpush.bf16.msra.mxu0 %v1120
  %1922 = vmatpush.bf16.msra.mxu0 %v1104
  %1923 = vmatpush.bf16.msra.mxu0 %v1088
  %1924 = vmatpush.bf16.msra.mxu0 %v1072
  %1925 = vmatpush.bf16.msra.mxu0 %v1056
  %1926 = vmatmul.bf16.gmra.mxu0 %v270
  %v1927 = vpop.f32.mrf.mxu0
  %v1928 = vadd.f32 0.0, %v1927
  %v1929 = vpop.f32.mrf.mxu0
  %1930 = vdwg.mxu0
  %1931 = vmatpush.bf16.msra.mxu0 %v1296
  %1932 = vmatpush.bf16.msra.mxu0 %v1280
  %1933 = vmatpush.bf16.msra.mxu0 %v1264
  %1934 = vmatpush.bf16.msra.mxu0 %v1248
  %1935 = vmatpush.bf16.msra.mxu0 %v1232
  %1936 = vmatpush.bf16.msra.mxu0 %v1216
  %1937 = vmatpush.bf16.msra.mxu0 %v1200
  %1938 = vmatpush.bf16.msra.mxu0 %v1184
  %1939 = vmatmul.bf16.gmra.mxu0 %v271
  %v1940 = vpop.f32.mrf.mxu0
  %v1941 = vadd.f32 %v1928, %v1940
  %v1942 = vpop.f32.mrf.mxu0
  %1943 = vdwg.mxu0
  %1944 = vmatpush.bf16.msra.mxu0 %v1169
  %1945 = vmatpush.bf16.msra.mxu0 %v1153
  %1946 = vmatpush.bf16.msra.mxu0 %v1137
  %1947 = vmatpush.bf16.msra.mxu0 %v1121
  %1948 = vmatpush.bf16.msra.mxu0 %v1105
  %1949 = vmatpush.bf16.msra.mxu0 %v1089
  %1950 = vmatpush.bf16.msra.mxu0 %v1073
  %1951 = vmatpush.bf16.msra.mxu0 %v1057
  %1952 = vmatmul.bf16.gmra.mxu0 %v270
  %v1953 = vpop.f32.mrf.mxu0
  %v1954 = vadd.f32 0.0, %v1953
  %v1955 = vpop.f32.mrf.mxu0
  %1956 = vdwg.mxu0
  %1957 = vmatpush.bf16.msra.mxu0 %v1297
  %1958 = vmatpush.bf16.msra.mxu0 %v1281
  %1959 = vmatpush.bf16.msra.mxu0 %v1265
  %1960 = vmatpush.bf16.msra.mxu0 %v1249
  %1961 = vmatpush.bf16.msra.mxu0 %v1233
  %1962 = vmatpush.bf16.msra.mxu0 %v1217
  %1963 = vmatpush.bf16.msra.mxu0 %v1201
  %1964 = vmatpush.bf16.msra.mxu0 %v1185
  %1965 = vmatmul.bf16.gmra.mxu0 %v271
  %v1966 = vpop.f32.mrf.mxu0
  %v1967 = vadd.f32 %v1954, %v1966
  %v1968 = vpop.f32.mrf.mxu0
  %1969 = vdwg.mxu0
  %v1986 = vrot.slane %v1603, 6
  %v1987 = vrot.slane %v1629, 4
  %v1988 = vrot.slane %v1655, 2
  %v1989 = vrot.slane %v1707, 6
  %v1990 = vrot.slane %v1733, 4
  %v1991 = vrot.slane %v1759, 2
  %v1992 = vrot.slane %v1811, 6
  %v1993 = vrot.slane %v1837, 4
  %v1994 = vrot.slane %v1863, 2
  %v1995 = vrot.slane %v1915, 6
  %v1996 = vrot.slane %v1941, 4
  %v1997 = vrot.slane %v1967, 2
  %vm1998 = vcmask 1041408
  %v1999 = vsel %vm1998, %v1577, %v1986
  %vm2000 = vcmask 1045508
  %v2001 = vsel %vm2000, %v1987, %v1988
  %vm2002 = vcmask 1043456
  %v2003 = vsel %vm2002, %v1999, %v2001
  %v2004 = vsel %vm1998, %v1681, %v1989
  %v2005 = vsel %vm2000, %v1990, %v1991
  %v2006 = vsel %vm2002, %v2004, %v2005
  %v2007 = vsel %vm1998, %v1785, %v1992
  %v2008 = vsel %vm2000, %v1993, %v1994
  %v2009 = vsel %vm2002, %v2007, %v2008
  %v2010 = vsel %vm1998, %v1889, %v1995
  %v2011 = vsel %vm2000, %v1996, %v1997
  %v2012 = vsel %vm2002, %v2010, %v2011
  %2017 = vst [vmem:[%s2] sm:$0xff] %v2003
  %2018 = vst [vmem:[%s2 + $0x8] sm:$0xff] %v2006
  %2019 = vst [vmem:[%s2 + $0x10] sm:$0xff] %v2009
  %2020 = vst [vmem:[%s2 + $0x18] sm:$0xff] %v2012
  // Predicated region
  $region10: #{vae_forward.15} parent=0 // pred_check
    _
  $region11: #{vae_forward.15} parent=0 // pred_check_branch
    %2022 = sbr.rel (0) target = $region13
  $region12: #{vae_forward.15} parent=0 // pred_region
    _
  $region13: #{vae_forward.15} parent=0 // pred_fallthru
    _
  // Predicated region
  $region14: #{vae_forward.15} parent=0 // pred_check
    _
  $region15: #{vae_forward.15} parent=0 // pred_check_branch
    %2024 = sbr.rel (0) target = $region17
  $region16: #{vae_forward.15} parent=0 // pred_region
    _
  $region17: #{vae_forward.15} parent=0 // pred_fallthru
    _

// kernel: vae_forward.16
$region0: #{vae_forward.16}
  #allocation0 [shape = 'u32[]', space=smem, size = 0x4, offset = 0x4, fixed_abs, tag = 'smem constant byte address 0x4 - core index']
  #allocation1 [shape = 'u32[72,128]{1,0:T(1,128)}', space=vmem, size = 0x9000, scoped, tag = 'internal scratch']
  %s0 = inlined_call_operand.vmem [shape: f32[32,128], index: 0, kind: input, shape index: {}]
  %s1 = inlined_call_operand.vmem [shape: f32[1,128], index: 1, kind: input, shape index: {}]
  %s2 = inlined_call_operand.vmem [shape: bf16[128,576], index: 2, kind: input, shape index: {}]
  %s3 = inlined_call_operand.vmem [shape: f32[32,576], index: 3, kind: output, shape index: {}]
  %s4 = sld [smem:[#allocation0]]
  $region22: #{vae_forward.16} parent=0
    _
  %s6 = ssub.s32 1, %s4
  %s7 = scalar_select 0, %s6, %s4
  // Predicated region
  $region2: #{vae_forward.16} parent=0 // pred_check
    _
  $region3: #{vae_forward.16} parent=0 // pred_check_branch
    %9 = sbr.rel (0) target = $region5
  $region4: #{vae_forward.16} parent=0 // pred_region
    _
  $region5: #{vae_forward.16} parent=0 // pred_fallthru
    _
  // Predicated region
  $region6: #{vae_forward.16} parent=0 // pred_check
    _
  $region7: #{vae_forward.16} parent=0 // pred_check_branch
    %11 = sbr.rel (0) target = $region9
  $region8: #{vae_forward.16} parent=0 // pred_region
    _
  $region9: #{vae_forward.16} parent=0 // pred_fallthru
    _
  // Predicated region
  $region10: #{vae_forward.16} parent=0 // pred_check
    _
  $region11: #{vae_forward.16} parent=0 // pred_check_branch
    %13 = sbr.rel (0) target = $region13
  $region12: #{vae_forward.16} parent=0 // pred_region
    _
  $region13: #{vae_forward.16} parent=0 // pred_fallthru
    _
  %v14 = vld [vmem:[%s0] sm:$0xff]
  %v15 = vld [vmem:[%s0 + $0x8] sm:$0xff]
  %v16 = vld [vmem:[%s0 + $0x10] sm:$0xff]
  %v17 = vld [vmem:[%s0 + $0x18] sm:$0xff]
  %v18 = vld [vmem:[%s1] sm:$0x1]
  %v20 = vperm.slane %v18, 0
  %v22 = vadd.f32 %v14, %v20
  %v23 = vadd.f32 %v15, %v20
  %v24 = vadd.f32 %v16, %v20
  %v25 = vadd.f32 %v17, %v20
  %v26 = vmax.f32 %v22, 0.0
  %v27 = vmax.f32 %v23, 0.0
  %v28 = vmax.f32 %v24, 0.0
  %v29 = vmax.f32 %v25, 0.0
  %v30 = vld [vmem:[%s2] sm:$0xff]
  %v31 = vld [vmem:[%s2 + $0x8] sm:$0xff]
  %v32 = vld [vmem:[%s2 + $0x10] sm:$0xf]
  %v33 = vld [vmem:[%s2 + $0x14] sm:$0xff]
  %v34 = vld [vmem:[%s2 + $0x1c] sm:$0xff]
  %v35 = vld [vmem:[%s2 + $0x24] sm:$0xf]
  %v36 = vld [vmem:[%s2 + $0x28] sm:$0xff]
  %v37 = vld [vmem:[%s2 + $0x30] sm:$0xff]
  %v38 = vld [vmem:[%s2 + $0x38] sm:$0xf]
  %v39 = vld [vmem:[%s2 + $0x3c] sm:$0xff]
  %v40 = vld [vmem:[%s2 + $0x44] sm:$0xff]
  %v41 = vld [vmem:[%s2 + $0x4c] sm:$0xf]
  %v42 = vld [vmem:[%s2 + $0x50] sm:$0xff]
  %v43 = vld [vmem:[%s2 + $0x58] sm:$0xff]
  %v44 = vld [vmem:[%s2 + $0x60] sm:$0xf]
  %v45 = vld [vmem:[%s2 + $0x64] sm:$0xff]
  %v46 = vld [vmem:[%s2 + $0x6c] sm:$0xff]
  %v47 = vld [vmem:[%s2 + $0x74] sm:$0xf]
  %v48 = vld [vmem:[%s2 + $0x78] sm:$0xff]
  %v49 = vld [vmem:[%s2 + $0x80] sm:$0xff]
  %v50 = vld [vmem:[%s2 + $0x88] sm:$0xf]
  %v51 = vld [vmem:[%s2 + $0x8c] sm:$0xff]
  %v52 = vld [vmem:[%s2 + $0x94] sm:$0xff]
  %v53 = vld [vmem:[%s2 + $0x9c] sm:$0xf]
  %v54 = vld [vmem:[%s2 + $0xa0] sm:$0xff]
  %v55 = vld [vmem:[%s2 + $0xa8] sm:$0xff]
  %v56 = vld [vmem:[%s2 + $0xb0] sm:$0xf]
  %v57 = vld [vmem:[%s2 + $0xb4] sm:$0xff]
  %v58 = vld [vmem:[%s2 + $0xbc] sm:$0xff]
  %v59 = vld [vmem:[%s2 + $0xc4] sm:$0xf]
  %v60 = vld [vmem:[%s2 + $0xc8] sm:$0xff]
  %v61 = vld [vmem:[%s2 + $0xd0] sm:$0xff]
  %v62 = vld [vmem:[%s2 + $0xd8] sm:$0xf]
  %v63 = vld [vmem:[%s2 + $0xdc] sm:$0xff]
  %v64 = vld [vmem:[%s2 + $0xe4] sm:$0xff]
  %v65 = vld [vmem:[%s2 + $0xec] sm:$0xf]
  %v66 = vld [vmem:[%s2 + $0xf0] sm:$0xff]
  %v67 = vld [vmem:[%s2 + $0xf8] sm:$0xff]
  %v68 = vld [vmem:[%s2 + $0x100] sm:$0xf]
  %v69 = vld [vmem:[%s2 + $0x104] sm:$0xff]
  %v70 = vld [vmem:[%s2 + $0x10c] sm:$0xff]
  %v71 = vld [vmem:[%s2 + $0x114] sm:$0xf]
  %v72 = vld [vmem:[%s2 + $0x118] sm:$0xff]
  %v73 = vld [vmem:[%s2 + $0x120] sm:$0xff]
  %v74 = vld [vmem:[%s2 + $0x128] sm:$0xf]
  %v75 = vld [vmem:[%s2 + $0x12c] sm:$0xff]
  %v76 = vld [vmem:[%s2 + $0x134] sm:$0xff]
  %v77 = vld [vmem:[%s2 + $0x13c] sm:$0xf]
  %v78 = vpack.c.bf16 %v27, %v26
  %v79 = vpack.c.bf16 %v29, %v28
  %v128 = vunpack.c.l.b16 %v30
  %v129 = vunpack.c.h.b16 %v30
  %v130 = vunpack.c.l.b16 %v31
  %v131 = vunpack.c.h.b16 %v31
  %v132 = vunpack.c.l.b16 %v32
  %v133 = vunpack.c.l.b16 %v33
  %v134 = vunpack.c.h.b16 %v33
  %v135 = vunpack.c.l.b16 %v34
  %v136 = vunpack.c.h.b16 %v34
  %v137 = vunpack.c.l.b16 %v35
  %v138 = vunpack.c.l.b16 %v36
  %v139 = vunpack.c.h.b16 %v36
  %v140 = vunpack.c.l.b16 %v37
  %v141 = vunpack.c.h.b16 %v37
  %v142 = vunpack.c.l.b16 %v38
  %v143 = vunpack.c.l.b16 %v39
  %v144 = vunpack.c.h.b16 %v39
  %v145 = vunpack.c.l.b16 %v40
  %v146 = vunpack.c.h.b16 %v40
  %v147 = vunpack.c.l.b16 %v41
  %v148 = vunpack.c.l.b16 %v42
  %v149 = vunpack.c.h.b16 %v42
  %v150 = vunpack.c.l.b16 %v43
  %v151 = vunpack.c.h.b16 %v43
  %v152 = vunpack.c.l.b16 %v44
  %v153 = vunpack.c.l.b16 %v45
  %v154 = vunpack.c.h.b16 %v45
  %v155 = vunpack.c.l.b16 %v46
  %v156 = vunpack.c.h.b16 %v46
  %v157 = vunpack.c.l.b16 %v47
  %v158 = vunpack.c.l.b16 %v48
  %v159 = vunpack.c.h.b16 %v48
  %v160 = vunpack.c.l.b16 %v49
  %v161 = vunpack.c.h.b16 %v49
  %v162 = vunpack.c.l.b16 %v50
  %v163 = vunpack.c.l.b16 %v51
  %v164 = vunpack.c.h.b16 %v51
  %v165 = vunpack.c.l.b16 %v52
  %v166 = vunpack.c.h.b16 %v52
  %v167 = vunpack.c.l.b16 %v53
  %v168 = vunpack.c.l.b16 %v54
  %v169 = vunpack.c.h.b16 %v54
  %v170 = vunpack.c.l.b16 %v55
  %v171 = vunpack.c.h.b16 %v55
  %v172 = vunpack.c.l.b16 %v56
  %v173 = vunpack.c.l.b16 %v57
  %v174 = vunpack.c.h.b16 %v57
  %v175 = vunpack.c.l.b16 %v58
  %v176 = vunpack.c.h.b16 %v58
  %v177 = vunpack.c.l.b16 %v59
  %v178 = vunpack.c.l.b16 %v60
  %v179 = vunpack.c.h.b16 %v60
  %v180 = vunpack.c.l.b16 %v61
  %v181 = vunpack.c.h.b16 %v61
  %v182 = vunpack.c.l.b16 %v62
  %v183 = vunpack.c.l.b16 %v63
  %v184 = vunpack.c.h.b16 %v63
  %v185 = vunpack.c.l.b16 %v64
  %v186 = vunpack.c.h.b16 %v64
  %v187 = vunpack.c.l.b16 %v65
  %v188 = vunpack.c.l.b16 %v66
  %v189 = vunpack.c.h.b16 %v66
  %v190 = vunpack.c.l.b16 %v67
  %v191 = vunpack.c.h.b16 %v67
  %v192 = vunpack.c.l.b16 %v68
  %v193 = vunpack.c.l.b16 %v69
  %v194 = vunpack.c.h.b16 %v69
  %v195 = vunpack.c.l.b16 %v70
  %v196 = vunpack.c.h.b16 %v70
  %v197 = vunpack.c.l.b16 %v71
  %v198 = vunpack.c.l.b16 %v72
  %v199 = vunpack.c.h.b16 %v72
  %v200 = vunpack.c.l.b16 %v73
  %v201 = vunpack.c.h.b16 %v73
  %v202 = vunpack.c.l.b16 %v74
  %v203 = vunpack.c.l.b16 %v75
  %v204 = vunpack.c.h.b16 %v75
  %v205 = vunpack.c.l.b16 %v76
  %v206 = vunpack.c.h.b16 %v76
  %v207 = vunpack.c.l.b16 %v77
  %v208 = vpack.c.b16 %v133, %v128
  %v209 = vpack.c.b16 %v134, %v129
  %v210 = vpack.c.b16 %v135, %v130
  %v211 = vpack.c.b16 %v136, %v131
  %v212 = vpack.c.b16 %v137, %v132
  %v213 = vpack.c.b16 %v143, %v138
  %v214 = vpack.c.b16 %v144, %v139
  %v215 = vpack.c.b16 %v145, %v140
  %v216 = vpack.c.b16 %v146, %v141
  %v217 = vpack.c.b16 %v147, %v142
  %v218 = vpack.c.b16 %v153, %v148
  %v219 = vpack.c.b16 %v154, %v149
  %v220 = vpack.c.b16 %v155, %v150
  %v221 = vpack.c.b16 %v156, %v151
  %v222 = vpack.c.b16 %v157, %v152
  %v223 = vpack.c.b16 %v163, %v158
  %v224 = vpack.c.b16 %v164, %v159
  %v225 = vpack.c.b16 %v165, %v160
  %v226 = vpack.c.b16 %v166, %v161
  %v227 = vpack.c.b16 %v167, %v162
  %v228 = vpack.c.b16 %v173, %v168
  %v229 = vpack.c.b16 %v174, %v169
  %v230 = vpack.c.b16 %v175, %v170
  %v231 = vpack.c.b16 %v176, %v171
  %v232 = vpack.c.b16 %v177, %v172
  %v233 = vpack.c.b16 %v183, %v178
  %v234 = vpack.c.b16 %v184, %v179
  %v235 = vpack.c.b16 %v185, %v180
  %v236 = vpack.c.b16 %v186, %v181
  %v237 = vpack.c.b16 %v187, %v182
  %v238 = vpack.c.b16 %v193, %v188
  %v239 = vpack.c.b16 %v194, %v189
  %v240 = vpack.c.b16 %v195, %v190
  %v241 = vpack.c.b16 %v196, %v191
  %v242 = vpack.c.b16 %v197, %v192
  %v243 = vpack.c.b16 %v203, %v198
  %v244 = vpack.c.b16 %v204, %v199
  %v245 = vpack.c.b16 %v205, %v200
  %v246 = vpack.c.b16 %v206, %v201
  %v247 = vpack.c.b16 %v207, %v202
  %288 = vmatpush.bf16.msra.mxu0 %v243
  %289 = vmatpush.bf16.msra.mxu0 %v238
  %290 = vmatpush.bf16.msra.mxu0 %v233
  %291 = vmatpush.bf16.msra.mxu0 %v228
  %292 = vmatpush.bf16.msra.mxu0 %v223
  %293 = vmatpush.bf16.msra.mxu0 %v218
  %294 = vmatpush.bf16.msra.mxu0 %v213
  %295 = vmatpush.bf16.msra.mxu0 %v208
  %296 = vmatmul.bf16.gmra.mxu0 %v78
  %v297 = vpop.f32.mrf.mxu0
  %v298 = vadd.f32 0.0, %v297
  %v299 = vpop.f32.mrf.mxu0
  %v300 = vadd.f32 0.0, %v299
  %301 = vmatmul.bf16.gmra.mxu0 %v79
  %v302 = vpop.f32.mrf.mxu0
  %v303 = vadd.f32 0.0, %v302
  %v304 = vpop.f32.mrf.mxu0
  %v305 = vadd.f32 0.0, %v304
  %306 = vdwg.mxu0
  %307 = vmatpush.bf16.msra.mxu0 %v244
  %308 = vmatpush.bf16.msra.mxu0 %v239
  %309 = vmatpush.bf16.msra.mxu0 %v234
  %310 = vmatpush.bf16.msra.mxu0 %v229
  %311 = vmatpush.bf16.msra.mxu0 %v224
  %312 = vmatpush.bf16.msra.mxu0 %v219
  %313 = vmatpush.bf16.msra.mxu0 %v214
  %314 = vmatpush.bf16.msra.mxu0 %v209
  %315 = vmatmul.bf16.gmra.mxu0 %v78
  %v316 = vpop.f32.mrf.mxu0
  %v317 = vadd.f32 0.0, %v316
  %v318 = vpop.f32.mrf.mxu0
  %v319 = vadd.f32 0.0, %v318
  %320 = vmatmul.bf16.gmra.mxu0 %v79
  %v321 = vpop.f32.mrf.mxu0
  %v322 = vadd.f32 0.0, %v321
  %v323 = vpop.f32.mrf.mxu0
  %v324 = vadd.f32 0.0, %v323
  %325 = vdwg.mxu0
  %326 = vmatpush.bf16.msra.mxu0 %v245
  %327 = vmatpush.bf16.msra.mxu0 %v240
  %328 = vmatpush.bf16.msra.mxu0 %v235
  %329 = vmatpush.bf16.msra.mxu0 %v230
  %330 = vmatpush.bf16.msra.mxu0 %v225
  %331 = vmatpush.bf16.msra.mxu0 %v220
  %332 = vmatpush.bf16.msra.mxu0 %v215
  %333 = vmatpush.bf16.msra.mxu0 %v210
  %334 = vmatmul.bf16.gmra.mxu0 %v78
  %v335 = vpop.f32.mrf.mxu0
  %v336 = vadd.f32 0.0, %v335
  %v337 = vpop.f32.mrf.mxu0
  %v338 = vadd.f32 0.0, %v337
  %339 = vmatmul.bf16.gmra.mxu0 %v79
  %v340 = vpop.f32.mrf.mxu0
  %v341 = vadd.f32 0.0, %v340
  %v342 = vpop.f32.mrf.mxu0
  %v343 = vadd.f32 0.0, %v342
  %344 = vdwg.mxu0
  %345 = vmatpush.bf16.msra.mxu0 %v246
  %346 = vmatpush.bf16.msra.mxu0 %v241
  %347 = vmatpush.bf16.msra.mxu0 %v236
  %348 = vmatpush.bf16.msra.mxu0 %v231
  %349 = vmatpush.bf16.msra.mxu0 %v226
  %350 = vmatpush.bf16.msra.mxu0 %v221
  %351 = vmatpush.bf16.msra.mxu0 %v216
  %352 = vmatpush.bf16.msra.mxu0 %v211
  %353 = vmatmul.bf16.gmra.mxu0 %v78
  %v354 = vpop.f32.mrf.mxu0
  %v355 = vadd.f32 0.0, %v354
  %v356 = vpop.f32.mrf.mxu0
  %v357 = vadd.f32 0.0, %v356
  %358 = vmatmul.bf16.gmra.mxu0 %v79
  %v359 = vpop.f32.mrf.mxu0
  %v360 = vadd.f32 0.0, %v359
  %v361 = vpop.f32.mrf.mxu0
  %v362 = vadd.f32 0.0, %v361
  %363 = vdwg.mxu0
  %364 = vmatpush.bf16.msra.mxu0 %v247
  %365 = vmatpush.bf16.msra.mxu0 %v242
  %366 = vmatpush.bf16.msra.mxu0 %v237
  %367 = vmatpush.bf16.msra.mxu0 %v232
  %368 = vmatpush.bf16.msra.mxu0 %v227
  %369 = vmatpush.bf16.msra.mxu0 %v222
  %370 = vmatpush.bf16.msra.mxu0 %v217
  %371 = vmatpush.bf16.msra.mxu0 %v212
  %372 = vmatmul.bf16.gmra.mxu0 %v78
  %v373 = vpop.f32.mrf.mxu0
  %v374 = vadd.f32 0.0, %v373
  %v375 = vpop.f32.mrf.mxu0
  %v376 = vadd.f32 0.0, %v375
  %377 = vmatmul.bf16.gmra.mxu0 %v79
  %v378 = vpop.f32.mrf.mxu0
  %v379 = vadd.f32 0.0, %v378
  %v380 = vpop.f32.mrf.mxu0
  %v381 = vadd.f32 0.0, %v380
  %382 = vdwg.mxu0
  %383 = vst [vmem:[%s3] sm:$0xff] %v298
  %384 = vst [vmem:[%s3 + $0x8] sm:$0xff] %v317
  %385 = vst [vmem:[%s3 + $0x10] sm:$0xff] %v336
  %386 = vst [vmem:[%s3 + $0x18] sm:$0xff] %v355
  %vm387 = vcmask 523264
  %388 = vst.msk [vmem:[%s3 + $0x20] sm:$0xff] %vm387, %v374
  %389 = vst [vmem:[%s3 + $0x28] sm:$0xff] %v300
  %390 = vst [vmem:[%s3 + $0x30] sm:$0xff] %v319
  %391 = vst [vmem:[%s3 + $0x38] sm:$0xff] %v338
  %392 = vst [vmem:[%s3 + $0x40] sm:$0xff] %v357
  %393 = vst.msk [vmem:[%s3 + $0x48] sm:$0xff] %vm387, %v376
  %394 = vst [vmem:[%s3 + $0x50] sm:$0xff] %v303
  %395 = vst [vmem:[%s3 + $0x58] sm:$0xff] %v322
  %396 = vst [vmem:[%s3 + $0x60] sm:$0xff] %v341
  %397 = vst [vmem:[%s3 + $0x68] sm:$0xff] %v360
  %398 = vst.msk [vmem:[%s3 + $0x70] sm:$0xff] %vm387, %v379
  %399 = vst [vmem:[%s3 + $0x78] sm:$0xff] %v305
  %400 = vst [vmem:[%s3 + $0x80] sm:$0xff] %v324
  %401 = vst [vmem:[%s3 + $0x88] sm:$0xff] %v343
  %402 = vst [vmem:[%s3 + $0x90] sm:$0xff] %v362
  %403 = vst.msk [vmem:[%s3 + $0x98] sm:$0xff] %vm387, %v381
  // Predicated region
  $region14: #{vae_forward.16} parent=0 // pred_check
    _
  $region15: #{vae_forward.16} parent=0 // pred_check_branch
    %405 = sbr.rel (0) target = $region17
  $region16: #{vae_forward.16} parent=0 // pred_region
    _
  $region17: #{vae_forward.16} parent=0 // pred_fallthru
    _
  // Predicated region
  $region18: #{vae_forward.16} parent=0 // pred_check
    _
  $region19: #{vae_forward.16} parent=0 // pred_check_branch
    %407 = sbr.rel (0) target = $region21
  $region20: #{vae_forward.16} parent=0 // pred_region
    _
  $region21: #{vae_forward.16} parent=0 // pred_fallthru
    _

// kernel: vae_forward.17
$region0: #{vae_forward.17}
  #allocation0 [shape = 'u32[]', space=smem, size = 0x4, offset = 0x4, fixed_abs, tag = 'smem constant byte address 0x4 - core index']
  #allocation1 [shape = 'u32[72,128]{1,0:T(1,128)}', space=vmem, size = 0x9000, scoped, tag = 'internal scratch']
  %s0 = inlined_call_operand.vmem [shape: f32[98,64], index: 0, kind: input, shape index: {}]
  %s1 = inlined_call_operand.vmem [shape: f32[1,64], index: 1, kind: input, shape index: {}]
  %s2 = inlined_call_operand.vmem [shape: bf16[64,512], index: 2, kind: input, shape index: {}]
  %s3 = inlined_call_operand.vmem [shape: f32[98,512], index: 3, kind: output, shape index: {}]
  %s4 = sld [smem:[#allocation0]]
  $region22: #{vae_forward.17} parent=0
    _
  %s6 = ssub.s32 1, %s4
  %s7 = scalar_select 0, %s6, %s4
  // Predicated region
  $region2: #{vae_forward.17} parent=0 // pred_check
    _
  $region3: #{vae_forward.17} parent=0 // pred_check_branch
    %9 = sbr.rel (0) target = $region5
  $region4: #{vae_forward.17} parent=0 // pred_region
    _
  $region5: #{vae_forward.17} parent=0 // pred_fallthru
    _
  // Predicated region
  $region6: #{vae_forward.17} parent=0 // pred_check
    _
  $region7: #{vae_forward.17} parent=0 // pred_check_branch
    %11 = sbr.rel (0) target = $region9
  $region8: #{vae_forward.17} parent=0 // pred_region
    _
  $region9: #{vae_forward.17} parent=0 // pred_fallthru
    _
  // Predicated region
  $region10: #{vae_forward.17} parent=0 // pred_check
    _
  $region11: #{vae_forward.17} parent=0 // pred_check_branch
    %13 = sbr.rel (0) target = $region13
  $region12: #{vae_forward.17} parent=0 // pred_region
    _
  $region13: #{vae_forward.17} parent=0 // pred_fallthru
    _
  %v15 = vld [vmem:[%s0] sm:$0xff]
  %v16 = vld [vmem:[%s0 + $0x8] sm:$0xff]
  %v17 = vld [vmem:[%s0 + $0x10] sm:$0xff]
  %v18 = vld [vmem:[%s0 + $0x18] sm:$0xff]
  %v19 = vld [vmem:[%s0 + $0x20] sm:$0xff]
  %v20 = vld [vmem:[%s0 + $0x28] sm:$0xff]
  %v21 = vld [vmem:[%s0 + $0x30] sm:$0xff]
  %v22 = vld [vmem:[%s0 + $0x38] sm:$0xff]
  %v23 = vld [vmem:[%s0 + $0x40] sm:$0xff]
  %v24 = vld [vmem:[%s0 + $0x48] sm:$0xff]
  %v25 = vld [vmem:[%s0 + $0x50] sm:$0xff]
  %v26 = vld [vmem:[%s0 + $0x58] sm:$0xff]
  %v27 = vld [vmem:[%s0 + $0x60] sm:$0x3]
  %v28 = vld [vmem:[%s1] sm:$0x1]
  %v30 = vperm.slane %v28, 0
  %v32 = vadd.f32 %v15, %v30
  %v33 = vadd.f32 %v16, %v30
  %v34 = vadd.f32 %v17, %v30
  %v35 = vadd.f32 %v18, %v30
  %v36 = vadd.f32 %v19, %v30
  %v37 = vadd.f32 %v20, %v30
  %v38 = vadd.f32 %v21, %v30
  %v39 = vadd.f32 %v22, %v30
  %v40 = vadd.f32 %v23, %v30
  %v41 = vadd.f32 %v24, %v30
  %v42 = vadd.f32 %v25, %v30
  %v43 = vadd.f32 %v26, %v30
  %v44 = vadd.f32 %v27, %v30
  %v45 = vmax.f32 %v32, 0.0
  %v46 = vmax.f32 %v33, 0.0
  %v47 = vmax.f32 %v34, 0.0
  %v48 = vmax.f32 %v35, 0.0
  %v49 = vmax.f32 %v36, 0.0
  %v50 = vmax.f32 %v37, 0.0
  %v51 = vmax.f32 %v38, 0.0
  %v52 = vmax.f32 %v39, 0.0
  %v53 = vmax.f32 %v40, 0.0
  %v54 = vmax.f32 %v41, 0.0
  %v55 = vmax.f32 %v42, 0.0
  %v56 = vmax.f32 %v43, 0.0
  %v57 = vmax.f32 %v44, 0.0
  %v58 = vld [vmem:[%s2] sm:$0xff]
  %v59 = vld [vmem:[%s2 + $0x8] sm:$0xff]
  %v60 = vld [vmem:[%s2 + $0x10] sm:$0xff]
  %v61 = vld [vmem:[%s2 + $0x18] sm:$0xff]
  %v62 = vld [vmem:[%s2 + $0x20] sm:$0xff]
  %v63 = vld [vmem:[%s2 + $0x28] sm:$0xff]
  %v64 = vld [vmem:[%s2 + $0x30] sm:$0xff]
  %v65 = vld [vmem:[%s2 + $0x38] sm:$0xff]
  %v66 = vld [vmem:[%s2 + $0x40] sm:$0xff]
  %v67 = vld [vmem:[%s2 + $0x48] sm:$0xff]
  %v68 = vld [vmem:[%s2 + $0x50] sm:$0xff]
  %v69 = vld [vmem:[%s2 + $0x58] sm:$0xff]
  %v70 = vld [vmem:[%s2 + $0x60] sm:$0xff]
  %v71 = vld [vmem:[%s2 + $0x68] sm:$0xff]
  %v72 = vld [vmem:[%s2 + $0x70] sm:$0xff]
  %v73 = vld [vmem:[%s2 + $0x78] sm:$0xff]
  %v74 = vpack.c.bf16 %v46, %v45
  %v75 = vpack.c.bf16 %v48, %v47
  %v76 = vpack.c.bf16 %v50, %v49
  %v77 = vpack.c.bf16 %v52, %v51
  %v78 = vpack.c.bf16 %v54, %v53
  %v79 = vpack.c.bf16 %v56, %v55
  %v80 = vpack.c.bf16 %v57, %v57
  %v97 = vunpack.c.l.b16 %v58
  %v98 = vunpack.c.h.b16 %v58
  %v99 = vunpack.c.l.b16 %v59
  %v100 = vunpack.c.h.b16 %v59
  %v101 = vunpack.c.l.b16 %v60
  %v102 = vunpack.c.h.b16 %v60
  %v103 = vunpack.c.l.b16 %v61
  %v104 = vunpack.c.h.b16 %v61
  %v105 = vunpack.c.l.b16 %v62
  %v106 = vunpack.c.h.b16 %v62
  %v107 = vunpack.c.l.b16 %v63
  %v108 = vunpack.c.h.b16 %v63
  %v109 = vunpack.c.l.b16 %v64
  %v110 = vunpack.c.h.b16 %v64
  %v111 = vunpack.c.l.b16 %v65
  %v112 = vunpack.c.h.b16 %v65
  %v113 = vunpack.c.l.b16 %v66
  %v114 = vunpack.c.h.b16 %v66
  %v115 = vunpack.c.l.b16 %v67
  %v116 = vunpack.c.h.b16 %v67
  %v117 = vunpack.c.l.b16 %v68
  %v118 = vunpack.c.h.b16 %v68
  %v119 = vunpack.c.l.b16 %v69
  %v120 = vunpack.c.h.b16 %v69
  %v121 = vunpack.c.l.b16 %v70
  %v122 = vunpack.c.h.b16 %v70
  %v123 = vunpack.c.l.b16 %v71
  %v124 = vunpack.c.h.b16 %v71
  %v125 = vunpack.c.l.b16 %v72
  %v126 = vunpack.c.h.b16 %v72
  %v127 = vunpack.c.l.b16 %v73
  %v128 = vunpack.c.h.b16 %v73
  %v129 = vpack.c.b16 %v101, %v97
  %v130 = vpack.c.b16 %v102, %v98
  %v131 = vpack.c.b16 %v103, %v99
  %v132 = vpack.c.b16 %v104, %v100
  %v133 = vpack.c.b16 %v109, %v105
  %v134 = vpack.c.b16 %v110, %v106
  %v135 = vpack.c.b16 %v111, %v107
  %v136 = vpack.c.b16 %v112, %v108
  %v137 = vpack.c.b16 %v117, %v113
  %v138 = vpack.c.b16 %v118, %v114
  %v139 = vpack.c.b16 %v119, %v115
  %v140 = vpack.c.b16 %v120, %v116
  %v141 = vpack.c.b16 %v125, %v121
  %v142 = vpack.c.b16 %v126, %v122
  %v143 = vpack.c.b16 %v127, %v123
  %v144 = vpack.c.b16 %v128, %v124
  %vm161 = vcmask 523264
  %v163 = vsel %vm161, %v74, 0
  %v166 = vsel %vm161, %v75, 0
  %v169 = vsel %vm161, %v76, 0
  %v172 = vsel %vm161, %v77, 0
  %v175 = vsel %vm161, %v78, 0
  %v178 = vsel %vm161, %v79, 0
  %v181 = vsel %vm161, %v80, 0
  %183 = vmatpush.bf16.msra.mxu0 0
  %184 = vmatpush.bf16.msra.mxu0 0
  %185 = vmatpush.bf16.msra.mxu0 0
  %186 = vmatpush.bf16.msra.mxu0 0
  %187 = vmatpush.bf16.msra.mxu0 %v141
  %188 = vmatpush.bf16.msra.mxu0 %v137
  %189 = vmatpush.bf16.msra.mxu0 %v133
  %190 = vmatpush.bf16.msra.mxu0 %v129
  %191 = vmatmul.bf16.gmra.mxu0 %v163
  %v192 = vpop.f32.mrf.mxu0
  %v193 = vadd.f32 0.0, %v192
  %v194 = vpop.f32.mrf.mxu0
  %v195 = vadd.f32 0.0, %v194
  %196 = vmatmul.bf16.gmra.mxu0 %v166
  %v197 = vpop.f32.mrf.mxu0
  %v198 = vadd.f32 0.0, %v197
  %v199 = vpop.f32.mrf.mxu0
  %v200 = vadd.f32 0.0, %v199
  %201 = vmatmul.bf16.gmra.mxu0 %v169
  %v202 = vpop.f32.mrf.mxu0
  %v203 = vadd.f32 0.0, %v202
  %v204 = vpop.f32.mrf.mxu0
  %v205 = vadd.f32 0.0, %v204
  %206 = vmatmul.bf16.gmra.mxu0 %v172
  %v207 = vpop.f32.mrf.mxu0
  %v208 = vadd.f32 0.0, %v207
  %v209 = vpop.f32.mrf.mxu0
  %v210 = vadd.f32 0.0, %v209
  %211 = vmatmul.bf16.gmra.mxu0 %v175
  %v212 = vpop.f32.mrf.mxu0
  %v213 = vadd.f32 0.0, %v212
  %v214 = vpop.f32.mrf.mxu0
  %v215 = vadd.f32 0.0, %v214
  %216 = vmatmul.bf16.gmra.mxu0 %v178
  %v217 = vpop.f32.mrf.mxu0
  %v218 = vadd.f32 0.0, %v217
  %v219 = vpop.f32.mrf.mxu0
  %v220 = vadd.f32 0.0, %v219
  %221 = vmatmul.bf16.gmra.mxu0 %v181
  %v222 = vpop.f32.mrf.mxu0
  %v223 = vadd.f32 0.0, %v222
  %v224 = vpop.f32.mrf.mxu0
  %225 = vdwg.mxu0
  %226 = vmatpush.bf16.msra.mxu0 0
  %227 = vmatpush.bf16.msra.mxu0 0
  %228 = vmatpush.bf16.msra.mxu0 0
  %229 = vmatpush.bf16.msra.mxu0 0
  %230 = vmatpush.bf16.msra.mxu0 %v142
  %231 = vmatpush.bf16.msra.mxu0 %v138
  %232 = vmatpush.bf16.msra.mxu0 %v134
  %233 = vmatpush.bf16.msra.mxu0 %v130
  %234 = vmatmul.bf16.gmra.mxu0 %v163
  %v235 = vpop.f32.mrf.mxu0
  %v236 = vadd.f32 0.0, %v235
  %v237 = vpop.f32.mrf.mxu0
  %v238 = vadd.f32 0.0, %v237
  %239 = vmatmul.bf16.gmra.mxu0 %v166
  %v240 = vpop.f32.mrf.mxu0
  %v241 = vadd.f32 0.0, %v240
  %v242 = vpop.f32.mrf.mxu0
  %v243 = vadd.f32 0.0, %v242
  %244 = vmatmul.bf16.gmra.mxu0 %v169
  %v245 = vpop.f32.mrf.mxu0
  %v246 = vadd.f32 0.0, %v245
  %v247 = vpop.f32.mrf.mxu0
  %v248 = vadd.f32 0.0, %v247
  %249 = vmatmul.bf16.gmra.mxu0 %v172
  %v250 = vpop.f32.mrf.mxu0
  %v251 = vadd.f32 0.0, %v250
  %v252 = vpop.f32.mrf.mxu0
  %v253 = vadd.f32 0.0, %v252
  %254 = vmatmul.bf16.gmra.mxu0 %v175
  %v255 = vpop.f32.mrf.mxu0
  %v256 = vadd.f32 0.0, %v255
  %v257 = vpop.f32.mrf.mxu0
  %v258 = vadd.f32 0.0, %v257
  %259 = vmatmul.bf16.gmra.mxu0 %v178
  %v260 = vpop.f32.mrf.mxu0
  %v261 = vadd.f32 0.0, %v260
  %v262 = vpop.f32.mrf.mxu0
  %v263 = vadd.f32 0.0, %v262
  %264 = vmatmul.bf16.gmra.mxu0 %v181
  %v265 = vpop.f32.mrf.mxu0
  %v266 = vadd.f32 0.0, %v265
  %v267 = vpop.f32.mrf.mxu0
  %268 = vdwg.mxu0
  %269 = vmatpush.bf16.msra.mxu0 0
  %270 = vmatpush.bf16.msra.mxu0 0
  %271 = vmatpush.bf16.msra.mxu0 0
  %272 = vmatpush.bf16.msra.mxu0 0
  %273 = vmatpush.bf16.msra.mxu0 %v143
  %274 = vmatpush.bf16.msra.mxu0 %v139
  %275 = vmatpush.bf16.msra.mxu0 %v135
  %276 = vmatpush.bf16.msra.mxu0 %v131
  %277 = vmatmul.bf16.gmra.mxu0 %v163
  %v278 = vpop.f32.mrf.mxu0
  %v279 = vadd.f32 0.0, %v278
  %v280 = vpop.f32.mrf.mxu0
  %v281 = vadd.f32 0.0, %v280
  %282 = vmatmul.bf16.gmra.mxu0 %v166
  %v283 = vpop.f32.mrf.mxu0
  %v284 = vadd.f32 0.0, %v283
  %v285 = vpop.f32.mrf.mxu0
  %v286 = vadd.f32 0.0, %v285
  %287 = vmatmul.bf16.gmra.mxu0 %v169
  %v288 = vpop.f32.mrf.mxu0
  %v289 = vadd.f32 0.0, %v288
  %v290 = vpop.f32.mrf.mxu0
  %v291 = vadd.f32 0.0, %v290
  %292 = vmatmul.bf16.gmra.mxu0 %v172
  %v293 = vpop.f32.mrf.mxu0
  %v294 = vadd.f32 0.0, %v293
  %v295 = vpop.f32.mrf.mxu0
  %v296 = vadd.f32 0.0, %v295
  %297 = vmatmul.bf16.gmra.mxu0 %v175
  %v298 = vpop.f32.mrf.mxu0
  %v299 = vadd.f32 0.0, %v298
  %v300 = vpop.f32.mrf.mxu0
  %v301 = vadd.f32 0.0, %v300
  %302 = vmatmul.bf16.gmra.mxu0 %v178
  %v303 = vpop.f32.mrf.mxu0
  %v304 = vadd.f32 0.0, %v303
  %v305 = vpop.f32.mrf.mxu0
  %v306 = vadd.f32 0.0, %v305
  %307 = vmatmul.bf16.gmra.mxu0 %v181
  %v308 = vpop.f32.mrf.mxu0
  %v309 = vadd.f32 0.0, %v308
  %v310 = vpop.f32.mrf.mxu0
  %311 = vdwg.mxu0
  %312 = vmatpush.bf16.msra.mxu0 0
  %313 = vmatpush.bf16.msra.mxu0 0
  %314 = vmatpush.bf16.msra.mxu0 0
  %315 = vmatpush.bf16.msra.mxu0 0
  %316 = vmatpush.bf16.msra.mxu0 %v144
  %317 = vmatpush.bf16.msra.mxu0 %v140
  %318 = vmatpush.bf16.msra.mxu0 %v136
  %319 = vmatpush.bf16.msra.mxu0 %v132
  %320 = vmatmul.bf16.gmra.mxu0 %v163
  %v321 = vpop.f32.mrf.mxu0
  %v322 = vadd.f32 0.0, %v321
  %v323 = vpop.f32.mrf.mxu0
  %v324 = vadd.f32 0.0, %v323
  %325 = vmatmul.bf16.gmra.mxu0 %v166
  %v326 = vpop.f32.mrf.mxu0
  %v327 = vadd.f32 0.0, %v326
  %v328 = vpop.f32.mrf.mxu0
  %v329 = vadd.f32 0.0, %v328
  %330 = vmatmul.bf16.gmra.mxu0 %v169
  %v331 = vpop.f32.mrf.mxu0
  %v332 = vadd.f32 0.0, %v331
  %v333 = vpop.f32.mrf.mxu0
  %v334 = vadd.f32 0.0, %v333
  %335 = vmatmul.bf16.gmra.mxu0 %v172
  %v336 = vpop.f32.mrf.mxu0
  %v337 = vadd.f32 0.0, %v336
  %v338 = vpop.f32.mrf.mxu0
  %v339 = vadd.f32 0.0, %v338
  %340 = vmatmul.bf16.gmra.mxu0 %v175
  %v341 = vpop.f32.mrf.mxu0
  %v342 = vadd.f32 0.0, %v341
  %v343 = vpop.f32.mrf.mxu0
  %v344 = vadd.f32 0.0, %v343
  %345 = vmatmul.bf16.gmra.mxu0 %v178
  %v346 = vpop.f32.mrf.mxu0
  %v347 = vadd.f32 0.0, %v346
  %v348 = vpop.f32.mrf.mxu0
  %v349 = vadd.f32 0.0, %v348
  %350 = vmatmul.bf16.gmra.mxu0 %v181
  %v351 = vpop.f32.mrf.mxu0
  %v352 = vadd.f32 0.0, %v351
  %v353 = vpop.f32.mrf.mxu0
  %354 = vdwg.mxu0
  %355 = vst [vmem:[%s3] sm:$0xff] %v193
  %356 = vst [vmem:[%s3 + $0x8] sm:$0xff] %v236
  %357 = vst [vmem:[%s3 + $0x10] sm:$0xff] %v279
  %358 = vst [vmem:[%s3 + $0x18] sm:$0xff] %v322
  %359 = vst [vmem:[%s3 + $0x20] sm:$0xff] %v195
  %360 = vst [vmem:[%s3 + $0x28] sm:$0xff] %v238
  %361 = vst [vmem:[%s3 + $0x30] sm:$0xff] %v281
  %362 = vst [vmem:[%s3 + $0x38] sm:$0xff] %v324
  %363 = vst [vmem:[%s3 + $0x40] sm:$0xff] %v198
  %364 = vst [vmem:[%s3 + $0x48] sm:$0xff] %v241
  %365 = vst [vmem:[%s3 + $0x50] sm:$0xff] %v284
  %366 = vst [vmem:[%s3 + $0x58] sm:$0xff] %v327
  %367 = vst [vmem:[%s3 + $0x60] sm:$0xff] %v200
  %368 = vst [vmem:[%s3 + $0x68] sm:$0xff] %v243
  %369 = vst [vmem:[%s3 + $0x70] sm:$0xff] %v286
  %370 = vst [vmem:[%s3 + $0x78] sm:$0xff] %v329
  %371 = vst [vmem:[%s3 + $0x80] sm:$0xff] %v203
  %372 = vst [vmem:[%s3 + $0x88] sm:$0xff] %v246
  %373 = vst [vmem:[%s3 + $0x90] sm:$0xff] %v289
  %374 = vst [vmem:[%s3 + $0x98] sm:$0xff] %v332
  %375 = vst [vmem:[%s3 + $0xa0] sm:$0xff] %v205
  %376 = vst [vmem:[%s3 + $0xa8] sm:$0xff] %v248
  %377 = vst [vmem:[%s3 + $0xb0] sm:$0xff] %v291
  %378 = vst [vmem:[%s3 + $0xb8] sm:$0xff] %v334
  %379 = vst [vmem:[%s3 + $0xc0] sm:$0xff] %v208
  %380 = vst [vmem:[%s3 + $0xc8] sm:$0xff] %v251
  %381 = vst [vmem:[%s3 + $0xd0] sm:$0xff] %v294
  %382 = vst [vmem:[%s3 + $0xd8] sm:$0xff] %v337
  %383 = vst [vmem:[%s3 + $0xe0] sm:$0xff] %v210
  %384 = vst [vmem:[%s3 + $0xe8] sm:$0xff] %v253
  %385 = vst [vmem:[%s3 + $0xf0] sm:$0xff] %v296
  %386 = vst [vmem:[%s3 + $0xf8] sm:$0xff] %v339
  %387 = vst [vmem:[%s3 + $0x100] sm:$0xff] %v213
  %388 = vst [vmem:[%s3 + $0x108] sm:$0xff] %v256
  %389 = vst [vmem:[%s3 + $0x110] sm:$0xff] %v299
  %390 = vst [vmem:[%s3 + $0x118] sm:$0xff] %v342
  %391 = vst [vmem:[%s3 + $0x120] sm:$0xff] %v215
  %392 = vst [vmem:[%s3 + $0x128] sm:$0xff] %v258
  %393 = vst [vmem:[%s3 + $0x130] sm:$0xff] %v301
  %394 = vst [vmem:[%s3 + $0x138] sm:$0xff] %v344
  %395 = vst [vmem:[%s3 + $0x140] sm:$0xff] %v218
  %396 = vst [vmem:[%s3 + $0x148] sm:$0xff] %v261
  %397 = vst [vmem:[%s3 + $0x150] sm:$0xff] %v304
  %398 = vst [vmem:[%s3 + $0x158] sm:$0xff] %v347
  %399 = vst [vmem:[%s3 + $0x160] sm:$0xff] %v220
  %400 = vst [vmem:[%s3 + $0x168] sm:$0xff] %v263
  %401 = vst [vmem:[%s3 + $0x170] sm:$0xff] %v306
  %402 = vst [vmem:[%s3 + $0x178] sm:$0xff] %v349
  %403 = vst [vmem:[%s3 + $0x180] sm:$0x3] %v223
  %404 = vst [vmem:[%s3 + $0x188] sm:$0x3] %v266
  %405 = vst [vmem:[%s3 + $0x190] sm:$0x3] %v309
  %406 = vst [vmem:[%s3 + $0x198] sm:$0x3] %v352
  // Predicated region
  $region14: #{vae_forward.17} parent=0 // pred_check
    _
  $region15: #{vae_forward.17} parent=0 // pred_check_branch
    %408 = sbr.rel (0) target = $region17
  $region16: #{vae_forward.17} parent=0 // pred_region
    _
  $region17: #{vae_forward.17} parent=0 // pred_fallthru
    _
  // Predicated region
  $region18: #{vae_forward.17} parent=0 // pred_check
    _
  $region19: #{vae_forward.17} parent=0 // pred_check_branch
    %410 = sbr.rel (0) target = $region21
  $region20: #{vae_forward.17} parent=0 // pred_region
    _
  $region21: #{vae_forward.17} parent=0 // pred_fallthru
    _

// kernel: vae_forward.18
$region0: #{vae_forward.18}
  #allocation0 [shape = 'u32[]', space=smem, size = 0x4, offset = 0x4, fixed_abs, tag = 'smem constant byte address 0x4 - core index']
  #allocation1 [shape = 'u32[72,128]{1,0:T(1,128)}', space=vmem, size = 0x9000, scoped, tag = 'internal scratch']
  %s0 = inlined_call_operand.vmem [shape: f32[392,32], index: 0, kind: input, shape index: {}]
  %s1 = inlined_call_operand.vmem [shape: f32[1,32], index: 1, kind: input, shape index: {}]
  %s2 = inlined_call_operand.vmem [shape: bf16[32,16], index: 2, kind: input, shape index: {}]
  %s3 = inlined_call_operand.vmem [shape: f32[392,16], index: 3, kind: output, shape index: {}]
  %s4 = sld [smem:[#allocation0]]
  $region22: #{vae_forward.18} parent=0
    _
  %s6 = ssub.s32 1, %s4
  %s7 = scalar_select 0, %s6, %s4
  // Predicated region
  $region2: #{vae_forward.18} parent=0 // pred_check
    _
  $region3: #{vae_forward.18} parent=0 // pred_check_branch
    %9 = sbr.rel (0) target = $region5
  $region4: #{vae_forward.18} parent=0 // pred_region
    _
  $region5: #{vae_forward.18} parent=0 // pred_fallthru
    _
  // Predicated region
  $region6: #{vae_forward.18} parent=0 // pred_check
    _
  $region7: #{vae_forward.18} parent=0 // pred_check_branch
    %11 = sbr.rel (0) target = $region9
  $region8: #{vae_forward.18} parent=0 // pred_region
    _
  $region9: #{vae_forward.18} parent=0 // pred_fallthru
    _
  // Predicated region
  $region10: #{vae_forward.18} parent=0 // pred_check
    _
  $region11: #{vae_forward.18} parent=0 // pred_check_branch
    %13 = sbr.rel (0) target = $region13
  $region12: #{vae_forward.18} parent=0 // pred_region
    _
  $region13: #{vae_forward.18} parent=0 // pred_fallthru
    _
  %v15 = vld [vmem:[%s0] sm:$0xff]
  %v16 = vld [vmem:[%s0 + $0x8] sm:$0xff]
  %v17 = vld [vmem:[%s0 + $0x10] sm:$0xff]
  %v18 = vld [vmem:[%s0 + $0x18] sm:$0xff]
  %v19 = vld [vmem:[%s0 + $0x20] sm:$0xff]
  %v20 = vld [vmem:[%s0 + $0x28] sm:$0xff]
  %v21 = vld [vmem:[%s0 + $0x30] sm:$0xff]
  %v22 = vld [vmem:[%s0 + $0x38] sm:$0xff]
  %v23 = vld [vmem:[%s0 + $0x40] sm:$0xff]
  %v24 = vld [vmem:[%s0 + $0x48] sm:$0xff]
  %v25 = vld [vmem:[%s0 + $0x50] sm:$0xff]
  %v26 = vld [vmem:[%s0 + $0x58] sm:$0xff]
  %v27 = vld [vmem:[%s0 + $0x60] sm:$0xff]
  %v28 = vld [vmem:[%s0 + $0x68] sm:$0xff]
  %v29 = vld [vmem:[%s0 + $0x70] sm:$0xff]
  %v30 = vld [vmem:[%s0 + $0x78] sm:$0xff]
  %v31 = vld [vmem:[%s0 + $0x80] sm:$0xff]
  %v32 = vld [vmem:[%s0 + $0x88] sm:$0xff]
  %v33 = vld [vmem:[%s0 + $0x90] sm:$0xff]
  %v34 = vld [vmem:[%s0 + $0x98] sm:$0xff]
  %v35 = vld [vmem:[%s0 + $0xa0] sm:$0xff]
  %v36 = vld [vmem:[%s0 + $0xa8] sm:$0xff]
  %v37 = vld [vmem:[%s0 + $0xb0] sm:$0xff]
  %v38 = vld [vmem:[%s0 + $0xb8] sm:$0xff]
  %v39 = vld [vmem:[%s0 + $0xc0] sm:$0xff]
  %v40 = vld [vmem:[%s0 + $0xc8] sm:$0xff]
  %v41 = vld [vmem:[%s0 + $0xd0] sm:$0xff]
  %v42 = vld [vmem:[%s0 + $0xd8] sm:$0xff]
  %v43 = vld [vmem:[%s0 + $0xe0] sm:$0xff]
  %v44 = vld [vmem:[%s0 + $0xe8] sm:$0xff]
  %v45 = vld [vmem:[%s0 + $0xf0] sm:$0xff]
  %v46 = vld [vmem:[%s0 + $0xf8] sm:$0xff]
  %v47 = vld [vmem:[%s0 + $0x100] sm:$0xff]
  %v48 = vld [vmem:[%s0 + $0x108] sm:$0xff]
  %v49 = vld [vmem:[%s0 + $0x110] sm:$0xff]
  %v50 = vld [vmem:[%s0 + $0x118] sm:$0xff]
  %v51 = vld [vmem:[%s0 + $0x120] sm:$0xff]
  %v52 = vld [vmem:[%s0 + $0x128] sm:$0xff]
  %v53 = vld [vmem:[%s0 + $0x130] sm:$0xff]
  %v54 = vld [vmem:[%s0 + $0x138] sm:$0xff]
  %v55 = vld [vmem:[%s0 + $0x140] sm:$0xff]
  %v56 = vld [vmem:[%s0 + $0x148] sm:$0xff]
  %v57 = vld [vmem:[%s0 + $0x150] sm:$0xff]
  %v58 = vld [vmem:[%s0 + $0x158] sm:$0xff]
  %v59 = vld [vmem:[%s0 + $0x160] sm:$0xff]
  %v60 = vld [vmem:[%s0 + $0x168] sm:$0xff]
  %v61 = vld [vmem:[%s0 + $0x170] sm:$0xff]
  %v62 = vld [vmem:[%s0 + $0x178] sm:$0xff]
  %v63 = vld [vmem:[%s0 + $0x180] sm:$0xff]
  %v64 = vld [vmem:[%s1] sm:$0x1]
  %v66 = vperm.slane %v64, 0
  %v68 = vadd.f32 %v15, %v66
  %v69 = vadd.f32 %v16, %v66
  %v70 = vadd.f32 %v17, %v66
  %v71 = vadd.f32 %v18, %v66
  %v72 = vadd.f32 %v19, %v66
  %v73 = vadd.f32 %v20, %v66
  %v74 = vadd.f32 %v21, %v66
  %v75 = vadd.f32 %v22, %v66
  %v76 = vadd.f32 %v23, %v66
  %v77 = vadd.f32 %v24, %v66
  %v78 = vadd.f32 %v25, %v66
  %v79 = vadd.f32 %v26, %v66
  %v80 = vadd.f32 %v27, %v66
  %v81 = vadd.f32 %v28, %v66
  %v82 = vadd.f32 %v29, %v66
  %v83 = vadd.f32 %v30, %v66
  %v84 = vadd.f32 %v31, %v66
  %v85 = vadd.f32 %v32, %v66
  %v86 = vadd.f32 %v33, %v66
  %v87 = vadd.f32 %v34, %v66
  %v88 = vadd.f32 %v35, %v66
  %v89 = vadd.f32 %v36, %v66
  %v90 = vadd.f32 %v37, %v66
  %v91 = vadd.f32 %v38, %v66
  %v92 = vadd.f32 %v39, %v66
  %v93 = vadd.f32 %v40, %v66
  %v94 = vadd.f32 %v41, %v66
  %v95 = vadd.f32 %v42, %v66
  %v96 = vadd.f32 %v43, %v66
  %v97 = vadd.f32 %v44, %v66
  %v98 = vadd.f32 %v45, %v66
  %v99 = vadd.f32 %v46, %v66
  %v100 = vadd.f32 %v47, %v66
  %v101 = vadd.f32 %v48, %v66
  %v102 = vadd.f32 %v49, %v66
  %v103 = vadd.f32 %v50, %v66
  %v104 = vadd.f32 %v51, %v66
  %v105 = vadd.f32 %v52, %v66
  %v106 = vadd.f32 %v53, %v66
  %v107 = vadd.f32 %v54, %v66
  %v108 = vadd.f32 %v55, %v66
  %v109 = vadd.f32 %v56, %v66
  %v110 = vadd.f32 %v57, %v66
  %v111 = vadd.f32 %v58, %v66
  %v112 = vadd.f32 %v59, %v66
  %v113 = vadd.f32 %v60, %v66
  %v114 = vadd.f32 %v61, %v66
  %v115 = vadd.f32 %v62, %v66
  %v116 = vadd.f32 %v63, %v66
  %v117 = vmax.f32 %v68, 0.0
  %v118 = vmax.f32 %v69, 0.0
  %v119 = vmax.f32 %v70, 0.0
  %v120 = vmax.f32 %v71, 0.0
  %v121 = vmax.f32 %v72, 0.0
  %v122 = vmax.f32 %v73, 0.0
  %v123 = vmax.f32 %v74, 0.0
  %v124 = vmax.f32 %v75, 0.0
  %v125 = vmax.f32 %v76, 0.0
  %v126 = vmax.f32 %v77, 0.0
  %v127 = vmax.f32 %v78, 0.0
  %v128 = vmax.f32 %v79, 0.0
  %v129 = vmax.f32 %v80, 0.0
  %v130 = vmax.f32 %v81, 0.0
  %v131 = vmax.f32 %v82, 0.0
  %v132 = vmax.f32 %v83, 0.0
  %v133 = vmax.f32 %v84, 0.0
  %v134 = vmax.f32 %v85, 0.0
  %v135 = vmax.f32 %v86, 0.0
  %v136 = vmax.f32 %v87, 0.0
  %v137 = vmax.f32 %v88, 0.0
  %v138 = vmax.f32 %v89, 0.0
  %v139 = vmax.f32 %v90, 0.0
  %v140 = vmax.f32 %v91, 0.0
  %v141 = vmax.f32 %v92, 0.0
  %v142 = vmax.f32 %v93, 0.0
  %v143 = vmax.f32 %v94, 0.0
  %v144 = vmax.f32 %v95, 0.0
  %v145 = vmax.f32 %v96, 0.0
  %v146 = vmax.f32 %v97, 0.0
  %v147 = vmax.f32 %v98, 0.0
  %v148 = vmax.f32 %v99, 0.0
  %v149 = vmax.f32 %v100, 0.0
  %v150 = vmax.f32 %v101, 0.0
  %v151 = vmax.f32 %v102, 0.0
  %v152 = vmax.f32 %v103, 0.0
  %v153 = vmax.f32 %v104, 0.0
  %v154 = vmax.f32 %v105, 0.0
  %v155 = vmax.f32 %v106, 0.0
  %v156 = vmax.f32 %v107, 0.0
  %v157 = vmax.f32 %v108, 0.0
  %v158 = vmax.f32 %v109, 0.0
  %v159 = vmax.f32 %v110, 0.0
  %v160 = vmax.f32 %v111, 0.0
  %v161 = vmax.f32 %v112, 0.0
  %v162 = vmax.f32 %v113, 0.0
  %v163 = vmax.f32 %v114, 0.0
  %v164 = vmax.f32 %v115, 0.0
  %v165 = vmax.f32 %v116, 0.0
  %v166 = vld [vmem:[%s2] sm:$0xf]
  %v167 = vld [vmem:[%s2 + $0x4] sm:$0xf]
  %v168 = vld [vmem:[%s2 + $0x8] sm:$0xf]
  %v169 = vld [vmem:[%s2 + $0xc] sm:$0xf]
  %v170 = vpack.c.bf16 %v118, %v117
  %v171 = vpack.c.bf16 %v120, %v119
  %v172 = vpack.c.bf16 %v122, %v121
  %v173 = vpack.c.bf16 %v124, %v123
  %v174 = vpack.c.bf16 %v126, %v125
  %v175 = vpack.c.bf16 %v128, %v127
  %v176 = vpack.c.bf16 %v130, %v129
  %v177 = vpack.c.bf16 %v132, %v131
  %v178 = vpack.c.bf16 %v134, %v133
  %v179 = vpack.c.bf16 %v136, %v135
  %v180 = vpack.c.bf16 %v138, %v137
  %v181 = vpack.c.bf16 %v140, %v139
  %v182 = vpack.c.bf16 %v142, %v141
  %v183 = vpack.c.bf16 %v144, %v143
  %v184 = vpack.c.bf16 %v146, %v145
  %v185 = vpack.c.bf16 %v148, %v147
  %v186 = vpack.c.bf16 %v150, %v149
  %v187 = vpack.c.bf16 %v152, %v151
  %v188 = vpack.c.bf16 %v154, %v153
  %v189 = vpack.c.bf16 %v156, %v155
  %v190 = vpack.c.bf16 %v158, %v157
  %v191 = vpack.c.bf16 %v160, %v159
  %v192 = vpack.c.bf16 %v162, %v161
  %v193 = vpack.c.bf16 %v164, %v163
  %v194 = vpack.c.bf16 %v165, %v165
  %v199 = vunpack.c.l.b16 %v166
  %v200 = vunpack.c.l.b16 %v167
  %v201 = vunpack.c.l.b16 %v168
  %v202 = vunpack.c.l.b16 %v169
  %v203 = vpack.c.b16 %v200, %v199
  %v204 = vpack.c.b16 %v202, %v201
  %vm207 = vcmask 261120
  %v209 = vsel %vm207, %v170, 0
  %v212 = vsel %vm207, %v171, 0
  %v215 = vsel %vm207, %v172, 0
  %v218 = vsel %vm207, %v173, 0
  %v221 = vsel %vm207, %v174, 0
  %v224 = vsel %vm207, %v175, 0
  %v227 = vsel %vm207, %v176, 0
  %v230 = vsel %vm207, %v177, 0
  %v233 = vsel %vm207, %v178, 0
  %v236 = vsel %vm207, %v179, 0
  %v239 = vsel %vm207, %v180, 0
  %v242 = vsel %vm207, %v181, 0
  %v245 = vsel %vm207, %v182, 0
  %v248 = vsel %vm207, %v183, 0
  %v251 = vsel %vm207, %v184, 0
  %v254 = vsel %vm207, %v185, 0
  %v257 = vsel %vm207, %v186, 0
  %v260 = vsel %vm207, %v187, 0
  %v263 = vsel %vm207, %v188, 0
  %v266 = vsel %vm207, %v189, 0
  %v269 = vsel %vm207, %v190, 0
  %v272 = vsel %vm207, %v191, 0
  %v275 = vsel %vm207, %v192, 0
  %v278 = vsel %vm207, %v193, 0
  %v281 = vsel %vm207, %v194, 0
  %283 = vmatpush.bf16.msra.mxu0 0
  %284 = vmatpush.bf16.msra.mxu0 0
  %285 = vmatpush.bf16.msra.mxu0 0
  %286 = vmatpush.bf16.msra.mxu0 0
  %287 = vmatpush.bf16.msra.mxu0 0
  %288 = vmatpush.bf16.msra.mxu0 0
  %289 = vmatpush.bf16.msra.mxu0 %v204
  %290 = vmatpush.bf16.msra.mxu0 %v203
  %291 = vmatmul.bf16.gmra.mxu0 %v209
  %v292 = vpop.f32.mrf.mxu0
  %v293 = vadd.f32 0.0, %v292
  %v294 = vpop.f32.mrf.mxu0
  %v295 = vadd.f32 0.0, %v294
  %296 = vmatmul.bf16.gmra.mxu0 %v212
  %v297 = vpop.f32.mrf.mxu0
  %v298 = vadd.f32 0.0, %v297
  %v299 = vpop.f32.mrf.mxu0
  %v300 = vadd.f32 0.0, %v299
  %301 = vmatmul.bf16.gmra.mxu0 %v215
  %v302 = vpop.f32.mrf.mxu0
  %v303 = vadd.f32 0.0, %v302
  %v304 = vpop.f32.mrf.mxu0
  %v305 = vadd.f32 0.0, %v304
  %306 = vmatmul.bf16.gmra.mxu0 %v218
  %v307 = vpop.f32.mrf.mxu0
  %v308 = vadd.f32 0.0, %v307
  %v309 = vpop.f32.mrf.mxu0
  %v310 = vadd.f32 0.0, %v309
  %311 = vmatmul.bf16.gmra.mxu0 %v221
  %v312 = vpop.f32.mrf.mxu0
  %v313 = vadd.f32 0.0, %v312
  %v314 = vpop.f32.mrf.mxu0
  %v315 = vadd.f32 0.0, %v314
  %316 = vmatmul.bf16.gmra.mxu0 %v224
  %v317 = vpop.f32.mrf.mxu0
  %v318 = vadd.f32 0.0, %v317
  %v319 = vpop.f32.mrf.mxu0
  %v320 = vadd.f32 0.0, %v319
  %321 = vmatmul.bf16.gmra.mxu0 %v227
  %v322 = vpop.f32.mrf.mxu0
  %v323 = vadd.f32 0.0, %v322
  %v324 = vpop.f32.mrf.mxu0
  %v325 = vadd.f32 0.0, %v324
  %326 = vmatmul.bf16.gmra.mxu0 %v230
  %v327 = vpop.f32.mrf.mxu0
  %v328 = vadd.f32 0.0, %v327
  %v329 = vpop.f32.mrf.mxu0
  %v330 = vadd.f32 0.0, %v329
  %331 = vmatmul.bf16.gmra.mxu0 %v233
  %v332 = vpop.f32.mrf.mxu0
  %v333 = vadd.f32 0.0, %v332
  %v334 = vpop.f32.mrf.mxu0
  %v335 = vadd.f32 0.0, %v334
  %336 = vmatmul.bf16.gmra.mxu0 %v236
  %v337 = vpop.f32.mrf.mxu0
  %v338 = vadd.f32 0.0, %v337
  %v339 = vpop.f32.mrf.mxu0
  %v340 = vadd.f32 0.0, %v339
  %341 = vmatmul.bf16.gmra.mxu0 %v239
  %v342 = vpop.f32.mrf.mxu0
  %v343 = vadd.f32 0.0, %v342
  %v344 = vpop.f32.mrf.mxu0
  %v345 = vadd.f32 0.0, %v344
  %346 = vmatmul.bf16.gmra.mxu0 %v242
  %v347 = vpop.f32.mrf.mxu0
  %v348 = vadd.f32 0.0, %v347
  %v349 = vpop.f32.mrf.mxu0
  %v350 = vadd.f32 0.0, %v349
  %351 = vmatmul.bf16.gmra.mxu0 %v245
  %v352 = vpop.f32.mrf.mxu0
  %v353 = vadd.f32 0.0, %v352
  %v354 = vpop.f32.mrf.mxu0
  %v355 = vadd.f32 0.0, %v354
  %356 = vmatmul.bf16.gmra.mxu0 %v248
  %v357 = vpop.f32.mrf.mxu0
  %v358 = vadd.f32 0.0, %v357
  %v359 = vpop.f32.mrf.mxu0
  %v360 = vadd.f32 0.0, %v359
  %361 = vmatmul.bf16.gmra.mxu0 %v251
  %v362 = vpop.f32.mrf.mxu0
  %v363 = vadd.f32 0.0, %v362
  %v364 = vpop.f32.mrf.mxu0
  %v365 = vadd.f32 0.0, %v364
  %366 = vmatmul.bf16.gmra.mxu0 %v254
  %v367 = vpop.f32.mrf.mxu0
  %v368 = vadd.f32 0.0, %v367
  %v369 = vpop.f32.mrf.mxu0
  %v370 = vadd.f32 0.0, %v369
  %371 = vmatmul.bf16.gmra.mxu0 %v257
  %v372 = vpop.f32.mrf.mxu0
  %v373 = vadd.f32 0.0, %v372
  %v374 = vpop.f32.mrf.mxu0
  %v375 = vadd.f32 0.0, %v374
  %376 = vmatmul.bf16.gmra.mxu0 %v260
  %v377 = vpop.f32.mrf.mxu0
  %v378 = vadd.f32 0.0, %v377
  %v379 = vpop.f32.mrf.mxu0
  %v380 = vadd.f32 0.0, %v379
  %381 = vmatmul.bf16.gmra.mxu0 %v263
  %v382 = vpop.f32.mrf.mxu0
  %v383 = vadd.f32 0.0, %v382
  %v384 = vpop.f32.mrf.mxu0
  %v385 = vadd.f32 0.0, %v384
  %386 = vmatmul.bf16.gmra.mxu0 %v266
  %v387 = vpop.f32.mrf.mxu0
  %v388 = vadd.f32 0.0, %v387
  %v389 = vpop.f32.mrf.mxu0
  %v390 = vadd.f32 0.0, %v389
  %391 = vmatmul.bf16.gmra.mxu0 %v269
  %v392 = vpop.f32.mrf.mxu0
  %v393 = vadd.f32 0.0, %v392
  %v394 = vpop.f32.mrf.mxu0
  %v395 = vadd.f32 0.0, %v394
  %396 = vmatmul.bf16.gmra.mxu0 %v272
  %v397 = vpop.f32.mrf.mxu0
  %v398 = vadd.f32 0.0, %v397
  %v399 = vpop.f32.mrf.mxu0
  %v400 = vadd.f32 0.0, %v399
  %401 = vmatmul.bf16.gmra.mxu0 %v275
  %v402 = vpop.f32.mrf.mxu0
  %v403 = vadd.f32 0.0, %v402
  %v404 = vpop.f32.mrf.mxu0
  %v405 = vadd.f32 0.0, %v404
  %406 = vmatmul.bf16.gmra.mxu0 %v278
  %v407 = vpop.f32.mrf.mxu0
  %v408 = vadd.f32 0.0, %v407
  %v409 = vpop.f32.mrf.mxu0
  %v410 = vadd.f32 0.0, %v409
  %411 = vmatmul.bf16.gmra.mxu0 %v281
  %v412 = vpop.f32.mrf.mxu0
  %v413 = vadd.f32 0.0, %v412
  %v414 = vpop.f32.mrf.mxu0
  %415 = vdwg.mxu0
  %vm416 = vcmask 130048
  %417 = vst.msk [vmem:[%s3] sm:$0xff] %vm416, %v293
  %418 = vst.msk [vmem:[%s3 + $0x8] sm:$0xff] %vm416, %v295
  %419 = vst.msk [vmem:[%s3 + $0x10] sm:$0xff] %vm416, %v298
  %420 = vst.msk [vmem:[%s3 + $0x18] sm:$0xff] %vm416, %v300
  %421 = vst.msk [vmem:[%s3 + $0x20] sm:$0xff] %vm416, %v303
  %422 = vst.msk [vmem:[%s3 + $0x28] sm:$0xff] %vm416, %v305
  %423 = vst.msk [vmem:[%s3 + $0x30] sm:$0xff] %vm416, %v308
  %424 = vst.msk [vmem:[%s3 + $0x38] sm:$0xff] %vm416, %v310
  %425 = vst.msk [vmem:[%s3 + $0x40] sm:$0xff] %vm416, %v313
  %426 = vst.msk [vmem:[%s3 + $0x48] sm:$0xff] %vm416, %v315
  %427 = vst.msk [vmem:[%s3 + $0x50] sm:$0xff] %vm416, %v318
  %428 = vst.msk [vmem:[%s3 + $0x58] sm:$0xff] %vm416, %v320
  %429 = vst.msk [vmem:[%s3 + $0x60] sm:$0xff] %vm416, %v323
  %430 = vst.msk [vmem:[%s3 + $0x68] sm:$0xff] %vm416, %v325
  %431 = vst.msk [vmem:[%s3 + $0x70] sm:$0xff] %vm416, %v328
  %432 = vst.msk [vmem:[%s3 + $0x78] sm:$0xff] %vm416, %v330
  %433 = vst.msk [vmem:[%s3 + $0x80] sm:$0xff] %vm416, %v333
  %434 = vst.msk [vmem:[%s3 + $0x88] sm:$0xff] %vm416, %v335
  %435 = vst.msk [vmem:[%s3 + $0x90] sm:$0xff] %vm416, %v338
  %436 = vst.msk [vmem:[%s3 + $0x98] sm:$0xff] %vm416, %v340
  %437 = vst.msk [vmem:[%s3 + $0xa0] sm:$0xff] %vm416, %v343
  %438 = vst.msk [vmem:[%s3 + $0xa8] sm:$0xff] %vm416, %v345
  %439 = vst.msk [vmem:[%s3 + $0xb0] sm:$0xff] %vm416, %v348
  %440 = vst.msk [vmem:[%s3 + $0xb8] sm:$0xff] %vm416, %v350
  %441 = vst.msk [vmem:[%s3 + $0xc0] sm:$0xff] %vm416, %v353
  %442 = vst.msk [vmem:[%s3 + $0xc8] sm:$0xff] %vm416, %v355
  %443 = vst.msk [vmem:[%s3 + $0xd0] sm:$0xff] %vm416, %v358
  %444 = vst.msk [vmem:[%s3 + $0xd8] sm:$0xff] %vm416, %v360
  %445 = vst.msk [vmem:[%s3 + $0xe0] sm:$0xff] %vm416, %v363
  %446 = vst.msk [vmem:[%s3 + $0xe8] sm:$0xff] %vm416, %v365
  %447 = vst.msk [vmem:[%s3 + $0xf0] sm:$0xff] %vm416, %v368
  %448 = vst.msk [vmem:[%s3 + $0xf8] sm:$0xff] %vm416, %v370
  %449 = vst.msk [vmem:[%s3 + $0x100] sm:$0xff] %vm416, %v373
  %450 = vst.msk [vmem:[%s3 + $0x108] sm:$0xff] %vm416, %v375
  %451 = vst.msk [vmem:[%s3 + $0x110] sm:$0xff] %vm416, %v378
  %452 = vst.msk [vmem:[%s3 + $0x118] sm:$0xff] %vm416, %v380
  %453 = vst.msk [vmem:[%s3 + $0x120] sm:$0xff] %vm416, %v383
  %454 = vst.msk [vmem:[%s3 + $0x128] sm:$0xff] %vm416, %v385
  %455 = vst.msk [vmem:[%s3 + $0x130] sm:$0xff] %vm416, %v388
  %456 = vst.msk [vmem:[%s3 + $0x138] sm:$0xff] %vm416, %v390
  %457 = vst.msk [vmem:[%s3 + $0x140] sm:$0xff] %vm416, %v393
  %458 = vst.msk [vmem:[%s3 + $0x148] sm:$0xff] %vm416, %v395
  %459 = vst.msk [vmem:[%s3 + $0x150] sm:$0xff] %vm416, %v398
  %460 = vst.msk [vmem:[%s3 + $0x158] sm:$0xff] %vm416, %v400
  %461 = vst.msk [vmem:[%s3 + $0x160] sm:$0xff] %vm416, %v403
  %462 = vst.msk [vmem:[%s3 + $0x168] sm:$0xff] %vm416, %v405
  %463 = vst.msk [vmem:[%s3 + $0x170] sm:$0xff] %vm416, %v408
  %464 = vst.msk [vmem:[%s3 + $0x178] sm:$0xff] %vm416, %v410
  %465 = vst.msk [vmem:[%s3 + $0x180] sm:$0xff] %vm416, %v413
  // Predicated region
  $region14: #{vae_forward.18} parent=0 // pred_check
    _
  $region15: #{vae_forward.18} parent=0 // pred_check_branch
    %467 = sbr.rel (0) target = $region17
  $region16: #{vae_forward.18} parent=0 // pred_region
    _
  $region17: #{vae_forward.18} parent=0 // pred_fallthru
    _
  // Predicated region
  $region18: #{vae_forward.18} parent=0 // pred_check
    _
  $region19: #{vae_forward.18} parent=0 // pred_check_branch
    %469 = sbr.rel (0) target = $region21
  $region20: #{vae_forward.18} parent=0 // pred_region
    _
  $region21: #{vae_forward.18} parent=0 // pred_fallthru
    _

// kernel: vae_forward.19
$region0: #{vae_forward.19}
  #allocation0 [shape = 'u32[]', space=smem, size = 0x4, offset = 0x4, fixed_abs, tag = 'smem constant byte address 0x4 - core index']
  #allocation1 [shape = 'u32[72,128]{1,0:T(1,128)}', space=vmem, size = 0x9000, scoped, tag = 'internal scratch']
  #allocation2 [shape = 'f32[1,1]{1,0:T(1,128)S(1)}', space=vmem, size = 0x200, scoped, tag = 'scoped memory for vae_forward.19']
  %s0 = inlined_call_operand.vmem [shape: f32[1568,1], index: 0, kind: input, shape index: {}]
  %s1 = inlined_call_operand.<no memory space> [shape: f32[1,1], index: 1, kind: input, shape index: {}]
  %s2 = inlined_call_operand.vmem [shape: f32[1568,1], index: 2, kind: output, shape index: {}]
  %s3 = sld [smem:[#allocation0]]
  $region18: #{vae_forward.19} parent=0
    _
  %s5 = ssub.s32 1, %s3
  %s6 = scalar_select 0, %s5, %s3
  %v7 = vstv %s1
  %8 = vst [vmem:[#allocation2] sm:$0x1] %v7
  // Predicated region
  $region2: #{vae_forward.19} parent=0 // pred_check
    _
  $region3: #{vae_forward.19} parent=0 // pred_check_branch
    %10 = sbr.rel (0) target = $region5
  $region4: #{vae_forward.19} parent=0 // pred_region
    _
  $region5: #{vae_forward.19} parent=0 // pred_fallthru
    _
  // Predicated region
  $region6: #{vae_forward.19} parent=0 // pred_check
    _
  $region7: #{vae_forward.19} parent=0 // pred_check_branch
    %12 = sbr.rel (0) target = $region9
  $region8: #{vae_forward.19} parent=0 // pred_region
    _
  $region9: #{vae_forward.19} parent=0 // pred_fallthru
    _
  %v13 = vld [vmem:[%s0] sm:$0xff]
  %v14 = vld [vmem:[%s0 + $0x8] sm:$0xff]
  %v15 = vld [vmem:[%s0 + $0x10] sm:$0xff]
  %v16 = vld [vmem:[%s0 + $0x18] sm:$0xff]
  %v17 = vld [vmem:[%s0 + $0x20] sm:$0xff]
  %v18 = vld [vmem:[%s0 + $0x28] sm:$0xff]
  %v19 = vld [vmem:[%s0 + $0x30] sm:$0xff]
  %v20 = vld [vmem:[%s0 + $0x38] sm:$0xff]
  %v21 = vld [vmem:[%s0 + $0x40] sm:$0xff]
  %v22 = vld [vmem:[%s0 + $0x48] sm:$0xff]
  %v23 = vld [vmem:[%s0 + $0x50] sm:$0xff]
  %v24 = vld [vmem:[%s0 + $0x58] sm:$0xff]
  %v25 = vld [vmem:[%s0 + $0x60] sm:$0xff]
  %v26 = vld [vmem:[%s0 + $0x68] sm:$0xff]
  %v27 = vld [vmem:[%s0 + $0x70] sm:$0xff]
  %v28 = vld [vmem:[%s0 + $0x78] sm:$0xff]
  %v29 = vld [vmem:[%s0 + $0x80] sm:$0xff]
  %v30 = vld [vmem:[%s0 + $0x88] sm:$0xff]
  %v31 = vld [vmem:[%s0 + $0x90] sm:$0xff]
  %v32 = vld [vmem:[%s0 + $0x98] sm:$0xff]
  %v33 = vld [vmem:[%s0 + $0xa0] sm:$0xff]
  %v34 = vld [vmem:[%s0 + $0xa8] sm:$0xff]
  %v35 = vld [vmem:[%s0 + $0xb0] sm:$0xff]
  %v36 = vld [vmem:[%s0 + $0xb8] sm:$0xff]
  %v37 = vld [vmem:[%s0 + $0xc0] sm:$0xff]
  %v38 = vld [vmem:[%s0 + $0xc8] sm:$0xff]
  %v39 = vld [vmem:[%s0 + $0xd0] sm:$0xff]
  %v40 = vld [vmem:[%s0 + $0xd8] sm:$0xff]
  %v41 = vld [vmem:[%s0 + $0xe0] sm:$0xff]
  %v42 = vld [vmem:[%s0 + $0xe8] sm:$0xff]
  %v43 = vld [vmem:[%s0 + $0xf0] sm:$0xff]
  %v44 = vld [vmem:[%s0 + $0xf8] sm:$0xff]
  %v45 = vld [vmem:[%s0 + $0x100] sm:$0xff]
  %v46 = vld [vmem:[%s0 + $0x108] sm:$0xff]
  %v47 = vld [vmem:[%s0 + $0x110] sm:$0xff]
  %v48 = vld [vmem:[%s0 + $0x118] sm:$0xff]
  %v49 = vld [vmem:[%s0 + $0x120] sm:$0xff]
  %v50 = vld [vmem:[%s0 + $0x128] sm:$0xff]
  %v51 = vld [vmem:[%s0 + $0x130] sm:$0xff]
  %v52 = vld [vmem:[%s0 + $0x138] sm:$0xff]
  %v53 = vld [vmem:[%s0 + $0x140] sm:$0xff]
  %v54 = vld [vmem:[%s0 + $0x148] sm:$0xff]
  %v55 = vld [vmem:[%s0 + $0x150] sm:$0xff]
  %v56 = vld [vmem:[%s0 + $0x158] sm:$0xff]
  %v57 = vld [vmem:[%s0 + $0x160] sm:$0xff]
  %v58 = vld [vmem:[%s0 + $0x168] sm:$0xff]
  %v59 = vld [vmem:[%s0 + $0x170] sm:$0xff]
  %v60 = vld [vmem:[%s0 + $0x178] sm:$0xff]
  %v61 = vld [vmem:[%s0 + $0x180] sm:$0xff]
  %v62 = vld [vmem:[%s0 + $0x188] sm:$0xff]
  %v63 = vld [vmem:[%s0 + $0x190] sm:$0xff]
  %v64 = vld [vmem:[%s0 + $0x198] sm:$0xff]
  %v65 = vld [vmem:[%s0 + $0x1a0] sm:$0xff]
  %v66 = vld [vmem:[%s0 + $0x1a8] sm:$0xff]
  %v67 = vld [vmem:[%s0 + $0x1b0] sm:$0xff]
  %v68 = vld [vmem:[%s0 + $0x1b8] sm:$0xff]
  %v69 = vld [vmem:[%s0 + $0x1c0] sm:$0xff]
  %v70 = vld [vmem:[%s0 + $0x1c8] sm:$0xff]
  %v71 = vld [vmem:[%s0 + $0x1d0] sm:$0xff]
  %v72 = vld [vmem:[%s0 + $0x1d8] sm:$0xff]
  %v73 = vld [vmem:[%s0 + $0x1e0] sm:$0xff]
  %v74 = vld [vmem:[%s0 + $0x1e8] sm:$0xff]
  %v75 = vld [vmem:[%s0 + $0x1f0] sm:$0xff]
  %v76 = vld [vmem:[%s0 + $0x1f8] sm:$0xff]
  %v77 = vld [vmem:[%s0 + $0x200] sm:$0xff]
  %v78 = vld [vmem:[%s0 + $0x208] sm:$0xff]
  %v79 = vld [vmem:[%s0 + $0x210] sm:$0xff]
  %v80 = vld [vmem:[%s0 + $0x218] sm:$0xff]
  %v81 = vld [vmem:[%s0 + $0x220] sm:$0xff]
  %v82 = vld [vmem:[%s0 + $0x228] sm:$0xff]
  %v83 = vld [vmem:[%s0 + $0x230] sm:$0xff]
  %v84 = vld [vmem:[%s0 + $0x238] sm:$0xff]
  %v85 = vld [vmem:[%s0 + $0x240] sm:$0xff]
  %v86 = vld [vmem:[%s0 + $0x248] sm:$0xff]
  %v87 = vld [vmem:[%s0 + $0x250] sm:$0xff]
  %v88 = vld [vmem:[%s0 + $0x258] sm:$0xff]
  %v89 = vld [vmem:[%s0 + $0x260] sm:$0xff]
  %v90 = vld [vmem:[%s0 + $0x268] sm:$0xff]
  %v91 = vld [vmem:[%s0 + $0x270] sm:$0xff]
  %v92 = vld [vmem:[%s0 + $0x278] sm:$0xff]
  %v93 = vld [vmem:[%s0 + $0x280] sm:$0xff]
  %v94 = vld [vmem:[%s0 + $0x288] sm:$0xff]
  %v95 = vld [vmem:[%s0 + $0x290] sm:$0xff]
  %v96 = vld [vmem:[%s0 + $0x298] sm:$0xff]
  %v97 = vld [vmem:[%s0 + $0x2a0] sm:$0xff]
  %v98 = vld [vmem:[%s0 + $0x2a8] sm:$0xff]
  %v99 = vld [vmem:[%s0 + $0x2b0] sm:$0xff]
  %v100 = vld [vmem:[%s0 + $0x2b8] sm:$0xff]
  %v101 = vld [vmem:[%s0 + $0x2c0] sm:$0xff]
  %v102 = vld [vmem:[%s0 + $0x2c8] sm:$0xff]
  %v103 = vld [vmem:[%s0 + $0x2d0] sm:$0xff]
  %v104 = vld [vmem:[%s0 + $0x2d8] sm:$0xff]
  %v105 = vld [vmem:[%s0 + $0x2e0] sm:$0xff]
  %v106 = vld [vmem:[%s0 + $0x2e8] sm:$0xff]
  %v107 = vld [vmem:[%s0 + $0x2f0] sm:$0xff]
  %v108 = vld [vmem:[%s0 + $0x2f8] sm:$0xff]
  %v109 = vld [vmem:[%s0 + $0x300] sm:$0xff]
  %v110 = vld [vmem:[%s0 + $0x308] sm:$0xff]
  %v111 = vld [vmem:[%s0 + $0x310] sm:$0xff]
  %v112 = vld [vmem:[%s0 + $0x318] sm:$0xff]
  %v113 = vld [vmem:[%s0 + $0x320] sm:$0xff]
  %v114 = vld [vmem:[%s0 + $0x328] sm:$0xff]
  %v115 = vld [vmem:[%s0 + $0x330] sm:$0xff]
  %v116 = vld [vmem:[%s0 + $0x338] sm:$0xff]
  %v117 = vld [vmem:[%s0 + $0x340] sm:$0xff]
  %v118 = vld [vmem:[%s0 + $0x348] sm:$0xff]
  %v119 = vld [vmem:[%s0 + $0x350] sm:$0xff]
  %v120 = vld [vmem:[%s0 + $0x358] sm:$0xff]
  %v121 = vld [vmem:[%s0 + $0x360] sm:$0xff]
  %v122 = vld [vmem:[%s0 + $0x368] sm:$0xff]
  %v123 = vld [vmem:[%s0 + $0x370] sm:$0xff]
  %v124 = vld [vmem:[%s0 + $0x378] sm:$0xff]
  %v125 = vld [vmem:[%s0 + $0x380] sm:$0xff]
  %v126 = vld [vmem:[%s0 + $0x388] sm:$0xff]
  %v127 = vld [vmem:[%s0 + $0x390] sm:$0xff]
  %v128 = vld [vmem:[%s0 + $0x398] sm:$0xff]
  %v129 = vld [vmem:[%s0 + $0x3a0] sm:$0xff]
  %v130 = vld [vmem:[%s0 + $0x3a8] sm:$0xff]
  %v131 = vld [vmem:[%s0 + $0x3b0] sm:$0xff]
  %v132 = vld [vmem:[%s0 + $0x3b8] sm:$0xff]
  %v133 = vld [vmem:[%s0 + $0x3c0] sm:$0xff]
  %v134 = vld [vmem:[%s0 + $0x3c8] sm:$0xff]
  %v135 = vld [vmem:[%s0 + $0x3d0] sm:$0xff]
  %v136 = vld [vmem:[%s0 + $0x3d8] sm:$0xff]
  %v137 = vld [vmem:[%s0 + $0x3e0] sm:$0xff]
  %v138 = vld [vmem:[%s0 + $0x3e8] sm:$0xff]
  %v139 = vld [vmem:[%s0 + $0x3f0] sm:$0xff]
  %v140 = vld [vmem:[%s0 + $0x3f8] sm:$0xff]
  %v141 = vld [vmem:[%s0 + $0x400] sm:$0xff]
  %v142 = vld [vmem:[%s0 + $0x408] sm:$0xff]
  %v143 = vld [vmem:[%s0 + $0x410] sm:$0xff]
  %v144 = vld [vmem:[%s0 + $0x418] sm:$0xff]
  %v145 = vld [vmem:[%s0 + $0x420] sm:$0xff]
  %v146 = vld [vmem:[%s0 + $0x428] sm:$0xff]
  %v147 = vld [vmem:[%s0 + $0x430] sm:$0xff]
  %v148 = vld [vmem:[%s0 + $0x438] sm:$0xff]
  %v149 = vld [vmem:[%s0 + $0x440] sm:$0xff]
  %v150 = vld [vmem:[%s0 + $0x448] sm:$0xff]
  %v151 = vld [vmem:[%s0 + $0x450] sm:$0xff]
  %v152 = vld [vmem:[%s0 + $0x458] sm:$0xff]
  %v153 = vld [vmem:[%s0 + $0x460] sm:$0xff]
  %v154 = vld [vmem:[%s0 + $0x468] sm:$0xff]
  %v155 = vld [vmem:[%s0 + $0x470] sm:$0xff]
  %v156 = vld [vmem:[%s0 + $0x478] sm:$0xff]
  %v157 = vld [vmem:[%s0 + $0x480] sm:$0xff]
  %v158 = vld [vmem:[%s0 + $0x488] sm:$0xff]
  %v159 = vld [vmem:[%s0 + $0x490] sm:$0xff]
  %v160 = vld [vmem:[%s0 + $0x498] sm:$0xff]
  %v161 = vld [vmem:[%s0 + $0x4a0] sm:$0xff]
  %v162 = vld [vmem:[%s0 + $0x4a8] sm:$0xff]
  %v163 = vld [vmem:[%s0 + $0x4b0] sm:$0xff]
  %v164 = vld [vmem:[%s0 + $0x4b8] sm:$0xff]
  %v165 = vld [vmem:[%s0 + $0x4c0] sm:$0xff]
  %v166 = vld [vmem:[%s0 + $0x4c8] sm:$0xff]
  %v167 = vld [vmem:[%s0 + $0x4d0] sm:$0xff]
  %v168 = vld [vmem:[%s0 + $0x4d8] sm:$0xff]
  %v169 = vld [vmem:[%s0 + $0x4e0] sm:$0xff]
  %v170 = vld [vmem:[%s0 + $0x4e8] sm:$0xff]
  %v171 = vld [vmem:[%s0 + $0x4f0] sm:$0xff]
  %v172 = vld [vmem:[%s0 + $0x4f8] sm:$0xff]
  %v173 = vld [vmem:[%s0 + $0x500] sm:$0xff]
  %v174 = vld [vmem:[%s0 + $0x508] sm:$0xff]
  %v175 = vld [vmem:[%s0 + $0x510] sm:$0xff]
  %v176 = vld [vmem:[%s0 + $0x518] sm:$0xff]
  %v177 = vld [vmem:[%s0 + $0x520] sm:$0xff]
  %v178 = vld [vmem:[%s0 + $0x528] sm:$0xff]
  %v179 = vld [vmem:[%s0 + $0x530] sm:$0xff]
  %v180 = vld [vmem:[%s0 + $0x538] sm:$0xff]
  %v181 = vld [vmem:[%s0 + $0x540] sm:$0xff]
  %v182 = vld [vmem:[%s0 + $0x548] sm:$0xff]
  %v183 = vld [vmem:[%s0 + $0x550] sm:$0xff]
  %v184 = vld [vmem:[%s0 + $0x558] sm:$0xff]
  %v185 = vld [vmem:[%s0 + $0x560] sm:$0xff]
  %v186 = vld [vmem:[%s0 + $0x568] sm:$0xff]
  %v187 = vld [vmem:[%s0 + $0x570] sm:$0xff]
  %v188 = vld [vmem:[%s0 + $0x578] sm:$0xff]
  %v189 = vld [vmem:[%s0 + $0x580] sm:$0xff]
  %v190 = vld [vmem:[%s0 + $0x588] sm:$0xff]
  %v191 = vld [vmem:[%s0 + $0x590] sm:$0xff]
  %v192 = vld [vmem:[%s0 + $0x598] sm:$0xff]
  %v193 = vld [vmem:[%s0 + $0x5a0] sm:$0xff]
  %v194 = vld [vmem:[%s0 + $0x5a8] sm:$0xff]
  %v195 = vld [vmem:[%s0 + $0x5b0] sm:$0xff]
  %v196 = vld [vmem:[%s0 + $0x5b8] sm:$0xff]
  %v197 = vld [vmem:[%s0 + $0x5c0] sm:$0xff]
  %v198 = vld [vmem:[%s0 + $0x5c8] sm:$0xff]
  %v199 = vld [vmem:[%s0 + $0x5d0] sm:$0xff]
  %v200 = vld [vmem:[%s0 + $0x5d8] sm:$0xff]
  %v201 = vld [vmem:[%s0 + $0x5e0] sm:$0xff]
  %v202 = vld [vmem:[%s0 + $0x5e8] sm:$0xff]
  %v203 = vld [vmem:[%s0 + $0x5f0] sm:$0xff]
  %v204 = vld [vmem:[%s0 + $0x5f8] sm:$0xff]
  %v205 = vld [vmem:[%s0 + $0x600] sm:$0xff]
  %v206 = vld [vmem:[%s0 + $0x608] sm:$0xff]
  %v207 = vld [vmem:[%s0 + $0x610] sm:$0xff]
  %v208 = vld [vmem:[%s0 + $0x618] sm:$0xff]
  %v209 = vld [vmem:[#allocation2] sm:$0x1]
  %v211 = vperm.slane %v209, 0
  %v213 = vadd.f32 %v13, %v211
  %v214 = vadd.f32 %v14, %v211
  %v215 = vadd.f32 %v15, %v211
  %v216 = vadd.f32 %v16, %v211
  %v217 = vadd.f32 %v17, %v211
  %v218 = vadd.f32 %v18, %v211
  %v219 = vadd.f32 %v19, %v211
  %v220 = vadd.f32 %v20, %v211
  %v221 = vadd.f32 %v21, %v211
  %v222 = vadd.f32 %v22, %v211
  %v223 = vadd.f32 %v23, %v211
  %v224 = vadd.f32 %v24, %v211
  %v225 = vadd.f32 %v25, %v211
  %v226 = vadd.f32 %v26, %v211
  %v227 = vadd.f32 %v27, %v211
  %v228 = vadd.f32 %v28, %v211
  %v229 = vadd.f32 %v29, %v211
  %v230 = vadd.f32 %v30, %v211
  %v231 = vadd.f32 %v31, %v211
  %v232 = vadd.f32 %v32, %v211
  %v233 = vadd.f32 %v33, %v211
  %v234 = vadd.f32 %v34, %v211
  %v235 = vadd.f32 %v35, %v211
  %v236 = vadd.f32 %v36, %v211
  %v237 = vadd.f32 %v37, %v211
  %v238 = vadd.f32 %v38, %v211
  %v239 = vadd.f32 %v39, %v211
  %v240 = vadd.f32 %v40, %v211
  %v241 = vadd.f32 %v41, %v211
  %v242 = vadd.f32 %v42, %v211
  %v243 = vadd.f32 %v43, %v211
  %v244 = vadd.f32 %v44, %v211
  %v245 = vadd.f32 %v45, %v211
  %v246 = vadd.f32 %v46, %v211
  %v247 = vadd.f32 %v47, %v211
  %v248 = vadd.f32 %v48, %v211
  %v249 = vadd.f32 %v49, %v211
  %v250 = vadd.f32 %v50, %v211
  %v251 = vadd.f32 %v51, %v211
  %v252 = vadd.f32 %v52, %v211
  %v253 = vadd.f32 %v53, %v211
  %v254 = vadd.f32 %v54, %v211
  %v255 = vadd.f32 %v55, %v211
  %v256 = vadd.f32 %v56, %v211
  %v257 = vadd.f32 %v57, %v211
  %v258 = vadd.f32 %v58, %v211
  %v259 = vadd.f32 %v59, %v211
  %v260 = vadd.f32 %v60, %v211
  %v261 = vadd.f32 %v61, %v211
  %v262 = vadd.f32 %v62, %v211
  %v263 = vadd.f32 %v63, %v211
  %v264 = vadd.f32 %v64, %v211
  %v265 = vadd.f32 %v65, %v211
  %v266 = vadd.f32 %v66, %v211
  %v267 = vadd.f32 %v67, %v211
  %v268 = vadd.f32 %v68, %v211
  %v269 = vadd.f32 %v69, %v211
  %v270 = vadd.f32 %v70, %v211
  %v271 = vadd.f32 %v71, %v211
  %v272 = vadd.f32 %v72, %v211
  %v273 = vadd.f32 %v73, %v211
  %v274 = vadd.f32 %v74, %v211
  %v275 = vadd.f32 %v75, %v211
  %v276 = vadd.f32 %v76, %v211
  %v277 = vadd.f32 %v77, %v211
  %v278 = vadd.f32 %v78, %v211
  %v279 = vadd.f32 %v79, %v211
  %v280 = vadd.f32 %v80, %v211
  %v281 = vadd.f32 %v81, %v211
  %v282 = vadd.f32 %v82, %v211
  %v283 = vadd.f32 %v83, %v211
  %v284 = vadd.f32 %v84, %v211
  %v285 = vadd.f32 %v85, %v211
  %v286 = vadd.f32 %v86, %v211
  %v287 = vadd.f32 %v87, %v211
  %v288 = vadd.f32 %v88, %v211
  %v289 = vadd.f32 %v89, %v211
  %v290 = vadd.f32 %v90, %v211
  %v291 = vadd.f32 %v91, %v211
  %v292 = vadd.f32 %v92, %v211
  %v293 = vadd.f32 %v93, %v211
  %v294 = vadd.f32 %v94, %v211
  %v295 = vadd.f32 %v95, %v211
  %v296 = vadd.f32 %v96, %v211
  %v297 = vadd.f32 %v97, %v211
  %v298 = vadd.f32 %v98, %v211
  %v299 = vadd.f32 %v99, %v211
  %v300 = vadd.f32 %v100, %v211
  %v301 = vadd.f32 %v101, %v211
  %v302 = vadd.f32 %v102, %v211
  %v303 = vadd.f32 %v103, %v211
  %v304 = vadd.f32 %v104, %v211
  %v305 = vadd.f32 %v105, %v211
  %v306 = vadd.f32 %v106, %v211
  %v307 = vadd.f32 %v107, %v211
  %v308 = vadd.f32 %v108, %v211
  %v309 = vadd.f32 %v109, %v211
  %v310 = vadd.f32 %v110, %v211
  %v311 = vadd.f32 %v111, %v211
  %v312 = vadd.f32 %v112, %v211
  %v313 = vadd.f32 %v113, %v211
  %v314 = vadd.f32 %v114, %v211
  %v315 = vadd.f32 %v115, %v211
  %v316 = vadd.f32 %v116, %v211
  %v317 = vadd.f32 %v117, %v211
  %v318 = vadd.f32 %v118, %v211
  %v319 = vadd.f32 %v119, %v211
  %v320 = vadd.f32 %v120, %v211
  %v321 = vadd.f32 %v121, %v211
  %v322 = vadd.f32 %v122, %v211
  %v323 = vadd.f32 %v123, %v211
  %v324 = vadd.f32 %v124, %v211
  %v325 = vadd.f32 %v125, %v211
  %v326 = vadd.f32 %v126, %v211
  %v327 = vadd.f32 %v127, %v211
  %v328 = vadd.f32 %v128, %v211
  %v329 = vadd.f32 %v129, %v211
  %v330 = vadd.f32 %v130, %v211
  %v331 = vadd.f32 %v131, %v211
  %v332 = vadd.f32 %v132, %v211
  %v333 = vadd.f32 %v133, %v211
  %v334 = vadd.f32 %v134, %v211
  %v335 = vadd.f32 %v135, %v211
  %v336 = vadd.f32 %v136, %v211
  %v337 = vadd.f32 %v137, %v211
  %v338 = vadd.f32 %v138, %v211
  %v339 = vadd.f32 %v139, %v211
  %v340 = vadd.f32 %v140, %v211
  %v341 = vadd.f32 %v141, %v211
  %v342 = vadd.f32 %v142, %v211
  %v343 = vadd.f32 %v143, %v211
  %v344 = vadd.f32 %v144, %v211
  %v345 = vadd.f32 %v145, %v211
  %v346 = vadd.f32 %v146, %v211
  %v347 = vadd.f32 %v147, %v211
  %v348 = vadd.f32 %v148, %v211
  %v349 = vadd.f32 %v149, %v211
  %v350 = vadd.f32 %v150, %v211
  %v351 = vadd.f32 %v151, %v211
  %v352 = vadd.f32 %v152, %v211
  %v353 = vadd.f32 %v153, %v211
  %v354 = vadd.f32 %v154, %v211
  %v355 = vadd.f32 %v155, %v211
  %v356 = vadd.f32 %v156, %v211
  %v357 = vadd.f32 %v157, %v211
  %v358 = vadd.f32 %v158, %v211
  %v359 = vadd.f32 %v159, %v211
  %v360 = vadd.f32 %v160, %v211
  %v361 = vadd.f32 %v161, %v211
  %v362 = vadd.f32 %v162, %v211
  %v363 = vadd.f32 %v163, %v211
  %v364 = vadd.f32 %v164, %v211
  %v365 = vadd.f32 %v165, %v211
  %v366 = vadd.f32 %v166, %v211
  %v367 = vadd.f32 %v167, %v211
  %v368 = vadd.f32 %v168, %v211
  %v369 = vadd.f32 %v169, %v211
  %v370 = vadd.f32 %v170, %v211
  %v371 = vadd.f32 %v171, %v211
  %v372 = vadd.f32 %v172, %v211
  %v373 = vadd.f32 %v173, %v211
  %v374 = vadd.f32 %v174, %v211
  %v375 = vadd.f32 %v175, %v211
  %v376 = vadd.f32 %v176, %v211
  %v377 = vadd.f32 %v177, %v211
  %v378 = vadd.f32 %v178, %v211
  %v379 = vadd.f32 %v179, %v211
  %v380 = vadd.f32 %v180, %v211
  %v381 = vadd.f32 %v181, %v211
  %v382 = vadd.f32 %v182, %v211
  %v383 = vadd.f32 %v183, %v211
  %v384 = vadd.f32 %v184, %v211
  %v385 = vadd.f32 %v185, %v211
  %v386 = vadd.f32 %v186, %v211
  %v387 = vadd.f32 %v187, %v211
  %v388 = vadd.f32 %v188, %v211
  %v389 = vadd.f32 %v189, %v211
  %v390 = vadd.f32 %v190, %v211
  %v391 = vadd.f32 %v191, %v211
  %v392 = vadd.f32 %v192, %v211
  %v393 = vadd.f32 %v193, %v211
  %v394 = vadd.f32 %v194, %v211
  %v395 = vadd.f32 %v195, %v211
  %v396 = vadd.f32 %v196, %v211
  %v397 = vadd.f32 %v197, %v211
  %v398 = vadd.f32 %v198, %v211
  %v399 = vadd.f32 %v199, %v211
  %v400 = vadd.f32 %v200, %v211
  %v401 = vadd.f32 %v201, %v211
  %v402 = vadd.f32 %v202, %v211
  %v403 = vadd.f32 %v203, %v211
  %v404 = vadd.f32 %v204, %v211
  %v405 = vadd.f32 %v205, %v211
  %v406 = vadd.f32 %v206, %v211
  %v407 = vadd.f32 %v207, %v211
  %v408 = vadd.f32 %v208, %v211
  %v409 = vmax.f32 %v213, 0.0
  %v410 = vmax.f32 %v214, 0.0
  %v411 = vmax.f32 %v215, 0.0
  %v412 = vmax.f32 %v216, 0.0
  %v413 = vmax.f32 %v217, 0.0
  %v414 = vmax.f32 %v218, 0.0
  %v415 = vmax.f32 %v219, 0.0
  %v416 = vmax.f32 %v220, 0.0
  %v417 = vmax.f32 %v221, 0.0
  %v418 = vmax.f32 %v222, 0.0
  %v419 = vmax.f32 %v223, 0.0
  %v420 = vmax.f32 %v224, 0.0
  %v421 = vmax.f32 %v225, 0.0
  %v422 = vmax.f32 %v226, 0.0
  %v423 = vmax.f32 %v227, 0.0
  %v424 = vmax.f32 %v228, 0.0
  %v425 = vmax.f32 %v229, 0.0
  %v426 = vmax.f32 %v230, 0.0
  %v427 = vmax.f32 %v231, 0.0
  %v428 = vmax.f32 %v232, 0.0
  %v429 = vmax.f32 %v233, 0.0
  %v430 = vmax.f32 %v234, 0.0
  %v431 = vmax.f32 %v235, 0.0
  %v432 = vmax.f32 %v236, 0.0
  %v433 = vmax.f32 %v237, 0.0
  %v434 = vmax.f32 %v238, 0.0
  %v435 = vmax.f32 %v239, 0.0
  %v436 = vmax.f32 %v240, 0.0
  %v437 = vmax.f32 %v241, 0.0
  %v438 = vmax.f32 %v242, 0.0
  %v439 = vmax.f32 %v243, 0.0
  %v440 = vmax.f32 %v244, 0.0
  %v441 = vmax.f32 %v245, 0.0
  %v442 = vmax.f32 %v246, 0.0
  %v443 = vmax.f32 %v247, 0.0
  %v444 = vmax.f32 %v248, 0.0
  %v445 = vmax.f32 %v249, 0.0
  %v446 = vmax.f32 %v250, 0.0
  %v447 = vmax.f32 %v251, 0.0
  %v448 = vmax.f32 %v252, 0.0
  %v449 = vmax.f32 %v253, 0.0
  %v450 = vmax.f32 %v254, 0.0
  %v451 = vmax.f32 %v255, 0.0
  %v452 = vmax.f32 %v256, 0.0
  %v453 = vmax.f32 %v257, 0.0
  %v454 = vmax.f32 %v258, 0.0
  %v455 = vmax.f32 %v259, 0.0
  %v456 = vmax.f32 %v260, 0.0
  %v457 = vmax.f32 %v261, 0.0
  %v458 = vmax.f32 %v262, 0.0
  %v459 = vmax.f32 %v263, 0.0
  %v460 = vmax.f32 %v264, 0.0
  %v461 = vmax.f32 %v265, 0.0
  %v462 = vmax.f32 %v266, 0.0
  %v463 = vmax.f32 %v267, 0.0
  %v464 = vmax.f32 %v268, 0.0
  %v465 = vmax.f32 %v269, 0.0
  %v466 = vmax.f32 %v270, 0.0
  %v467 = vmax.f32 %v271, 0.0
  %v468 = vmax.f32 %v272, 0.0
  %v469 = vmax.f32 %v273, 0.0
  %v470 = vmax.f32 %v274, 0.0
  %v471 = vmax.f32 %v275, 0.0
  %v472 = vmax.f32 %v276, 0.0
  %v473 = vmax.f32 %v277, 0.0
  %v474 = vmax.f32 %v278, 0.0
  %v475 = vmax.f32 %v279, 0.0
  %v476 = vmax.f32 %v280, 0.0
  %v477 = vmax.f32 %v281, 0.0
  %v478 = vmax.f32 %v282, 0.0
  %v479 = vmax.f32 %v283, 0.0
  %v480 = vmax.f32 %v284, 0.0
  %v481 = vmax.f32 %v285, 0.0
  %v482 = vmax.f32 %v286, 0.0
  %v483 = vmax.f32 %v287, 0.0
  %v484 = vmax.f32 %v288, 0.0
  %v485 = vmax.f32 %v289, 0.0
  %v486 = vmax.f32 %v290, 0.0
  %v487 = vmax.f32 %v291, 0.0
  %v488 = vmax.f32 %v292, 0.0
  %v489 = vmax.f32 %v293, 0.0
  %v490 = vmax.f32 %v294, 0.0
  %v491 = vmax.f32 %v295, 0.0
  %v492 = vmax.f32 %v296, 0.0
  %v493 = vmax.f32 %v297, 0.0
  %v494 = vmax.f32 %v298, 0.0
  %v495 = vmax.f32 %v299, 0.0
  %v496 = vmax.f32 %v300, 0.0
  %v497 = vmax.f32 %v301, 0.0
  %v498 = vmax.f32 %v302, 0.0
  %v499 = vmax.f32 %v303, 0.0
  %v500 = vmax.f32 %v304, 0.0
  %v501 = vmax.f32 %v305, 0.0
  %v502 = vmax.f32 %v306, 0.0
  %v503 = vmax.f32 %v307, 0.0
  %v504 = vmax.f32 %v308, 0.0
  %v505 = vmax.f32 %v309, 0.0
  %v506 = vmax.f32 %v310, 0.0
  %v507 = vmax.f32 %v311, 0.0
  %v508 = vmax.f32 %v312, 0.0
  %v509 = vmax.f32 %v313, 0.0
  %v510 = vmax.f32 %v314, 0.0
  %v511 = vmax.f32 %v315, 0.0
  %v512 = vmax.f32 %v316, 0.0
  %v513 = vmax.f32 %v317, 0.0
  %v514 = vmax.f32 %v318, 0.0
  %v515 = vmax.f32 %v319, 0.0
  %v516 = vmax.f32 %v320, 0.0
  %v517 = vmax.f32 %v321, 0.0
  %v518 = vmax.f32 %v322, 0.0
  %v519 = vmax.f32 %v323, 0.0
  %v520 = vmax.f32 %v324, 0.0
  %v521 = vmax.f32 %v325, 0.0
  %v522 = vmax.f32 %v326, 0.0
  %v523 = vmax.f32 %v327, 0.0
  %v524 = vmax.f32 %v328, 0.0
  %v525 = vmax.f32 %v329, 0.0
  %v526 = vmax.f32 %v330, 0.0
  %v527 = vmax.f32 %v331, 0.0
  %v528 = vmax.f32 %v332, 0.0
  %v529 = vmax.f32 %v333, 0.0
  %v530 = vmax.f32 %v334, 0.0
  %v531 = vmax.f32 %v335, 0.0
  %v532 = vmax.f32 %v336, 0.0
  %v533 = vmax.f32 %v337, 0.0
  %v534 = vmax.f32 %v338, 0.0
  %v535 = vmax.f32 %v339, 0.0
  %v536 = vmax.f32 %v340, 0.0
  %v537 = vmax.f32 %v341, 0.0
  %v538 = vmax.f32 %v342, 0.0
  %v539 = vmax.f32 %v343, 0.0
  %v540 = vmax.f32 %v344, 0.0
  %v541 = vmax.f32 %v345, 0.0
  %v542 = vmax.f32 %v346, 0.0
  %v543 = vmax.f32 %v347, 0.0
  %v544 = vmax.f32 %v348, 0.0
  %v545 = vmax.f32 %v349, 0.0
  %v546 = vmax.f32 %v350, 0.0
  %v547 = vmax.f32 %v351, 0.0
  %v548 = vmax.f32 %v352, 0.0
  %v549 = vmax.f32 %v353, 0.0
  %v550 = vmax.f32 %v354, 0.0
  %v551 = vmax.f32 %v355, 0.0
  %v552 = vmax.f32 %v356, 0.0
  %v553 = vmax.f32 %v357, 0.0
  %v554 = vmax.f32 %v358, 0.0
  %v555 = vmax.f32 %v359, 0.0
  %v556 = vmax.f32 %v360, 0.0
  %v557 = vmax.f32 %v361, 0.0
  %v558 = vmax.f32 %v362, 0.0
  %v559 = vmax.f32 %v363, 0.0
  %v560 = vmax.f32 %v364, 0.0
  %v561 = vmax.f32 %v365, 0.0
  %v562 = vmax.f32 %v366, 0.0
  %v563 = vmax.f32 %v367, 0.0
  %v564 = vmax.f32 %v368, 0.0
  %v565 = vmax.f32 %v369, 0.0
  %v566 = vmax.f32 %v370, 0.0
  %v567 = vmax.f32 %v371, 0.0
  %v568 = vmax.f32 %v372, 0.0
  %v569 = vmax.f32 %v373, 0.0
  %v570 = vmax.f32 %v374, 0.0
  %v571 = vmax.f32 %v375, 0.0
  %v572 = vmax.f32 %v376, 0.0
  %v573 = vmax.f32 %v377, 0.0
  %v574 = vmax.f32 %v378, 0.0
  %v575 = vmax.f32 %v379, 0.0
  %v576 = vmax.f32 %v380, 0.0
  %v577 = vmax.f32 %v381, 0.0
  %v578 = vmax.f32 %v382, 0.0
  %v579 = vmax.f32 %v383, 0.0
  %v580 = vmax.f32 %v384, 0.0
  %v581 = vmax.f32 %v385, 0.0
  %v582 = vmax.f32 %v386, 0.0
  %v583 = vmax.f32 %v387, 0.0
  %v584 = vmax.f32 %v388, 0.0
  %v585 = vmax.f32 %v389, 0.0
  %v586 = vmax.f32 %v390, 0.0
  %v587 = vmax.f32 %v391, 0.0
  %v588 = vmax.f32 %v392, 0.0
  %v589 = vmax.f32 %v393, 0.0
  %v590 = vmax.f32 %v394, 0.0
  %v591 = vmax.f32 %v395, 0.0
  %v592 = vmax.f32 %v396, 0.0
  %v593 = vmax.f32 %v397, 0.0
  %v594 = vmax.f32 %v398, 0.0
  %v595 = vmax.f32 %v399, 0.0
  %v596 = vmax.f32 %v400, 0.0
  %v597 = vmax.f32 %v401, 0.0
  %v598 = vmax.f32 %v402, 0.0
  %v599 = vmax.f32 %v403, 0.0
  %v600 = vmax.f32 %v404, 0.0
  %v601 = vmax.f32 %v405, 0.0
  %v602 = vmax.f32 %v406, 0.0
  %v603 = vmax.f32 %v407, 0.0
  %v604 = vmax.f32 %v408, 0.0
  %vm605 = vcmask 7168
  %606 = vst.msk [vmem:[%s2] sm:$0xff] %vm605, %v409
  %607 = vst.msk [vmem:[%s2 + $0x8] sm:$0xff] %vm605, %v410
  %608 = vst.msk [vmem:[%s2 + $0x10] sm:$0xff] %vm605, %v411
  %609 = vst.msk [vmem:[%s2 + $0x18] sm:$0xff] %vm605, %v412
  %610 = vst.msk [vmem:[%s2 + $0x20] sm:$0xff] %vm605, %v413
  %611 = vst.msk [vmem:[%s2 + $0x28] sm:$0xff] %vm605, %v414
  %612 = vst.msk [vmem:[%s2 + $0x30] sm:$0xff] %vm605, %v415
  %613 = vst.msk [vmem:[%s2 + $0x38] sm:$0xff] %vm605, %v416
  %614 = vst.msk [vmem:[%s2 + $0x40] sm:$0xff] %vm605, %v417
  %615 = vst.msk [vmem:[%s2 + $0x48] sm:$0xff] %vm605, %v418
  %616 = vst.msk [vmem:[%s2 + $0x50] sm:$0xff] %vm605, %v419
  %617 = vst.msk [vmem:[%s2 + $0x58] sm:$0xff] %vm605, %v420
  %618 = vst.msk [vmem:[%s2 + $0x60] sm:$0xff] %vm605, %v421
  %619 = vst.msk [vmem:[%s2 + $0x68] sm:$0xff] %vm605, %v422
  %620 = vst.msk [vmem:[%s2 + $0x70] sm:$0xff] %vm605, %v423
  %621 = vst.msk [vmem:[%s2 + $0x78] sm:$0xff] %vm605, %v424
  %622 = vst.msk [vmem:[%s2 + $0x80] sm:$0xff] %vm605, %v425
  %623 = vst.msk [vmem:[%s2 + $0x88] sm:$0xff] %vm605, %v426
  %624 = vst.msk [vmem:[%s2 + $0x90] sm:$0xff] %vm605, %v427
  %625 = vst.msk [vmem:[%s2 + $0x98] sm:$0xff] %vm605, %v428
  %626 = vst.msk [vmem:[%s2 + $0xa0] sm:$0xff] %vm605, %v429
  %627 = vst.msk [vmem:[%s2 + $0xa8] sm:$0xff] %vm605, %v430
  %628 = vst.msk [vmem:[%s2 + $0xb0] sm:$0xff] %vm605, %v431
  %629 = vst.msk [vmem:[%s2 + $0xb8] sm:$0xff] %vm605, %v432
  %630 = vst.msk [vmem:[%s2 + $0xc0] sm:$0xff] %vm605, %v433
  %631 = vst.msk [vmem:[%s2 + $0xc8] sm:$0xff] %vm605, %v434
  %632 = vst.msk [vmem:[%s2 + $0xd0] sm:$0xff] %vm605, %v435
  %633 = vst.msk [vmem:[%s2 + $0xd8] sm:$0xff] %vm605, %v436
  %634 = vst.msk [vmem:[%s2 + $0xe0] sm:$0xff] %vm605, %v437
  %635 = vst.msk [vmem:[%s2 + $0xe8] sm:$0xff] %vm605, %v438
  %636 = vst.msk [vmem:[%s2 + $0xf0] sm:$0xff] %vm605, %v439
  %637 = vst.msk [vmem:[%s2 + $0xf8] sm:$0xff] %vm605, %v440
  %638 = vst.msk [vmem:[%s2 + $0x100] sm:$0xff] %vm605, %v441
  %639 = vst.msk [vmem:[%s2 + $0x108] sm:$0xff] %vm605, %v442
  %640 = vst.msk [vmem:[%s2 + $0x110] sm:$0xff] %vm605, %v443
  %641 = vst.msk [vmem:[%s2 + $0x118] sm:$0xff] %vm605, %v444
  %642 = vst.msk [vmem:[%s2 + $0x120] sm:$0xff] %vm605, %v445
  %643 = vst.msk [vmem:[%s2 + $0x128] sm:$0xff] %vm605, %v446
  %644 = vst.msk [vmem:[%s2 + $0x130] sm:$0xff] %vm605, %v447
  %645 = vst.msk [vmem:[%s2 + $0x138] sm:$0xff] %vm605, %v448
  %646 = vst.msk [vmem:[%s2 + $0x140] sm:$0xff] %vm605, %v449
  %647 = vst.msk [vmem:[%s2 + $0x148] sm:$0xff] %vm605, %v450
  %648 = vst.msk [vmem:[%s2 + $0x150] sm:$0xff] %vm605, %v451
  %649 = vst.msk [vmem:[%s2 + $0x158] sm:$0xff] %vm605, %v452
  %650 = vst.msk [vmem:[%s2 + $0x160] sm:$0xff] %vm605, %v453
  %651 = vst.msk [vmem:[%s2 + $0x168] sm:$0xff] %vm605, %v454
  %652 = vst.msk [vmem:[%s2 + $0x170] sm:$0xff] %vm605, %v455
  %653 = vst.msk [vmem:[%s2 + $0x178] sm:$0xff] %vm605, %v456
  %654 = vst.msk [vmem:[%s2 + $0x180] sm:$0xff] %vm605, %v457
  %655 = vst.msk [vmem:[%s2 + $0x188] sm:$0xff] %vm605, %v458
  %656 = vst.msk [vmem:[%s2 + $0x190] sm:$0xff] %vm605, %v459
  %657 = vst.msk [vmem:[%s2 + $0x198] sm:$0xff] %vm605, %v460
  %658 = vst.msk [vmem:[%s2 + $0x1a0] sm:$0xff] %vm605, %v461
  %659 = vst.msk [vmem:[%s2 + $0x1a8] sm:$0xff] %vm605, %v462
  %660 = vst.msk [vmem:[%s2 + $0x1b0] sm:$0xff] %vm605, %v463
  %661 = vst.msk [vmem:[%s2 + $0x1b8] sm:$0xff] %vm605, %v464
  %662 = vst.msk [vmem:[%s2 + $0x1c0] sm:$0xff] %vm605, %v465
  %663 = vst.msk [vmem:[%s2 + $0x1c8] sm:$0xff] %vm605, %v466
  %664 = vst.msk [vmem:[%s2 + $0x1d0] sm:$0xff] %vm605, %v467
  %665 = vst.msk [vmem:[%s2 + $0x1d8] sm:$0xff] %vm605, %v468
  %666 = vst.msk [vmem:[%s2 + $0x1e0] sm:$0xff] %vm605, %v469
  %667 = vst.msk [vmem:[%s2 + $0x1e8] sm:$0xff] %vm605, %v470
  %668 = vst.msk [vmem:[%s2 + $0x1f0] sm:$0xff] %vm605, %v471
  %669 = vst.msk [vmem:[%s2 + $0x1f8] sm:$0xff] %vm605, %v472
  %670 = vst.msk [vmem:[%s2 + $0x200] sm:$0xff] %vm605, %v473
  %671 = vst.msk [vmem:[%s2 + $0x208] sm:$0xff] %vm605, %v474
  %672 = vst.msk [vmem:[%s2 + $0x210] sm:$0xff] %vm605, %v475
  %673 = vst.msk [vmem:[%s2 + $0x218] sm:$0xff] %vm605, %v476
  %674 = vst.msk [vmem:[%s2 + $0x220] sm:$0xff] %vm605, %v477
  %675 = vst.msk [vmem:[%s2 + $0x228] sm:$0xff] %vm605, %v478
  %676 = vst.msk [vmem:[%s2 + $0x230] sm:$0xff] %vm605, %v479
  %677 = vst.msk [vmem:[%s2 + $0x238] sm:$0xff] %vm605, %v480
  %678 = vst.msk [vmem:[%s2 + $0x240] sm:$0xff] %vm605, %v481
  %679 = vst.msk [vmem:[%s2 + $0x248] sm:$0xff] %vm605, %v482
  %680 = vst.msk [vmem:[%s2 + $0x250] sm:$0xff] %vm605, %v483
  %681 = vst.msk [vmem:[%s2 + $0x258] sm:$0xff] %vm605, %v484
  %682 = vst.msk [vmem:[%s2 + $0x260] sm:$0xff] %vm605, %v485
  %683 = vst.msk [vmem:[%s2 + $0x268] sm:$0xff] %vm605, %v486
  %684 = vst.msk [vmem:[%s2 + $0x270] sm:$0xff] %vm605, %v487
  %685 = vst.msk [vmem:[%s2 + $0x278] sm:$0xff] %vm605, %v488
  %686 = vst.msk [vmem:[%s2 + $0x280] sm:$0xff] %vm605, %v489
  %687 = vst.msk [vmem:[%s2 + $0x288] sm:$0xff] %vm605, %v490
  %688 = vst.msk [vmem:[%s2 + $0x290] sm:$0xff] %vm605, %v491
  %689 = vst.msk [vmem:[%s2 + $0x298] sm:$0xff] %vm605, %v492
  %690 = vst.msk [vmem:[%s2 + $0x2a0] sm:$0xff] %vm605, %v493
  %691 = vst.msk [vmem:[%s2 + $0x2a8] sm:$0xff] %vm605, %v494
  %692 = vst.msk [vmem:[%s2 + $0x2b0] sm:$0xff] %vm605, %v495
  %693 = vst.msk [vmem:[%s2 + $0x2b8] sm:$0xff] %vm605, %v496
  %694 = vst.msk [vmem:[%s2 + $0x2c0] sm:$0xff] %vm605, %v497
  %695 = vst.msk [vmem:[%s2 + $0x2c8] sm:$0xff] %vm605, %v498
  %696 = vst.msk [vmem:[%s2 + $0x2d0] sm:$0xff] %vm605, %v499
  %697 = vst.msk [vmem:[%s2 + $0x2d8] sm:$0xff] %vm605, %v500
  %698 = vst.msk [vmem:[%s2 + $0x2e0] sm:$0xff] %vm605, %v501
  %699 = vst.msk [vmem:[%s2 + $0x2e8] sm:$0xff] %vm605, %v502
  %700 = vst.msk [vmem:[%s2 + $0x2f0] sm:$0xff] %vm605, %v503
  %701 = vst.msk [vmem:[%s2 + $0x2f8] sm:$0xff] %vm605, %v504
  %702 = vst.msk [vmem:[%s2 + $0x300] sm:$0xff] %vm605, %v505
  %703 = vst.msk [vmem:[%s2 + $0x308] sm:$0xff] %vm605, %v506
  %704 = vst.msk [vmem:[%s2 + $0x310] sm:$0xff] %vm605, %v507
  %705 = vst.msk [vmem:[%s2 + $0x318] sm:$0xff] %vm605, %v508
  %706 = vst.msk [vmem:[%s2 + $0x320] sm:$0xff] %vm605, %v509
  %707 = vst.msk [vmem:[%s2 + $0x328] sm:$0xff] %vm605, %v510
  %708 = vst.msk [vmem:[%s2 + $0x330] sm:$0xff] %vm605, %v511
  %709 = vst.msk [vmem:[%s2 + $0x338] sm:$0xff] %vm605, %v512
  %710 = vst.msk [vmem:[%s2 + $0x340] sm:$0xff] %vm605, %v513
  %711 = vst.msk [vmem:[%s2 + $0x348] sm:$0xff] %vm605, %v514
  %712 = vst.msk [vmem:[%s2 + $0x350] sm:$0xff] %vm605, %v515
  %713 = vst.msk [vmem:[%s2 + $0x358] sm:$0xff] %vm605, %v516
  %714 = vst.msk [vmem:[%s2 + $0x360] sm:$0xff] %vm605, %v517
  %715 = vst.msk [vmem:[%s2 + $0x368] sm:$0xff] %vm605, %v518
  %716 = vst.msk [vmem:[%s2 + $0x370] sm:$0xff] %vm605, %v519
  %717 = vst.msk [vmem:[%s2 + $0x378] sm:$0xff] %vm605, %v520
  %718 = vst.msk [vmem:[%s2 + $0x380] sm:$0xff] %vm605, %v521
  %719 = vst.msk [vmem:[%s2 + $0x388] sm:$0xff] %vm605, %v522
  %720 = vst.msk [vmem:[%s2 + $0x390] sm:$0xff] %vm605, %v523
  %721 = vst.msk [vmem:[%s2 + $0x398] sm:$0xff] %vm605, %v524
  %722 = vst.msk [vmem:[%s2 + $0x3a0] sm:$0xff] %vm605, %v525
  %723 = vst.msk [vmem:[%s2 + $0x3a8] sm:$0xff] %vm605, %v526
  %724 = vst.msk [vmem:[%s2 + $0x3b0] sm:$0xff] %vm605, %v527
  %725 = vst.msk [vmem:[%s2 + $0x3b8] sm:$0xff] %vm605, %v528
  %726 = vst.msk [vmem:[%s2 + $0x3c0] sm:$0xff] %vm605, %v529
  %727 = vst.msk [vmem:[%s2 + $0x3c8] sm:$0xff] %vm605, %v530
  %728 = vst.msk [vmem:[%s2 + $0x3d0] sm:$0xff] %vm605, %v531
  %729 = vst.msk [vmem:[%s2 + $0x3d8] sm:$0xff] %vm605, %v532
  %730 = vst.msk [vmem:[%s2 + $0x3e0] sm:$0xff] %vm605, %v533
  %731 = vst.msk [vmem:[%s2 + $0x3e8] sm:$0xff] %vm605, %v534
  %732 = vst.msk [vmem:[%s2 + $0x3f0] sm:$0xff] %vm605, %v535
  %733 = vst.msk [vmem:[%s2 + $0x3f8] sm:$0xff] %vm605, %v536
  %734 = vst.msk [vmem:[%s2 + $0x400] sm:$0xff] %vm605, %v537
  %735 = vst.msk [vmem:[%s2 + $0x408] sm:$0xff] %vm605, %v538
  %736 = vst.msk [vmem:[%s2 + $0x410] sm:$0xff] %vm605, %v539
  %737 = vst.msk [vmem:[%s2 + $0x418] sm:$0xff] %vm605, %v540
  %738 = vst.msk [vmem:[%s2 + $0x420] sm:$0xff] %vm605, %v541
  %739 = vst.msk [vmem:[%s2 + $0x428] sm:$0xff] %vm605, %v542
  %740 = vst.msk [vmem:[%s2 + $0x430] sm:$0xff] %vm605, %v543
  %741 = vst.msk [vmem:[%s2 + $0x438] sm:$0xff] %vm605, %v544
  %742 = vst.msk [vmem:[%s2 + $0x440] sm:$0xff] %vm605, %v545
  %743 = vst.msk [vmem:[%s2 + $0x448] sm:$0xff] %vm605, %v546
  %744 = vst.msk [vmem:[%s2 + $0x450] sm:$0xff] %vm605, %v547
  %745 = vst.msk [vmem:[%s2 + $0x458] sm:$0xff] %vm605, %v548
  %746 = vst.msk [vmem:[%s2 + $0x460] sm:$0xff] %vm605, %v549
  %747 = vst.msk [vmem:[%s2 + $0x468] sm:$0xff] %vm605, %v550
  %748 = vst.msk [vmem:[%s2 + $0x470] sm:$0xff] %vm605, %v551
  %749 = vst.msk [vmem:[%s2 + $0x478] sm:$0xff] %vm605, %v552
  %750 = vst.msk [vmem:[%s2 + $0x480] sm:$0xff] %vm605, %v553
  %751 = vst.msk [vmem:[%s2 + $0x488] sm:$0xff] %vm605, %v554
  %752 = vst.msk [vmem:[%s2 + $0x490] sm:$0xff] %vm605, %v555
  %753 = vst.msk [vmem:[%s2 + $0x498] sm:$0xff] %vm605, %v556
  %754 = vst.msk [vmem:[%s2 + $0x4a0] sm:$0xff] %vm605, %v557
  %755 = vst.msk [vmem:[%s2 + $0x4a8] sm:$0xff] %vm605, %v558
  %756 = vst.msk [vmem:[%s2 + $0x4b0] sm:$0xff] %vm605, %v559
  %757 = vst.msk [vmem:[%s2 + $0x4b8] sm:$0xff] %vm605, %v560
  %758 = vst.msk [vmem:[%s2 + $0x4c0] sm:$0xff] %vm605, %v561
  %759 = vst.msk [vmem:[%s2 + $0x4c8] sm:$0xff] %vm605, %v562
  %760 = vst.msk [vmem:[%s2 + $0x4d0] sm:$0xff] %vm605, %v563
  %761 = vst.msk [vmem:[%s2 + $0x4d8] sm:$0xff] %vm605, %v564
  %762 = vst.msk [vmem:[%s2 + $0x4e0] sm:$0xff] %vm605, %v565
  %763 = vst.msk [vmem:[%s2 + $0x4e8] sm:$0xff] %vm605, %v566
  %764 = vst.msk [vmem:[%s2 + $0x4f0] sm:$0xff] %vm605, %v567
  %765 = vst.msk [vmem:[%s2 + $0x4f8] sm:$0xff] %vm605, %v568
  %766 = vst.msk [vmem:[%s2 + $0x500] sm:$0xff] %vm605, %v569
  %767 = vst.msk [vmem:[%s2 + $0x508] sm:$0xff] %vm605, %v570
  %768 = vst.msk [vmem:[%s2 + $0x510] sm:$0xff] %vm605, %v571
  %769 = vst.msk [vmem:[%s2 + $0x518] sm:$0xff] %vm605, %v572
  %770 = vst.msk [vmem:[%s2 + $0x520] sm:$0xff] %vm605, %v573
  %771 = vst.msk [vmem:[%s2 + $0x528] sm:$0xff] %vm605, %v574
  %772 = vst.msk [vmem:[%s2 + $0x530] sm:$0xff] %vm605, %v575
  %773 = vst.msk [vmem:[%s2 + $0x538] sm:$0xff] %vm605, %v576
  %774 = vst.msk [vmem:[%s2 + $0x540] sm:$0xff] %vm605, %v577
  %775 = vst.msk [vmem:[%s2 + $0x548] sm:$0xff] %vm605, %v578
  %776 = vst.msk [vmem:[%s2 + $0x550] sm:$0xff] %vm605, %v579
  %777 = vst.msk [vmem:[%s2 + $0x558] sm:$0xff] %vm605, %v580
  %778 = vst.msk [vmem:[%s2 + $0x560] sm:$0xff] %vm605, %v581
  %779 = vst.msk [vmem:[%s2 + $0x568] sm:$0xff] %vm605, %v582
  %780 = vst.msk [vmem:[%s2 + $0x570] sm:$0xff] %vm605, %v583
  %781 = vst.msk [vmem:[%s2 + $0x578] sm:$0xff] %vm605, %v584
  %782 = vst.msk [vmem:[%s2 + $0x580] sm:$0xff] %vm605, %v585
  %783 = vst.msk [vmem:[%s2 + $0x588] sm:$0xff] %vm605, %v586
  %784 = vst.msk [vmem:[%s2 + $0x590] sm:$0xff] %vm605, %v587
  %785 = vst.msk [vmem:[%s2 + $0x598] sm:$0xff] %vm605, %v588
  %786 = vst.msk [vmem:[%s2 + $0x5a0] sm:$0xff] %vm605, %v589
  %787 = vst.msk [vmem:[%s2 + $0x5a8] sm:$0xff] %vm605, %v590
  %788 = vst.msk [vmem:[%s2 + $0x5b0] sm:$0xff] %vm605, %v591
  %789 = vst.msk [vmem:[%s2 + $0x5b8] sm:$0xff] %vm605, %v592
  %790 = vst.msk [vmem:[%s2 + $0x5c0] sm:$0xff] %vm605, %v593
  %791 = vst.msk [vmem:[%s2 + $0x5c8] sm:$0xff] %vm605, %v594
  %792 = vst.msk [vmem:[%s2 + $0x5d0] sm:$0xff] %vm605, %v595
  %793 = vst.msk [vmem:[%s2 + $0x5d8] sm:$0xff] %vm605, %v596
  %794 = vst.msk [vmem:[%s2 + $0x5e0] sm:$0xff] %vm605, %v597
  %795 = vst.msk [vmem:[%s2 + $0x5e8] sm:$0xff] %vm605, %v598
  %796 = vst.msk [vmem:[%s2 + $0x5f0] sm:$0xff] %vm605, %v599
  %797 = vst.msk [vmem:[%s2 + $0x5f8] sm:$0xff] %vm605, %v600
  %798 = vst.msk [vmem:[%s2 + $0x600] sm:$0xff] %vm605, %v601
  %799 = vst.msk [vmem:[%s2 + $0x608] sm:$0xff] %vm605, %v602
  %800 = vst.msk [vmem:[%s2 + $0x610] sm:$0xff] %vm605, %v603
  %801 = vst.msk [vmem:[%s2 + $0x618] sm:$0xff] %vm605, %v604
  // Predicated region
  $region10: #{vae_forward.19} parent=0 // pred_check
    _
  $region11: #{vae_forward.19} parent=0 // pred_check_branch
    %803 = sbr.rel (0) target = $region13
  $region12: #{vae_forward.19} parent=0 // pred_region
    _
  $region13: #{vae_forward.19} parent=0 // pred_fallthru
    _
  // Predicated region
  $region14: #{vae_forward.19} parent=0 // pred_check
    _
  $region15: #{vae_forward.19} parent=0 // pred_check_branch
    %805 = sbr.rel (0) target = $region17
  $region16: #{vae_forward.19} parent=0 // pred_region
    _
  $region17: #{vae_forward.19} parent=0 // pred_fallthru
    _

</llo_original>
